<compile_context>
chip_gen: v7x
topology: tpu7x:2x2x1
jax: 0.10.0
libtpu: 0.0.40
codegen_flags: <defaults>
</compile_context>

<pallas_src>
import functools

import jax
import jax.numpy as jnp
from jax.experimental import pallas as pl
from jax.experimental.pallas import tpu as pltpu

LANE = 128                       # lane-dense padding for K and Cout
ROW_ALIGN = 256                  # minimum / alignment of the M tile
VMEM_TILE_BUDGET = 16 * 1024 * 1024   # target bytes for double-buffered A + O


def _round_up(x, m):
    return (x + m - 1) // m * m


def _pick_tm(m, kp, np_):
    """Largest M tile (<=2048) whose double-buffered A+O footprint fits budget."""
    tm = 2048
    while tm > ROW_ALIGN and 2 * tm * (kp * 2 + np_ * 4) > VMEM_TILE_BUDGET:
        tm //= 2
    return max(ROW_ALIGN, min(tm, _round_up(m, ROW_ALIGN)))


# ---------------------------------------------------------------------------
# Pallas kernel: O = maybe_relu(A @ W + shift)
#   A: (TM, K) bf16 im2col patches, W: (K, Cout) bf16 (BN scale pre-folded),
#   shift: (1, Cout) f32 (folded BN shift, or bias for the head).
#   Grid is 1-D over M; K and Cout are full blocks, so A is read once and W is
#   fetched once (constant index_map -> revisited block).
# ---------------------------------------------------------------------------
def _mm_shift_act_kernel(a_ref, w_ref, s_ref, o_ref, *, relu):
    acc = jnp.dot(a_ref[...], w_ref[...], preferred_element_type=jnp.float32)
    acc = acc + s_ref[...]
    if relu:
        acc = jnp.maximum(acc, 0.0)
    o_ref[...] = acc.astype(o_ref.dtype)


def matmul_shift_act(a, w, shift, *, relu, out_dtype=jnp.bfloat16):
    m, k = a.shape
    k2, n = w.shape
    assert k == k2, (a.shape, w.shape)
    kp = _round_up(k, LANE)
    np_ = _round_up(n, LANE)
    tm = _pick_tm(m, kp, np_)
    mp = _round_up(m, tm)

    a = a.astype(jnp.bfloat16)
    w = w.astype(jnp.bfloat16)
    if (mp, kp) != (m, k):
        a = jnp.pad(a, ((0, mp - m), (0, kp - k)))
    if (kp, np_) != (k, n):
        w = jnp.pad(w, ((0, kp - k), (0, np_ - n)))
    s = jnp.pad(shift.astype(jnp.float32).reshape(1, n), ((0, 0), (0, np_ - n)))

    out = pl.pallas_call(
        functools.partial(_mm_shift_act_kernel, relu=relu),
        out_shape=jax.ShapeDtypeStruct((mp, np_), out_dtype),
        grid_spec=pltpu.PrefetchScalarGridSpec(
            num_scalar_prefetch=0,
            grid=(mp // tm,),
            in_specs=[
                pl.BlockSpec((tm, kp), lambda i: (i, 0)),   # A: streamed once
                pl.BlockSpec((kp, np_), lambda i: (0, 0)),  # W: fetched once
                pl.BlockSpec((1, np_), lambda i: (0, 0)),   # shift
            ],
            out_specs=pl.BlockSpec((tm, np_), lambda i: (i, 0)),
        ),
        compiler_params=pltpu.CompilerParams(
            dimension_semantics=("parallel",),
            vmem_limit_bytes=32 * 1024 * 1024,
        ),
    )(a, w, s)
    if (mp, np_) != (m, n):
        out = out[:m, :n]
    return out


# ---------------------------------------------------------------------------
# Conv3d + (folded) BatchNorm3d + ReLU  == BasicConv3d
# ---------------------------------------------------------------------------
def conv3d_bn_act(x, p, *, stride=(1, 1, 1), padding=(0, 0, 0), relu=True,
                  out_dtype=jnp.bfloat16):
    wt = p["w"]                               # (kd, kh, kw, Cin, Cout), bf16
    kd, kh, kw, cin, cout = wt.shape
    n, d, h, wd, c = x.shape
    assert c == cin, (x.shape, wt.shape)
    sd, sh, sw = stride
    pd, ph, pw = padding
    do = (d + 2 * pd - kd) // sd + 1
    ho = (h + 2 * ph - kh) // sh + 1
    wo = (wd + 2 * pw - kw) // sw + 1
    k = kd * kh * kw * cin
    kp = _round_up(k, LANE)
    wm = wt.reshape(k, cout)

    if (kd, kh, kw) == (1, 1, 1) and stride == (1, 1, 1) and padding == (0, 0, 0):
        patches = x.reshape(-1, c)            # no im2col for pointwise convs
    else:
        xp = jnp.pad(x, ((0, 0), (pd, pd), (ph, ph), (pw, pw), (0, 0)))
        cols = []
        for a in range(kd):
            for b in range(kh):
                for cc in range(kw):
                    cols.append(xp[:, a:a + do * sd:sd, b:b + ho * sh:sh,
                                   cc:cc + wo * sw:sw, :])
        if kp != k:   # build K already lane-padded -> no extra full-array pad
            cols.append(jnp.zeros((n, do, ho, wo, kp - k), x.dtype))
            wm = jnp.pad(wm, ((0, kp - k), (0, 0)))
        patches = jnp.concatenate(cols, axis=-1).reshape(n * do * ho * wo, -1)

    out = matmul_shift_act(patches, wm, p["shift"], relu=relu, out_dtype=out_dtype)
    return out.reshape(n, do, ho, wo, cout)


def maxpool3d(x, kernel, stride, padding):
    n, d, h, w, c = x.shape
    kd, kh, kw = kernel
    sd, sh, sw = stride
    pd, ph, pw = padding
    do = (d + 2 * pd - kd) // sd + 1
    ho = (h + 2 * ph - kh) // sh + 1
    wo = (w + 2 * pw - kw) // sw + 1
    xp = jnp.pad(x, ((0, 0), (pd, pd), (ph, ph), (pw, pw), (0, 0)),
                 constant_values=-jnp.inf)
    out = None
    for a in range(kd):
        for b in range(kh):
            for cc in range(kw):
                sl = xp[:, a:a + do * sd:sd, b:b + ho * sh:sh,
                        cc:cc + wo * sw:sw, :]
                out = sl if out is None else jnp.maximum(out, sl)
    return out


# ---------------------------------------------------------------------------
# Parameters (deterministic synthetic init; BN scale folded into weights)
# ---------------------------------------------------------------------------
BN_SCALE = 1.0 / (1.0 + 1e-3) ** 0.5   # eval-mode BN: gamma=1, beta=0, mean=0, var=1


def _bconv_params(key, cin, cout, k):
    kd, kh, kw = (k, k, k) if isinstance(k, int) else k
    fan_in = cin * kd * kh * kw
    w = jax.random.normal(key, (kd, kh, kw, cin, cout),
                          jnp.float32) * (2.0 / fan_in) ** 0.5
    w = (w * BN_SCALE).astype(jnp.bfloat16)          # fold BN scale into weights
    shift = jnp.zeros((cout,), jnp.float32)           # beta - mean*scale == 0
    return {"w": w, "shift": shift}


def _mixed_params(key, cin, c0, c1, c2, c3):
    ks = jax.random.split(key, 6)
    p = {
        "b0":  _bconv_params(ks[0], cin, c0, 1),
        "b1a": _bconv_params(ks[1], cin, c1[0], 1),
        "b1b": _bconv_params(ks[2], c1[0], c1[1], 3),
        "b2a": _bconv_params(ks[3], cin, c2[0], 1),
        "b2b": _bconv_params(ks[4], c2[0], c2[1], 3),
        "b3":  _bconv_params(ks[5], cin, c3, 1),
    }
    # Fuse the three 1x1x1 convs sharing the same input (b0, b1a, b2a) into one
    # wide matmul: activations read from HBM once, lane-dense N >= 256.
    p["b012"] = {
        "w": jnp.concatenate([p["b0"]["w"], p["b1a"]["w"], p["b2a"]["w"]], axis=-1),
        "shift": jnp.concatenate(
            [p["b0"]["shift"], p["b1a"]["shift"], p["b2a"]["shift"]]),
    }
    p["splits"] = (c0, c1[0], c2[0])
    return p


MIXED_CFG = {
    "3b": (192, 64, (96, 128), (16, 32), 32),
    "3c": (256, 128, (128, 192), (32, 96), 64),
    "4b": (480, 192, (96, 208), (16, 48), 64),
    "4c": (512, 160, (112, 224), (24, 64), 64),
    "4d": (512, 128, (128, 256), (24, 64), 64),
    "4e": (512, 112, (144, 288), (32, 64), 64),
    "4f": (528, 256, (160, 320), (32, 128), 128),
    "5b": (832, 256, (160, 320), (32, 128), 128),
    "5c": (832, 384, (192, 384), (48, 128), 128),
}


def init_params(key, input_channel=2, num_classes=1):
    keys = jax.random.split(key, 14)
    p = {}
    p["conv1"] = _bconv_params(keys[0], input_channel, 64, 7)
    p["conv2"] = _bconv_params(keys[1], 64, 64, 1)
    p["conv3"] = _bconv_params(keys[2], 64, 192, 3)
    for i, (name, cfg) in enumerate(MIXED_CFG.items()):
        p[name] = _mixed_params(keys[3 + i], *cfg)
    p["final_w"] = (jax.random.normal(keys[12], (1024, num_classes), jnp.float32)
                    * (1.0 / 1024.0) ** 0.5).astype(jnp.bfloat16)
    p["final_b"] = jnp.full((num_classes,), 0.1, jnp.float32)
    return p


# ---------------------------------------------------------------------------
# Forward pass
# ---------------------------------------------------------------------------
def mixed_forward(x, p):
    c0, c1a, _ = p["splits"]
    fused = conv3d_bn_act(x, p["b012"])               # b0 | b1a | b2a in one matmul
    b0 = fused[..., :c0]
    b1 = conv3d_bn_act(fused[..., c0:c0 + c1a], p["b1b"], padding=(1, 1, 1))
    b2 = conv3d_bn_act(fused[..., c0 + c1a:], p["b2b"], padding=(1, 1, 1))
    b3 = maxpool3d(x, (3, 3, 3), (1, 1, 1), (1, 1, 1))
    b3 = conv3d_bn_act(b3, p["b3"])
    return jnp.concatenate([b0, b1, b2, b3], axis=-1)


def i3d_forward(x_ncdhw, p):
    # NCDHW (PyTorch) -> NDHWC (kernel layout), bf16 activations throughout.
    x = jnp.transpose(x_ncdhw, (0, 2, 3, 4, 1)).astype(jnp.bfloat16)

    x = conv3d_bn_act(x, p["conv1"], stride=(2, 2, 2), padding=(3, 3, 3))
    x = maxpool3d(x, (1, 3, 3), (1, 2, 2), (0, 1, 1))
    x = conv3d_bn_act(x, p["conv2"])
    x = conv3d_bn_act(x, p["conv3"], padding=(1, 1, 1))
    x = maxpool3d(x, (1, 3, 3), (1, 2, 2), (0, 1, 1))
    x = mixed_forward(x, p["3b"])
    x = mixed_forward(x, p["3c"])
    x = maxpool3d(x, (3, 3, 3), (2, 2, 2), (1, 1, 1))
    for name in ("4b", "4c", "4d", "4e", "4f"):
        x = mixed_forward(x, p[name])
    x = maxpool3d(x, (2, 2, 2), (2, 2, 2), (0, 0, 0))
    x = mixed_forward(x, p["5b"])
    x = mixed_forward(x, p["5c"])

    # AvgPool3d(kernel=(2,7,7), stride=1): the spatial dims equal the kernel
    # here, so the pool reduces to a single-window mean over (D, H, W).
    assert x.shape[1:4] == (2, 7, 7), x.shape
    xm = jnp.mean(x.astype(jnp.float32), axis=(1, 2, 3))          # (N, 1024)

    # Dropout3d -> identity (eval mode). Final 1x1x1 Conv3d with bias:
    nb = xm.shape[0]
    ncls = p["final_b"].shape[0]
    logits = matmul_shift_act(xm, p["final_w"], p["final_b"],
                              relu=False, out_dtype=jnp.float32)   # (N, ncls)

    # squeeze(3).squeeze(3) then mean over the (length-1) temporal dim.
    logits = logits.reshape(nb, ncls, 1)
    averaged_logits = jnp.mean(logits, axis=2)
    predictions = jax.nn.sigmoid(averaged_logits)
    return predictions, averaged_logits


if __name__ == "__main__":
    key = jax.random.PRNGKey(0)
    kx, kp = jax.random.split(key)
    # Smallest input this architecture supports: the AvgPool3d(kernel=(2,7,7))
    # head needs 224x224 spatial (divided by 32 through the net) and 16 frames
    # (to reach the length-2 temporal window).
    x = jax.random.normal(kx, (1, 2, 16, 224, 224), jnp.float32)
    params = init_params(kp, input_channel=2, num_classes=1)

    preds, avg_logits = i3d_forward(x, params)
    preds, avg_logits = jax.block_until_ready((preds, avg_logits))

    assert preds.shape == (1, 1) and avg_logits.shape == (1, 1)
    assert bool(jnp.all(jnp.isfinite(preds))) and bool(jnp.all(jnp.isfinite(avg_logits)))
    print("KERNEL_OK")
</pallas_src>

<mosaic_0001>
module attributes {stable_mosaic.version = 11 : i64} {
  func.func @_mm_shift_act_kernel(%arg0: i32, %arg1: memref<2048x768xbf16, #tpu.memory_space<vmem>>, %arg2: memref<768x128xbf16, #tpu.memory_space<vmem>>, %arg3: memref<1x128xf32, #tpu.memory_space<vmem>>, %arg4: memref<2048x128xbf16, #tpu.memory_space<vmem>>) attributes {dimension_semantics = [#tpu.dimension_semantics<parallel>], iteration_bounds = array<i64: 49>, scalar_prefetch = 0 : i64, scratch_operands = 0 : i64, tpu.core_type = #tpu.core_type<tc>, window_params = [{transform_indices = @transform_0, window_bounds = array<i64: 2048, 768>}, {pipeline_mode = #tpu.pipeline_mode<synchronous>, transform_indices = @transform_1, window_bounds = array<i64: 768, 128>}, {pipeline_mode = #tpu.pipeline_mode<synchronous>, transform_indices = @transform_2, window_bounds = array<i64: 1, 128>}, {transform_indices = @transform_3, window_bounds = array<i64: 2048, 128>}]} {
    %c0 = arith.constant 0 : index
    %c0_0 = arith.constant 0 : index
    %0 = vector.load %arg1[%c0, %c0_0] : memref<2048x768xbf16, #tpu.memory_space<vmem>>, vector<2048x768xbf16>
    %c0_1 = arith.constant 0 : index
    %c0_2 = arith.constant 0 : index
    %1 = vector.load %arg2[%c0_1, %c0_2] : memref<768x128xbf16, #tpu.memory_space<vmem>>, vector<768x128xbf16>
    %cst = arith.constant dense<0.000000e+00> : vector<2048x128xf32>
    %2 = tpu.matmul %0, %1, %cst {dimension_numbers = #tpu.dot_dimension_numbers<[1], [0], [0], [1], [0, 0, 1, 1], [], []>} : vector<2048x768xbf16>, vector<768x128xbf16>, vector<2048x128xf32> -> vector<2048x128xf32>
    %c0_3 = arith.constant 0 : index
    %c0_4 = arith.constant 0 : index
    %3 = vector.load %arg3[%c0_3, %c0_4] : memref<1x128xf32, #tpu.memory_space<vmem>>, vector<1x128xf32>
    %4 = vector.broadcast %3 : vector<1x128xf32> to vector<2048x128xf32>
    %5 = arith.addf %2, %4 : vector<2048x128xf32>
    %cst_5 = arith.constant 0.000000e+00 : f32
    %6 = vector.broadcast %cst_5 : f32 to vector<2048x128xf32>
    %7 = arith.maximumf %5, %6 : vector<2048x128xf32>
    %8 = arith.truncf %7 : vector<2048x128xf32> to vector<2048x128xbf16>
    %c0_6 = arith.constant 0 : index
    %c0_7 = arith.constant 0 : index
    %9 = vector.load %arg4[%c0_6, %c0_7] : memref<2048x128xbf16, #tpu.memory_space<vmem>>, vector<2048x128xbf16>
    tpu.vector_store %arg4[%c0_6, %c0_7], %8 {strides = array<i32>} : memref<2048x128xbf16, #tpu.memory_space<vmem>>, vector<2048x128xbf16>,
    return
  }
  func.func @transform_0(%arg0: i32) -> (i32, i32) {
    %c0_i32 = arith.constant 0 : i32
    %c0_i32_0 = arith.constant 0 : i32
    return %arg0, %c0_i32 : i32, i32
  }
  func.func @transform_1(%arg0: i32) -> (i32, i32) {
    %c0_i32 = arith.constant 0 : i32
    %c0_i32_0 = arith.constant 0 : i32
    %c0_i32_1 = arith.constant 0 : i32
    return %c0_i32, %c0_i32_0 : i32, i32
  }
  func.func @transform_2(%arg0: i32) -> (i32, i32) {
    %c0_i32 = arith.constant 0 : i32
    %c0_i32_0 = arith.constant 0 : i32
    %c0_i32_1 = arith.constant 0 : i32
    return %c0_i32, %c0_i32_0 : i32, i32
  }
  func.func @transform_3(%arg0: i32) -> (i32, i32) {
    %c0_i32 = arith.constant 0 : i32
    %c0_i32_0 = arith.constant 0 : i32
    return %arg0, %c0_i32 : i32, i32
  }
}

</mosaic_0001>

<llo_original>
// kernel: tpu_custom_call.1
$region0: #{tpu_custom_call.1}
  #allocation0 [shape = 'u32[]', space=smem, size = 0x4, offset = 0x4, fixed_abs, tag = 'smem constant byte address 0x4 - core index']
  #allocation1 [shape = 'u32[144,128]{1,0:T(1,128)}', space=vmem, size = 0x12000, scoped, tag = 'internal scratch']
  %s0 = inlined_call_operand.hbm [shape: bf16[100352,768], index: 0, kind: input, shape index: {}]
  %s1 = inlined_call_operand.hbm [shape: bf16[768,128], index: 1, kind: input, shape index: {}]
  %s2 = inlined_call_operand.hbm [shape: f32[1,128], index: 2, kind: input, shape index: {}]
  %s3 = inlined_call_operand.hbm [shape: bf16[100352,128], index: 3, kind: output, shape index: {}]
  %s4 = sld [smem:[#allocation0]]
  $region57: #{tpu_custom_call.1} parent=0
    _
  %s6 = ssub.s32 1, %s4
  %s7 = scalar_select 0, %s6, %s4
  $region1: #{tpu_custom_call.1} parent=0
    #allocation2 [shape = 'u8[6291456]{0}', space=vmem, size = 0x600000, scoped, tag = 'input window, operand 0']
    #allocation3 [shape = 's32[2]{0}', space=sflag, size = 0x8, scoped, tag = 'scoped memory for tpu_custom_call.1']
    #allocation4 [shape = 's32[2]{0}', space=sflag, size = 0x8, scoped, tag = 'scoped memory for tpu_custom_call.1']
    #allocation5 [shape = 'u8[196608]{0}', space=vmem, size = 0x30000, scoped, tag = 'input window, operand 1, single buffered']
    #allocation6 [shape = 's32[1]{0}', space=sflag, size = 0x4, scoped, tag = 'scoped memory for tpu_custom_call.1']
    #allocation7 [shape = 'u8[512]{0}', space=vmem, size = 0x400, scoped, tag = 'input window, operand 2, single buffered']
    #allocation8 [shape = 'u8[1048576]{0}', space=vmem, size = 0x100000, scoped, tag = 'output window, operand 0']
    %8 = vsyncpa [#allocation3], 0
    %s9 = scalar_lea.sflag [#allocation3], 1
    %10 = vsyncpa %s9, 0
    %11 = vsyncpa [#allocation6], 0
    %12 = vsyncpa [#allocation4], 0
    %s13 = scalar_lea.sflag [#allocation4], 1
    %14 = vsyncpa %s13, 0
    loop: start=0, step=1, limit=51
    $region2: #{tpu_custom_call.1} parent=1 // loop_pre_header
      _
    $region3: #{tpu_custom_call.1} parent=1 // loop_header
      %s16 = sphi 0, %s20
      %p17 = scmp.ge.s32.totalorder %s16, 51
      %s26 = sphi 0, %s28
      %s29 = sphi 0, %s26
      %s30 = sphi 0, %s29
      %s46 = sphi 0, %s30
      %s50 = sphi 0, %s50
      %s52 = sphi 0, %s50
      %s53 = sphi 0, %s52
      %s67 = sphi 0, %s53
      %s71 = sphi 0, %s71
      %s73 = sphi 0, %s71
      %s74 = sphi 0, %s73
      %s88 = sphi 0, %s74
      %s94 = sphi 0, %s96
      %s97 = sphi 0, %s94
      %s98 = sphi 0, %s97
      %s114 = sphi 0, %s98
    $region4: #{tpu_custom_call.1} parent=1 // loop_header_branch
      %19 = sbr.rel (%p17) target = $region8
    $region5: #{tpu_custom_call.1} parent=1 // loop_body
      %s21 = ssub.s32 %s16, 1
      %s22 = ssub.s32 %s16, 2
      %s23 = sadd.s32 %s16, 1
      %s24 = ssub.s32 %s16, %s23
      %p25 = scmp.eq.s32.totalorder %s24, 0
      %s27 = sadd.s32 %s26, 1
      %s28 = scalar_select %p25, %s26, %s27
      %p31 = pneg %p25
      %p32 = scmp.eq.s32.totalorder %s16, 48
      %p33 = por %p31, %p32
      %p34 = scmp.ne.s32.totalorder %s26, %s29
      %p35 = scmp.eq.s32.totalorder %s16, 0
      %p36 = por %p34, %p35
      %p37 = scmp.ne.s32.totalorder %s26, %s29
      %p38 = scmp.eq.s32.totalorder %s21, 48
      %p39 = por %p37, %p38
      %p40 = scmp.ne.s32.totalorder %s29, %s30
      %p41 = scmp.eq.s32.totalorder %s21, 0
      %p42 = por %p40, %p41
      %p43 = scmp.ne.s32.totalorder %s29, %s30
      %p44 = scmp.eq.s32.totalorder %s22, 48
      %p45 = por %p43, %p44
      %p47 = scmp.ne.s32.totalorder %s30, %s46
      %p48 = scmp.eq.s32.totalorder %s22, 0
      %p49 = por %p47, %p48
      %s51 = sadd.s32 %s50, 1
      %p54 = scmp.eq.s32.totalorder %s16, 48
      %p55 = scmp.ne.s32.totalorder %s50, %s52
      %p56 = scmp.eq.s32.totalorder %s16, 0
      %p57 = por %p55, %p56
      %p58 = scmp.ne.s32.totalorder %s50, %s52
      %p59 = scmp.eq.s32.totalorder %s21, 48
      %p60 = por %p58, %p59
      %p61 = scmp.ne.s32.totalorder %s52, %s53
      %p62 = scmp.eq.s32.totalorder %s21, 0
      %p63 = por %p61, %p62
      %p64 = scmp.ne.s32.totalorder %s52, %s53
      %p65 = scmp.eq.s32.totalorder %s22, 48
      %p66 = por %p64, %p65
      %p68 = scmp.ne.s32.totalorder %s53, %s67
      %p69 = scmp.eq.s32.totalorder %s22, 0
      %p70 = por %p68, %p69
      %s72 = sadd.s32 %s71, 1
      %p75 = scmp.eq.s32.totalorder %s16, 48
      %p76 = scmp.ne.s32.totalorder %s71, %s73
      %p77 = scmp.eq.s32.totalorder %s16, 0
      %p78 = por %p76, %p77
      %p79 = scmp.ne.s32.totalorder %s71, %s73
      %p80 = scmp.eq.s32.totalorder %s21, 48
      %p81 = por %p79, %p80
      %p82 = scmp.ne.s32.totalorder %s73, %s74
      %p83 = scmp.eq.s32.totalorder %s21, 0
      %p84 = por %p82, %p83
      %p85 = scmp.ne.s32.totalorder %s73, %s74
      %p86 = scmp.eq.s32.totalorder %s22, 48
      %p87 = por %p85, %p86
      %p89 = scmp.ne.s32.totalorder %s74, %s88
      %p90 = scmp.eq.s32.totalorder %s22, 0
      %p91 = por %p89, %p90
      %s92 = ssub.s32 %s16, %s23
      %p93 = scmp.eq.s32.totalorder %s92, 0
      %s95 = sadd.s32 %s94, 1
      %s96 = scalar_select %p93, %s94, %s95
      %p99 = pneg %p93
      %p100 = scmp.eq.s32.totalorder %s16, 48
      %p101 = por %p99, %p100
      %p102 = scmp.ne.s32.totalorder %s94, %s97
      %p103 = scmp.eq.s32.totalorder %s16, 0
      %p104 = por %p102, %p103
      %p105 = scmp.ne.s32.totalorder %s94, %s97
      %p106 = scmp.eq.s32.totalorder %s21, 48
      %p107 = por %p105, %p106
      %p108 = scmp.ne.s32.totalorder %s97, %s98
      %p109 = scmp.eq.s32.totalorder %s21, 0
      %p110 = por %p108, %p109
      %p111 = scmp.ne.s32.totalorder %s97, %s98
      %p112 = scmp.eq.s32.totalorder %s22, 48
      %p113 = por %p111, %p112
      %p115 = scmp.ne.s32.totalorder %s98, %s114
      %p116 = scmp.eq.s32.totalorder %s22, 0
      %p117 = por %p115, %p116
      %p118 = scmp.le.s32.totalorder 1, %s16
      %p119 = scmp.lt.s32.totalorder %s16, 50
      %p120 = pnand %p118, %p119
      %p121 = pneg %p120
      // Predicated region
      $region9: #{tpu_custom_call.1} parent=5 // pred_check
        _
      $region10: #{tpu_custom_call.1} parent=5 // pred_check_branch
        %123 = sbr.rel (%p120) target = $region12
      $region11: #{tpu_custom_call.1} parent=5 // pred_region
        %s124 = ssub.s32 %s16, 1
        // Predicated region
        $region13: #{tpu_custom_call.1} parent=11 // pred_check
          %p125 = pneg %p63
        $region14: #{tpu_custom_call.1} parent=11 // pred_check_branch
          %127 = sbr.rel (%p125) target = $region16
        $region15: #{tpu_custom_call.1} parent=11 // pred_region
          %s129 = ssub.s32 6144, 6144
          %130 = vsyncadd [#allocation6], %s129
          %s131 = sshll.u32 [#allocation5], 4
          %s132 = int_to_ptr.vmem [resolvable:$true] %s131
          %137 = dma.hbm_to_vmem [thread:$0]  %s1, 6144, %s132, [#allocation6], 64, 64, 4
        $region16: #{tpu_custom_call.1} parent=11 // pred_fallthru
          _
        // Predicated region
        $region17: #{tpu_custom_call.1} parent=11 // pred_check
          %p138 = pneg %p84
        $region18: #{tpu_custom_call.1} parent=11 // pred_check_branch
          %140 = sbr.rel (%p138) target = $region20
        $region19: #{tpu_custom_call.1} parent=11 // pred_region
          %s142 = ssub.s32 16, 16
          %143 = vsyncadd [#allocation6], %s142
          %s145 = sshll.u32 [#allocation7], 4
          %s146 = int_to_ptr.vmem [resolvable:$true] %s145
          %148 = dma.hbm_to_vmem [thread:$0]  %s2, 16, %s146, [#allocation6]
        $region20: #{tpu_custom_call.1} parent=11 // pred_fallthru
          _
      $region12: #{tpu_custom_call.1} parent=5 // pred_fallthru
        _
      %p149 = scmp.lt.s32.totalorder %s16, 49
      // Predicated region
      $region21: #{tpu_custom_call.1} parent=5 // pred_check
        %p150 = pneg %p149
      $region22: #{tpu_custom_call.1} parent=5 // pred_check_branch
        %152 = sbr.rel (%p150) target = $region24
      $region23: #{tpu_custom_call.1} parent=5 // pred_region
        // Predicated region
        $region25: #{tpu_custom_call.1} parent=23 // pred_check
          %p153 = pneg %p36
        $region26: #{tpu_custom_call.1} parent=23 // pred_check_branch
          %155 = sbr.rel (%p153) target = $region28
        $region27: #{tpu_custom_call.1} parent=23 // pred_region
          %s156 = sand.u32 %s26, 1
          %s157 = scalar_lea.sflag [#allocation3], %s156
          %s158 = sand.u32 %s26, 1
          %s159 = smul.addr %s158, 6144
          %s160 = scalar_lea.vmem [#allocation2], %s159
          %s161 = smul.u32 256, %s16
          %s163 = ssub.s32 98304, 98304
          %164 = vsyncadd %s157, %s163
          %s165 = smul.addr %s161, 6
          %s166 = smul.addr %s165, 64
          %s167 = scalar_lea.hbm %s0, %s166
          %s168 = sshll.u32 %s160, 4
          %s169 = int_to_ptr.vmem [resolvable:$true] %s168
          %174 = dma.hbm_to_vmem [thread:$0]  %s167, 98304, %s169, %s157, 384, 384, 24
        $region28: #{tpu_custom_call.1} parent=23 // pred_fallthru
          _
      $region24: #{tpu_custom_call.1} parent=5 // pred_fallthru
        _
      %p175 = scmp.le.s32.totalorder 1, %s16
      %p176 = scmp.lt.s32.totalorder %s16, 50
      %p177 = pnand %p175, %p176
      %p178 = pneg %p177
      // Predicated region
      $region29: #{tpu_custom_call.1} parent=5 // pred_check
        _
      $region30: #{tpu_custom_call.1} parent=5 // pred_check_branch
        %180 = sbr.rel (%p177) target = $region32
      $region31: #{tpu_custom_call.1} parent=5 // pred_region
        %s181 = ssub.s32 %s16, 1
        %s182 = sand.u32 %s29, 1
        %s183 = scalar_lea.sflag [#allocation3], %s182
        %s184 = sand.u32 %s29, 1
        %s185 = smul.addr %s184, 6144
        %s186 = scalar_lea.vmem [#allocation2], %s185
        // Predicated region
        $region33: #{tpu_custom_call.1} parent=31 // pred_check
          %p187 = pneg %p42
        $region34: #{tpu_custom_call.1} parent=31 // pred_check_branch
          %189 = sbr.rel (%p187) target = $region36
        $region35: #{tpu_custom_call.1} parent=31 // pred_region
          %190 = dma.done %s183, 98304
        $region36: #{tpu_custom_call.1} parent=31 // pred_fallthru
          _
        // Predicated region
        $region37: #{tpu_custom_call.1} parent=31 // pred_check
          %p191 = pneg %p63
        $region38: #{tpu_custom_call.1} parent=31 // pred_check_branch
          %193 = sbr.rel (%p191) target = $region40
        $region39: #{tpu_custom_call.1} parent=31 // pred_region
          %194 = dma.done [#allocation6], 6144
        $region40: #{tpu_custom_call.1} parent=31 // pred_fallthru
          _
        // Predicated region
        $region41: #{tpu_custom_call.1} parent=31 // pred_check
          %p195 = pneg %p84
        $region42: #{tpu_custom_call.1} parent=31 // pred_check_branch
          %197 = sbr.rel (%p195) target = $region44
        $region43: #{tpu_custom_call.1} parent=31 // pred_region
          %198 = dma.done [#allocation6], 16
        $region44: #{tpu_custom_call.1} parent=31 // pred_fallthru
          _
        %s199 = sand.u32 %s29, 1
        %s200 = scalar_lea.sflag [#allocation3], %s199
        %s201 = sand.u32 %s29, 1
        %s202 = smul.addr %s201, 6144
        %s203 = scalar_lea.vmem [#allocation2], %s202
        %p204 = pneg %p42
        %p205 = pneg %p39
        %p206 = pneg %p63
        %p207 = pneg %p60
        %p208 = pneg %p84
        %p209 = pneg %p81
        %p210 = pneg %p110
        %p211 = pneg %p107
        %s212 = sand.u32 %s97, 1
        %s213 = scalar_lea.sflag [#allocation4], %s212
        %s214 = sand.u32 %s97, 1
        %s215 = smul.addr %s214, 1024
        %s216 = scalar_lea.vmem [#allocation8], %s215
        %s217 = smul.u32 256, %s21
        %s218 = smul.u32 256, %s21
        %v220 = vld [vmem:[%s186] sm:$0xff]
        %v221 = vld [vmem:[%s186 + $0x8] sm:$0xff]
        %v222 = vld [vmem:[%s186 + $0x10] sm:$0xff]
        %v223 = vld [vmem:[%s186 + $0x18] sm:$0xff]
        %v224 = vld [vmem:[%s186 + $0x20] sm:$0xff]
        %v225 = vld [vmem:[%s186 + $0x28] sm:$0xff]
        %v226 = vld [vmem:[%s186 + $0x30] sm:$0xff]
        %v227 = vld [vmem:[%s186 + $0x38] sm:$0xff]
        %v228 = vld [vmem:[%s186 + $0x40] sm:$0xff]
        %v229 = vld [vmem:[%s186 + $0x48] sm:$0xff]
        %v230 = vld [vmem:[%s186 + $0x50] sm:$0xff]
        %v231 = vld [vmem:[%s186 + $0x58] sm:$0xff]
        %v232 = vld [vmem:[%s186 + $0x60] sm:$0xff]
        %v233 = vld [vmem:[%s186 + $0x68] sm:$0xff]
        %v234 = vld [vmem:[%s186 + $0x70] sm:$0xff]
        %v235 = vld [vmem:[%s186 + $0x78] sm:$0xff]
        %v236 = vld [vmem:[%s186 + $0x80] sm:$0xff]
        %v237 = vld [vmem:[%s186 + $0x88] sm:$0xff]
        %v238 = vld [vmem:[%s186 + $0x90] sm:$0xff]
        %v239 = vld [vmem:[%s186 + $0x98] sm:$0xff]
        %v240 = vld [vmem:[%s186 + $0xa0] sm:$0xff]
        %v241 = vld [vmem:[%s186 + $0xa8] sm:$0xff]
        %v242 = vld [vmem:[%s186 + $0xb0] sm:$0xff]
        %v243 = vld [vmem:[%s186 + $0xb8] sm:$0xff]
        %v244 = vld [vmem:[%s186 + $0xc0] sm:$0xff]
        %v245 = vld [vmem:[%s186 + $0xc8] sm:$0xff]
        %v246 = vld [vmem:[%s186 + $0xd0] sm:$0xff]
        %v247 = vld [vmem:[%s186 + $0xd8] sm:$0xff]
        %v248 = vld [vmem:[%s186 + $0xe0] sm:$0xff]
        %v249 = vld [vmem:[%s186 + $0xe8] sm:$0xff]
        %v250 = vld [vmem:[%s186 + $0xf0] sm:$0xff]
        %v251 = vld [vmem:[%s186 + $0xf8] sm:$0xff]
        %v252 = vld [vmem:[%s186 + $0x100] sm:$0xff]
        %v253 = vld [vmem:[%s186 + $0x108] sm:$0xff]
        %v254 = vld [vmem:[%s186 + $0x110] sm:$0xff]
        %v255 = vld [vmem:[%s186 + $0x118] sm:$0xff]
        %v256 = vld [vmem:[%s186 + $0x120] sm:$0xff]
        %v257 = vld [vmem:[%s186 + $0x128] sm:$0xff]
        %v258 = vld [vmem:[%s186 + $0x130] sm:$0xff]
        %v259 = vld [vmem:[%s186 + $0x138] sm:$0xff]
        %v260 = vld [vmem:[%s186 + $0x140] sm:$0xff]
        %v261 = vld [vmem:[%s186 + $0x148] sm:$0xff]
        %v262 = vld [vmem:[%s186 + $0x150] sm:$0xff]
        %v263 = vld [vmem:[%s186 + $0x158] sm:$0xff]
        %v264 = vld [vmem:[%s186 + $0x160] sm:$0xff]
        %v265 = vld [vmem:[%s186 + $0x168] sm:$0xff]
        %v266 = vld [vmem:[%s186 + $0x170] sm:$0xff]
        %v267 = vld [vmem:[%s186 + $0x178] sm:$0xff]
        %v268 = vld [vmem:[%s186 + $0x180] sm:$0xff]
        %v269 = vld [vmem:[%s186 + $0x188] sm:$0xff]
        %v270 = vld [vmem:[%s186 + $0x190] sm:$0xff]
        %v271 = vld [vmem:[%s186 + $0x198] sm:$0xff]
        %v272 = vld [vmem:[%s186 + $0x1a0] sm:$0xff]
        %v273 = vld [vmem:[%s186 + $0x1a8] sm:$0xff]
        %v274 = vld [vmem:[%s186 + $0x1b0] sm:$0xff]
        %v275 = vld [vmem:[%s186 + $0x1b8] sm:$0xff]
        %v276 = vld [vmem:[%s186 + $0x1c0] sm:$0xff]
        %v277 = vld [vmem:[%s186 + $0x1c8] sm:$0xff]
        %v278 = vld [vmem:[%s186 + $0x1d0] sm:$0xff]
        %v279 = vld [vmem:[%s186 + $0x1d8] sm:$0xff]
        %v280 = vld [vmem:[%s186 + $0x1e0] sm:$0xff]
        %v281 = vld [vmem:[%s186 + $0x1e8] sm:$0xff]
        %v282 = vld [vmem:[%s186 + $0x1f0] sm:$0xff]
        %v283 = vld [vmem:[%s186 + $0x1f8] sm:$0xff]
        %v284 = vld [vmem:[%s186 + $0x200] sm:$0xff]
        %v285 = vld [vmem:[%s186 + $0x208] sm:$0xff]
        %v286 = vld [vmem:[%s186 + $0x210] sm:$0xff]
        %v287 = vld [vmem:[%s186 + $0x218] sm:$0xff]
        %v288 = vld [vmem:[%s186 + $0x220] sm:$0xff]
        %v289 = vld [vmem:[%s186 + $0x228] sm:$0xff]
        %v290 = vld [vmem:[%s186 + $0x230] sm:$0xff]
        %v291 = vld [vmem:[%s186 + $0x238] sm:$0xff]
        %v292 = vld [vmem:[%s186 + $0x240] sm:$0xff]
        %v293 = vld [vmem:[%s186 + $0x248] sm:$0xff]
        %v294 = vld [vmem:[%s186 + $0x250] sm:$0xff]
        %v295 = vld [vmem:[%s186 + $0x258] sm:$0xff]
        %v296 = vld [vmem:[%s186 + $0x260] sm:$0xff]
        %v297 = vld [vmem:[%s186 + $0x268] sm:$0xff]
        %v298 = vld [vmem:[%s186 + $0x270] sm:$0xff]
        %v299 = vld [vmem:[%s186 + $0x278] sm:$0xff]
        %v300 = vld [vmem:[%s186 + $0x280] sm:$0xff]
        %v301 = vld [vmem:[%s186 + $0x288] sm:$0xff]
        %v302 = vld [vmem:[%s186 + $0x290] sm:$0xff]
        %v303 = vld [vmem:[%s186 + $0x298] sm:$0xff]
        %v304 = vld [vmem:[%s186 + $0x2a0] sm:$0xff]
        %v305 = vld [vmem:[%s186 + $0x2a8] sm:$0xff]
        %v306 = vld [vmem:[%s186 + $0x2b0] sm:$0xff]
        %v307 = vld [vmem:[%s186 + $0x2b8] sm:$0xff]
        %v308 = vld [vmem:[%s186 + $0x2c0] sm:$0xff]
        %v309 = vld [vmem:[%s186 + $0x2c8] sm:$0xff]
        %v310 = vld [vmem:[%s186 + $0x2d0] sm:$0xff]
        %v311 = vld [vmem:[%s186 + $0x2d8] sm:$0xff]
        %v312 = vld [vmem:[%s186 + $0x2e0] sm:$0xff]
        %v313 = vld [vmem:[%s186 + $0x2e8] sm:$0xff]
        %v314 = vld [vmem:[%s186 + $0x2f0] sm:$0xff]
        %v315 = vld [vmem:[%s186 + $0x2f8] sm:$0xff]
        %v316 = vld [vmem:[%s186 + $0x300] sm:$0xff]
        %v317 = vld [vmem:[%s186 + $0x308] sm:$0xff]
        %v318 = vld [vmem:[%s186 + $0x310] sm:$0xff]
        %v319 = vld [vmem:[%s186 + $0x318] sm:$0xff]
        %v320 = vld [vmem:[%s186 + $0x320] sm:$0xff]
        %v321 = vld [vmem:[%s186 + $0x328] sm:$0xff]
        %v322 = vld [vmem:[%s186 + $0x330] sm:$0xff]
        %v323 = vld [vmem:[%s186 + $0x338] sm:$0xff]
        %v324 = vld [vmem:[%s186 + $0x340] sm:$0xff]
        %v325 = vld [vmem:[%s186 + $0x348] sm:$0xff]
        %v326 = vld [vmem:[%s186 + $0x350] sm:$0xff]
        %v327 = vld [vmem:[%s186 + $0x358] sm:$0xff]
        %v328 = vld [vmem:[%s186 + $0x360] sm:$0xff]
        %v329 = vld [vmem:[%s186 + $0x368] sm:$0xff]
        %v330 = vld [vmem:[%s186 + $0x370] sm:$0xff]
        %v331 = vld [vmem:[%s186 + $0x378] sm:$0xff]
        %v332 = vld [vmem:[%s186 + $0x380] sm:$0xff]
        %v333 = vld [vmem:[%s186 + $0x388] sm:$0xff]
        %v334 = vld [vmem:[%s186 + $0x390] sm:$0xff]
        %v335 = vld [vmem:[%s186 + $0x398] sm:$0xff]
        %v336 = vld [vmem:[%s186 + $0x3a0] sm:$0xff]
        %v337 = vld [vmem:[%s186 + $0x3a8] sm:$0xff]
        %v338 = vld [vmem:[%s186 + $0x3b0] sm:$0xff]
        %v339 = vld [vmem:[%s186 + $0x3b8] sm:$0xff]
        %v340 = vld [vmem:[%s186 + $0x3c0] sm:$0xff]
        %v341 = vld [vmem:[%s186 + $0x3c8] sm:$0xff]
        %v342 = vld [vmem:[%s186 + $0x3d0] sm:$0xff]
        %v343 = vld [vmem:[%s186 + $0x3d8] sm:$0xff]
        %v344 = vld [vmem:[%s186 + $0x3e0] sm:$0xff]
        %v345 = vld [vmem:[%s186 + $0x3e8] sm:$0xff]
        %v346 = vld [vmem:[%s186 + $0x3f0] sm:$0xff]
        %v347 = vld [vmem:[%s186 + $0x3f8] sm:$0xff]
        %v348 = vld [vmem:[%s186 + $0x400] sm:$0xff]
        %v349 = vld [vmem:[%s186 + $0x408] sm:$0xff]
        %v350 = vld [vmem:[%s186 + $0x410] sm:$0xff]
        %v351 = vld [vmem:[%s186 + $0x418] sm:$0xff]
        %v352 = vld [vmem:[%s186 + $0x420] sm:$0xff]
        %v353 = vld [vmem:[%s186 + $0x428] sm:$0xff]
        %v354 = vld [vmem:[%s186 + $0x430] sm:$0xff]
        %v355 = vld [vmem:[%s186 + $0x438] sm:$0xff]
        %v356 = vld [vmem:[%s186 + $0x440] sm:$0xff]
        %v357 = vld [vmem:[%s186 + $0x448] sm:$0xff]
        %v358 = vld [vmem:[%s186 + $0x450] sm:$0xff]
        %v359 = vld [vmem:[%s186 + $0x458] sm:$0xff]
        %v360 = vld [vmem:[%s186 + $0x460] sm:$0xff]
        %v361 = vld [vmem:[%s186 + $0x468] sm:$0xff]
        %v362 = vld [vmem:[%s186 + $0x470] sm:$0xff]
        %v363 = vld [vmem:[%s186 + $0x478] sm:$0xff]
        %v364 = vld [vmem:[%s186 + $0x480] sm:$0xff]
        %v365 = vld [vmem:[%s186 + $0x488] sm:$0xff]
        %v366 = vld [vmem:[%s186 + $0x490] sm:$0xff]
        %v367 = vld [vmem:[%s186 + $0x498] sm:$0xff]
        %v368 = vld [vmem:[%s186 + $0x4a0] sm:$0xff]
        %v369 = vld [vmem:[%s186 + $0x4a8] sm:$0xff]
        %v370 = vld [vmem:[%s186 + $0x4b0] sm:$0xff]
        %v371 = vld [vmem:[%s186 + $0x4b8] sm:$0xff]
        %v372 = vld [vmem:[%s186 + $0x4c0] sm:$0xff]
        %v373 = vld [vmem:[%s186 + $0x4c8] sm:$0xff]
        %v374 = vld [vmem:[%s186 + $0x4d0] sm:$0xff]
        %v375 = vld [vmem:[%s186 + $0x4d8] sm:$0xff]
        %v376 = vld [vmem:[%s186 + $0x4e0] sm:$0xff]
        %v377 = vld [vmem:[%s186 + $0x4e8] sm:$0xff]
        %v378 = vld [vmem:[%s186 + $0x4f0] sm:$0xff]
        %v379 = vld [vmem:[%s186 + $0x4f8] sm:$0xff]
        %v380 = vld [vmem:[%s186 + $0x500] sm:$0xff]
        %v381 = vld [vmem:[%s186 + $0x508] sm:$0xff]
        %v382 = vld [vmem:[%s186 + $0x510] sm:$0xff]
        %v383 = vld [vmem:[%s186 + $0x518] sm:$0xff]
        %v384 = vld [vmem:[%s186 + $0x520] sm:$0xff]
        %v385 = vld [vmem:[%s186 + $0x528] sm:$0xff]
        %v386 = vld [vmem:[%s186 + $0x530] sm:$0xff]
        %v387 = vld [vmem:[%s186 + $0x538] sm:$0xff]
        %v388 = vld [vmem:[%s186 + $0x540] sm:$0xff]
        %v389 = vld [vmem:[%s186 + $0x548] sm:$0xff]
        %v390 = vld [vmem:[%s186 + $0x550] sm:$0xff]
        %v391 = vld [vmem:[%s186 + $0x558] sm:$0xff]
        %v392 = vld [vmem:[%s186 + $0x560] sm:$0xff]
        %v393 = vld [vmem:[%s186 + $0x568] sm:$0xff]
        %v394 = vld [vmem:[%s186 + $0x570] sm:$0xff]
        %v395 = vld [vmem:[%s186 + $0x578] sm:$0xff]
        %v396 = vld [vmem:[%s186 + $0x580] sm:$0xff]
        %v397 = vld [vmem:[%s186 + $0x588] sm:$0xff]
        %v398 = vld [vmem:[%s186 + $0x590] sm:$0xff]
        %v399 = vld [vmem:[%s186 + $0x598] sm:$0xff]
        %v400 = vld [vmem:[%s186 + $0x5a0] sm:$0xff]
        %v401 = vld [vmem:[%s186 + $0x5a8] sm:$0xff]
        %v402 = vld [vmem:[%s186 + $0x5b0] sm:$0xff]
        %v403 = vld [vmem:[%s186 + $0x5b8] sm:$0xff]
        %v404 = vld [vmem:[%s186 + $0x5c0] sm:$0xff]
        %v405 = vld [vmem:[%s186 + $0x5c8] sm:$0xff]
        %v406 = vld [vmem:[%s186 + $0x5d0] sm:$0xff]
        %v407 = vld [vmem:[%s186 + $0x5d8] sm:$0xff]
        %v408 = vld [vmem:[%s186 + $0x5e0] sm:$0xff]
        %v409 = vld [vmem:[%s186 + $0x5e8] sm:$0xff]
        %v410 = vld [vmem:[%s186 + $0x5f0] sm:$0xff]
        %v411 = vld [vmem:[%s186 + $0x5f8] sm:$0xff]
        %v412 = vld [vmem:[%s186 + $0x600] sm:$0xff]
        %v413 = vld [vmem:[%s186 + $0x608] sm:$0xff]
        %v414 = vld [vmem:[%s186 + $0x610] sm:$0xff]
        %v415 = vld [vmem:[%s186 + $0x618] sm:$0xff]
        %v416 = vld [vmem:[%s186 + $0x620] sm:$0xff]
        %v417 = vld [vmem:[%s186 + $0x628] sm:$0xff]
        %v418 = vld [vmem:[%s186 + $0x630] sm:$0xff]
        %v419 = vld [vmem:[%s186 + $0x638] sm:$0xff]
        %v420 = vld [vmem:[%s186 + $0x640] sm:$0xff]
        %v421 = vld [vmem:[%s186 + $0x648] sm:$0xff]
        %v422 = vld [vmem:[%s186 + $0x650] sm:$0xff]
        %v423 = vld [vmem:[%s186 + $0x658] sm:$0xff]
        %v424 = vld [vmem:[%s186 + $0x660] sm:$0xff]
        %v425 = vld [vmem:[%s186 + $0x668] sm:$0xff]
        %v426 = vld [vmem:[%s186 + $0x670] sm:$0xff]
        %v427 = vld [vmem:[%s186 + $0x678] sm:$0xff]
        %v428 = vld [vmem:[%s186 + $0x680] sm:$0xff]
        %v429 = vld [vmem:[%s186 + $0x688] sm:$0xff]
        %v430 = vld [vmem:[%s186 + $0x690] sm:$0xff]
        %v431 = vld [vmem:[%s186 + $0x698] sm:$0xff]
        %v432 = vld [vmem:[%s186 + $0x6a0] sm:$0xff]
        %v433 = vld [vmem:[%s186 + $0x6a8] sm:$0xff]
        %v434 = vld [vmem:[%s186 + $0x6b0] sm:$0xff]
        %v435 = vld [vmem:[%s186 + $0x6b8] sm:$0xff]
        %v436 = vld [vmem:[%s186 + $0x6c0] sm:$0xff]
        %v437 = vld [vmem:[%s186 + $0x6c8] sm:$0xff]
        %v438 = vld [vmem:[%s186 + $0x6d0] sm:$0xff]
        %v439 = vld [vmem:[%s186 + $0x6d8] sm:$0xff]
        %v440 = vld [vmem:[%s186 + $0x6e0] sm:$0xff]
        %v441 = vld [vmem:[%s186 + $0x6e8] sm:$0xff]
        %v442 = vld [vmem:[%s186 + $0x6f0] sm:$0xff]
        %v443 = vld [vmem:[%s186 + $0x6f8] sm:$0xff]
        %v444 = vld [vmem:[%s186 + $0x700] sm:$0xff]
        %v445 = vld [vmem:[%s186 + $0x708] sm:$0xff]
        %v446 = vld [vmem:[%s186 + $0x710] sm:$0xff]
        %v447 = vld [vmem:[%s186 + $0x718] sm:$0xff]
        %v448 = vld [vmem:[%s186 + $0x720] sm:$0xff]
        %v449 = vld [vmem:[%s186 + $0x728] sm:$0xff]
        %v450 = vld [vmem:[%s186 + $0x730] sm:$0xff]
        %v451 = vld [vmem:[%s186 + $0x738] sm:$0xff]
        %v452 = vld [vmem:[%s186 + $0x740] sm:$0xff]
        %v453 = vld [vmem:[%s186 + $0x748] sm:$0xff]
        %v454 = vld [vmem:[%s186 + $0x750] sm:$0xff]
        %v455 = vld [vmem:[%s186 + $0x758] sm:$0xff]
        %v456 = vld [vmem:[%s186 + $0x760] sm:$0xff]
        %v457 = vld [vmem:[%s186 + $0x768] sm:$0xff]
        %v458 = vld [vmem:[%s186 + $0x770] sm:$0xff]
        %v459 = vld [vmem:[%s186 + $0x778] sm:$0xff]
        %v460 = vld [vmem:[%s186 + $0x780] sm:$0xff]
        %v461 = vld [vmem:[%s186 + $0x788] sm:$0xff]
        %v462 = vld [vmem:[%s186 + $0x790] sm:$0xff]
        %v463 = vld [vmem:[%s186 + $0x798] sm:$0xff]
        %v464 = vld [vmem:[%s186 + $0x7a0] sm:$0xff]
        %v465 = vld [vmem:[%s186 + $0x7a8] sm:$0xff]
        %v466 = vld [vmem:[%s186 + $0x7b0] sm:$0xff]
        %v467 = vld [vmem:[%s186 + $0x7b8] sm:$0xff]
        %v468 = vld [vmem:[%s186 + $0x7c0] sm:$0xff]
        %v469 = vld [vmem:[%s186 + $0x7c8] sm:$0xff]
        %v470 = vld [vmem:[%s186 + $0x7d0] sm:$0xff]
        %v471 = vld [vmem:[%s186 + $0x7d8] sm:$0xff]
        %v472 = vld [vmem:[%s186 + $0x7e0] sm:$0xff]
        %v473 = vld [vmem:[%s186 + $0x7e8] sm:$0xff]
        %v474 = vld [vmem:[%s186 + $0x7f0] sm:$0xff]
        %v475 = vld [vmem:[%s186 + $0x7f8] sm:$0xff]
        %v476 = vld [vmem:[%s186 + $0x800] sm:$0xff]
        %v477 = vld [vmem:[%s186 + $0x808] sm:$0xff]
        %v478 = vld [vmem:[%s186 + $0x810] sm:$0xff]
        %v479 = vld [vmem:[%s186 + $0x818] sm:$0xff]
        %v480 = vld [vmem:[%s186 + $0x820] sm:$0xff]
        %v481 = vld [vmem:[%s186 + $0x828] sm:$0xff]
        %v482 = vld [vmem:[%s186 + $0x830] sm:$0xff]
        %v483 = vld [vmem:[%s186 + $0x838] sm:$0xff]
        %v484 = vld [vmem:[%s186 + $0x840] sm:$0xff]
        %v485 = vld [vmem:[%s186 + $0x848] sm:$0xff]
        %v486 = vld [vmem:[%s186 + $0x850] sm:$0xff]
        %v487 = vld [vmem:[%s186 + $0x858] sm:$0xff]
        %v488 = vld [vmem:[%s186 + $0x860] sm:$0xff]
        %v489 = vld [vmem:[%s186 + $0x868] sm:$0xff]
        %v490 = vld [vmem:[%s186 + $0x870] sm:$0xff]
        %v491 = vld [vmem:[%s186 + $0x878] sm:$0xff]
        %v492 = vld [vmem:[%s186 + $0x880] sm:$0xff]
        %v493 = vld [vmem:[%s186 + $0x888] sm:$0xff]
        %v494 = vld [vmem:[%s186 + $0x890] sm:$0xff]
        %v495 = vld [vmem:[%s186 + $0x898] sm:$0xff]
        %v496 = vld [vmem:[%s186 + $0x8a0] sm:$0xff]
        %v497 = vld [vmem:[%s186 + $0x8a8] sm:$0xff]
        %v498 = vld [vmem:[%s186 + $0x8b0] sm:$0xff]
        %v499 = vld [vmem:[%s186 + $0x8b8] sm:$0xff]
        %v500 = vld [vmem:[%s186 + $0x8c0] sm:$0xff]
        %v501 = vld [vmem:[%s186 + $0x8c8] sm:$0xff]
        %v502 = vld [vmem:[%s186 + $0x8d0] sm:$0xff]
        %v503 = vld [vmem:[%s186 + $0x8d8] sm:$0xff]
        %v504 = vld [vmem:[%s186 + $0x8e0] sm:$0xff]
        %v505 = vld [vmem:[%s186 + $0x8e8] sm:$0xff]
        %v506 = vld [vmem:[%s186 + $0x8f0] sm:$0xff]
        %v507 = vld [vmem:[%s186 + $0x8f8] sm:$0xff]
        %v508 = vld [vmem:[%s186 + $0x900] sm:$0xff]
        %v509 = vld [vmem:[%s186 + $0x908] sm:$0xff]
        %v510 = vld [vmem:[%s186 + $0x910] sm:$0xff]
        %v511 = vld [vmem:[%s186 + $0x918] sm:$0xff]
        %v512 = vld [vmem:[%s186 + $0x920] sm:$0xff]
        %v513 = vld [vmem:[%s186 + $0x928] sm:$0xff]
        %v514 = vld [vmem:[%s186 + $0x930] sm:$0xff]
        %v515 = vld [vmem:[%s186 + $0x938] sm:$0xff]
        %v516 = vld [vmem:[%s186 + $0x940] sm:$0xff]
        %v517 = vld [vmem:[%s186 + $0x948] sm:$0xff]
        %v518 = vld [vmem:[%s186 + $0x950] sm:$0xff]
        %v519 = vld [vmem:[%s186 + $0x958] sm:$0xff]
        %v520 = vld [vmem:[%s186 + $0x960] sm:$0xff]
        %v521 = vld [vmem:[%s186 + $0x968] sm:$0xff]
        %v522 = vld [vmem:[%s186 + $0x970] sm:$0xff]
        %v523 = vld [vmem:[%s186 + $0x978] sm:$0xff]
        %v524 = vld [vmem:[%s186 + $0x980] sm:$0xff]
        %v525 = vld [vmem:[%s186 + $0x988] sm:$0xff]
        %v526 = vld [vmem:[%s186 + $0x990] sm:$0xff]
        %v527 = vld [vmem:[%s186 + $0x998] sm:$0xff]
        %v528 = vld [vmem:[%s186 + $0x9a0] sm:$0xff]
        %v529 = vld [vmem:[%s186 + $0x9a8] sm:$0xff]
        %v530 = vld [vmem:[%s186 + $0x9b0] sm:$0xff]
        %v531 = vld [vmem:[%s186 + $0x9b8] sm:$0xff]
        %v532 = vld [vmem:[%s186 + $0x9c0] sm:$0xff]
        %v533 = vld [vmem:[%s186 + $0x9c8] sm:$0xff]
        %v534 = vld [vmem:[%s186 + $0x9d0] sm:$0xff]
        %v535 = vld [vmem:[%s186 + $0x9d8] sm:$0xff]
        %v536 = vld [vmem:[%s186 + $0x9e0] sm:$0xff]
        %v537 = vld [vmem:[%s186 + $0x9e8] sm:$0xff]
        %v538 = vld [vmem:[%s186 + $0x9f0] sm:$0xff]
        %v539 = vld [vmem:[%s186 + $0x9f8] sm:$0xff]
        %v540 = vld [vmem:[%s186 + $0xa00] sm:$0xff]
        %v541 = vld [vmem:[%s186 + $0xa08] sm:$0xff]
        %v542 = vld [vmem:[%s186 + $0xa10] sm:$0xff]
        %v543 = vld [vmem:[%s186 + $0xa18] sm:$0xff]
        %v544 = vld [vmem:[%s186 + $0xa20] sm:$0xff]
        %v545 = vld [vmem:[%s186 + $0xa28] sm:$0xff]
        %v546 = vld [vmem:[%s186 + $0xa30] sm:$0xff]
        %v547 = vld [vmem:[%s186 + $0xa38] sm:$0xff]
        %v548 = vld [vmem:[%s186 + $0xa40] sm:$0xff]
        %v549 = vld [vmem:[%s186 + $0xa48] sm:$0xff]
        %v550 = vld [vmem:[%s186 + $0xa50] sm:$0xff]
        %v551 = vld [vmem:[%s186 + $0xa58] sm:$0xff]
        %v552 = vld [vmem:[%s186 + $0xa60] sm:$0xff]
        %v553 = vld [vmem:[%s186 + $0xa68] sm:$0xff]
        %v554 = vld [vmem:[%s186 + $0xa70] sm:$0xff]
        %v555 = vld [vmem:[%s186 + $0xa78] sm:$0xff]
        %v556 = vld [vmem:[%s186 + $0xa80] sm:$0xff]
        %v557 = vld [vmem:[%s186 + $0xa88] sm:$0xff]
        %v558 = vld [vmem:[%s186 + $0xa90] sm:$0xff]
        %v559 = vld [vmem:[%s186 + $0xa98] sm:$0xff]
        %v560 = vld [vmem:[%s186 + $0xaa0] sm:$0xff]
        %v561 = vld [vmem:[%s186 + $0xaa8] sm:$0xff]
        %v562 = vld [vmem:[%s186 + $0xab0] sm:$0xff]
        %v563 = vld [vmem:[%s186 + $0xab8] sm:$0xff]
        %v564 = vld [vmem:[%s186 + $0xac0] sm:$0xff]
        %v565 = vld [vmem:[%s186 + $0xac8] sm:$0xff]
        %v566 = vld [vmem:[%s186 + $0xad0] sm:$0xff]
        %v567 = vld [vmem:[%s186 + $0xad8] sm:$0xff]
        %v568 = vld [vmem:[%s186 + $0xae0] sm:$0xff]
        %v569 = vld [vmem:[%s186 + $0xae8] sm:$0xff]
        %v570 = vld [vmem:[%s186 + $0xaf0] sm:$0xff]
        %v571 = vld [vmem:[%s186 + $0xaf8] sm:$0xff]
        %v572 = vld [vmem:[%s186 + $0xb00] sm:$0xff]
        %v573 = vld [vmem:[%s186 + $0xb08] sm:$0xff]
        %v574 = vld [vmem:[%s186 + $0xb10] sm:$0xff]
        %v575 = vld [vmem:[%s186 + $0xb18] sm:$0xff]
        %v576 = vld [vmem:[%s186 + $0xb20] sm:$0xff]
        %v577 = vld [vmem:[%s186 + $0xb28] sm:$0xff]
        %v578 = vld [vmem:[%s186 + $0xb30] sm:$0xff]
        %v579 = vld [vmem:[%s186 + $0xb38] sm:$0xff]
        %v580 = vld [vmem:[%s186 + $0xb40] sm:$0xff]
        %v581 = vld [vmem:[%s186 + $0xb48] sm:$0xff]
        %v582 = vld [vmem:[%s186 + $0xb50] sm:$0xff]
        %v583 = vld [vmem:[%s186 + $0xb58] sm:$0xff]
        %v584 = vld [vmem:[%s186 + $0xb60] sm:$0xff]
        %v585 = vld [vmem:[%s186 + $0xb68] sm:$0xff]
        %v586 = vld [vmem:[%s186 + $0xb70] sm:$0xff]
        %v587 = vld [vmem:[%s186 + $0xb78] sm:$0xff]
        %v588 = vld [vmem:[%s186 + $0xb80] sm:$0xff]
        %v589 = vld [vmem:[%s186 + $0xb88] sm:$0xff]
        %v590 = vld [vmem:[%s186 + $0xb90] sm:$0xff]
        %v591 = vld [vmem:[%s186 + $0xb98] sm:$0xff]
        %v592 = vld [vmem:[%s186 + $0xba0] sm:$0xff]
        %v593 = vld [vmem:[%s186 + $0xba8] sm:$0xff]
        %v594 = vld [vmem:[%s186 + $0xbb0] sm:$0xff]
        %v595 = vld [vmem:[%s186 + $0xbb8] sm:$0xff]
        %v596 = vld [vmem:[%s186 + $0xbc0] sm:$0xff]
        %v597 = vld [vmem:[%s186 + $0xbc8] sm:$0xff]
        %v598 = vld [vmem:[%s186 + $0xbd0] sm:$0xff]
        %v599 = vld [vmem:[%s186 + $0xbd8] sm:$0xff]
        %v600 = vld [vmem:[%s186 + $0xbe0] sm:$0xff]
        %v601 = vld [vmem:[%s186 + $0xbe8] sm:$0xff]
        %v602 = vld [vmem:[%s186 + $0xbf0] sm:$0xff]
        %v603 = vld [vmem:[%s186 + $0xbf8] sm:$0xff]
        %v604 = vld [vmem:[%s186 + $0xc00] sm:$0xff]
        %v605 = vld [vmem:[%s186 + $0xc08] sm:$0xff]
        %v606 = vld [vmem:[%s186 + $0xc10] sm:$0xff]
        %v607 = vld [vmem:[%s186 + $0xc18] sm:$0xff]
        %v608 = vld [vmem:[%s186 + $0xc20] sm:$0xff]
        %v609 = vld [vmem:[%s186 + $0xc28] sm:$0xff]
        %v610 = vld [vmem:[%s186 + $0xc30] sm:$0xff]
        %v611 = vld [vmem:[%s186 + $0xc38] sm:$0xff]
        %v612 = vld [vmem:[%s186 + $0xc40] sm:$0xff]
        %v613 = vld [vmem:[%s186 + $0xc48] sm:$0xff]
        %v614 = vld [vmem:[%s186 + $0xc50] sm:$0xff]
        %v615 = vld [vmem:[%s186 + $0xc58] sm:$0xff]
        %v616 = vld [vmem:[%s186 + $0xc60] sm:$0xff]
        %v617 = vld [vmem:[%s186 + $0xc68] sm:$0xff]
        %v618 = vld [vmem:[%s186 + $0xc70] sm:$0xff]
        %v619 = vld [vmem:[%s186 + $0xc78] sm:$0xff]
        %v620 = vld [vmem:[%s186 + $0xc80] sm:$0xff]
        %v621 = vld [vmem:[%s186 + $0xc88] sm:$0xff]
        %v622 = vld [vmem:[%s186 + $0xc90] sm:$0xff]
        %v623 = vld [vmem:[%s186 + $0xc98] sm:$0xff]
        %v624 = vld [vmem:[%s186 + $0xca0] sm:$0xff]
        %v625 = vld [vmem:[%s186 + $0xca8] sm:$0xff]
        %v626 = vld [vmem:[%s186 + $0xcb0] sm:$0xff]
        %v627 = vld [vmem:[%s186 + $0xcb8] sm:$0xff]
        %v628 = vld [vmem:[%s186 + $0xcc0] sm:$0xff]
        %v629 = vld [vmem:[%s186 + $0xcc8] sm:$0xff]
        %v630 = vld [vmem:[%s186 + $0xcd0] sm:$0xff]
        %v631 = vld [vmem:[%s186 + $0xcd8] sm:$0xff]
        %v632 = vld [vmem:[%s186 + $0xce0] sm:$0xff]
        %v633 = vld [vmem:[%s186 + $0xce8] sm:$0xff]
        %v634 = vld [vmem:[%s186 + $0xcf0] sm:$0xff]
        %v635 = vld [vmem:[%s186 + $0xcf8] sm:$0xff]
        %v636 = vld [vmem:[%s186 + $0xd00] sm:$0xff]
        %v637 = vld [vmem:[%s186 + $0xd08] sm:$0xff]
        %v638 = vld [vmem:[%s186 + $0xd10] sm:$0xff]
        %v639 = vld [vmem:[%s186 + $0xd18] sm:$0xff]
        %v640 = vld [vmem:[%s186 + $0xd20] sm:$0xff]
        %v641 = vld [vmem:[%s186 + $0xd28] sm:$0xff]
        %v642 = vld [vmem:[%s186 + $0xd30] sm:$0xff]
        %v643 = vld [vmem:[%s186 + $0xd38] sm:$0xff]
        %v644 = vld [vmem:[%s186 + $0xd40] sm:$0xff]
        %v645 = vld [vmem:[%s186 + $0xd48] sm:$0xff]
        %v646 = vld [vmem:[%s186 + $0xd50] sm:$0xff]
        %v647 = vld [vmem:[%s186 + $0xd58] sm:$0xff]
        %v648 = vld [vmem:[%s186 + $0xd60] sm:$0xff]
        %v649 = vld [vmem:[%s186 + $0xd68] sm:$0xff]
        %v650 = vld [vmem:[%s186 + $0xd70] sm:$0xff]
        %v651 = vld [vmem:[%s186 + $0xd78] sm:$0xff]
        %v652 = vld [vmem:[%s186 + $0xd80] sm:$0xff]
        %v653 = vld [vmem:[%s186 + $0xd88] sm:$0xff]
        %v654 = vld [vmem:[%s186 + $0xd90] sm:$0xff]
        %v655 = vld [vmem:[%s186 + $0xd98] sm:$0xff]
        %v656 = vld [vmem:[%s186 + $0xda0] sm:$0xff]
        %v657 = vld [vmem:[%s186 + $0xda8] sm:$0xff]
        %v658 = vld [vmem:[%s186 + $0xdb0] sm:$0xff]
        %v659 = vld [vmem:[%s186 + $0xdb8] sm:$0xff]
        %v660 = vld [vmem:[%s186 + $0xdc0] sm:$0xff]
        %v661 = vld [vmem:[%s186 + $0xdc8] sm:$0xff]
        %v662 = vld [vmem:[%s186 + $0xdd0] sm:$0xff]
        %v663 = vld [vmem:[%s186 + $0xdd8] sm:$0xff]
        %v664 = vld [vmem:[%s186 + $0xde0] sm:$0xff]
        %v665 = vld [vmem:[%s186 + $0xde8] sm:$0xff]
        %v666 = vld [vmem:[%s186 + $0xdf0] sm:$0xff]
        %v667 = vld [vmem:[%s186 + $0xdf8] sm:$0xff]
        %v668 = vld [vmem:[%s186 + $0xe00] sm:$0xff]
        %v669 = vld [vmem:[%s186 + $0xe08] sm:$0xff]
        %v670 = vld [vmem:[%s186 + $0xe10] sm:$0xff]
        %v671 = vld [vmem:[%s186 + $0xe18] sm:$0xff]
        %v672 = vld [vmem:[%s186 + $0xe20] sm:$0xff]
        %v673 = vld [vmem:[%s186 + $0xe28] sm:$0xff]
        %v674 = vld [vmem:[%s186 + $0xe30] sm:$0xff]
        %v675 = vld [vmem:[%s186 + $0xe38] sm:$0xff]
        %v676 = vld [vmem:[%s186 + $0xe40] sm:$0xff]
        %v677 = vld [vmem:[%s186 + $0xe48] sm:$0xff]
        %v678 = vld [vmem:[%s186 + $0xe50] sm:$0xff]
        %v679 = vld [vmem:[%s186 + $0xe58] sm:$0xff]
        %v680 = vld [vmem:[%s186 + $0xe60] sm:$0xff]
        %v681 = vld [vmem:[%s186 + $0xe68] sm:$0xff]
        %v682 = vld [vmem:[%s186 + $0xe70] sm:$0xff]
        %v683 = vld [vmem:[%s186 + $0xe78] sm:$0xff]
        %v684 = vld [vmem:[%s186 + $0xe80] sm:$0xff]
        %v685 = vld [vmem:[%s186 + $0xe88] sm:$0xff]
        %v686 = vld [vmem:[%s186 + $0xe90] sm:$0xff]
        %v687 = vld [vmem:[%s186 + $0xe98] sm:$0xff]
        %v688 = vld [vmem:[%s186 + $0xea0] sm:$0xff]
        %v689 = vld [vmem:[%s186 + $0xea8] sm:$0xff]
        %v690 = vld [vmem:[%s186 + $0xeb0] sm:$0xff]
        %v691 = vld [vmem:[%s186 + $0xeb8] sm:$0xff]
        %v692 = vld [vmem:[%s186 + $0xec0] sm:$0xff]
        %v693 = vld [vmem:[%s186 + $0xec8] sm:$0xff]
        %v694 = vld [vmem:[%s186 + $0xed0] sm:$0xff]
        %v695 = vld [vmem:[%s186 + $0xed8] sm:$0xff]
        %v696 = vld [vmem:[%s186 + $0xee0] sm:$0xff]
        %v697 = vld [vmem:[%s186 + $0xee8] sm:$0xff]
        %v698 = vld [vmem:[%s186 + $0xef0] sm:$0xff]
        %v699 = vld [vmem:[%s186 + $0xef8] sm:$0xff]
        %v700 = vld [vmem:[%s186 + $0xf00] sm:$0xff]
        %v701 = vld [vmem:[%s186 + $0xf08] sm:$0xff]
        %v702 = vld [vmem:[%s186 + $0xf10] sm:$0xff]
        %v703 = vld [vmem:[%s186 + $0xf18] sm:$0xff]
        %v704 = vld [vmem:[%s186 + $0xf20] sm:$0xff]
        %v705 = vld [vmem:[%s186 + $0xf28] sm:$0xff]
        %v706 = vld [vmem:[%s186 + $0xf30] sm:$0xff]
        %v707 = vld [vmem:[%s186 + $0xf38] sm:$0xff]
        %v708 = vld [vmem:[%s186 + $0xf40] sm:$0xff]
        %v709 = vld [vmem:[%s186 + $0xf48] sm:$0xff]
        %v710 = vld [vmem:[%s186 + $0xf50] sm:$0xff]
        %v711 = vld [vmem:[%s186 + $0xf58] sm:$0xff]
        %v712 = vld [vmem:[%s186 + $0xf60] sm:$0xff]
        %v713 = vld [vmem:[%s186 + $0xf68] sm:$0xff]
        %v714 = vld [vmem:[%s186 + $0xf70] sm:$0xff]
        %v715 = vld [vmem:[%s186 + $0xf78] sm:$0xff]
        %v716 = vld [vmem:[%s186 + $0xf80] sm:$0xff]
        %v717 = vld [vmem:[%s186 + $0xf88] sm:$0xff]
        %v718 = vld [vmem:[%s186 + $0xf90] sm:$0xff]
        %v719 = vld [vmem:[%s186 + $0xf98] sm:$0xff]
        %v720 = vld [vmem:[%s186 + $0xfa0] sm:$0xff]
        %v721 = vld [vmem:[%s186 + $0xfa8] sm:$0xff]
        %v722 = vld [vmem:[%s186 + $0xfb0] sm:$0xff]
        %v723 = vld [vmem:[%s186 + $0xfb8] sm:$0xff]
        %v724 = vld [vmem:[%s186 + $0xfc0] sm:$0xff]
        %v725 = vld [vmem:[%s186 + $0xfc8] sm:$0xff]
        %v726 = vld [vmem:[%s186 + $0xfd0] sm:$0xff]
        %v727 = vld [vmem:[%s186 + $0xfd8] sm:$0xff]
        %v728 = vld [vmem:[%s186 + $0xfe0] sm:$0xff]
        %v729 = vld [vmem:[%s186 + $0xfe8] sm:$0xff]
        %v730 = vld [vmem:[%s186 + $0xff0] sm:$0xff]
        %v731 = vld [vmem:[%s186 + $0xff8] sm:$0xff]
        %v732 = vld [vmem:[%s186 + $0x1000] sm:$0xff]
        %v733 = vld [vmem:[%s186 + $0x1008] sm:$0xff]
        %v734 = vld [vmem:[%s186 + $0x1010] sm:$0xff]
        %v735 = vld [vmem:[%s186 + $0x1018] sm:$0xff]
        %v736 = vld [vmem:[%s186 + $0x1020] sm:$0xff]
        %v737 = vld [vmem:[%s186 + $0x1028] sm:$0xff]
        %v738 = vld [vmem:[%s186 + $0x1030] sm:$0xff]
        %v739 = vld [vmem:[%s186 + $0x1038] sm:$0xff]
        %v740 = vld [vmem:[%s186 + $0x1040] sm:$0xff]
        %v741 = vld [vmem:[%s186 + $0x1048] sm:$0xff]
        %v742 = vld [vmem:[%s186 + $0x1050] sm:$0xff]
        %v743 = vld [vmem:[%s186 + $0x1058] sm:$0xff]
        %v744 = vld [vmem:[%s186 + $0x1060] sm:$0xff]
        %v745 = vld [vmem:[%s186 + $0x1068] sm:$0xff]
        %v746 = vld [vmem:[%s186 + $0x1070] sm:$0xff]
        %v747 = vld [vmem:[%s186 + $0x1078] sm:$0xff]
        %v748 = vld [vmem:[%s186 + $0x1080] sm:$0xff]
        %v749 = vld [vmem:[%s186 + $0x1088] sm:$0xff]
        %v750 = vld [vmem:[%s186 + $0x1090] sm:$0xff]
        %v751 = vld [vmem:[%s186 + $0x1098] sm:$0xff]
        %v752 = vld [vmem:[%s186 + $0x10a0] sm:$0xff]
        %v753 = vld [vmem:[%s186 + $0x10a8] sm:$0xff]
        %v754 = vld [vmem:[%s186 + $0x10b0] sm:$0xff]
        %v755 = vld [vmem:[%s186 + $0x10b8] sm:$0xff]
        %v756 = vld [vmem:[%s186 + $0x10c0] sm:$0xff]
        %v757 = vld [vmem:[%s186 + $0x10c8] sm:$0xff]
        %v758 = vld [vmem:[%s186 + $0x10d0] sm:$0xff]
        %v759 = vld [vmem:[%s186 + $0x10d8] sm:$0xff]
        %v760 = vld [vmem:[%s186 + $0x10e0] sm:$0xff]
        %v761 = vld [vmem:[%s186 + $0x10e8] sm:$0xff]
        %v762 = vld [vmem:[%s186 + $0x10f0] sm:$0xff]
        %v763 = vld [vmem:[%s186 + $0x10f8] sm:$0xff]
        %v764 = vld [vmem:[%s186 + $0x1100] sm:$0xff]
        %v765 = vld [vmem:[%s186 + $0x1108] sm:$0xff]
        %v766 = vld [vmem:[%s186 + $0x1110] sm:$0xff]
        %v767 = vld [vmem:[%s186 + $0x1118] sm:$0xff]
        %v768 = vld [vmem:[%s186 + $0x1120] sm:$0xff]
        %v769 = vld [vmem:[%s186 + $0x1128] sm:$0xff]
        %v770 = vld [vmem:[%s186 + $0x1130] sm:$0xff]
        %v771 = vld [vmem:[%s186 + $0x1138] sm:$0xff]
        %v772 = vld [vmem:[%s186 + $0x1140] sm:$0xff]
        %v773 = vld [vmem:[%s186 + $0x1148] sm:$0xff]
        %v774 = vld [vmem:[%s186 + $0x1150] sm:$0xff]
        %v775 = vld [vmem:[%s186 + $0x1158] sm:$0xff]
        %v776 = vld [vmem:[%s186 + $0x1160] sm:$0xff]
        %v777 = vld [vmem:[%s186 + $0x1168] sm:$0xff]
        %v778 = vld [vmem:[%s186 + $0x1170] sm:$0xff]
        %v779 = vld [vmem:[%s186 + $0x1178] sm:$0xff]
        %v780 = vld [vmem:[%s186 + $0x1180] sm:$0xff]
        %v781 = vld [vmem:[%s186 + $0x1188] sm:$0xff]
        %v782 = vld [vmem:[%s186 + $0x1190] sm:$0xff]
        %v783 = vld [vmem:[%s186 + $0x1198] sm:$0xff]
        %v784 = vld [vmem:[%s186 + $0x11a0] sm:$0xff]
        %v785 = vld [vmem:[%s186 + $0x11a8] sm:$0xff]
        %v786 = vld [vmem:[%s186 + $0x11b0] sm:$0xff]
        %v787 = vld [vmem:[%s186 + $0x11b8] sm:$0xff]
        %v788 = vld [vmem:[%s186 + $0x11c0] sm:$0xff]
        %v789 = vld [vmem:[%s186 + $0x11c8] sm:$0xff]
        %v790 = vld [vmem:[%s186 + $0x11d0] sm:$0xff]
        %v791 = vld [vmem:[%s186 + $0x11d8] sm:$0xff]
        %v792 = vld [vmem:[%s186 + $0x11e0] sm:$0xff]
        %v793 = vld [vmem:[%s186 + $0x11e8] sm:$0xff]
        %v794 = vld [vmem:[%s186 + $0x11f0] sm:$0xff]
        %v795 = vld [vmem:[%s186 + $0x11f8] sm:$0xff]
        %v796 = vld [vmem:[%s186 + $0x1200] sm:$0xff]
        %v797 = vld [vmem:[%s186 + $0x1208] sm:$0xff]
        %v798 = vld [vmem:[%s186 + $0x1210] sm:$0xff]
        %v799 = vld [vmem:[%s186 + $0x1218] sm:$0xff]
        %v800 = vld [vmem:[%s186 + $0x1220] sm:$0xff]
        %v801 = vld [vmem:[%s186 + $0x1228] sm:$0xff]
        %v802 = vld [vmem:[%s186 + $0x1230] sm:$0xff]
        %v803 = vld [vmem:[%s186 + $0x1238] sm:$0xff]
        %v804 = vld [vmem:[%s186 + $0x1240] sm:$0xff]
        %v805 = vld [vmem:[%s186 + $0x1248] sm:$0xff]
        %v806 = vld [vmem:[%s186 + $0x1250] sm:$0xff]
        %v807 = vld [vmem:[%s186 + $0x1258] sm:$0xff]
        %v808 = vld [vmem:[%s186 + $0x1260] sm:$0xff]
        %v809 = vld [vmem:[%s186 + $0x1268] sm:$0xff]
        %v810 = vld [vmem:[%s186 + $0x1270] sm:$0xff]
        %v811 = vld [vmem:[%s186 + $0x1278] sm:$0xff]
        %v812 = vld [vmem:[%s186 + $0x1280] sm:$0xff]
        %v813 = vld [vmem:[%s186 + $0x1288] sm:$0xff]
        %v814 = vld [vmem:[%s186 + $0x1290] sm:$0xff]
        %v815 = vld [vmem:[%s186 + $0x1298] sm:$0xff]
        %v816 = vld [vmem:[%s186 + $0x12a0] sm:$0xff]
        %v817 = vld [vmem:[%s186 + $0x12a8] sm:$0xff]
        %v818 = vld [vmem:[%s186 + $0x12b0] sm:$0xff]
        %v819 = vld [vmem:[%s186 + $0x12b8] sm:$0xff]
        %v820 = vld [vmem:[%s186 + $0x12c0] sm:$0xff]
        %v821 = vld [vmem:[%s186 + $0x12c8] sm:$0xff]
        %v822 = vld [vmem:[%s186 + $0x12d0] sm:$0xff]
        %v823 = vld [vmem:[%s186 + $0x12d8] sm:$0xff]
        %v824 = vld [vmem:[%s186 + $0x12e0] sm:$0xff]
        %v825 = vld [vmem:[%s186 + $0x12e8] sm:$0xff]
        %v826 = vld [vmem:[%s186 + $0x12f0] sm:$0xff]
        %v827 = vld [vmem:[%s186 + $0x12f8] sm:$0xff]
        %v828 = vld [vmem:[%s186 + $0x1300] sm:$0xff]
        %v829 = vld [vmem:[%s186 + $0x1308] sm:$0xff]
        %v830 = vld [vmem:[%s186 + $0x1310] sm:$0xff]
        %v831 = vld [vmem:[%s186 + $0x1318] sm:$0xff]
        %v832 = vld [vmem:[%s186 + $0x1320] sm:$0xff]
        %v833 = vld [vmem:[%s186 + $0x1328] sm:$0xff]
        %v834 = vld [vmem:[%s186 + $0x1330] sm:$0xff]
        %v835 = vld [vmem:[%s186 + $0x1338] sm:$0xff]
        %v836 = vld [vmem:[%s186 + $0x1340] sm:$0xff]
        %v837 = vld [vmem:[%s186 + $0x1348] sm:$0xff]
        %v838 = vld [vmem:[%s186 + $0x1350] sm:$0xff]
        %v839 = vld [vmem:[%s186 + $0x1358] sm:$0xff]
        %v840 = vld [vmem:[%s186 + $0x1360] sm:$0xff]
        %v841 = vld [vmem:[%s186 + $0x1368] sm:$0xff]
        %v842 = vld [vmem:[%s186 + $0x1370] sm:$0xff]
        %v843 = vld [vmem:[%s186 + $0x1378] sm:$0xff]
        %v844 = vld [vmem:[%s186 + $0x1380] sm:$0xff]
        %v845 = vld [vmem:[%s186 + $0x1388] sm:$0xff]
        %v846 = vld [vmem:[%s186 + $0x1390] sm:$0xff]
        %v847 = vld [vmem:[%s186 + $0x1398] sm:$0xff]
        %v848 = vld [vmem:[%s186 + $0x13a0] sm:$0xff]
        %v849 = vld [vmem:[%s186 + $0x13a8] sm:$0xff]
        %v850 = vld [vmem:[%s186 + $0x13b0] sm:$0xff]
        %v851 = vld [vmem:[%s186 + $0x13b8] sm:$0xff]
        %v852 = vld [vmem:[%s186 + $0x13c0] sm:$0xff]
        %v853 = vld [vmem:[%s186 + $0x13c8] sm:$0xff]
        %v854 = vld [vmem:[%s186 + $0x13d0] sm:$0xff]
        %v855 = vld [vmem:[%s186 + $0x13d8] sm:$0xff]
        %v856 = vld [vmem:[%s186 + $0x13e0] sm:$0xff]
        %v857 = vld [vmem:[%s186 + $0x13e8] sm:$0xff]
        %v858 = vld [vmem:[%s186 + $0x13f0] sm:$0xff]
        %v859 = vld [vmem:[%s186 + $0x13f8] sm:$0xff]
        %v860 = vld [vmem:[%s186 + $0x1400] sm:$0xff]
        %v861 = vld [vmem:[%s186 + $0x1408] sm:$0xff]
        %v862 = vld [vmem:[%s186 + $0x1410] sm:$0xff]
        %v863 = vld [vmem:[%s186 + $0x1418] sm:$0xff]
        %v864 = vld [vmem:[%s186 + $0x1420] sm:$0xff]
        %v865 = vld [vmem:[%s186 + $0x1428] sm:$0xff]
        %v866 = vld [vmem:[%s186 + $0x1430] sm:$0xff]
        %v867 = vld [vmem:[%s186 + $0x1438] sm:$0xff]
        %v868 = vld [vmem:[%s186 + $0x1440] sm:$0xff]
        %v869 = vld [vmem:[%s186 + $0x1448] sm:$0xff]
        %v870 = vld [vmem:[%s186 + $0x1450] sm:$0xff]
        %v871 = vld [vmem:[%s186 + $0x1458] sm:$0xff]
        %v872 = vld [vmem:[%s186 + $0x1460] sm:$0xff]
        %v873 = vld [vmem:[%s186 + $0x1468] sm:$0xff]
        %v874 = vld [vmem:[%s186 + $0x1470] sm:$0xff]
        %v875 = vld [vmem:[%s186 + $0x1478] sm:$0xff]
        %v876 = vld [vmem:[%s186 + $0x1480] sm:$0xff]
        %v877 = vld [vmem:[%s186 + $0x1488] sm:$0xff]
        %v878 = vld [vmem:[%s186 + $0x1490] sm:$0xff]
        %v879 = vld [vmem:[%s186 + $0x1498] sm:$0xff]
        %v880 = vld [vmem:[%s186 + $0x14a0] sm:$0xff]
        %v881 = vld [vmem:[%s186 + $0x14a8] sm:$0xff]
        %v882 = vld [vmem:[%s186 + $0x14b0] sm:$0xff]
        %v883 = vld [vmem:[%s186 + $0x14b8] sm:$0xff]
        %v884 = vld [vmem:[%s186 + $0x14c0] sm:$0xff]
        %v885 = vld [vmem:[%s186 + $0x14c8] sm:$0xff]
        %v886 = vld [vmem:[%s186 + $0x14d0] sm:$0xff]
        %v887 = vld [vmem:[%s186 + $0x14d8] sm:$0xff]
        %v888 = vld [vmem:[%s186 + $0x14e0] sm:$0xff]
        %v889 = vld [vmem:[%s186 + $0x14e8] sm:$0xff]
        %v890 = vld [vmem:[%s186 + $0x14f0] sm:$0xff]
        %v891 = vld [vmem:[%s186 + $0x14f8] sm:$0xff]
        %v892 = vld [vmem:[%s186 + $0x1500] sm:$0xff]
        %v893 = vld [vmem:[%s186 + $0x1508] sm:$0xff]
        %v894 = vld [vmem:[%s186 + $0x1510] sm:$0xff]
        %v895 = vld [vmem:[%s186 + $0x1518] sm:$0xff]
        %v896 = vld [vmem:[%s186 + $0x1520] sm:$0xff]
        %v897 = vld [vmem:[%s186 + $0x1528] sm:$0xff]
        %v898 = vld [vmem:[%s186 + $0x1530] sm:$0xff]
        %v899 = vld [vmem:[%s186 + $0x1538] sm:$0xff]
        %v900 = vld [vmem:[%s186 + $0x1540] sm:$0xff]
        %v901 = vld [vmem:[%s186 + $0x1548] sm:$0xff]
        %v902 = vld [vmem:[%s186 + $0x1550] sm:$0xff]
        %v903 = vld [vmem:[%s186 + $0x1558] sm:$0xff]
        %v904 = vld [vmem:[%s186 + $0x1560] sm:$0xff]
        %v905 = vld [vmem:[%s186 + $0x1568] sm:$0xff]
        %v906 = vld [vmem:[%s186 + $0x1570] sm:$0xff]
        %v907 = vld [vmem:[%s186 + $0x1578] sm:$0xff]
        %v908 = vld [vmem:[%s186 + $0x1580] sm:$0xff]
        %v909 = vld [vmem:[%s186 + $0x1588] sm:$0xff]
        %v910 = vld [vmem:[%s186 + $0x1590] sm:$0xff]
        %v911 = vld [vmem:[%s186 + $0x1598] sm:$0xff]
        %v912 = vld [vmem:[%s186 + $0x15a0] sm:$0xff]
        %v913 = vld [vmem:[%s186 + $0x15a8] sm:$0xff]
        %v914 = vld [vmem:[%s186 + $0x15b0] sm:$0xff]
        %v915 = vld [vmem:[%s186 + $0x15b8] sm:$0xff]
        %v916 = vld [vmem:[%s186 + $0x15c0] sm:$0xff]
        %v917 = vld [vmem:[%s186 + $0x15c8] sm:$0xff]
        %v918 = vld [vmem:[%s186 + $0x15d0] sm:$0xff]
        %v919 = vld [vmem:[%s186 + $0x15d8] sm:$0xff]
        %v920 = vld [vmem:[%s186 + $0x15e0] sm:$0xff]
        %v921 = vld [vmem:[%s186 + $0x15e8] sm:$0xff]
        %v922 = vld [vmem:[%s186 + $0x15f0] sm:$0xff]
        %v923 = vld [vmem:[%s186 + $0x15f8] sm:$0xff]
        %v924 = vld [vmem:[%s186 + $0x1600] sm:$0xff]
        %v925 = vld [vmem:[%s186 + $0x1608] sm:$0xff]
        %v926 = vld [vmem:[%s186 + $0x1610] sm:$0xff]
        %v927 = vld [vmem:[%s186 + $0x1618] sm:$0xff]
        %v928 = vld [vmem:[%s186 + $0x1620] sm:$0xff]
        %v929 = vld [vmem:[%s186 + $0x1628] sm:$0xff]
        %v930 = vld [vmem:[%s186 + $0x1630] sm:$0xff]
        %v931 = vld [vmem:[%s186 + $0x1638] sm:$0xff]
        %v932 = vld [vmem:[%s186 + $0x1640] sm:$0xff]
        %v933 = vld [vmem:[%s186 + $0x1648] sm:$0xff]
        %v934 = vld [vmem:[%s186 + $0x1650] sm:$0xff]
        %v935 = vld [vmem:[%s186 + $0x1658] sm:$0xff]
        %v936 = vld [vmem:[%s186 + $0x1660] sm:$0xff]
        %v937 = vld [vmem:[%s186 + $0x1668] sm:$0xff]
        %v938 = vld [vmem:[%s186 + $0x1670] sm:$0xff]
        %v939 = vld [vmem:[%s186 + $0x1678] sm:$0xff]
        %v940 = vld [vmem:[%s186 + $0x1680] sm:$0xff]
        %v941 = vld [vmem:[%s186 + $0x1688] sm:$0xff]
        %v942 = vld [vmem:[%s186 + $0x1690] sm:$0xff]
        %v943 = vld [vmem:[%s186 + $0x1698] sm:$0xff]
        %v944 = vld [vmem:[%s186 + $0x16a0] sm:$0xff]
        %v945 = vld [vmem:[%s186 + $0x16a8] sm:$0xff]
        %v946 = vld [vmem:[%s186 + $0x16b0] sm:$0xff]
        %v947 = vld [vmem:[%s186 + $0x16b8] sm:$0xff]
        %v948 = vld [vmem:[%s186 + $0x16c0] sm:$0xff]
        %v949 = vld [vmem:[%s186 + $0x16c8] sm:$0xff]
        %v950 = vld [vmem:[%s186 + $0x16d0] sm:$0xff]
        %v951 = vld [vmem:[%s186 + $0x16d8] sm:$0xff]
        %v952 = vld [vmem:[%s186 + $0x16e0] sm:$0xff]
        %v953 = vld [vmem:[%s186 + $0x16e8] sm:$0xff]
        %v954 = vld [vmem:[%s186 + $0x16f0] sm:$0xff]
        %v955 = vld [vmem:[%s186 + $0x16f8] sm:$0xff]
        %v956 = vld [vmem:[%s186 + $0x1700] sm:$0xff]
        %v957 = vld [vmem:[%s186 + $0x1708] sm:$0xff]
        %v958 = vld [vmem:[%s186 + $0x1710] sm:$0xff]
        %v959 = vld [vmem:[%s186 + $0x1718] sm:$0xff]
        %v960 = vld [vmem:[%s186 + $0x1720] sm:$0xff]
        %v961 = vld [vmem:[%s186 + $0x1728] sm:$0xff]
        %v962 = vld [vmem:[%s186 + $0x1730] sm:$0xff]
        %v963 = vld [vmem:[%s186 + $0x1738] sm:$0xff]
        %v964 = vld [vmem:[%s186 + $0x1740] sm:$0xff]
        %v965 = vld [vmem:[%s186 + $0x1748] sm:$0xff]
        %v966 = vld [vmem:[%s186 + $0x1750] sm:$0xff]
        %v967 = vld [vmem:[%s186 + $0x1758] sm:$0xff]
        %v968 = vld [vmem:[%s186 + $0x1760] sm:$0xff]
        %v969 = vld [vmem:[%s186 + $0x1768] sm:$0xff]
        %v970 = vld [vmem:[%s186 + $0x1770] sm:$0xff]
        %v971 = vld [vmem:[%s186 + $0x1778] sm:$0xff]
        %v972 = vld [vmem:[%s186 + $0x1780] sm:$0xff]
        %v973 = vld [vmem:[%s186 + $0x1788] sm:$0xff]
        %v974 = vld [vmem:[%s186 + $0x1790] sm:$0xff]
        %v975 = vld [vmem:[%s186 + $0x1798] sm:$0xff]
        %v976 = vld [vmem:[%s186 + $0x17a0] sm:$0xff]
        %v977 = vld [vmem:[%s186 + $0x17a8] sm:$0xff]
        %v978 = vld [vmem:[%s186 + $0x17b0] sm:$0xff]
        %v979 = vld [vmem:[%s186 + $0x17b8] sm:$0xff]
        %v980 = vld [vmem:[%s186 + $0x17c0] sm:$0xff]
        %v981 = vld [vmem:[%s186 + $0x17c8] sm:$0xff]
        %v982 = vld [vmem:[%s186 + $0x17d0] sm:$0xff]
        %v983 = vld [vmem:[%s186 + $0x17d8] sm:$0xff]
        %v984 = vld [vmem:[%s186 + $0x17e0] sm:$0xff]
        %v985 = vld [vmem:[%s186 + $0x17e8] sm:$0xff]
        %v986 = vld [vmem:[%s186 + $0x17f0] sm:$0xff]
        %v987 = vld [vmem:[%s186 + $0x17f8] sm:$0xff]
        %v988 = vld [vmem:[#allocation5] sm:$0xf]
        %v989 = vld [vmem:[#allocation5 + $0x4] sm:$0xf]
        %v990 = vld [vmem:[#allocation5 + $0x8] sm:$0xf]
        %v991 = vld [vmem:[#allocation5 + $0xc] sm:$0xf]
        %v992 = vld [vmem:[#allocation5 + $0x10] sm:$0xf]
        %v993 = vld [vmem:[#allocation5 + $0x14] sm:$0xf]
        %v994 = vld [vmem:[#allocation5 + $0x18] sm:$0xf]
        %v995 = vld [vmem:[#allocation5 + $0x1c] sm:$0xf]
        %v996 = vld [vmem:[#allocation5 + $0x20] sm:$0xf]
        %v997 = vld [vmem:[#allocation5 + $0x24] sm:$0xf]
        %v998 = vld [vmem:[#allocation5 + $0x28] sm:$0xf]
        %v999 = vld [vmem:[#allocation5 + $0x2c] sm:$0xf]
        %v1000 = vld [vmem:[#allocation5 + $0x30] sm:$0xf]
        %v1001 = vld [vmem:[#allocation5 + $0x34] sm:$0xf]
        %v1002 = vld [vmem:[#allocation5 + $0x38] sm:$0xf]
        %v1003 = vld [vmem:[#allocation5 + $0x3c] sm:$0xf]
        %v1004 = vld [vmem:[#allocation5 + $0x40] sm:$0xf]
        %v1005 = vld [vmem:[#allocation5 + $0x44] sm:$0xf]
        %v1006 = vld [vmem:[#allocation5 + $0x48] sm:$0xf]
        %v1007 = vld [vmem:[#allocation5 + $0x4c] sm:$0xf]
        %v1008 = vld [vmem:[#allocation5 + $0x50] sm:$0xf]
        %v1009 = vld [vmem:[#allocation5 + $0x54] sm:$0xf]
        %v1010 = vld [vmem:[#allocation5 + $0x58] sm:$0xf]
        %v1011 = vld [vmem:[#allocation5 + $0x5c] sm:$0xf]
        %v1012 = vld [vmem:[#allocation5 + $0x60] sm:$0xf]
        %v1013 = vld [vmem:[#allocation5 + $0x64] sm:$0xf]
        %v1014 = vld [vmem:[#allocation5 + $0x68] sm:$0xf]
        %v1015 = vld [vmem:[#allocation5 + $0x6c] sm:$0xf]
        %v1016 = vld [vmem:[#allocation5 + $0x70] sm:$0xf]
        %v1017 = vld [vmem:[#allocation5 + $0x74] sm:$0xf]
        %v1018 = vld [vmem:[#allocation5 + $0x78] sm:$0xf]
        %v1019 = vld [vmem:[#allocation5 + $0x7c] sm:$0xf]
        %v1020 = vld [vmem:[#allocation5 + $0x80] sm:$0xf]
        %v1021 = vld [vmem:[#allocation5 + $0x84] sm:$0xf]
        %v1022 = vld [vmem:[#allocation5 + $0x88] sm:$0xf]
        %v1023 = vld [vmem:[#allocation5 + $0x8c] sm:$0xf]
        %v1024 = vld [vmem:[#allocation5 + $0x90] sm:$0xf]
        %v1025 = vld [vmem:[#allocation5 + $0x94] sm:$0xf]
        %v1026 = vld [vmem:[#allocation5 + $0x98] sm:$0xf]
        %v1027 = vld [vmem:[#allocation5 + $0x9c] sm:$0xf]
        %v1028 = vld [vmem:[#allocation5 + $0xa0] sm:$0xf]
        %v1029 = vld [vmem:[#allocation5 + $0xa4] sm:$0xf]
        %v1030 = vld [vmem:[#allocation5 + $0xa8] sm:$0xf]
        %v1031 = vld [vmem:[#allocation5 + $0xac] sm:$0xf]
        %v1032 = vld [vmem:[#allocation5 + $0xb0] sm:$0xf]
        %v1033 = vld [vmem:[#allocation5 + $0xb4] sm:$0xf]
        %v1034 = vld [vmem:[#allocation5 + $0xb8] sm:$0xf]
        %v1035 = vld [vmem:[#allocation5 + $0xbc] sm:$0xf]
        %v1036 = vld [vmem:[#allocation5 + $0xc0] sm:$0xf]
        %v1037 = vld [vmem:[#allocation5 + $0xc4] sm:$0xf]
        %v1038 = vld [vmem:[#allocation5 + $0xc8] sm:$0xf]
        %v1039 = vld [vmem:[#allocation5 + $0xcc] sm:$0xf]
        %v1040 = vld [vmem:[#allocation5 + $0xd0] sm:$0xf]
        %v1041 = vld [vmem:[#allocation5 + $0xd4] sm:$0xf]
        %v1042 = vld [vmem:[#allocation5 + $0xd8] sm:$0xf]
        %v1043 = vld [vmem:[#allocation5 + $0xdc] sm:$0xf]
        %v1044 = vld [vmem:[#allocation5 + $0xe0] sm:$0xf]
        %v1045 = vld [vmem:[#allocation5 + $0xe4] sm:$0xf]
        %v1046 = vld [vmem:[#allocation5 + $0xe8] sm:$0xf]
        %v1047 = vld [vmem:[#allocation5 + $0xec] sm:$0xf]
        %v1048 = vld [vmem:[#allocation5 + $0xf0] sm:$0xf]
        %v1049 = vld [vmem:[#allocation5 + $0xf4] sm:$0xf]
        %v1050 = vld [vmem:[#allocation5 + $0xf8] sm:$0xf]
        %v1051 = vld [vmem:[#allocation5 + $0xfc] sm:$0xf]
        %v1052 = vld [vmem:[#allocation5 + $0x100] sm:$0xf]
        %v1053 = vld [vmem:[#allocation5 + $0x104] sm:$0xf]
        %v1054 = vld [vmem:[#allocation5 + $0x108] sm:$0xf]
        %v1055 = vld [vmem:[#allocation5 + $0x10c] sm:$0xf]
        %v1056 = vld [vmem:[#allocation5 + $0x110] sm:$0xf]
        %v1057 = vld [vmem:[#allocation5 + $0x114] sm:$0xf]
        %v1058 = vld [vmem:[#allocation5 + $0x118] sm:$0xf]
        %v1059 = vld [vmem:[#allocation5 + $0x11c] sm:$0xf]
        %v1060 = vld [vmem:[#allocation5 + $0x120] sm:$0xf]
        %v1061 = vld [vmem:[#allocation5 + $0x124] sm:$0xf]
        %v1062 = vld [vmem:[#allocation5 + $0x128] sm:$0xf]
        %v1063 = vld [vmem:[#allocation5 + $0x12c] sm:$0xf]
        %v1064 = vld [vmem:[#allocation5 + $0x130] sm:$0xf]
        %v1065 = vld [vmem:[#allocation5 + $0x134] sm:$0xf]
        %v1066 = vld [vmem:[#allocation5 + $0x138] sm:$0xf]
        %v1067 = vld [vmem:[#allocation5 + $0x13c] sm:$0xf]
        %v1068 = vld [vmem:[#allocation5 + $0x140] sm:$0xf]
        %v1069 = vld [vmem:[#allocation5 + $0x144] sm:$0xf]
        %v1070 = vld [vmem:[#allocation5 + $0x148] sm:$0xf]
        %v1071 = vld [vmem:[#allocation5 + $0x14c] sm:$0xf]
        %v1072 = vld [vmem:[#allocation5 + $0x150] sm:$0xf]
        %v1073 = vld [vmem:[#allocation5 + $0x154] sm:$0xf]
        %v1074 = vld [vmem:[#allocation5 + $0x158] sm:$0xf]
        %v1075 = vld [vmem:[#allocation5 + $0x15c] sm:$0xf]
        %v1076 = vld [vmem:[#allocation5 + $0x160] sm:$0xf]
        %v1077 = vld [vmem:[#allocation5 + $0x164] sm:$0xf]
        %v1078 = vld [vmem:[#allocation5 + $0x168] sm:$0xf]
        %v1079 = vld [vmem:[#allocation5 + $0x16c] sm:$0xf]
        %v1080 = vld [vmem:[#allocation5 + $0x170] sm:$0xf]
        %v1081 = vld [vmem:[#allocation5 + $0x174] sm:$0xf]
        %v1082 = vld [vmem:[#allocation5 + $0x178] sm:$0xf]
        %v1083 = vld [vmem:[#allocation5 + $0x17c] sm:$0xf]
        %v1084 = vld [vmem:[#allocation7] sm:$0x1]
        %v1086 = vlaneseq
        %v1087 = vshrl.u32 %v1086, 7
        %v1088 = vsub.s32 0, %v1087
        %v1089 = vrot.slane %v1084, %v1088
        %v1859 = vunpack.c.l.b16 %v220
        %v1860 = vunpack.c.h.b16 %v220
        %v1861 = vunpack.c.l.b16 %v221
        %v1862 = vunpack.c.h.b16 %v221
        %v1863 = vunpack.c.l.b16 %v222
        %v1864 = vunpack.c.h.b16 %v222
        %v1865 = vunpack.c.l.b16 %v223
        %v1866 = vunpack.c.h.b16 %v223
        %v1867 = vunpack.c.l.b16 %v224
        %v1868 = vunpack.c.h.b16 %v224
        %v1869 = vunpack.c.l.b16 %v225
        %v1870 = vunpack.c.h.b16 %v225
        %v1871 = vunpack.c.l.b16 %v226
        %v1872 = vunpack.c.h.b16 %v226
        %v1873 = vunpack.c.l.b16 %v227
        %v1874 = vunpack.c.h.b16 %v227
        %v1875 = vunpack.c.l.b16 %v228
        %v1876 = vunpack.c.h.b16 %v228
        %v1877 = vunpack.c.l.b16 %v229
        %v1878 = vunpack.c.h.b16 %v229
        %v1879 = vunpack.c.l.b16 %v230
        %v1880 = vunpack.c.h.b16 %v230
        %v1881 = vunpack.c.l.b16 %v231
        %v1882 = vunpack.c.h.b16 %v231
        %v1883 = vunpack.c.l.b16 %v232
        %v1884 = vunpack.c.h.b16 %v232
        %v1885 = vunpack.c.l.b16 %v233
        %v1886 = vunpack.c.h.b16 %v233
        %v1887 = vunpack.c.l.b16 %v234
        %v1888 = vunpack.c.h.b16 %v234
        %v1889 = vunpack.c.l.b16 %v235
        %v1890 = vunpack.c.h.b16 %v235
        %v1891 = vunpack.c.l.b16 %v236
        %v1892 = vunpack.c.h.b16 %v236
        %v1893 = vunpack.c.l.b16 %v237
        %v1894 = vunpack.c.h.b16 %v237
        %v1895 = vunpack.c.l.b16 %v238
        %v1896 = vunpack.c.h.b16 %v238
        %v1897 = vunpack.c.l.b16 %v239
        %v1898 = vunpack.c.h.b16 %v239
        %v1899 = vunpack.c.l.b16 %v240
        %v1900 = vunpack.c.h.b16 %v240
        %v1901 = vunpack.c.l.b16 %v241
        %v1902 = vunpack.c.h.b16 %v241
        %v1903 = vunpack.c.l.b16 %v242
        %v1904 = vunpack.c.h.b16 %v242
        %v1905 = vunpack.c.l.b16 %v243
        %v1906 = vunpack.c.h.b16 %v243
        %v1907 = vunpack.c.l.b16 %v244
        %v1908 = vunpack.c.h.b16 %v244
        %v1909 = vunpack.c.l.b16 %v245
        %v1910 = vunpack.c.h.b16 %v245
        %v1911 = vunpack.c.l.b16 %v246
        %v1912 = vunpack.c.h.b16 %v246
        %v1913 = vunpack.c.l.b16 %v247
        %v1914 = vunpack.c.h.b16 %v247
        %v1915 = vunpack.c.l.b16 %v248
        %v1916 = vunpack.c.h.b16 %v248
        %v1917 = vunpack.c.l.b16 %v249
        %v1918 = vunpack.c.h.b16 %v249
        %v1919 = vunpack.c.l.b16 %v250
        %v1920 = vunpack.c.h.b16 %v250
        %v1921 = vunpack.c.l.b16 %v251
        %v1922 = vunpack.c.h.b16 %v251
        %v1923 = vunpack.c.l.b16 %v252
        %v1924 = vunpack.c.h.b16 %v252
        %v1925 = vunpack.c.l.b16 %v253
        %v1926 = vunpack.c.h.b16 %v253
        %v1927 = vunpack.c.l.b16 %v254
        %v1928 = vunpack.c.h.b16 %v254
        %v1929 = vunpack.c.l.b16 %v255
        %v1930 = vunpack.c.h.b16 %v255
        %v1931 = vunpack.c.l.b16 %v256
        %v1932 = vunpack.c.h.b16 %v256
        %v1933 = vunpack.c.l.b16 %v257
        %v1934 = vunpack.c.h.b16 %v257
        %v1935 = vunpack.c.l.b16 %v258
        %v1936 = vunpack.c.h.b16 %v258
        %v1937 = vunpack.c.l.b16 %v259
        %v1938 = vunpack.c.h.b16 %v259
        %v1939 = vunpack.c.l.b16 %v260
        %v1940 = vunpack.c.h.b16 %v260
        %v1941 = vunpack.c.l.b16 %v261
        %v1942 = vunpack.c.h.b16 %v261
        %v1943 = vunpack.c.l.b16 %v262
        %v1944 = vunpack.c.h.b16 %v262
        %v1945 = vunpack.c.l.b16 %v263
        %v1946 = vunpack.c.h.b16 %v263
        %v1947 = vunpack.c.l.b16 %v264
        %v1948 = vunpack.c.h.b16 %v264
        %v1949 = vunpack.c.l.b16 %v265
        %v1950 = vunpack.c.h.b16 %v265
        %v1951 = vunpack.c.l.b16 %v266
        %v1952 = vunpack.c.h.b16 %v266
        %v1953 = vunpack.c.l.b16 %v267
        %v1954 = vunpack.c.h.b16 %v267
        %v1955 = vunpack.c.l.b16 %v268
        %v1956 = vunpack.c.h.b16 %v268
        %v1957 = vunpack.c.l.b16 %v269
        %v1958 = vunpack.c.h.b16 %v269
        %v1959 = vunpack.c.l.b16 %v270
        %v1960 = vunpack.c.h.b16 %v270
        %v1961 = vunpack.c.l.b16 %v271
        %v1962 = vunpack.c.h.b16 %v271
        %v1963 = vunpack.c.l.b16 %v272
        %v1964 = vunpack.c.h.b16 %v272
        %v1965 = vunpack.c.l.b16 %v273
        %v1966 = vunpack.c.h.b16 %v273
        %v1967 = vunpack.c.l.b16 %v274
        %v1968 = vunpack.c.h.b16 %v274
        %v1969 = vunpack.c.l.b16 %v275
        %v1970 = vunpack.c.h.b16 %v275
        %v1971 = vunpack.c.l.b16 %v276
        %v1972 = vunpack.c.h.b16 %v276
        %v1973 = vunpack.c.l.b16 %v277
        %v1974 = vunpack.c.h.b16 %v277
        %v1975 = vunpack.c.l.b16 %v278
        %v1976 = vunpack.c.h.b16 %v278
        %v1977 = vunpack.c.l.b16 %v279
        %v1978 = vunpack.c.h.b16 %v279
        %v1979 = vunpack.c.l.b16 %v280
        %v1980 = vunpack.c.h.b16 %v280
        %v1981 = vunpack.c.l.b16 %v281
        %v1982 = vunpack.c.h.b16 %v281
        %v1983 = vunpack.c.l.b16 %v282
        %v1984 = vunpack.c.h.b16 %v282
        %v1985 = vunpack.c.l.b16 %v283
        %v1986 = vunpack.c.h.b16 %v283
        %v1987 = vunpack.c.l.b16 %v284
        %v1988 = vunpack.c.h.b16 %v284
        %v1989 = vunpack.c.l.b16 %v285
        %v1990 = vunpack.c.h.b16 %v285
        %v1991 = vunpack.c.l.b16 %v286
        %v1992 = vunpack.c.h.b16 %v286
        %v1993 = vunpack.c.l.b16 %v287
        %v1994 = vunpack.c.h.b16 %v287
        %v1995 = vunpack.c.l.b16 %v288
        %v1996 = vunpack.c.h.b16 %v288
        %v1997 = vunpack.c.l.b16 %v289
        %v1998 = vunpack.c.h.b16 %v289
        %v1999 = vunpack.c.l.b16 %v290
        %v2000 = vunpack.c.h.b16 %v290
        %v2001 = vunpack.c.l.b16 %v291
        %v2002 = vunpack.c.h.b16 %v291
        %v2003 = vunpack.c.l.b16 %v292
        %v2004 = vunpack.c.h.b16 %v292
        %v2005 = vunpack.c.l.b16 %v293
        %v2006 = vunpack.c.h.b16 %v293
        %v2007 = vunpack.c.l.b16 %v294
        %v2008 = vunpack.c.h.b16 %v294
        %v2009 = vunpack.c.l.b16 %v295
        %v2010 = vunpack.c.h.b16 %v295
        %v2011 = vunpack.c.l.b16 %v296
        %v2012 = vunpack.c.h.b16 %v296
        %v2013 = vunpack.c.l.b16 %v297
        %v2014 = vunpack.c.h.b16 %v297
        %v2015 = vunpack.c.l.b16 %v298
        %v2016 = vunpack.c.h.b16 %v298
        %v2017 = vunpack.c.l.b16 %v299
        %v2018 = vunpack.c.h.b16 %v299
        %v2019 = vunpack.c.l.b16 %v300
        %v2020 = vunpack.c.h.b16 %v300
        %v2021 = vunpack.c.l.b16 %v301
        %v2022 = vunpack.c.h.b16 %v301
        %v2023 = vunpack.c.l.b16 %v302
        %v2024 = vunpack.c.h.b16 %v302
        %v2025 = vunpack.c.l.b16 %v303
        %v2026 = vunpack.c.h.b16 %v303
        %v2027 = vunpack.c.l.b16 %v304
        %v2028 = vunpack.c.h.b16 %v304
        %v2029 = vunpack.c.l.b16 %v305
        %v2030 = vunpack.c.h.b16 %v305
        %v2031 = vunpack.c.l.b16 %v306
        %v2032 = vunpack.c.h.b16 %v306
        %v2033 = vunpack.c.l.b16 %v307
        %v2034 = vunpack.c.h.b16 %v307
        %v2035 = vunpack.c.l.b16 %v308
        %v2036 = vunpack.c.h.b16 %v308
        %v2037 = vunpack.c.l.b16 %v309
        %v2038 = vunpack.c.h.b16 %v309
        %v2039 = vunpack.c.l.b16 %v310
        %v2040 = vunpack.c.h.b16 %v310
        %v2041 = vunpack.c.l.b16 %v311
        %v2042 = vunpack.c.h.b16 %v311
        %v2043 = vunpack.c.l.b16 %v312
        %v2044 = vunpack.c.h.b16 %v312
        %v2045 = vunpack.c.l.b16 %v313
        %v2046 = vunpack.c.h.b16 %v313
        %v2047 = vunpack.c.l.b16 %v314
        %v2048 = vunpack.c.h.b16 %v314
        %v2049 = vunpack.c.l.b16 %v315
        %v2050 = vunpack.c.h.b16 %v315
        %v2051 = vunpack.c.l.b16 %v316
        %v2052 = vunpack.c.h.b16 %v316
        %v2053 = vunpack.c.l.b16 %v317
        %v2054 = vunpack.c.h.b16 %v317
        %v2055 = vunpack.c.l.b16 %v318
        %v2056 = vunpack.c.h.b16 %v318
        %v2057 = vunpack.c.l.b16 %v319
        %v2058 = vunpack.c.h.b16 %v319
        %v2059 = vunpack.c.l.b16 %v320
        %v2060 = vunpack.c.h.b16 %v320
        %v2061 = vunpack.c.l.b16 %v321
        %v2062 = vunpack.c.h.b16 %v321
        %v2063 = vunpack.c.l.b16 %v322
        %v2064 = vunpack.c.h.b16 %v322
        %v2065 = vunpack.c.l.b16 %v323
        %v2066 = vunpack.c.h.b16 %v323
        %v2067 = vunpack.c.l.b16 %v324
        %v2068 = vunpack.c.h.b16 %v324
        %v2069 = vunpack.c.l.b16 %v325
        %v2070 = vunpack.c.h.b16 %v325
        %v2071 = vunpack.c.l.b16 %v326
        %v2072 = vunpack.c.h.b16 %v326
        %v2073 = vunpack.c.l.b16 %v327
        %v2074 = vunpack.c.h.b16 %v327
        %v2075 = vunpack.c.l.b16 %v328
        %v2076 = vunpack.c.h.b16 %v328
        %v2077 = vunpack.c.l.b16 %v329
        %v2078 = vunpack.c.h.b16 %v329
        %v2079 = vunpack.c.l.b16 %v330
        %v2080 = vunpack.c.h.b16 %v330
        %v2081 = vunpack.c.l.b16 %v331
        %v2082 = vunpack.c.h.b16 %v331
        %v2083 = vunpack.c.l.b16 %v332
        %v2084 = vunpack.c.h.b16 %v332
        %v2085 = vunpack.c.l.b16 %v333
        %v2086 = vunpack.c.h.b16 %v333
        %v2087 = vunpack.c.l.b16 %v334
        %v2088 = vunpack.c.h.b16 %v334
        %v2089 = vunpack.c.l.b16 %v335
        %v2090 = vunpack.c.h.b16 %v335
        %v2091 = vunpack.c.l.b16 %v336
        %v2092 = vunpack.c.h.b16 %v336
        %v2093 = vunpack.c.l.b16 %v337
        %v2094 = vunpack.c.h.b16 %v337
        %v2095 = vunpack.c.l.b16 %v338
        %v2096 = vunpack.c.h.b16 %v338
        %v2097 = vunpack.c.l.b16 %v339
        %v2098 = vunpack.c.h.b16 %v339
        %v2099 = vunpack.c.l.b16 %v340
        %v2100 = vunpack.c.h.b16 %v340
        %v2101 = vunpack.c.l.b16 %v341
        %v2102 = vunpack.c.h.b16 %v341
        %v2103 = vunpack.c.l.b16 %v342
        %v2104 = vunpack.c.h.b16 %v342
        %v2105 = vunpack.c.l.b16 %v343
        %v2106 = vunpack.c.h.b16 %v343
        %v2107 = vunpack.c.l.b16 %v344
        %v2108 = vunpack.c.h.b16 %v344
        %v2109 = vunpack.c.l.b16 %v345
        %v2110 = vunpack.c.h.b16 %v345
        %v2111 = vunpack.c.l.b16 %v346
        %v2112 = vunpack.c.h.b16 %v346
        %v2113 = vunpack.c.l.b16 %v347
        %v2114 = vunpack.c.h.b16 %v347
        %v2115 = vunpack.c.l.b16 %v348
        %v2116 = vunpack.c.h.b16 %v348
        %v2117 = vunpack.c.l.b16 %v349
        %v2118 = vunpack.c.h.b16 %v349
        %v2119 = vunpack.c.l.b16 %v350
        %v2120 = vunpack.c.h.b16 %v350
        %v2121 = vunpack.c.l.b16 %v351
        %v2122 = vunpack.c.h.b16 %v351
        %v2123 = vunpack.c.l.b16 %v352
        %v2124 = vunpack.c.h.b16 %v352
        %v2125 = vunpack.c.l.b16 %v353
        %v2126 = vunpack.c.h.b16 %v353
        %v2127 = vunpack.c.l.b16 %v354
        %v2128 = vunpack.c.h.b16 %v354
        %v2129 = vunpack.c.l.b16 %v355
        %v2130 = vunpack.c.h.b16 %v355
        %v2131 = vunpack.c.l.b16 %v356
        %v2132 = vunpack.c.h.b16 %v356
        %v2133 = vunpack.c.l.b16 %v357
        %v2134 = vunpack.c.h.b16 %v357
        %v2135 = vunpack.c.l.b16 %v358
        %v2136 = vunpack.c.h.b16 %v358
        %v2137 = vunpack.c.l.b16 %v359
        %v2138 = vunpack.c.h.b16 %v359
        %v2139 = vunpack.c.l.b16 %v360
        %v2140 = vunpack.c.h.b16 %v360
        %v2141 = vunpack.c.l.b16 %v361
        %v2142 = vunpack.c.h.b16 %v361
        %v2143 = vunpack.c.l.b16 %v362
        %v2144 = vunpack.c.h.b16 %v362
        %v2145 = vunpack.c.l.b16 %v363
        %v2146 = vunpack.c.h.b16 %v363
        %v2147 = vunpack.c.l.b16 %v364
        %v2148 = vunpack.c.h.b16 %v364
        %v2149 = vunpack.c.l.b16 %v365
        %v2150 = vunpack.c.h.b16 %v365
        %v2151 = vunpack.c.l.b16 %v366
        %v2152 = vunpack.c.h.b16 %v366
        %v2153 = vunpack.c.l.b16 %v367
        %v2154 = vunpack.c.h.b16 %v367
        %v2155 = vunpack.c.l.b16 %v368
        %v2156 = vunpack.c.h.b16 %v368
        %v2157 = vunpack.c.l.b16 %v369
        %v2158 = vunpack.c.h.b16 %v369
        %v2159 = vunpack.c.l.b16 %v370
        %v2160 = vunpack.c.h.b16 %v370
        %v2161 = vunpack.c.l.b16 %v371
        %v2162 = vunpack.c.h.b16 %v371
        %v2163 = vunpack.c.l.b16 %v372
        %v2164 = vunpack.c.h.b16 %v372
        %v2165 = vunpack.c.l.b16 %v373
        %v2166 = vunpack.c.h.b16 %v373
        %v2167 = vunpack.c.l.b16 %v374
        %v2168 = vunpack.c.h.b16 %v374
        %v2169 = vunpack.c.l.b16 %v375
        %v2170 = vunpack.c.h.b16 %v375
        %v2171 = vunpack.c.l.b16 %v376
        %v2172 = vunpack.c.h.b16 %v376
        %v2173 = vunpack.c.l.b16 %v377
        %v2174 = vunpack.c.h.b16 %v377
        %v2175 = vunpack.c.l.b16 %v378
        %v2176 = vunpack.c.h.b16 %v378
        %v2177 = vunpack.c.l.b16 %v379
        %v2178 = vunpack.c.h.b16 %v379
        %v2179 = vunpack.c.l.b16 %v380
        %v2180 = vunpack.c.h.b16 %v380
        %v2181 = vunpack.c.l.b16 %v381
        %v2182 = vunpack.c.h.b16 %v381
        %v2183 = vunpack.c.l.b16 %v382
        %v2184 = vunpack.c.h.b16 %v382
        %v2185 = vunpack.c.l.b16 %v383
        %v2186 = vunpack.c.h.b16 %v383
        %v2187 = vunpack.c.l.b16 %v384
        %v2188 = vunpack.c.h.b16 %v384
        %v2189 = vunpack.c.l.b16 %v385
        %v2190 = vunpack.c.h.b16 %v385
        %v2191 = vunpack.c.l.b16 %v386
        %v2192 = vunpack.c.h.b16 %v386
        %v2193 = vunpack.c.l.b16 %v387
        %v2194 = vunpack.c.h.b16 %v387
        %v2195 = vunpack.c.l.b16 %v388
        %v2196 = vunpack.c.h.b16 %v388
        %v2197 = vunpack.c.l.b16 %v389
        %v2198 = vunpack.c.h.b16 %v389
        %v2199 = vunpack.c.l.b16 %v390
        %v2200 = vunpack.c.h.b16 %v390
        %v2201 = vunpack.c.l.b16 %v391
        %v2202 = vunpack.c.h.b16 %v391
        %v2203 = vunpack.c.l.b16 %v392
        %v2204 = vunpack.c.h.b16 %v392
        %v2205 = vunpack.c.l.b16 %v393
        %v2206 = vunpack.c.h.b16 %v393
        %v2207 = vunpack.c.l.b16 %v394
        %v2208 = vunpack.c.h.b16 %v394
        %v2209 = vunpack.c.l.b16 %v395
        %v2210 = vunpack.c.h.b16 %v395
        %v2211 = vunpack.c.l.b16 %v396
        %v2212 = vunpack.c.h.b16 %v396
        %v2213 = vunpack.c.l.b16 %v397
        %v2214 = vunpack.c.h.b16 %v397
        %v2215 = vunpack.c.l.b16 %v398
        %v2216 = vunpack.c.h.b16 %v398
        %v2217 = vunpack.c.l.b16 %v399
        %v2218 = vunpack.c.h.b16 %v399
        %v2219 = vunpack.c.l.b16 %v400
        %v2220 = vunpack.c.h.b16 %v400
        %v2221 = vunpack.c.l.b16 %v401
        %v2222 = vunpack.c.h.b16 %v401
        %v2223 = vunpack.c.l.b16 %v402
        %v2224 = vunpack.c.h.b16 %v402
        %v2225 = vunpack.c.l.b16 %v403
        %v2226 = vunpack.c.h.b16 %v403
        %v2227 = vunpack.c.l.b16 %v404
        %v2228 = vunpack.c.h.b16 %v404
        %v2229 = vunpack.c.l.b16 %v405
        %v2230 = vunpack.c.h.b16 %v405
        %v2231 = vunpack.c.l.b16 %v406
        %v2232 = vunpack.c.h.b16 %v406
        %v2233 = vunpack.c.l.b16 %v407
        %v2234 = vunpack.c.h.b16 %v407
        %v2235 = vunpack.c.l.b16 %v408
        %v2236 = vunpack.c.h.b16 %v408
        %v2237 = vunpack.c.l.b16 %v409
        %v2238 = vunpack.c.h.b16 %v409
        %v2239 = vunpack.c.l.b16 %v410
        %v2240 = vunpack.c.h.b16 %v410
        %v2241 = vunpack.c.l.b16 %v411
        %v2242 = vunpack.c.h.b16 %v411
        %v2243 = vunpack.c.l.b16 %v412
        %v2244 = vunpack.c.h.b16 %v412
        %v2245 = vunpack.c.l.b16 %v413
        %v2246 = vunpack.c.h.b16 %v413
        %v2247 = vunpack.c.l.b16 %v414
        %v2248 = vunpack.c.h.b16 %v414
        %v2249 = vunpack.c.l.b16 %v415
        %v2250 = vunpack.c.h.b16 %v415
        %v2251 = vunpack.c.l.b16 %v416
        %v2252 = vunpack.c.h.b16 %v416
        %v2253 = vunpack.c.l.b16 %v417
        %v2254 = vunpack.c.h.b16 %v417
        %v2255 = vunpack.c.l.b16 %v418
        %v2256 = vunpack.c.h.b16 %v418
        %v2257 = vunpack.c.l.b16 %v419
        %v2258 = vunpack.c.h.b16 %v419
        %v2259 = vunpack.c.l.b16 %v420
        %v2260 = vunpack.c.h.b16 %v420
        %v2261 = vunpack.c.l.b16 %v421
        %v2262 = vunpack.c.h.b16 %v421
        %v2263 = vunpack.c.l.b16 %v422
        %v2264 = vunpack.c.h.b16 %v422
        %v2265 = vunpack.c.l.b16 %v423
        %v2266 = vunpack.c.h.b16 %v423
        %v2267 = vunpack.c.l.b16 %v424
        %v2268 = vunpack.c.h.b16 %v424
        %v2269 = vunpack.c.l.b16 %v425
        %v2270 = vunpack.c.h.b16 %v425
        %v2271 = vunpack.c.l.b16 %v426
        %v2272 = vunpack.c.h.b16 %v426
        %v2273 = vunpack.c.l.b16 %v427
        %v2274 = vunpack.c.h.b16 %v427
        %v2275 = vunpack.c.l.b16 %v428
        %v2276 = vunpack.c.h.b16 %v428
        %v2277 = vunpack.c.l.b16 %v429
        %v2278 = vunpack.c.h.b16 %v429
        %v2279 = vunpack.c.l.b16 %v430
        %v2280 = vunpack.c.h.b16 %v430
        %v2281 = vunpack.c.l.b16 %v431
        %v2282 = vunpack.c.h.b16 %v431
        %v2283 = vunpack.c.l.b16 %v432
        %v2284 = vunpack.c.h.b16 %v432
        %v2285 = vunpack.c.l.b16 %v433
        %v2286 = vunpack.c.h.b16 %v433
        %v2287 = vunpack.c.l.b16 %v434
        %v2288 = vunpack.c.h.b16 %v434
        %v2289 = vunpack.c.l.b16 %v435
        %v2290 = vunpack.c.h.b16 %v435
        %v2291 = vunpack.c.l.b16 %v436
        %v2292 = vunpack.c.h.b16 %v436
        %v2293 = vunpack.c.l.b16 %v437
        %v2294 = vunpack.c.h.b16 %v437
        %v2295 = vunpack.c.l.b16 %v438
        %v2296 = vunpack.c.h.b16 %v438
        %v2297 = vunpack.c.l.b16 %v439
        %v2298 = vunpack.c.h.b16 %v439
        %v2299 = vunpack.c.l.b16 %v440
        %v2300 = vunpack.c.h.b16 %v440
        %v2301 = vunpack.c.l.b16 %v441
        %v2302 = vunpack.c.h.b16 %v441
        %v2303 = vunpack.c.l.b16 %v442
        %v2304 = vunpack.c.h.b16 %v442
        %v2305 = vunpack.c.l.b16 %v443
        %v2306 = vunpack.c.h.b16 %v443
        %v2307 = vunpack.c.l.b16 %v444
        %v2308 = vunpack.c.h.b16 %v444
        %v2309 = vunpack.c.l.b16 %v445
        %v2310 = vunpack.c.h.b16 %v445
        %v2311 = vunpack.c.l.b16 %v446
        %v2312 = vunpack.c.h.b16 %v446
        %v2313 = vunpack.c.l.b16 %v447
        %v2314 = vunpack.c.h.b16 %v447
        %v2315 = vunpack.c.l.b16 %v448
        %v2316 = vunpack.c.h.b16 %v448
        %v2317 = vunpack.c.l.b16 %v449
        %v2318 = vunpack.c.h.b16 %v449
        %v2319 = vunpack.c.l.b16 %v450
        %v2320 = vunpack.c.h.b16 %v450
        %v2321 = vunpack.c.l.b16 %v451
        %v2322 = vunpack.c.h.b16 %v451
        %v2323 = vunpack.c.l.b16 %v452
        %v2324 = vunpack.c.h.b16 %v452
        %v2325 = vunpack.c.l.b16 %v453
        %v2326 = vunpack.c.h.b16 %v453
        %v2327 = vunpack.c.l.b16 %v454
        %v2328 = vunpack.c.h.b16 %v454
        %v2329 = vunpack.c.l.b16 %v455
        %v2330 = vunpack.c.h.b16 %v455
        %v2331 = vunpack.c.l.b16 %v456
        %v2332 = vunpack.c.h.b16 %v456
        %v2333 = vunpack.c.l.b16 %v457
        %v2334 = vunpack.c.h.b16 %v457
        %v2335 = vunpack.c.l.b16 %v458
        %v2336 = vunpack.c.h.b16 %v458
        %v2337 = vunpack.c.l.b16 %v459
        %v2338 = vunpack.c.h.b16 %v459
        %v2339 = vunpack.c.l.b16 %v460
        %v2340 = vunpack.c.h.b16 %v460
        %v2341 = vunpack.c.l.b16 %v461
        %v2342 = vunpack.c.h.b16 %v461
        %v2343 = vunpack.c.l.b16 %v462
        %v2344 = vunpack.c.h.b16 %v462
        %v2345 = vunpack.c.l.b16 %v463
        %v2346 = vunpack.c.h.b16 %v463
        %v2347 = vunpack.c.l.b16 %v464
        %v2348 = vunpack.c.h.b16 %v464
        %v2349 = vunpack.c.l.b16 %v465
        %v2350 = vunpack.c.h.b16 %v465
        %v2351 = vunpack.c.l.b16 %v466
        %v2352 = vunpack.c.h.b16 %v466
        %v2353 = vunpack.c.l.b16 %v467
        %v2354 = vunpack.c.h.b16 %v467
        %v2355 = vunpack.c.l.b16 %v468
        %v2356 = vunpack.c.h.b16 %v468
        %v2357 = vunpack.c.l.b16 %v469
        %v2358 = vunpack.c.h.b16 %v469
        %v2359 = vunpack.c.l.b16 %v470
        %v2360 = vunpack.c.h.b16 %v470
        %v2361 = vunpack.c.l.b16 %v471
        %v2362 = vunpack.c.h.b16 %v471
        %v2363 = vunpack.c.l.b16 %v472
        %v2364 = vunpack.c.h.b16 %v472
        %v2365 = vunpack.c.l.b16 %v473
        %v2366 = vunpack.c.h.b16 %v473
        %v2367 = vunpack.c.l.b16 %v474
        %v2368 = vunpack.c.h.b16 %v474
        %v2369 = vunpack.c.l.b16 %v475
        %v2370 = vunpack.c.h.b16 %v475
        %v2371 = vunpack.c.l.b16 %v476
        %v2372 = vunpack.c.h.b16 %v476
        %v2373 = vunpack.c.l.b16 %v477
        %v2374 = vunpack.c.h.b16 %v477
        %v2375 = vunpack.c.l.b16 %v478
        %v2376 = vunpack.c.h.b16 %v478
        %v2377 = vunpack.c.l.b16 %v479
        %v2378 = vunpack.c.h.b16 %v479
        %v2379 = vunpack.c.l.b16 %v480
        %v2380 = vunpack.c.h.b16 %v480
        %v2381 = vunpack.c.l.b16 %v481
        %v2382 = vunpack.c.h.b16 %v481
        %v2383 = vunpack.c.l.b16 %v482
        %v2384 = vunpack.c.h.b16 %v482
        %v2385 = vunpack.c.l.b16 %v483
        %v2386 = vunpack.c.h.b16 %v483
        %v2387 = vunpack.c.l.b16 %v484
        %v2388 = vunpack.c.h.b16 %v484
        %v2389 = vunpack.c.l.b16 %v485
        %v2390 = vunpack.c.h.b16 %v485
        %v2391 = vunpack.c.l.b16 %v486
        %v2392 = vunpack.c.h.b16 %v486
        %v2393 = vunpack.c.l.b16 %v487
        %v2394 = vunpack.c.h.b16 %v487
        %v2395 = vunpack.c.l.b16 %v488
        %v2396 = vunpack.c.h.b16 %v488
        %v2397 = vunpack.c.l.b16 %v489
        %v2398 = vunpack.c.h.b16 %v489
        %v2399 = vunpack.c.l.b16 %v490
        %v2400 = vunpack.c.h.b16 %v490
        %v2401 = vunpack.c.l.b16 %v491
        %v2402 = vunpack.c.h.b16 %v491
        %v2403 = vunpack.c.l.b16 %v492
        %v2404 = vunpack.c.h.b16 %v492
        %v2405 = vunpack.c.l.b16 %v493
        %v2406 = vunpack.c.h.b16 %v493
        %v2407 = vunpack.c.l.b16 %v494
        %v2408 = vunpack.c.h.b16 %v494
        %v2409 = vunpack.c.l.b16 %v495
        %v2410 = vunpack.c.h.b16 %v495
        %v2411 = vunpack.c.l.b16 %v496
        %v2412 = vunpack.c.h.b16 %v496
        %v2413 = vunpack.c.l.b16 %v497
        %v2414 = vunpack.c.h.b16 %v497
        %v2415 = vunpack.c.l.b16 %v498
        %v2416 = vunpack.c.h.b16 %v498
        %v2417 = vunpack.c.l.b16 %v499
        %v2418 = vunpack.c.h.b16 %v499
        %v2419 = vunpack.c.l.b16 %v500
        %v2420 = vunpack.c.h.b16 %v500
        %v2421 = vunpack.c.l.b16 %v501
        %v2422 = vunpack.c.h.b16 %v501
        %v2423 = vunpack.c.l.b16 %v502
        %v2424 = vunpack.c.h.b16 %v502
        %v2425 = vunpack.c.l.b16 %v503
        %v2426 = vunpack.c.h.b16 %v503
        %v2427 = vunpack.c.l.b16 %v504
        %v2428 = vunpack.c.h.b16 %v504
        %v2429 = vunpack.c.l.b16 %v505
        %v2430 = vunpack.c.h.b16 %v505
        %v2431 = vunpack.c.l.b16 %v506
        %v2432 = vunpack.c.h.b16 %v506
        %v2433 = vunpack.c.l.b16 %v507
        %v2434 = vunpack.c.h.b16 %v507
        %v2435 = vunpack.c.l.b16 %v508
        %v2436 = vunpack.c.h.b16 %v508
        %v2437 = vunpack.c.l.b16 %v509
        %v2438 = vunpack.c.h.b16 %v509
        %v2439 = vunpack.c.l.b16 %v510
        %v2440 = vunpack.c.h.b16 %v510
        %v2441 = vunpack.c.l.b16 %v511
        %v2442 = vunpack.c.h.b16 %v511
        %v2443 = vunpack.c.l.b16 %v512
        %v2444 = vunpack.c.h.b16 %v512
        %v2445 = vunpack.c.l.b16 %v513
        %v2446 = vunpack.c.h.b16 %v513
        %v2447 = vunpack.c.l.b16 %v514
        %v2448 = vunpack.c.h.b16 %v514
        %v2449 = vunpack.c.l.b16 %v515
        %v2450 = vunpack.c.h.b16 %v515
        %v2451 = vunpack.c.l.b16 %v516
        %v2452 = vunpack.c.h.b16 %v516
        %v2453 = vunpack.c.l.b16 %v517
        %v2454 = vunpack.c.h.b16 %v517
        %v2455 = vunpack.c.l.b16 %v518
        %v2456 = vunpack.c.h.b16 %v518
        %v2457 = vunpack.c.l.b16 %v519
        %v2458 = vunpack.c.h.b16 %v519
        %v2459 = vunpack.c.l.b16 %v520
        %v2460 = vunpack.c.h.b16 %v520
        %v2461 = vunpack.c.l.b16 %v521
        %v2462 = vunpack.c.h.b16 %v521
        %v2463 = vunpack.c.l.b16 %v522
        %v2464 = vunpack.c.h.b16 %v522
        %v2465 = vunpack.c.l.b16 %v523
        %v2466 = vunpack.c.h.b16 %v523
        %v2467 = vunpack.c.l.b16 %v524
        %v2468 = vunpack.c.h.b16 %v524
        %v2469 = vunpack.c.l.b16 %v525
        %v2470 = vunpack.c.h.b16 %v525
        %v2471 = vunpack.c.l.b16 %v526
        %v2472 = vunpack.c.h.b16 %v526
        %v2473 = vunpack.c.l.b16 %v527
        %v2474 = vunpack.c.h.b16 %v527
        %v2475 = vunpack.c.l.b16 %v528
        %v2476 = vunpack.c.h.b16 %v528
        %v2477 = vunpack.c.l.b16 %v529
        %v2478 = vunpack.c.h.b16 %v529
        %v2479 = vunpack.c.l.b16 %v530
        %v2480 = vunpack.c.h.b16 %v530
        %v2481 = vunpack.c.l.b16 %v531
        %v2482 = vunpack.c.h.b16 %v531
        %v2483 = vunpack.c.l.b16 %v532
        %v2484 = vunpack.c.h.b16 %v532
        %v2485 = vunpack.c.l.b16 %v533
        %v2486 = vunpack.c.h.b16 %v533
        %v2487 = vunpack.c.l.b16 %v534
        %v2488 = vunpack.c.h.b16 %v534
        %v2489 = vunpack.c.l.b16 %v535
        %v2490 = vunpack.c.h.b16 %v535
        %v2491 = vunpack.c.l.b16 %v536
        %v2492 = vunpack.c.h.b16 %v536
        %v2493 = vunpack.c.l.b16 %v537
        %v2494 = vunpack.c.h.b16 %v537
        %v2495 = vunpack.c.l.b16 %v538
        %v2496 = vunpack.c.h.b16 %v538
        %v2497 = vunpack.c.l.b16 %v539
        %v2498 = vunpack.c.h.b16 %v539
        %v2499 = vunpack.c.l.b16 %v540
        %v2500 = vunpack.c.h.b16 %v540
        %v2501 = vunpack.c.l.b16 %v541
        %v2502 = vunpack.c.h.b16 %v541
        %v2503 = vunpack.c.l.b16 %v542
        %v2504 = vunpack.c.h.b16 %v542
        %v2505 = vunpack.c.l.b16 %v543
        %v2506 = vunpack.c.h.b16 %v543
        %v2507 = vunpack.c.l.b16 %v544
        %v2508 = vunpack.c.h.b16 %v544
        %v2509 = vunpack.c.l.b16 %v545
        %v2510 = vunpack.c.h.b16 %v545
        %v2511 = vunpack.c.l.b16 %v546
        %v2512 = vunpack.c.h.b16 %v546
        %v2513 = vunpack.c.l.b16 %v547
        %v2514 = vunpack.c.h.b16 %v547
        %v2515 = vunpack.c.l.b16 %v548
        %v2516 = vunpack.c.h.b16 %v548
        %v2517 = vunpack.c.l.b16 %v549
        %v2518 = vunpack.c.h.b16 %v549
        %v2519 = vunpack.c.l.b16 %v550
        %v2520 = vunpack.c.h.b16 %v550
        %v2521 = vunpack.c.l.b16 %v551
        %v2522 = vunpack.c.h.b16 %v551
        %v2523 = vunpack.c.l.b16 %v552
        %v2524 = vunpack.c.h.b16 %v552
        %v2525 = vunpack.c.l.b16 %v553
        %v2526 = vunpack.c.h.b16 %v553
        %v2527 = vunpack.c.l.b16 %v554
        %v2528 = vunpack.c.h.b16 %v554
        %v2529 = vunpack.c.l.b16 %v555
        %v2530 = vunpack.c.h.b16 %v555
        %v2531 = vunpack.c.l.b16 %v556
        %v2532 = vunpack.c.h.b16 %v556
        %v2533 = vunpack.c.l.b16 %v557
        %v2534 = vunpack.c.h.b16 %v557
        %v2535 = vunpack.c.l.b16 %v558
        %v2536 = vunpack.c.h.b16 %v558
        %v2537 = vunpack.c.l.b16 %v559
        %v2538 = vunpack.c.h.b16 %v559
        %v2539 = vunpack.c.l.b16 %v560
        %v2540 = vunpack.c.h.b16 %v560
        %v2541 = vunpack.c.l.b16 %v561
        %v2542 = vunpack.c.h.b16 %v561
        %v2543 = vunpack.c.l.b16 %v562
        %v2544 = vunpack.c.h.b16 %v562
        %v2545 = vunpack.c.l.b16 %v563
        %v2546 = vunpack.c.h.b16 %v563
        %v2547 = vunpack.c.l.b16 %v564
        %v2548 = vunpack.c.h.b16 %v564
        %v2549 = vunpack.c.l.b16 %v565
        %v2550 = vunpack.c.h.b16 %v565
        %v2551 = vunpack.c.l.b16 %v566
        %v2552 = vunpack.c.h.b16 %v566
        %v2553 = vunpack.c.l.b16 %v567
        %v2554 = vunpack.c.h.b16 %v567
        %v2555 = vunpack.c.l.b16 %v568
        %v2556 = vunpack.c.h.b16 %v568
        %v2557 = vunpack.c.l.b16 %v569
        %v2558 = vunpack.c.h.b16 %v569
        %v2559 = vunpack.c.l.b16 %v570
        %v2560 = vunpack.c.h.b16 %v570
        %v2561 = vunpack.c.l.b16 %v571
        %v2562 = vunpack.c.h.b16 %v571
        %v2563 = vunpack.c.l.b16 %v572
        %v2564 = vunpack.c.h.b16 %v572
        %v2565 = vunpack.c.l.b16 %v573
        %v2566 = vunpack.c.h.b16 %v573
        %v2567 = vunpack.c.l.b16 %v574
        %v2568 = vunpack.c.h.b16 %v574
        %v2569 = vunpack.c.l.b16 %v575
        %v2570 = vunpack.c.h.b16 %v575
        %v2571 = vunpack.c.l.b16 %v576
        %v2572 = vunpack.c.h.b16 %v576
        %v2573 = vunpack.c.l.b16 %v577
        %v2574 = vunpack.c.h.b16 %v577
        %v2575 = vunpack.c.l.b16 %v578
        %v2576 = vunpack.c.h.b16 %v578
        %v2577 = vunpack.c.l.b16 %v579
        %v2578 = vunpack.c.h.b16 %v579
        %v2579 = vunpack.c.l.b16 %v580
        %v2580 = vunpack.c.h.b16 %v580
        %v2581 = vunpack.c.l.b16 %v581
        %v2582 = vunpack.c.h.b16 %v581
        %v2583 = vunpack.c.l.b16 %v582
        %v2584 = vunpack.c.h.b16 %v582
        %v2585 = vunpack.c.l.b16 %v583
        %v2586 = vunpack.c.h.b16 %v583
        %v2587 = vunpack.c.l.b16 %v584
        %v2588 = vunpack.c.h.b16 %v584
        %v2589 = vunpack.c.l.b16 %v585
        %v2590 = vunpack.c.h.b16 %v585
        %v2591 = vunpack.c.l.b16 %v586
        %v2592 = vunpack.c.h.b16 %v586
        %v2593 = vunpack.c.l.b16 %v587
        %v2594 = vunpack.c.h.b16 %v587
        %v2595 = vunpack.c.l.b16 %v588
        %v2596 = vunpack.c.h.b16 %v588
        %v2597 = vunpack.c.l.b16 %v589
        %v2598 = vunpack.c.h.b16 %v589
        %v2599 = vunpack.c.l.b16 %v590
        %v2600 = vunpack.c.h.b16 %v590
        %v2601 = vunpack.c.l.b16 %v591
        %v2602 = vunpack.c.h.b16 %v591
        %v2603 = vunpack.c.l.b16 %v592
        %v2604 = vunpack.c.h.b16 %v592
        %v2605 = vunpack.c.l.b16 %v593
        %v2606 = vunpack.c.h.b16 %v593
        %v2607 = vunpack.c.l.b16 %v594
        %v2608 = vunpack.c.h.b16 %v594
        %v2609 = vunpack.c.l.b16 %v595
        %v2610 = vunpack.c.h.b16 %v595
        %v2611 = vunpack.c.l.b16 %v596
        %v2612 = vunpack.c.h.b16 %v596
        %v2613 = vunpack.c.l.b16 %v597
        %v2614 = vunpack.c.h.b16 %v597
        %v2615 = vunpack.c.l.b16 %v598
        %v2616 = vunpack.c.h.b16 %v598
        %v2617 = vunpack.c.l.b16 %v599
        %v2618 = vunpack.c.h.b16 %v599
        %v2619 = vunpack.c.l.b16 %v600
        %v2620 = vunpack.c.h.b16 %v600
        %v2621 = vunpack.c.l.b16 %v601
        %v2622 = vunpack.c.h.b16 %v601
        %v2623 = vunpack.c.l.b16 %v602
        %v2624 = vunpack.c.h.b16 %v602
        %v2625 = vunpack.c.l.b16 %v603
        %v2626 = vunpack.c.h.b16 %v603
        %v2627 = vunpack.c.l.b16 %v604
        %v2628 = vunpack.c.h.b16 %v604
        %v2629 = vunpack.c.l.b16 %v605
        %v2630 = vunpack.c.h.b16 %v605
        %v2631 = vunpack.c.l.b16 %v606
        %v2632 = vunpack.c.h.b16 %v606
        %v2633 = vunpack.c.l.b16 %v607
        %v2634 = vunpack.c.h.b16 %v607
        %v2635 = vunpack.c.l.b16 %v608
        %v2636 = vunpack.c.h.b16 %v608
        %v2637 = vunpack.c.l.b16 %v609
        %v2638 = vunpack.c.h.b16 %v609
        %v2639 = vunpack.c.l.b16 %v610
        %v2640 = vunpack.c.h.b16 %v610
        %v2641 = vunpack.c.l.b16 %v611
        %v2642 = vunpack.c.h.b16 %v611
        %v2643 = vunpack.c.l.b16 %v612
        %v2644 = vunpack.c.h.b16 %v612
        %v2645 = vunpack.c.l.b16 %v613
        %v2646 = vunpack.c.h.b16 %v613
        %v2647 = vunpack.c.l.b16 %v614
        %v2648 = vunpack.c.h.b16 %v614
        %v2649 = vunpack.c.l.b16 %v615
        %v2650 = vunpack.c.h.b16 %v615
        %v2651 = vunpack.c.l.b16 %v616
        %v2652 = vunpack.c.h.b16 %v616
        %v2653 = vunpack.c.l.b16 %v617
        %v2654 = vunpack.c.h.b16 %v617
        %v2655 = vunpack.c.l.b16 %v618
        %v2656 = vunpack.c.h.b16 %v618
        %v2657 = vunpack.c.l.b16 %v619
        %v2658 = vunpack.c.h.b16 %v619
        %v2659 = vunpack.c.l.b16 %v620
        %v2660 = vunpack.c.h.b16 %v620
        %v2661 = vunpack.c.l.b16 %v621
        %v2662 = vunpack.c.h.b16 %v621
        %v2663 = vunpack.c.l.b16 %v622
        %v2664 = vunpack.c.h.b16 %v622
        %v2665 = vunpack.c.l.b16 %v623
        %v2666 = vunpack.c.h.b16 %v623
        %v2667 = vunpack.c.l.b16 %v624
        %v2668 = vunpack.c.h.b16 %v624
        %v2669 = vunpack.c.l.b16 %v625
        %v2670 = vunpack.c.h.b16 %v625
        %v2671 = vunpack.c.l.b16 %v626
        %v2672 = vunpack.c.h.b16 %v626
        %v2673 = vunpack.c.l.b16 %v627
        %v2674 = vunpack.c.h.b16 %v627
        %v2675 = vunpack.c.l.b16 %v628
        %v2676 = vunpack.c.h.b16 %v628
        %v2677 = vunpack.c.l.b16 %v629
        %v2678 = vunpack.c.h.b16 %v629
        %v2679 = vunpack.c.l.b16 %v630
        %v2680 = vunpack.c.h.b16 %v630
        %v2681 = vunpack.c.l.b16 %v631
        %v2682 = vunpack.c.h.b16 %v631
        %v2683 = vunpack.c.l.b16 %v632
        %v2684 = vunpack.c.h.b16 %v632
        %v2685 = vunpack.c.l.b16 %v633
        %v2686 = vunpack.c.h.b16 %v633
        %v2687 = vunpack.c.l.b16 %v634
        %v2688 = vunpack.c.h.b16 %v634
        %v2689 = vunpack.c.l.b16 %v635
        %v2690 = vunpack.c.h.b16 %v635
        %v2691 = vunpack.c.l.b16 %v636
        %v2692 = vunpack.c.h.b16 %v636
        %v2693 = vunpack.c.l.b16 %v637
        %v2694 = vunpack.c.h.b16 %v637
        %v2695 = vunpack.c.l.b16 %v638
        %v2696 = vunpack.c.h.b16 %v638
        %v2697 = vunpack.c.l.b16 %v639
        %v2698 = vunpack.c.h.b16 %v639
        %v2699 = vunpack.c.l.b16 %v640
        %v2700 = vunpack.c.h.b16 %v640
        %v2701 = vunpack.c.l.b16 %v641
        %v2702 = vunpack.c.h.b16 %v641
        %v2703 = vunpack.c.l.b16 %v642
        %v2704 = vunpack.c.h.b16 %v642
        %v2705 = vunpack.c.l.b16 %v643
        %v2706 = vunpack.c.h.b16 %v643
        %v2707 = vunpack.c.l.b16 %v644
        %v2708 = vunpack.c.h.b16 %v644
        %v2709 = vunpack.c.l.b16 %v645
        %v2710 = vunpack.c.h.b16 %v645
        %v2711 = vunpack.c.l.b16 %v646
        %v2712 = vunpack.c.h.b16 %v646
        %v2713 = vunpack.c.l.b16 %v647
        %v2714 = vunpack.c.h.b16 %v647
        %v2715 = vunpack.c.l.b16 %v648
        %v2716 = vunpack.c.h.b16 %v648
        %v2717 = vunpack.c.l.b16 %v649
        %v2718 = vunpack.c.h.b16 %v649
        %v2719 = vunpack.c.l.b16 %v650
        %v2720 = vunpack.c.h.b16 %v650
        %v2721 = vunpack.c.l.b16 %v651
        %v2722 = vunpack.c.h.b16 %v651
        %v2723 = vunpack.c.l.b16 %v652
        %v2724 = vunpack.c.h.b16 %v652
        %v2725 = vunpack.c.l.b16 %v653
        %v2726 = vunpack.c.h.b16 %v653
        %v2727 = vunpack.c.l.b16 %v654
        %v2728 = vunpack.c.h.b16 %v654
        %v2729 = vunpack.c.l.b16 %v655
        %v2730 = vunpack.c.h.b16 %v655
        %v2731 = vunpack.c.l.b16 %v656
        %v2732 = vunpack.c.h.b16 %v656
        %v2733 = vunpack.c.l.b16 %v657
        %v2734 = vunpack.c.h.b16 %v657
        %v2735 = vunpack.c.l.b16 %v658
        %v2736 = vunpack.c.h.b16 %v658
        %v2737 = vunpack.c.l.b16 %v659
        %v2738 = vunpack.c.h.b16 %v659
        %v2739 = vunpack.c.l.b16 %v660
        %v2740 = vunpack.c.h.b16 %v660
        %v2741 = vunpack.c.l.b16 %v661
        %v2742 = vunpack.c.h.b16 %v661
        %v2743 = vunpack.c.l.b16 %v662
        %v2744 = vunpack.c.h.b16 %v662
        %v2745 = vunpack.c.l.b16 %v663
        %v2746 = vunpack.c.h.b16 %v663
        %v2747 = vunpack.c.l.b16 %v664
        %v2748 = vunpack.c.h.b16 %v664
        %v2749 = vunpack.c.l.b16 %v665
        %v2750 = vunpack.c.h.b16 %v665
        %v2751 = vunpack.c.l.b16 %v666
        %v2752 = vunpack.c.h.b16 %v666
        %v2753 = vunpack.c.l.b16 %v667
        %v2754 = vunpack.c.h.b16 %v667
        %v2755 = vunpack.c.l.b16 %v668
        %v2756 = vunpack.c.h.b16 %v668
        %v2757 = vunpack.c.l.b16 %v669
        %v2758 = vunpack.c.h.b16 %v669
        %v2759 = vunpack.c.l.b16 %v670
        %v2760 = vunpack.c.h.b16 %v670
        %v2761 = vunpack.c.l.b16 %v671
        %v2762 = vunpack.c.h.b16 %v671
        %v2763 = vunpack.c.l.b16 %v672
        %v2764 = vunpack.c.h.b16 %v672
        %v2765 = vunpack.c.l.b16 %v673
        %v2766 = vunpack.c.h.b16 %v673
        %v2767 = vunpack.c.l.b16 %v674
        %v2768 = vunpack.c.h.b16 %v674
        %v2769 = vunpack.c.l.b16 %v675
        %v2770 = vunpack.c.h.b16 %v675
        %v2771 = vunpack.c.l.b16 %v676
        %v2772 = vunpack.c.h.b16 %v676
        %v2773 = vunpack.c.l.b16 %v677
        %v2774 = vunpack.c.h.b16 %v677
        %v2775 = vunpack.c.l.b16 %v678
        %v2776 = vunpack.c.h.b16 %v678
        %v2777 = vunpack.c.l.b16 %v679
        %v2778 = vunpack.c.h.b16 %v679
        %v2779 = vunpack.c.l.b16 %v680
        %v2780 = vunpack.c.h.b16 %v680
        %v2781 = vunpack.c.l.b16 %v681
        %v2782 = vunpack.c.h.b16 %v681
        %v2783 = vunpack.c.l.b16 %v682
        %v2784 = vunpack.c.h.b16 %v682
        %v2785 = vunpack.c.l.b16 %v683
        %v2786 = vunpack.c.h.b16 %v683
        %v2787 = vunpack.c.l.b16 %v684
        %v2788 = vunpack.c.h.b16 %v684
        %v2789 = vunpack.c.l.b16 %v685
        %v2790 = vunpack.c.h.b16 %v685
        %v2791 = vunpack.c.l.b16 %v686
        %v2792 = vunpack.c.h.b16 %v686
        %v2793 = vunpack.c.l.b16 %v687
        %v2794 = vunpack.c.h.b16 %v687
        %v2795 = vunpack.c.l.b16 %v688
        %v2796 = vunpack.c.h.b16 %v688
        %v2797 = vunpack.c.l.b16 %v689
        %v2798 = vunpack.c.h.b16 %v689
        %v2799 = vunpack.c.l.b16 %v690
        %v2800 = vunpack.c.h.b16 %v690
        %v2801 = vunpack.c.l.b16 %v691
        %v2802 = vunpack.c.h.b16 %v691
        %v2803 = vunpack.c.l.b16 %v692
        %v2804 = vunpack.c.h.b16 %v692
        %v2805 = vunpack.c.l.b16 %v693
        %v2806 = vunpack.c.h.b16 %v693
        %v2807 = vunpack.c.l.b16 %v694
        %v2808 = vunpack.c.h.b16 %v694
        %v2809 = vunpack.c.l.b16 %v695
        %v2810 = vunpack.c.h.b16 %v695
        %v2811 = vunpack.c.l.b16 %v696
        %v2812 = vunpack.c.h.b16 %v696
        %v2813 = vunpack.c.l.b16 %v697
        %v2814 = vunpack.c.h.b16 %v697
        %v2815 = vunpack.c.l.b16 %v698
        %v2816 = vunpack.c.h.b16 %v698
        %v2817 = vunpack.c.l.b16 %v699
        %v2818 = vunpack.c.h.b16 %v699
        %v2819 = vunpack.c.l.b16 %v700
        %v2820 = vunpack.c.h.b16 %v700
        %v2821 = vunpack.c.l.b16 %v701
        %v2822 = vunpack.c.h.b16 %v701
        %v2823 = vunpack.c.l.b16 %v702
        %v2824 = vunpack.c.h.b16 %v702
        %v2825 = vunpack.c.l.b16 %v703
        %v2826 = vunpack.c.h.b16 %v703
        %v2827 = vunpack.c.l.b16 %v704
        %v2828 = vunpack.c.h.b16 %v704
        %v2829 = vunpack.c.l.b16 %v705
        %v2830 = vunpack.c.h.b16 %v705
        %v2831 = vunpack.c.l.b16 %v706
        %v2832 = vunpack.c.h.b16 %v706
        %v2833 = vunpack.c.l.b16 %v707
        %v2834 = vunpack.c.h.b16 %v707
        %v2835 = vunpack.c.l.b16 %v708
        %v2836 = vunpack.c.h.b16 %v708
        %v2837 = vunpack.c.l.b16 %v709
        %v2838 = vunpack.c.h.b16 %v709
        %v2839 = vunpack.c.l.b16 %v710
        %v2840 = vunpack.c.h.b16 %v710
        %v2841 = vunpack.c.l.b16 %v711
        %v2842 = vunpack.c.h.b16 %v711
        %v2843 = vunpack.c.l.b16 %v712
        %v2844 = vunpack.c.h.b16 %v712
        %v2845 = vunpack.c.l.b16 %v713
        %v2846 = vunpack.c.h.b16 %v713
        %v2847 = vunpack.c.l.b16 %v714
        %v2848 = vunpack.c.h.b16 %v714
        %v2849 = vunpack.c.l.b16 %v715
        %v2850 = vunpack.c.h.b16 %v715
        %v2851 = vunpack.c.l.b16 %v716
        %v2852 = vunpack.c.h.b16 %v716
        %v2853 = vunpack.c.l.b16 %v717
        %v2854 = vunpack.c.h.b16 %v717
        %v2855 = vunpack.c.l.b16 %v718
        %v2856 = vunpack.c.h.b16 %v718
        %v2857 = vunpack.c.l.b16 %v719
        %v2858 = vunpack.c.h.b16 %v719
        %v2859 = vunpack.c.l.b16 %v720
        %v2860 = vunpack.c.h.b16 %v720
        %v2861 = vunpack.c.l.b16 %v721
        %v2862 = vunpack.c.h.b16 %v721
        %v2863 = vunpack.c.l.b16 %v722
        %v2864 = vunpack.c.h.b16 %v722
        %v2865 = vunpack.c.l.b16 %v723
        %v2866 = vunpack.c.h.b16 %v723
        %v2867 = vunpack.c.l.b16 %v724
        %v2868 = vunpack.c.h.b16 %v724
        %v2869 = vunpack.c.l.b16 %v725
        %v2870 = vunpack.c.h.b16 %v725
        %v2871 = vunpack.c.l.b16 %v726
        %v2872 = vunpack.c.h.b16 %v726
        %v2873 = vunpack.c.l.b16 %v727
        %v2874 = vunpack.c.h.b16 %v727
        %v2875 = vunpack.c.l.b16 %v728
        %v2876 = vunpack.c.h.b16 %v728
        %v2877 = vunpack.c.l.b16 %v729
        %v2878 = vunpack.c.h.b16 %v729
        %v2879 = vunpack.c.l.b16 %v730
        %v2880 = vunpack.c.h.b16 %v730
        %v2881 = vunpack.c.l.b16 %v731
        %v2882 = vunpack.c.h.b16 %v731
        %v2883 = vunpack.c.l.b16 %v732
        %v2884 = vunpack.c.h.b16 %v732
        %v2885 = vunpack.c.l.b16 %v733
        %v2886 = vunpack.c.h.b16 %v733
        %v2887 = vunpack.c.l.b16 %v734
        %v2888 = vunpack.c.h.b16 %v734
        %v2889 = vunpack.c.l.b16 %v735
        %v2890 = vunpack.c.h.b16 %v735
        %v2891 = vunpack.c.l.b16 %v736
        %v2892 = vunpack.c.h.b16 %v736
        %v2893 = vunpack.c.l.b16 %v737
        %v2894 = vunpack.c.h.b16 %v737
        %v2895 = vunpack.c.l.b16 %v738
        %v2896 = vunpack.c.h.b16 %v738
        %v2897 = vunpack.c.l.b16 %v739
        %v2898 = vunpack.c.h.b16 %v739
        %v2899 = vunpack.c.l.b16 %v740
        %v2900 = vunpack.c.h.b16 %v740
        %v2901 = vunpack.c.l.b16 %v741
        %v2902 = vunpack.c.h.b16 %v741
        %v2903 = vunpack.c.l.b16 %v742
        %v2904 = vunpack.c.h.b16 %v742
        %v2905 = vunpack.c.l.b16 %v743
        %v2906 = vunpack.c.h.b16 %v743
        %v2907 = vunpack.c.l.b16 %v744
        %v2908 = vunpack.c.h.b16 %v744
        %v2909 = vunpack.c.l.b16 %v745
        %v2910 = vunpack.c.h.b16 %v745
        %v2911 = vunpack.c.l.b16 %v746
        %v2912 = vunpack.c.h.b16 %v746
        %v2913 = vunpack.c.l.b16 %v747
        %v2914 = vunpack.c.h.b16 %v747
        %v2915 = vunpack.c.l.b16 %v748
        %v2916 = vunpack.c.h.b16 %v748
        %v2917 = vunpack.c.l.b16 %v749
        %v2918 = vunpack.c.h.b16 %v749
        %v2919 = vunpack.c.l.b16 %v750
        %v2920 = vunpack.c.h.b16 %v750
        %v2921 = vunpack.c.l.b16 %v751
        %v2922 = vunpack.c.h.b16 %v751
        %v2923 = vunpack.c.l.b16 %v752
        %v2924 = vunpack.c.h.b16 %v752
        %v2925 = vunpack.c.l.b16 %v753
        %v2926 = vunpack.c.h.b16 %v753
        %v2927 = vunpack.c.l.b16 %v754
        %v2928 = vunpack.c.h.b16 %v754
        %v2929 = vunpack.c.l.b16 %v755
        %v2930 = vunpack.c.h.b16 %v755
        %v2931 = vunpack.c.l.b16 %v756
        %v2932 = vunpack.c.h.b16 %v756
        %v2933 = vunpack.c.l.b16 %v757
        %v2934 = vunpack.c.h.b16 %v757
        %v2935 = vunpack.c.l.b16 %v758
        %v2936 = vunpack.c.h.b16 %v758
        %v2937 = vunpack.c.l.b16 %v759
        %v2938 = vunpack.c.h.b16 %v759
        %v2939 = vunpack.c.l.b16 %v760
        %v2940 = vunpack.c.h.b16 %v760
        %v2941 = vunpack.c.l.b16 %v761
        %v2942 = vunpack.c.h.b16 %v761
        %v2943 = vunpack.c.l.b16 %v762
        %v2944 = vunpack.c.h.b16 %v762
        %v2945 = vunpack.c.l.b16 %v763
        %v2946 = vunpack.c.h.b16 %v763
        %v2947 = vunpack.c.l.b16 %v764
        %v2948 = vunpack.c.h.b16 %v764
        %v2949 = vunpack.c.l.b16 %v765
        %v2950 = vunpack.c.h.b16 %v765
        %v2951 = vunpack.c.l.b16 %v766
        %v2952 = vunpack.c.h.b16 %v766
        %v2953 = vunpack.c.l.b16 %v767
        %v2954 = vunpack.c.h.b16 %v767
        %v2955 = vunpack.c.l.b16 %v768
        %v2956 = vunpack.c.h.b16 %v768
        %v2957 = vunpack.c.l.b16 %v769
        %v2958 = vunpack.c.h.b16 %v769
        %v2959 = vunpack.c.l.b16 %v770
        %v2960 = vunpack.c.h.b16 %v770
        %v2961 = vunpack.c.l.b16 %v771
        %v2962 = vunpack.c.h.b16 %v771
        %v2963 = vunpack.c.l.b16 %v772
        %v2964 = vunpack.c.h.b16 %v772
        %v2965 = vunpack.c.l.b16 %v773
        %v2966 = vunpack.c.h.b16 %v773
        %v2967 = vunpack.c.l.b16 %v774
        %v2968 = vunpack.c.h.b16 %v774
        %v2969 = vunpack.c.l.b16 %v775
        %v2970 = vunpack.c.h.b16 %v775
        %v2971 = vunpack.c.l.b16 %v776
        %v2972 = vunpack.c.h.b16 %v776
        %v2973 = vunpack.c.l.b16 %v777
        %v2974 = vunpack.c.h.b16 %v777
        %v2975 = vunpack.c.l.b16 %v778
        %v2976 = vunpack.c.h.b16 %v778
        %v2977 = vunpack.c.l.b16 %v779
        %v2978 = vunpack.c.h.b16 %v779
        %v2979 = vunpack.c.l.b16 %v780
        %v2980 = vunpack.c.h.b16 %v780
        %v2981 = vunpack.c.l.b16 %v781
        %v2982 = vunpack.c.h.b16 %v781
        %v2983 = vunpack.c.l.b16 %v782
        %v2984 = vunpack.c.h.b16 %v782
        %v2985 = vunpack.c.l.b16 %v783
        %v2986 = vunpack.c.h.b16 %v783
        %v2987 = vunpack.c.l.b16 %v784
        %v2988 = vunpack.c.h.b16 %v784
        %v2989 = vunpack.c.l.b16 %v785
        %v2990 = vunpack.c.h.b16 %v785
        %v2991 = vunpack.c.l.b16 %v786
        %v2992 = vunpack.c.h.b16 %v786
        %v2993 = vunpack.c.l.b16 %v787
        %v2994 = vunpack.c.h.b16 %v787
        %v2995 = vunpack.c.l.b16 %v788
        %v2996 = vunpack.c.h.b16 %v788
        %v2997 = vunpack.c.l.b16 %v789
        %v2998 = vunpack.c.h.b16 %v789
        %v2999 = vunpack.c.l.b16 %v790
        %v3000 = vunpack.c.h.b16 %v790
        %v3001 = vunpack.c.l.b16 %v791
        %v3002 = vunpack.c.h.b16 %v791
        %v3003 = vunpack.c.l.b16 %v792
        %v3004 = vunpack.c.h.b16 %v792
        %v3005 = vunpack.c.l.b16 %v793
        %v3006 = vunpack.c.h.b16 %v793
        %v3007 = vunpack.c.l.b16 %v794
        %v3008 = vunpack.c.h.b16 %v794
        %v3009 = vunpack.c.l.b16 %v795
        %v3010 = vunpack.c.h.b16 %v795
        %v3011 = vunpack.c.l.b16 %v796
        %v3012 = vunpack.c.h.b16 %v796
        %v3013 = vunpack.c.l.b16 %v797
        %v3014 = vunpack.c.h.b16 %v797
        %v3015 = vunpack.c.l.b16 %v798
        %v3016 = vunpack.c.h.b16 %v798
        %v3017 = vunpack.c.l.b16 %v799
        %v3018 = vunpack.c.h.b16 %v799
        %v3019 = vunpack.c.l.b16 %v800
        %v3020 = vunpack.c.h.b16 %v800
        %v3021 = vunpack.c.l.b16 %v801
        %v3022 = vunpack.c.h.b16 %v801
        %v3023 = vunpack.c.l.b16 %v802
        %v3024 = vunpack.c.h.b16 %v802
        %v3025 = vunpack.c.l.b16 %v803
        %v3026 = vunpack.c.h.b16 %v803
        %v3027 = vunpack.c.l.b16 %v804
        %v3028 = vunpack.c.h.b16 %v804
        %v3029 = vunpack.c.l.b16 %v805
        %v3030 = vunpack.c.h.b16 %v805
        %v3031 = vunpack.c.l.b16 %v806
        %v3032 = vunpack.c.h.b16 %v806
        %v3033 = vunpack.c.l.b16 %v807
        %v3034 = vunpack.c.h.b16 %v807
        %v3035 = vunpack.c.l.b16 %v808
        %v3036 = vunpack.c.h.b16 %v808
        %v3037 = vunpack.c.l.b16 %v809
        %v3038 = vunpack.c.h.b16 %v809
        %v3039 = vunpack.c.l.b16 %v810
        %v3040 = vunpack.c.h.b16 %v810
        %v3041 = vunpack.c.l.b16 %v811
        %v3042 = vunpack.c.h.b16 %v811
        %v3043 = vunpack.c.l.b16 %v812
        %v3044 = vunpack.c.h.b16 %v812
        %v3045 = vunpack.c.l.b16 %v813
        %v3046 = vunpack.c.h.b16 %v813
        %v3047 = vunpack.c.l.b16 %v814
        %v3048 = vunpack.c.h.b16 %v814
        %v3049 = vunpack.c.l.b16 %v815
        %v3050 = vunpack.c.h.b16 %v815
        %v3051 = vunpack.c.l.b16 %v816
        %v3052 = vunpack.c.h.b16 %v816
        %v3053 = vunpack.c.l.b16 %v817
        %v3054 = vunpack.c.h.b16 %v817
        %v3055 = vunpack.c.l.b16 %v818
        %v3056 = vunpack.c.h.b16 %v818
        %v3057 = vunpack.c.l.b16 %v819
        %v3058 = vunpack.c.h.b16 %v819
        %v3059 = vunpack.c.l.b16 %v820
        %v3060 = vunpack.c.h.b16 %v820
        %v3061 = vunpack.c.l.b16 %v821
        %v3062 = vunpack.c.h.b16 %v821
        %v3063 = vunpack.c.l.b16 %v822
        %v3064 = vunpack.c.h.b16 %v822
        %v3065 = vunpack.c.l.b16 %v823
        %v3066 = vunpack.c.h.b16 %v823
        %v3067 = vunpack.c.l.b16 %v824
        %v3068 = vunpack.c.h.b16 %v824
        %v3069 = vunpack.c.l.b16 %v825
        %v3070 = vunpack.c.h.b16 %v825
        %v3071 = vunpack.c.l.b16 %v826
        %v3072 = vunpack.c.h.b16 %v826
        %v3073 = vunpack.c.l.b16 %v827
        %v3074 = vunpack.c.h.b16 %v827
        %v3075 = vunpack.c.l.b16 %v828
        %v3076 = vunpack.c.h.b16 %v828
        %v3077 = vunpack.c.l.b16 %v829
        %v3078 = vunpack.c.h.b16 %v829
        %v3079 = vunpack.c.l.b16 %v830
        %v3080 = vunpack.c.h.b16 %v830
        %v3081 = vunpack.c.l.b16 %v831
        %v3082 = vunpack.c.h.b16 %v831
        %v3083 = vunpack.c.l.b16 %v832
        %v3084 = vunpack.c.h.b16 %v832
        %v3085 = vunpack.c.l.b16 %v833
        %v3086 = vunpack.c.h.b16 %v833
        %v3087 = vunpack.c.l.b16 %v834
        %v3088 = vunpack.c.h.b16 %v834
        %v3089 = vunpack.c.l.b16 %v835
        %v3090 = vunpack.c.h.b16 %v835
        %v3091 = vunpack.c.l.b16 %v836
        %v3092 = vunpack.c.h.b16 %v836
        %v3093 = vunpack.c.l.b16 %v837
        %v3094 = vunpack.c.h.b16 %v837
        %v3095 = vunpack.c.l.b16 %v838
        %v3096 = vunpack.c.h.b16 %v838
        %v3097 = vunpack.c.l.b16 %v839
        %v3098 = vunpack.c.h.b16 %v839
        %v3099 = vunpack.c.l.b16 %v840
        %v3100 = vunpack.c.h.b16 %v840
        %v3101 = vunpack.c.l.b16 %v841
        %v3102 = vunpack.c.h.b16 %v841
        %v3103 = vunpack.c.l.b16 %v842
        %v3104 = vunpack.c.h.b16 %v842
        %v3105 = vunpack.c.l.b16 %v843
        %v3106 = vunpack.c.h.b16 %v843
        %v3107 = vunpack.c.l.b16 %v844
        %v3108 = vunpack.c.h.b16 %v844
        %v3109 = vunpack.c.l.b16 %v845
        %v3110 = vunpack.c.h.b16 %v845
        %v3111 = vunpack.c.l.b16 %v846
        %v3112 = vunpack.c.h.b16 %v846
        %v3113 = vunpack.c.l.b16 %v847
        %v3114 = vunpack.c.h.b16 %v847
        %v3115 = vunpack.c.l.b16 %v848
        %v3116 = vunpack.c.h.b16 %v848
        %v3117 = vunpack.c.l.b16 %v849
        %v3118 = vunpack.c.h.b16 %v849
        %v3119 = vunpack.c.l.b16 %v850
        %v3120 = vunpack.c.h.b16 %v850
        %v3121 = vunpack.c.l.b16 %v851
        %v3122 = vunpack.c.h.b16 %v851
        %v3123 = vunpack.c.l.b16 %v852
        %v3124 = vunpack.c.h.b16 %v852
        %v3125 = vunpack.c.l.b16 %v853
        %v3126 = vunpack.c.h.b16 %v853
        %v3127 = vunpack.c.l.b16 %v854
        %v3128 = vunpack.c.h.b16 %v854
        %v3129 = vunpack.c.l.b16 %v855
        %v3130 = vunpack.c.h.b16 %v855
        %v3131 = vunpack.c.l.b16 %v856
        %v3132 = vunpack.c.h.b16 %v856
        %v3133 = vunpack.c.l.b16 %v857
        %v3134 = vunpack.c.h.b16 %v857
        %v3135 = vunpack.c.l.b16 %v858
        %v3136 = vunpack.c.h.b16 %v858
        %v3137 = vunpack.c.l.b16 %v859
        %v3138 = vunpack.c.h.b16 %v859
        %v3139 = vunpack.c.l.b16 %v860
        %v3140 = vunpack.c.h.b16 %v860
        %v3141 = vunpack.c.l.b16 %v861
        %v3142 = vunpack.c.h.b16 %v861
        %v3143 = vunpack.c.l.b16 %v862
        %v3144 = vunpack.c.h.b16 %v862
        %v3145 = vunpack.c.l.b16 %v863
        %v3146 = vunpack.c.h.b16 %v863
        %v3147 = vunpack.c.l.b16 %v864
        %v3148 = vunpack.c.h.b16 %v864
        %v3149 = vunpack.c.l.b16 %v865
        %v3150 = vunpack.c.h.b16 %v865
        %v3151 = vunpack.c.l.b16 %v866
        %v3152 = vunpack.c.h.b16 %v866
        %v3153 = vunpack.c.l.b16 %v867
        %v3154 = vunpack.c.h.b16 %v867
        %v3155 = vunpack.c.l.b16 %v868
        %v3156 = vunpack.c.h.b16 %v868
        %v3157 = vunpack.c.l.b16 %v869
        %v3158 = vunpack.c.h.b16 %v869
        %v3159 = vunpack.c.l.b16 %v870
        %v3160 = vunpack.c.h.b16 %v870
        %v3161 = vunpack.c.l.b16 %v871
        %v3162 = vunpack.c.h.b16 %v871
        %v3163 = vunpack.c.l.b16 %v872
        %v3164 = vunpack.c.h.b16 %v872
        %v3165 = vunpack.c.l.b16 %v873
        %v3166 = vunpack.c.h.b16 %v873
        %v3167 = vunpack.c.l.b16 %v874
        %v3168 = vunpack.c.h.b16 %v874
        %v3169 = vunpack.c.l.b16 %v875
        %v3170 = vunpack.c.h.b16 %v875
        %v3171 = vunpack.c.l.b16 %v876
        %v3172 = vunpack.c.h.b16 %v876
        %v3173 = vunpack.c.l.b16 %v877
        %v3174 = vunpack.c.h.b16 %v877
        %v3175 = vunpack.c.l.b16 %v878
        %v3176 = vunpack.c.h.b16 %v878
        %v3177 = vunpack.c.l.b16 %v879
        %v3178 = vunpack.c.h.b16 %v879
        %v3179 = vunpack.c.l.b16 %v880
        %v3180 = vunpack.c.h.b16 %v880
        %v3181 = vunpack.c.l.b16 %v881
        %v3182 = vunpack.c.h.b16 %v881
        %v3183 = vunpack.c.l.b16 %v882
        %v3184 = vunpack.c.h.b16 %v882
        %v3185 = vunpack.c.l.b16 %v883
        %v3186 = vunpack.c.h.b16 %v883
        %v3187 = vunpack.c.l.b16 %v884
        %v3188 = vunpack.c.h.b16 %v884
        %v3189 = vunpack.c.l.b16 %v885
        %v3190 = vunpack.c.h.b16 %v885
        %v3191 = vunpack.c.l.b16 %v886
        %v3192 = vunpack.c.h.b16 %v886
        %v3193 = vunpack.c.l.b16 %v887
        %v3194 = vunpack.c.h.b16 %v887
        %v3195 = vunpack.c.l.b16 %v888
        %v3196 = vunpack.c.h.b16 %v888
        %v3197 = vunpack.c.l.b16 %v889
        %v3198 = vunpack.c.h.b16 %v889
        %v3199 = vunpack.c.l.b16 %v890
        %v3200 = vunpack.c.h.b16 %v890
        %v3201 = vunpack.c.l.b16 %v891
        %v3202 = vunpack.c.h.b16 %v891
        %v3203 = vunpack.c.l.b16 %v892
        %v3204 = vunpack.c.h.b16 %v892
        %v3205 = vunpack.c.l.b16 %v893
        %v3206 = vunpack.c.h.b16 %v893
        %v3207 = vunpack.c.l.b16 %v894
        %v3208 = vunpack.c.h.b16 %v894
        %v3209 = vunpack.c.l.b16 %v895
        %v3210 = vunpack.c.h.b16 %v895
        %v3211 = vunpack.c.l.b16 %v896
        %v3212 = vunpack.c.h.b16 %v896
        %v3213 = vunpack.c.l.b16 %v897
        %v3214 = vunpack.c.h.b16 %v897
        %v3215 = vunpack.c.l.b16 %v898
        %v3216 = vunpack.c.h.b16 %v898
        %v3217 = vunpack.c.l.b16 %v899
        %v3218 = vunpack.c.h.b16 %v899
        %v3219 = vunpack.c.l.b16 %v900
        %v3220 = vunpack.c.h.b16 %v900
        %v3221 = vunpack.c.l.b16 %v901
        %v3222 = vunpack.c.h.b16 %v901
        %v3223 = vunpack.c.l.b16 %v902
        %v3224 = vunpack.c.h.b16 %v902
        %v3225 = vunpack.c.l.b16 %v903
        %v3226 = vunpack.c.h.b16 %v903
        %v3227 = vunpack.c.l.b16 %v904
        %v3228 = vunpack.c.h.b16 %v904
        %v3229 = vunpack.c.l.b16 %v905
        %v3230 = vunpack.c.h.b16 %v905
        %v3231 = vunpack.c.l.b16 %v906
        %v3232 = vunpack.c.h.b16 %v906
        %v3233 = vunpack.c.l.b16 %v907
        %v3234 = vunpack.c.h.b16 %v907
        %v3235 = vunpack.c.l.b16 %v908
        %v3236 = vunpack.c.h.b16 %v908
        %v3237 = vunpack.c.l.b16 %v909
        %v3238 = vunpack.c.h.b16 %v909
        %v3239 = vunpack.c.l.b16 %v910
        %v3240 = vunpack.c.h.b16 %v910
        %v3241 = vunpack.c.l.b16 %v911
        %v3242 = vunpack.c.h.b16 %v911
        %v3243 = vunpack.c.l.b16 %v912
        %v3244 = vunpack.c.h.b16 %v912
        %v3245 = vunpack.c.l.b16 %v913
        %v3246 = vunpack.c.h.b16 %v913
        %v3247 = vunpack.c.l.b16 %v914
        %v3248 = vunpack.c.h.b16 %v914
        %v3249 = vunpack.c.l.b16 %v915
        %v3250 = vunpack.c.h.b16 %v915
        %v3251 = vunpack.c.l.b16 %v916
        %v3252 = vunpack.c.h.b16 %v916
        %v3253 = vunpack.c.l.b16 %v917
        %v3254 = vunpack.c.h.b16 %v917
        %v3255 = vunpack.c.l.b16 %v918
        %v3256 = vunpack.c.h.b16 %v918
        %v3257 = vunpack.c.l.b16 %v919
        %v3258 = vunpack.c.h.b16 %v919
        %v3259 = vunpack.c.l.b16 %v920
        %v3260 = vunpack.c.h.b16 %v920
        %v3261 = vunpack.c.l.b16 %v921
        %v3262 = vunpack.c.h.b16 %v921
        %v3263 = vunpack.c.l.b16 %v922
        %v3264 = vunpack.c.h.b16 %v922
        %v3265 = vunpack.c.l.b16 %v923
        %v3266 = vunpack.c.h.b16 %v923
        %v3267 = vunpack.c.l.b16 %v924
        %v3268 = vunpack.c.h.b16 %v924
        %v3269 = vunpack.c.l.b16 %v925
        %v3270 = vunpack.c.h.b16 %v925
        %v3271 = vunpack.c.l.b16 %v926
        %v3272 = vunpack.c.h.b16 %v926
        %v3273 = vunpack.c.l.b16 %v927
        %v3274 = vunpack.c.h.b16 %v927
        %v3275 = vunpack.c.l.b16 %v928
        %v3276 = vunpack.c.h.b16 %v928
        %v3277 = vunpack.c.l.b16 %v929
        %v3278 = vunpack.c.h.b16 %v929
        %v3279 = vunpack.c.l.b16 %v930
        %v3280 = vunpack.c.h.b16 %v930
        %v3281 = vunpack.c.l.b16 %v931
        %v3282 = vunpack.c.h.b16 %v931
        %v3283 = vunpack.c.l.b16 %v932
        %v3284 = vunpack.c.h.b16 %v932
        %v3285 = vunpack.c.l.b16 %v933
        %v3286 = vunpack.c.h.b16 %v933
        %v3287 = vunpack.c.l.b16 %v934
        %v3288 = vunpack.c.h.b16 %v934
        %v3289 = vunpack.c.l.b16 %v935
        %v3290 = vunpack.c.h.b16 %v935
        %v3291 = vunpack.c.l.b16 %v936
        %v3292 = vunpack.c.h.b16 %v936
        %v3293 = vunpack.c.l.b16 %v937
        %v3294 = vunpack.c.h.b16 %v937
        %v3295 = vunpack.c.l.b16 %v938
        %v3296 = vunpack.c.h.b16 %v938
        %v3297 = vunpack.c.l.b16 %v939
        %v3298 = vunpack.c.h.b16 %v939
        %v3299 = vunpack.c.l.b16 %v940
        %v3300 = vunpack.c.h.b16 %v940
        %v3301 = vunpack.c.l.b16 %v941
        %v3302 = vunpack.c.h.b16 %v941
        %v3303 = vunpack.c.l.b16 %v942
        %v3304 = vunpack.c.h.b16 %v942
        %v3305 = vunpack.c.l.b16 %v943
        %v3306 = vunpack.c.h.b16 %v943
        %v3307 = vunpack.c.l.b16 %v944
        %v3308 = vunpack.c.h.b16 %v944
        %v3309 = vunpack.c.l.b16 %v945
        %v3310 = vunpack.c.h.b16 %v945
        %v3311 = vunpack.c.l.b16 %v946
        %v3312 = vunpack.c.h.b16 %v946
        %v3313 = vunpack.c.l.b16 %v947
        %v3314 = vunpack.c.h.b16 %v947
        %v3315 = vunpack.c.l.b16 %v948
        %v3316 = vunpack.c.h.b16 %v948
        %v3317 = vunpack.c.l.b16 %v949
        %v3318 = vunpack.c.h.b16 %v949
        %v3319 = vunpack.c.l.b16 %v950
        %v3320 = vunpack.c.h.b16 %v950
        %v3321 = vunpack.c.l.b16 %v951
        %v3322 = vunpack.c.h.b16 %v951
        %v3323 = vunpack.c.l.b16 %v952
        %v3324 = vunpack.c.h.b16 %v952
        %v3325 = vunpack.c.l.b16 %v953
        %v3326 = vunpack.c.h.b16 %v953
        %v3327 = vunpack.c.l.b16 %v954
        %v3328 = vunpack.c.h.b16 %v954
        %v3329 = vunpack.c.l.b16 %v955
        %v3330 = vunpack.c.h.b16 %v955
        %v3331 = vunpack.c.l.b16 %v956
        %v3332 = vunpack.c.h.b16 %v956
        %v3333 = vunpack.c.l.b16 %v957
        %v3334 = vunpack.c.h.b16 %v957
        %v3335 = vunpack.c.l.b16 %v958
        %v3336 = vunpack.c.h.b16 %v958
        %v3337 = vunpack.c.l.b16 %v959
        %v3338 = vunpack.c.h.b16 %v959
        %v3339 = vunpack.c.l.b16 %v960
        %v3340 = vunpack.c.h.b16 %v960
        %v3341 = vunpack.c.l.b16 %v961
        %v3342 = vunpack.c.h.b16 %v961
        %v3343 = vunpack.c.l.b16 %v962
        %v3344 = vunpack.c.h.b16 %v962
        %v3345 = vunpack.c.l.b16 %v963
        %v3346 = vunpack.c.h.b16 %v963
        %v3347 = vunpack.c.l.b16 %v964
        %v3348 = vunpack.c.h.b16 %v964
        %v3349 = vunpack.c.l.b16 %v965
        %v3350 = vunpack.c.h.b16 %v965
        %v3351 = vunpack.c.l.b16 %v966
        %v3352 = vunpack.c.h.b16 %v966
        %v3353 = vunpack.c.l.b16 %v967
        %v3354 = vunpack.c.h.b16 %v967
        %v3355 = vunpack.c.l.b16 %v968
        %v3356 = vunpack.c.h.b16 %v968
        %v3357 = vunpack.c.l.b16 %v969
        %v3358 = vunpack.c.h.b16 %v969
        %v3359 = vunpack.c.l.b16 %v970
        %v3360 = vunpack.c.h.b16 %v970
        %v3361 = vunpack.c.l.b16 %v971
        %v3362 = vunpack.c.h.b16 %v971
        %v3363 = vunpack.c.l.b16 %v972
        %v3364 = vunpack.c.h.b16 %v972
        %v3365 = vunpack.c.l.b16 %v973
        %v3366 = vunpack.c.h.b16 %v973
        %v3367 = vunpack.c.l.b16 %v974
        %v3368 = vunpack.c.h.b16 %v974
        %v3369 = vunpack.c.l.b16 %v975
        %v3370 = vunpack.c.h.b16 %v975
        %v3371 = vunpack.c.l.b16 %v976
        %v3372 = vunpack.c.h.b16 %v976
        %v3373 = vunpack.c.l.b16 %v977
        %v3374 = vunpack.c.h.b16 %v977
        %v3375 = vunpack.c.l.b16 %v978
        %v3376 = vunpack.c.h.b16 %v978
        %v3377 = vunpack.c.l.b16 %v979
        %v3378 = vunpack.c.h.b16 %v979
        %v3379 = vunpack.c.l.b16 %v980
        %v3380 = vunpack.c.h.b16 %v980
        %v3381 = vunpack.c.l.b16 %v981
        %v3382 = vunpack.c.h.b16 %v981
        %v3383 = vunpack.c.l.b16 %v982
        %v3384 = vunpack.c.h.b16 %v982
        %v3385 = vunpack.c.l.b16 %v983
        %v3386 = vunpack.c.h.b16 %v983
        %v3387 = vunpack.c.l.b16 %v984
        %v3388 = vunpack.c.h.b16 %v984
        %v3389 = vunpack.c.l.b16 %v985
        %v3390 = vunpack.c.h.b16 %v985
        %v3391 = vunpack.c.l.b16 %v986
        %v3392 = vunpack.c.h.b16 %v986
        %v3393 = vunpack.c.l.b16 %v987
        %v3394 = vunpack.c.h.b16 %v987
        %v3395 = vpack.c.b16 %v1865, %v1859
        %v3396 = vpack.c.b16 %v1866, %v1860
        %v3397 = vpack.c.b16 %v1867, %v1861
        %v3398 = vpack.c.b16 %v1868, %v1862
        %v3399 = vpack.c.b16 %v1869, %v1863
        %v3400 = vpack.c.b16 %v1870, %v1864
        %v3401 = vpack.c.b16 %v1877, %v1871
        %v3402 = vpack.c.b16 %v1878, %v1872
        %v3403 = vpack.c.b16 %v1879, %v1873
        %v3404 = vpack.c.b16 %v1880, %v1874
        %v3405 = vpack.c.b16 %v1881, %v1875
        %v3406 = vpack.c.b16 %v1882, %v1876
        %v3407 = vpack.c.b16 %v1889, %v1883
        %v3408 = vpack.c.b16 %v1890, %v1884
        %v3409 = vpack.c.b16 %v1891, %v1885
        %v3410 = vpack.c.b16 %v1892, %v1886
        %v3411 = vpack.c.b16 %v1893, %v1887
        %v3412 = vpack.c.b16 %v1894, %v1888
        %v3413 = vpack.c.b16 %v1901, %v1895
        %v3414 = vpack.c.b16 %v1902, %v1896
        %v3415 = vpack.c.b16 %v1903, %v1897
        %v3416 = vpack.c.b16 %v1904, %v1898
        %v3417 = vpack.c.b16 %v1905, %v1899
        %v3418 = vpack.c.b16 %v1906, %v1900
        %v3419 = vpack.c.b16 %v1913, %v1907
        %v3420 = vpack.c.b16 %v1914, %v1908
        %v3421 = vpack.c.b16 %v1915, %v1909
        %v3422 = vpack.c.b16 %v1916, %v1910
        %v3423 = vpack.c.b16 %v1917, %v1911
        %v3424 = vpack.c.b16 %v1918, %v1912
        %v3425 = vpack.c.b16 %v1925, %v1919
        %v3426 = vpack.c.b16 %v1926, %v1920
        %v3427 = vpack.c.b16 %v1927, %v1921
        %v3428 = vpack.c.b16 %v1928, %v1922
        %v3429 = vpack.c.b16 %v1929, %v1923
        %v3430 = vpack.c.b16 %v1930, %v1924
        %v3431 = vpack.c.b16 %v1937, %v1931
        %v3432 = vpack.c.b16 %v1938, %v1932
        %v3433 = vpack.c.b16 %v1939, %v1933
        %v3434 = vpack.c.b16 %v1940, %v1934
        %v3435 = vpack.c.b16 %v1941, %v1935
        %v3436 = vpack.c.b16 %v1942, %v1936
        %v3437 = vpack.c.b16 %v1949, %v1943
        %v3438 = vpack.c.b16 %v1950, %v1944
        %v3439 = vpack.c.b16 %v1951, %v1945
        %v3440 = vpack.c.b16 %v1952, %v1946
        %v3441 = vpack.c.b16 %v1953, %v1947
        %v3442 = vpack.c.b16 %v1954, %v1948
        %v3443 = vpack.c.b16 %v1961, %v1955
        %v3444 = vpack.c.b16 %v1962, %v1956
        %v3445 = vpack.c.b16 %v1963, %v1957
        %v3446 = vpack.c.b16 %v1964, %v1958
        %v3447 = vpack.c.b16 %v1965, %v1959
        %v3448 = vpack.c.b16 %v1966, %v1960
        %v3449 = vpack.c.b16 %v1973, %v1967
        %v3450 = vpack.c.b16 %v1974, %v1968
        %v3451 = vpack.c.b16 %v1975, %v1969
        %v3452 = vpack.c.b16 %v1976, %v1970
        %v3453 = vpack.c.b16 %v1977, %v1971
        %v3454 = vpack.c.b16 %v1978, %v1972
        %v3455 = vpack.c.b16 %v1985, %v1979
        %v3456 = vpack.c.b16 %v1986, %v1980
        %v3457 = vpack.c.b16 %v1987, %v1981
        %v3458 = vpack.c.b16 %v1988, %v1982
        %v3459 = vpack.c.b16 %v1989, %v1983
        %v3460 = vpack.c.b16 %v1990, %v1984
        %v3461 = vpack.c.b16 %v1997, %v1991
        %v3462 = vpack.c.b16 %v1998, %v1992
        %v3463 = vpack.c.b16 %v1999, %v1993
        %v3464 = vpack.c.b16 %v2000, %v1994
        %v3465 = vpack.c.b16 %v2001, %v1995
        %v3466 = vpack.c.b16 %v2002, %v1996
        %v3467 = vpack.c.b16 %v2009, %v2003
        %v3468 = vpack.c.b16 %v2010, %v2004
        %v3469 = vpack.c.b16 %v2011, %v2005
        %v3470 = vpack.c.b16 %v2012, %v2006
        %v3471 = vpack.c.b16 %v2013, %v2007
        %v3472 = vpack.c.b16 %v2014, %v2008
        %v3473 = vpack.c.b16 %v2021, %v2015
        %v3474 = vpack.c.b16 %v2022, %v2016
        %v3475 = vpack.c.b16 %v2023, %v2017
        %v3476 = vpack.c.b16 %v2024, %v2018
        %v3477 = vpack.c.b16 %v2025, %v2019
        %v3478 = vpack.c.b16 %v2026, %v2020
        %v3479 = vpack.c.b16 %v2033, %v2027
        %v3480 = vpack.c.b16 %v2034, %v2028
        %v3481 = vpack.c.b16 %v2035, %v2029
        %v3482 = vpack.c.b16 %v2036, %v2030
        %v3483 = vpack.c.b16 %v2037, %v2031
        %v3484 = vpack.c.b16 %v2038, %v2032
        %v3485 = vpack.c.b16 %v2045, %v2039
        %v3486 = vpack.c.b16 %v2046, %v2040
        %v3487 = vpack.c.b16 %v2047, %v2041
        %v3488 = vpack.c.b16 %v2048, %v2042
        %v3489 = vpack.c.b16 %v2049, %v2043
        %v3490 = vpack.c.b16 %v2050, %v2044
        %v3491 = vpack.c.b16 %v2057, %v2051
        %v3492 = vpack.c.b16 %v2058, %v2052
        %v3493 = vpack.c.b16 %v2059, %v2053
        %v3494 = vpack.c.b16 %v2060, %v2054
        %v3495 = vpack.c.b16 %v2061, %v2055
        %v3496 = vpack.c.b16 %v2062, %v2056
        %v3497 = vpack.c.b16 %v2069, %v2063
        %v3498 = vpack.c.b16 %v2070, %v2064
        %v3499 = vpack.c.b16 %v2071, %v2065
        %v3500 = vpack.c.b16 %v2072, %v2066
        %v3501 = vpack.c.b16 %v2073, %v2067
        %v3502 = vpack.c.b16 %v2074, %v2068
        %v3503 = vpack.c.b16 %v2081, %v2075
        %v3504 = vpack.c.b16 %v2082, %v2076
        %v3505 = vpack.c.b16 %v2083, %v2077
        %v3506 = vpack.c.b16 %v2084, %v2078
        %v3507 = vpack.c.b16 %v2085, %v2079
        %v3508 = vpack.c.b16 %v2086, %v2080
        %v3509 = vpack.c.b16 %v2093, %v2087
        %v3510 = vpack.c.b16 %v2094, %v2088
        %v3511 = vpack.c.b16 %v2095, %v2089
        %v3512 = vpack.c.b16 %v2096, %v2090
        %v3513 = vpack.c.b16 %v2097, %v2091
        %v3514 = vpack.c.b16 %v2098, %v2092
        %v3515 = vpack.c.b16 %v2105, %v2099
        %v3516 = vpack.c.b16 %v2106, %v2100
        %v3517 = vpack.c.b16 %v2107, %v2101
        %v3518 = vpack.c.b16 %v2108, %v2102
        %v3519 = vpack.c.b16 %v2109, %v2103
        %v3520 = vpack.c.b16 %v2110, %v2104
        %v3521 = vpack.c.b16 %v2117, %v2111
        %v3522 = vpack.c.b16 %v2118, %v2112
        %v3523 = vpack.c.b16 %v2119, %v2113
        %v3524 = vpack.c.b16 %v2120, %v2114
        %v3525 = vpack.c.b16 %v2121, %v2115
        %v3526 = vpack.c.b16 %v2122, %v2116
        %v3527 = vpack.c.b16 %v2129, %v2123
        %v3528 = vpack.c.b16 %v2130, %v2124
        %v3529 = vpack.c.b16 %v2131, %v2125
        %v3530 = vpack.c.b16 %v2132, %v2126
        %v3531 = vpack.c.b16 %v2133, %v2127
        %v3532 = vpack.c.b16 %v2134, %v2128
        %v3533 = vpack.c.b16 %v2141, %v2135
        %v3534 = vpack.c.b16 %v2142, %v2136
        %v3535 = vpack.c.b16 %v2143, %v2137
        %v3536 = vpack.c.b16 %v2144, %v2138
        %v3537 = vpack.c.b16 %v2145, %v2139
        %v3538 = vpack.c.b16 %v2146, %v2140
        %v3539 = vpack.c.b16 %v2153, %v2147
        %v3540 = vpack.c.b16 %v2154, %v2148
        %v3541 = vpack.c.b16 %v2155, %v2149
        %v3542 = vpack.c.b16 %v2156, %v2150
        %v3543 = vpack.c.b16 %v2157, %v2151
        %v3544 = vpack.c.b16 %v2158, %v2152
        %v3545 = vpack.c.b16 %v2165, %v2159
        %v3546 = vpack.c.b16 %v2166, %v2160
        %v3547 = vpack.c.b16 %v2167, %v2161
        %v3548 = vpack.c.b16 %v2168, %v2162
        %v3549 = vpack.c.b16 %v2169, %v2163
        %v3550 = vpack.c.b16 %v2170, %v2164
        %v3551 = vpack.c.b16 %v2177, %v2171
        %v3552 = vpack.c.b16 %v2178, %v2172
        %v3553 = vpack.c.b16 %v2179, %v2173
        %v3554 = vpack.c.b16 %v2180, %v2174
        %v3555 = vpack.c.b16 %v2181, %v2175
        %v3556 = vpack.c.b16 %v2182, %v2176
        %v3557 = vpack.c.b16 %v2189, %v2183
        %v3558 = vpack.c.b16 %v2190, %v2184
        %v3559 = vpack.c.b16 %v2191, %v2185
        %v3560 = vpack.c.b16 %v2192, %v2186
        %v3561 = vpack.c.b16 %v2193, %v2187
        %v3562 = vpack.c.b16 %v2194, %v2188
        %v3563 = vpack.c.b16 %v2201, %v2195
        %v3564 = vpack.c.b16 %v2202, %v2196
        %v3565 = vpack.c.b16 %v2203, %v2197
        %v3566 = vpack.c.b16 %v2204, %v2198
        %v3567 = vpack.c.b16 %v2205, %v2199
        %v3568 = vpack.c.b16 %v2206, %v2200
        %v3569 = vpack.c.b16 %v2213, %v2207
        %v3570 = vpack.c.b16 %v2214, %v2208
        %v3571 = vpack.c.b16 %v2215, %v2209
        %v3572 = vpack.c.b16 %v2216, %v2210
        %v3573 = vpack.c.b16 %v2217, %v2211
        %v3574 = vpack.c.b16 %v2218, %v2212
        %v3575 = vpack.c.b16 %v2225, %v2219
        %v3576 = vpack.c.b16 %v2226, %v2220
        %v3577 = vpack.c.b16 %v2227, %v2221
        %v3578 = vpack.c.b16 %v2228, %v2222
        %v3579 = vpack.c.b16 %v2229, %v2223
        %v3580 = vpack.c.b16 %v2230, %v2224
        %v3581 = vpack.c.b16 %v2237, %v2231
        %v3582 = vpack.c.b16 %v2238, %v2232
        %v3583 = vpack.c.b16 %v2239, %v2233
        %v3584 = vpack.c.b16 %v2240, %v2234
        %v3585 = vpack.c.b16 %v2241, %v2235
        %v3586 = vpack.c.b16 %v2242, %v2236
        %v3587 = vpack.c.b16 %v2249, %v2243
        %v3588 = vpack.c.b16 %v2250, %v2244
        %v3589 = vpack.c.b16 %v2251, %v2245
        %v3590 = vpack.c.b16 %v2252, %v2246
        %v3591 = vpack.c.b16 %v2253, %v2247
        %v3592 = vpack.c.b16 %v2254, %v2248
        %v3593 = vpack.c.b16 %v2261, %v2255
        %v3594 = vpack.c.b16 %v2262, %v2256
        %v3595 = vpack.c.b16 %v2263, %v2257
        %v3596 = vpack.c.b16 %v2264, %v2258
        %v3597 = vpack.c.b16 %v2265, %v2259
        %v3598 = vpack.c.b16 %v2266, %v2260
        %v3599 = vpack.c.b16 %v2273, %v2267
        %v3600 = vpack.c.b16 %v2274, %v2268
        %v3601 = vpack.c.b16 %v2275, %v2269
        %v3602 = vpack.c.b16 %v2276, %v2270
        %v3603 = vpack.c.b16 %v2277, %v2271
        %v3604 = vpack.c.b16 %v2278, %v2272
        %v3605 = vpack.c.b16 %v2285, %v2279
        %v3606 = vpack.c.b16 %v2286, %v2280
        %v3607 = vpack.c.b16 %v2287, %v2281
        %v3608 = vpack.c.b16 %v2288, %v2282
        %v3609 = vpack.c.b16 %v2289, %v2283
        %v3610 = vpack.c.b16 %v2290, %v2284
        %v3611 = vpack.c.b16 %v2297, %v2291
        %v3612 = vpack.c.b16 %v2298, %v2292
        %v3613 = vpack.c.b16 %v2299, %v2293
        %v3614 = vpack.c.b16 %v2300, %v2294
        %v3615 = vpack.c.b16 %v2301, %v2295
        %v3616 = vpack.c.b16 %v2302, %v2296
        %v3617 = vpack.c.b16 %v2309, %v2303
        %v3618 = vpack.c.b16 %v2310, %v2304
        %v3619 = vpack.c.b16 %v2311, %v2305
        %v3620 = vpack.c.b16 %v2312, %v2306
        %v3621 = vpack.c.b16 %v2313, %v2307
        %v3622 = vpack.c.b16 %v2314, %v2308
        %v3623 = vpack.c.b16 %v2321, %v2315
        %v3624 = vpack.c.b16 %v2322, %v2316
        %v3625 = vpack.c.b16 %v2323, %v2317
        %v3626 = vpack.c.b16 %v2324, %v2318
        %v3627 = vpack.c.b16 %v2325, %v2319
        %v3628 = vpack.c.b16 %v2326, %v2320
        %v3629 = vpack.c.b16 %v2333, %v2327
        %v3630 = vpack.c.b16 %v2334, %v2328
        %v3631 = vpack.c.b16 %v2335, %v2329
        %v3632 = vpack.c.b16 %v2336, %v2330
        %v3633 = vpack.c.b16 %v2337, %v2331
        %v3634 = vpack.c.b16 %v2338, %v2332
        %v3635 = vpack.c.b16 %v2345, %v2339
        %v3636 = vpack.c.b16 %v2346, %v2340
        %v3637 = vpack.c.b16 %v2347, %v2341
        %v3638 = vpack.c.b16 %v2348, %v2342
        %v3639 = vpack.c.b16 %v2349, %v2343
        %v3640 = vpack.c.b16 %v2350, %v2344
        %v3641 = vpack.c.b16 %v2357, %v2351
        %v3642 = vpack.c.b16 %v2358, %v2352
        %v3643 = vpack.c.b16 %v2359, %v2353
        %v3644 = vpack.c.b16 %v2360, %v2354
        %v3645 = vpack.c.b16 %v2361, %v2355
        %v3646 = vpack.c.b16 %v2362, %v2356
        %v3647 = vpack.c.b16 %v2369, %v2363
        %v3648 = vpack.c.b16 %v2370, %v2364
        %v3649 = vpack.c.b16 %v2371, %v2365
        %v3650 = vpack.c.b16 %v2372, %v2366
        %v3651 = vpack.c.b16 %v2373, %v2367
        %v3652 = vpack.c.b16 %v2374, %v2368
        %v3653 = vpack.c.b16 %v2381, %v2375
        %v3654 = vpack.c.b16 %v2382, %v2376
        %v3655 = vpack.c.b16 %v2383, %v2377
        %v3656 = vpack.c.b16 %v2384, %v2378
        %v3657 = vpack.c.b16 %v2385, %v2379
        %v3658 = vpack.c.b16 %v2386, %v2380
        %v3659 = vpack.c.b16 %v2393, %v2387
        %v3660 = vpack.c.b16 %v2394, %v2388
        %v3661 = vpack.c.b16 %v2395, %v2389
        %v3662 = vpack.c.b16 %v2396, %v2390
        %v3663 = vpack.c.b16 %v2397, %v2391
        %v3664 = vpack.c.b16 %v2398, %v2392
        %v3665 = vpack.c.b16 %v2405, %v2399
        %v3666 = vpack.c.b16 %v2406, %v2400
        %v3667 = vpack.c.b16 %v2407, %v2401
        %v3668 = vpack.c.b16 %v2408, %v2402
        %v3669 = vpack.c.b16 %v2409, %v2403
        %v3670 = vpack.c.b16 %v2410, %v2404
        %v3671 = vpack.c.b16 %v2417, %v2411
        %v3672 = vpack.c.b16 %v2418, %v2412
        %v3673 = vpack.c.b16 %v2419, %v2413
        %v3674 = vpack.c.b16 %v2420, %v2414
        %v3675 = vpack.c.b16 %v2421, %v2415
        %v3676 = vpack.c.b16 %v2422, %v2416
        %v3677 = vpack.c.b16 %v2429, %v2423
        %v3678 = vpack.c.b16 %v2430, %v2424
        %v3679 = vpack.c.b16 %v2431, %v2425
        %v3680 = vpack.c.b16 %v2432, %v2426
        %v3681 = vpack.c.b16 %v2433, %v2427
        %v3682 = vpack.c.b16 %v2434, %v2428
        %v3683 = vpack.c.b16 %v2441, %v2435
        %v3684 = vpack.c.b16 %v2442, %v2436
        %v3685 = vpack.c.b16 %v2443, %v2437
        %v3686 = vpack.c.b16 %v2444, %v2438
        %v3687 = vpack.c.b16 %v2445, %v2439
        %v3688 = vpack.c.b16 %v2446, %v2440
        %v3689 = vpack.c.b16 %v2453, %v2447
        %v3690 = vpack.c.b16 %v2454, %v2448
        %v3691 = vpack.c.b16 %v2455, %v2449
        %v3692 = vpack.c.b16 %v2456, %v2450
        %v3693 = vpack.c.b16 %v2457, %v2451
        %v3694 = vpack.c.b16 %v2458, %v2452
        %v3695 = vpack.c.b16 %v2465, %v2459
        %v3696 = vpack.c.b16 %v2466, %v2460
        %v3697 = vpack.c.b16 %v2467, %v2461
        %v3698 = vpack.c.b16 %v2468, %v2462
        %v3699 = vpack.c.b16 %v2469, %v2463
        %v3700 = vpack.c.b16 %v2470, %v2464
        %v3701 = vpack.c.b16 %v2477, %v2471
        %v3702 = vpack.c.b16 %v2478, %v2472
        %v3703 = vpack.c.b16 %v2479, %v2473
        %v3704 = vpack.c.b16 %v2480, %v2474
        %v3705 = vpack.c.b16 %v2481, %v2475
        %v3706 = vpack.c.b16 %v2482, %v2476
        %v3707 = vpack.c.b16 %v2489, %v2483
        %v3708 = vpack.c.b16 %v2490, %v2484
        %v3709 = vpack.c.b16 %v2491, %v2485
        %v3710 = vpack.c.b16 %v2492, %v2486
        %v3711 = vpack.c.b16 %v2493, %v2487
        %v3712 = vpack.c.b16 %v2494, %v2488
        %v3713 = vpack.c.b16 %v2501, %v2495
        %v3714 = vpack.c.b16 %v2502, %v2496
        %v3715 = vpack.c.b16 %v2503, %v2497
        %v3716 = vpack.c.b16 %v2504, %v2498
        %v3717 = vpack.c.b16 %v2505, %v2499
        %v3718 = vpack.c.b16 %v2506, %v2500
        %v3719 = vpack.c.b16 %v2513, %v2507
        %v3720 = vpack.c.b16 %v2514, %v2508
        %v3721 = vpack.c.b16 %v2515, %v2509
        %v3722 = vpack.c.b16 %v2516, %v2510
        %v3723 = vpack.c.b16 %v2517, %v2511
        %v3724 = vpack.c.b16 %v2518, %v2512
        %v3725 = vpack.c.b16 %v2525, %v2519
        %v3726 = vpack.c.b16 %v2526, %v2520
        %v3727 = vpack.c.b16 %v2527, %v2521
        %v3728 = vpack.c.b16 %v2528, %v2522
        %v3729 = vpack.c.b16 %v2529, %v2523
        %v3730 = vpack.c.b16 %v2530, %v2524
        %v3731 = vpack.c.b16 %v2537, %v2531
        %v3732 = vpack.c.b16 %v2538, %v2532
        %v3733 = vpack.c.b16 %v2539, %v2533
        %v3734 = vpack.c.b16 %v2540, %v2534
        %v3735 = vpack.c.b16 %v2541, %v2535
        %v3736 = vpack.c.b16 %v2542, %v2536
        %v3737 = vpack.c.b16 %v2549, %v2543
        %v3738 = vpack.c.b16 %v2550, %v2544
        %v3739 = vpack.c.b16 %v2551, %v2545
        %v3740 = vpack.c.b16 %v2552, %v2546
        %v3741 = vpack.c.b16 %v2553, %v2547
        %v3742 = vpack.c.b16 %v2554, %v2548
        %v3743 = vpack.c.b16 %v2561, %v2555
        %v3744 = vpack.c.b16 %v2562, %v2556
        %v3745 = vpack.c.b16 %v2563, %v2557
        %v3746 = vpack.c.b16 %v2564, %v2558
        %v3747 = vpack.c.b16 %v2565, %v2559
        %v3748 = vpack.c.b16 %v2566, %v2560
        %v3749 = vpack.c.b16 %v2573, %v2567
        %v3750 = vpack.c.b16 %v2574, %v2568
        %v3751 = vpack.c.b16 %v2575, %v2569
        %v3752 = vpack.c.b16 %v2576, %v2570
        %v3753 = vpack.c.b16 %v2577, %v2571
        %v3754 = vpack.c.b16 %v2578, %v2572
        %v3755 = vpack.c.b16 %v2585, %v2579
        %v3756 = vpack.c.b16 %v2586, %v2580
        %v3757 = vpack.c.b16 %v2587, %v2581
        %v3758 = vpack.c.b16 %v2588, %v2582
        %v3759 = vpack.c.b16 %v2589, %v2583
        %v3760 = vpack.c.b16 %v2590, %v2584
        %v3761 = vpack.c.b16 %v2597, %v2591
        %v3762 = vpack.c.b16 %v2598, %v2592
        %v3763 = vpack.c.b16 %v2599, %v2593
        %v3764 = vpack.c.b16 %v2600, %v2594
        %v3765 = vpack.c.b16 %v2601, %v2595
        %v3766 = vpack.c.b16 %v2602, %v2596
        %v3767 = vpack.c.b16 %v2609, %v2603
        %v3768 = vpack.c.b16 %v2610, %v2604
        %v3769 = vpack.c.b16 %v2611, %v2605
        %v3770 = vpack.c.b16 %v2612, %v2606
        %v3771 = vpack.c.b16 %v2613, %v2607
        %v3772 = vpack.c.b16 %v2614, %v2608
        %v3773 = vpack.c.b16 %v2621, %v2615
        %v3774 = vpack.c.b16 %v2622, %v2616
        %v3775 = vpack.c.b16 %v2623, %v2617
        %v3776 = vpack.c.b16 %v2624, %v2618
        %v3777 = vpack.c.b16 %v2625, %v2619
        %v3778 = vpack.c.b16 %v2626, %v2620
        %v3779 = vpack.c.b16 %v2633, %v2627
        %v3780 = vpack.c.b16 %v2634, %v2628
        %v3781 = vpack.c.b16 %v2635, %v2629
        %v3782 = vpack.c.b16 %v2636, %v2630
        %v3783 = vpack.c.b16 %v2637, %v2631
        %v3784 = vpack.c.b16 %v2638, %v2632
        %v3785 = vpack.c.b16 %v2645, %v2639
        %v3786 = vpack.c.b16 %v2646, %v2640
        %v3787 = vpack.c.b16 %v2647, %v2641
        %v3788 = vpack.c.b16 %v2648, %v2642
        %v3789 = vpack.c.b16 %v2649, %v2643
        %v3790 = vpack.c.b16 %v2650, %v2644
        %v3791 = vpack.c.b16 %v2657, %v2651
        %v3792 = vpack.c.b16 %v2658, %v2652
        %v3793 = vpack.c.b16 %v2659, %v2653
        %v3794 = vpack.c.b16 %v2660, %v2654
        %v3795 = vpack.c.b16 %v2661, %v2655
        %v3796 = vpack.c.b16 %v2662, %v2656
        %v3797 = vpack.c.b16 %v2669, %v2663
        %v3798 = vpack.c.b16 %v2670, %v2664
        %v3799 = vpack.c.b16 %v2671, %v2665
        %v3800 = vpack.c.b16 %v2672, %v2666
        %v3801 = vpack.c.b16 %v2673, %v2667
        %v3802 = vpack.c.b16 %v2674, %v2668
        %v3803 = vpack.c.b16 %v2681, %v2675
        %v3804 = vpack.c.b16 %v2682, %v2676
        %v3805 = vpack.c.b16 %v2683, %v2677
        %v3806 = vpack.c.b16 %v2684, %v2678
        %v3807 = vpack.c.b16 %v2685, %v2679
        %v3808 = vpack.c.b16 %v2686, %v2680
        %v3809 = vpack.c.b16 %v2693, %v2687
        %v3810 = vpack.c.b16 %v2694, %v2688
        %v3811 = vpack.c.b16 %v2695, %v2689
        %v3812 = vpack.c.b16 %v2696, %v2690
        %v3813 = vpack.c.b16 %v2697, %v2691
        %v3814 = vpack.c.b16 %v2698, %v2692
        %v3815 = vpack.c.b16 %v2705, %v2699
        %v3816 = vpack.c.b16 %v2706, %v2700
        %v3817 = vpack.c.b16 %v2707, %v2701
        %v3818 = vpack.c.b16 %v2708, %v2702
        %v3819 = vpack.c.b16 %v2709, %v2703
        %v3820 = vpack.c.b16 %v2710, %v2704
        %v3821 = vpack.c.b16 %v2717, %v2711
        %v3822 = vpack.c.b16 %v2718, %v2712
        %v3823 = vpack.c.b16 %v2719, %v2713
        %v3824 = vpack.c.b16 %v2720, %v2714
        %v3825 = vpack.c.b16 %v2721, %v2715
        %v3826 = vpack.c.b16 %v2722, %v2716
        %v3827 = vpack.c.b16 %v2729, %v2723
        %v3828 = vpack.c.b16 %v2730, %v2724
        %v3829 = vpack.c.b16 %v2731, %v2725
        %v3830 = vpack.c.b16 %v2732, %v2726
        %v3831 = vpack.c.b16 %v2733, %v2727
        %v3832 = vpack.c.b16 %v2734, %v2728
        %v3833 = vpack.c.b16 %v2741, %v2735
        %v3834 = vpack.c.b16 %v2742, %v2736
        %v3835 = vpack.c.b16 %v2743, %v2737
        %v3836 = vpack.c.b16 %v2744, %v2738
        %v3837 = vpack.c.b16 %v2745, %v2739
        %v3838 = vpack.c.b16 %v2746, %v2740
        %v3839 = vpack.c.b16 %v2753, %v2747
        %v3840 = vpack.c.b16 %v2754, %v2748
        %v3841 = vpack.c.b16 %v2755, %v2749
        %v3842 = vpack.c.b16 %v2756, %v2750
        %v3843 = vpack.c.b16 %v2757, %v2751
        %v3844 = vpack.c.b16 %v2758, %v2752
        %v3845 = vpack.c.b16 %v2765, %v2759
        %v3846 = vpack.c.b16 %v2766, %v2760
        %v3847 = vpack.c.b16 %v2767, %v2761
        %v3848 = vpack.c.b16 %v2768, %v2762
        %v3849 = vpack.c.b16 %v2769, %v2763
        %v3850 = vpack.c.b16 %v2770, %v2764
        %v3851 = vpack.c.b16 %v2777, %v2771
        %v3852 = vpack.c.b16 %v2778, %v2772
        %v3853 = vpack.c.b16 %v2779, %v2773
        %v3854 = vpack.c.b16 %v2780, %v2774
        %v3855 = vpack.c.b16 %v2781, %v2775
        %v3856 = vpack.c.b16 %v2782, %v2776
        %v3857 = vpack.c.b16 %v2789, %v2783
        %v3858 = vpack.c.b16 %v2790, %v2784
        %v3859 = vpack.c.b16 %v2791, %v2785
        %v3860 = vpack.c.b16 %v2792, %v2786
        %v3861 = vpack.c.b16 %v2793, %v2787
        %v3862 = vpack.c.b16 %v2794, %v2788
        %v3863 = vpack.c.b16 %v2801, %v2795
        %v3864 = vpack.c.b16 %v2802, %v2796
        %v3865 = vpack.c.b16 %v2803, %v2797
        %v3866 = vpack.c.b16 %v2804, %v2798
        %v3867 = vpack.c.b16 %v2805, %v2799
        %v3868 = vpack.c.b16 %v2806, %v2800
        %v3869 = vpack.c.b16 %v2813, %v2807
        %v3870 = vpack.c.b16 %v2814, %v2808
        %v3871 = vpack.c.b16 %v2815, %v2809
        %v3872 = vpack.c.b16 %v2816, %v2810
        %v3873 = vpack.c.b16 %v2817, %v2811
        %v3874 = vpack.c.b16 %v2818, %v2812
        %v3875 = vpack.c.b16 %v2825, %v2819
        %v3876 = vpack.c.b16 %v2826, %v2820
        %v3877 = vpack.c.b16 %v2827, %v2821
        %v3878 = vpack.c.b16 %v2828, %v2822
        %v3879 = vpack.c.b16 %v2829, %v2823
        %v3880 = vpack.c.b16 %v2830, %v2824
        %v3881 = vpack.c.b16 %v2837, %v2831
        %v3882 = vpack.c.b16 %v2838, %v2832
        %v3883 = vpack.c.b16 %v2839, %v2833
        %v3884 = vpack.c.b16 %v2840, %v2834
        %v3885 = vpack.c.b16 %v2841, %v2835
        %v3886 = vpack.c.b16 %v2842, %v2836
        %v3887 = vpack.c.b16 %v2849, %v2843
        %v3888 = vpack.c.b16 %v2850, %v2844
        %v3889 = vpack.c.b16 %v2851, %v2845
        %v3890 = vpack.c.b16 %v2852, %v2846
        %v3891 = vpack.c.b16 %v2853, %v2847
        %v3892 = vpack.c.b16 %v2854, %v2848
        %v3893 = vpack.c.b16 %v2861, %v2855
        %v3894 = vpack.c.b16 %v2862, %v2856
        %v3895 = vpack.c.b16 %v2863, %v2857
        %v3896 = vpack.c.b16 %v2864, %v2858
        %v3897 = vpack.c.b16 %v2865, %v2859
        %v3898 = vpack.c.b16 %v2866, %v2860
        %v3899 = vpack.c.b16 %v2873, %v2867
        %v3900 = vpack.c.b16 %v2874, %v2868
        %v3901 = vpack.c.b16 %v2875, %v2869
        %v3902 = vpack.c.b16 %v2876, %v2870
        %v3903 = vpack.c.b16 %v2877, %v2871
        %v3904 = vpack.c.b16 %v2878, %v2872
        %v3905 = vpack.c.b16 %v2885, %v2879
        %v3906 = vpack.c.b16 %v2886, %v2880
        %v3907 = vpack.c.b16 %v2887, %v2881
        %v3908 = vpack.c.b16 %v2888, %v2882
        %v3909 = vpack.c.b16 %v2889, %v2883
        %v3910 = vpack.c.b16 %v2890, %v2884
        %v3911 = vpack.c.b16 %v2897, %v2891
        %v3912 = vpack.c.b16 %v2898, %v2892
        %v3913 = vpack.c.b16 %v2899, %v2893
        %v3914 = vpack.c.b16 %v2900, %v2894
        %v3915 = vpack.c.b16 %v2901, %v2895
        %v3916 = vpack.c.b16 %v2902, %v2896
        %v3917 = vpack.c.b16 %v2909, %v2903
        %v3918 = vpack.c.b16 %v2910, %v2904
        %v3919 = vpack.c.b16 %v2911, %v2905
        %v3920 = vpack.c.b16 %v2912, %v2906
        %v3921 = vpack.c.b16 %v2913, %v2907
        %v3922 = vpack.c.b16 %v2914, %v2908
        %v3923 = vpack.c.b16 %v2921, %v2915
        %v3924 = vpack.c.b16 %v2922, %v2916
        %v3925 = vpack.c.b16 %v2923, %v2917
        %v3926 = vpack.c.b16 %v2924, %v2918
        %v3927 = vpack.c.b16 %v2925, %v2919
        %v3928 = vpack.c.b16 %v2926, %v2920
        %v3929 = vpack.c.b16 %v2933, %v2927
        %v3930 = vpack.c.b16 %v2934, %v2928
        %v3931 = vpack.c.b16 %v2935, %v2929
        %v3932 = vpack.c.b16 %v2936, %v2930
        %v3933 = vpack.c.b16 %v2937, %v2931
        %v3934 = vpack.c.b16 %v2938, %v2932
        %v3935 = vpack.c.b16 %v2945, %v2939
        %v3936 = vpack.c.b16 %v2946, %v2940
        %v3937 = vpack.c.b16 %v2947, %v2941
        %v3938 = vpack.c.b16 %v2948, %v2942
        %v3939 = vpack.c.b16 %v2949, %v2943
        %v3940 = vpack.c.b16 %v2950, %v2944
        %v3941 = vpack.c.b16 %v2957, %v2951
        %v3942 = vpack.c.b16 %v2958, %v2952
        %v3943 = vpack.c.b16 %v2959, %v2953
        %v3944 = vpack.c.b16 %v2960, %v2954
        %v3945 = vpack.c.b16 %v2961, %v2955
        %v3946 = vpack.c.b16 %v2962, %v2956
        %v3947 = vpack.c.b16 %v2969, %v2963
        %v3948 = vpack.c.b16 %v2970, %v2964
        %v3949 = vpack.c.b16 %v2971, %v2965
        %v3950 = vpack.c.b16 %v2972, %v2966
        %v3951 = vpack.c.b16 %v2973, %v2967
        %v3952 = vpack.c.b16 %v2974, %v2968
        %v3953 = vpack.c.b16 %v2981, %v2975
        %v3954 = vpack.c.b16 %v2982, %v2976
        %v3955 = vpack.c.b16 %v2983, %v2977
        %v3956 = vpack.c.b16 %v2984, %v2978
        %v3957 = vpack.c.b16 %v2985, %v2979
        %v3958 = vpack.c.b16 %v2986, %v2980
        %v3959 = vpack.c.b16 %v2993, %v2987
        %v3960 = vpack.c.b16 %v2994, %v2988
        %v3961 = vpack.c.b16 %v2995, %v2989
        %v3962 = vpack.c.b16 %v2996, %v2990
        %v3963 = vpack.c.b16 %v2997, %v2991
        %v3964 = vpack.c.b16 %v2998, %v2992
        %v3965 = vpack.c.b16 %v3005, %v2999
        %v3966 = vpack.c.b16 %v3006, %v3000
        %v3967 = vpack.c.b16 %v3007, %v3001
        %v3968 = vpack.c.b16 %v3008, %v3002
        %v3969 = vpack.c.b16 %v3009, %v3003
        %v3970 = vpack.c.b16 %v3010, %v3004
        %v3971 = vpack.c.b16 %v3017, %v3011
        %v3972 = vpack.c.b16 %v3018, %v3012
        %v3973 = vpack.c.b16 %v3019, %v3013
        %v3974 = vpack.c.b16 %v3020, %v3014
        %v3975 = vpack.c.b16 %v3021, %v3015
        %v3976 = vpack.c.b16 %v3022, %v3016
        %v3977 = vpack.c.b16 %v3029, %v3023
        %v3978 = vpack.c.b16 %v3030, %v3024
        %v3979 = vpack.c.b16 %v3031, %v3025
        %v3980 = vpack.c.b16 %v3032, %v3026
        %v3981 = vpack.c.b16 %v3033, %v3027
        %v3982 = vpack.c.b16 %v3034, %v3028
        %v3983 = vpack.c.b16 %v3041, %v3035
        %v3984 = vpack.c.b16 %v3042, %v3036
        %v3985 = vpack.c.b16 %v3043, %v3037
        %v3986 = vpack.c.b16 %v3044, %v3038
        %v3987 = vpack.c.b16 %v3045, %v3039
        %v3988 = vpack.c.b16 %v3046, %v3040
        %v3989 = vpack.c.b16 %v3053, %v3047
        %v3990 = vpack.c.b16 %v3054, %v3048
        %v3991 = vpack.c.b16 %v3055, %v3049
        %v3992 = vpack.c.b16 %v3056, %v3050
        %v3993 = vpack.c.b16 %v3057, %v3051
        %v3994 = vpack.c.b16 %v3058, %v3052
        %v3995 = vpack.c.b16 %v3065, %v3059
        %v3996 = vpack.c.b16 %v3066, %v3060
        %v3997 = vpack.c.b16 %v3067, %v3061
        %v3998 = vpack.c.b16 %v3068, %v3062
        %v3999 = vpack.c.b16 %v3069, %v3063
        %v4000 = vpack.c.b16 %v3070, %v3064
        %v4001 = vpack.c.b16 %v3077, %v3071
        %v4002 = vpack.c.b16 %v3078, %v3072
        %v4003 = vpack.c.b16 %v3079, %v3073
        %v4004 = vpack.c.b16 %v3080, %v3074
        %v4005 = vpack.c.b16 %v3081, %v3075
        %v4006 = vpack.c.b16 %v3082, %v3076
        %v4007 = vpack.c.b16 %v3089, %v3083
        %v4008 = vpack.c.b16 %v3090, %v3084
        %v4009 = vpack.c.b16 %v3091, %v3085
        %v4010 = vpack.c.b16 %v3092, %v3086
        %v4011 = vpack.c.b16 %v3093, %v3087
        %v4012 = vpack.c.b16 %v3094, %v3088
        %v4013 = vpack.c.b16 %v3101, %v3095
        %v4014 = vpack.c.b16 %v3102, %v3096
        %v4015 = vpack.c.b16 %v3103, %v3097
        %v4016 = vpack.c.b16 %v3104, %v3098
        %v4017 = vpack.c.b16 %v3105, %v3099
        %v4018 = vpack.c.b16 %v3106, %v3100
        %v4019 = vpack.c.b16 %v3113, %v3107
        %v4020 = vpack.c.b16 %v3114, %v3108
        %v4021 = vpack.c.b16 %v3115, %v3109
        %v4022 = vpack.c.b16 %v3116, %v3110
        %v4023 = vpack.c.b16 %v3117, %v3111
        %v4024 = vpack.c.b16 %v3118, %v3112
        %v4025 = vpack.c.b16 %v3125, %v3119
        %v4026 = vpack.c.b16 %v3126, %v3120
        %v4027 = vpack.c.b16 %v3127, %v3121
        %v4028 = vpack.c.b16 %v3128, %v3122
        %v4029 = vpack.c.b16 %v3129, %v3123
        %v4030 = vpack.c.b16 %v3130, %v3124
        %v4031 = vpack.c.b16 %v3137, %v3131
        %v4032 = vpack.c.b16 %v3138, %v3132
        %v4033 = vpack.c.b16 %v3139, %v3133
        %v4034 = vpack.c.b16 %v3140, %v3134
        %v4035 = vpack.c.b16 %v3141, %v3135
        %v4036 = vpack.c.b16 %v3142, %v3136
        %v4037 = vpack.c.b16 %v3149, %v3143
        %v4038 = vpack.c.b16 %v3150, %v3144
        %v4039 = vpack.c.b16 %v3151, %v3145
        %v4040 = vpack.c.b16 %v3152, %v3146
        %v4041 = vpack.c.b16 %v3153, %v3147
        %v4042 = vpack.c.b16 %v3154, %v3148
        %v4043 = vpack.c.b16 %v3161, %v3155
        %v4044 = vpack.c.b16 %v3162, %v3156
        %v4045 = vpack.c.b16 %v3163, %v3157
        %v4046 = vpack.c.b16 %v3164, %v3158
        %v4047 = vpack.c.b16 %v3165, %v3159
        %v4048 = vpack.c.b16 %v3166, %v3160
        %v4049 = vpack.c.b16 %v3173, %v3167
        %v4050 = vpack.c.b16 %v3174, %v3168
        %v4051 = vpack.c.b16 %v3175, %v3169
        %v4052 = vpack.c.b16 %v3176, %v3170
        %v4053 = vpack.c.b16 %v3177, %v3171
        %v4054 = vpack.c.b16 %v3178, %v3172
        %v4055 = vpack.c.b16 %v3185, %v3179
        %v4056 = vpack.c.b16 %v3186, %v3180
        %v4057 = vpack.c.b16 %v3187, %v3181
        %v4058 = vpack.c.b16 %v3188, %v3182
        %v4059 = vpack.c.b16 %v3189, %v3183
        %v4060 = vpack.c.b16 %v3190, %v3184
        %v4061 = vpack.c.b16 %v3197, %v3191
        %v4062 = vpack.c.b16 %v3198, %v3192
        %v4063 = vpack.c.b16 %v3199, %v3193
        %v4064 = vpack.c.b16 %v3200, %v3194
        %v4065 = vpack.c.b16 %v3201, %v3195
        %v4066 = vpack.c.b16 %v3202, %v3196
        %v4067 = vpack.c.b16 %v3209, %v3203
        %v4068 = vpack.c.b16 %v3210, %v3204
        %v4069 = vpack.c.b16 %v3211, %v3205
        %v4070 = vpack.c.b16 %v3212, %v3206
        %v4071 = vpack.c.b16 %v3213, %v3207
        %v4072 = vpack.c.b16 %v3214, %v3208
        %v4073 = vpack.c.b16 %v3221, %v3215
        %v4074 = vpack.c.b16 %v3222, %v3216
        %v4075 = vpack.c.b16 %v3223, %v3217
        %v4076 = vpack.c.b16 %v3224, %v3218
        %v4077 = vpack.c.b16 %v3225, %v3219
        %v4078 = vpack.c.b16 %v3226, %v3220
        %v4079 = vpack.c.b16 %v3233, %v3227
        %v4080 = vpack.c.b16 %v3234, %v3228
        %v4081 = vpack.c.b16 %v3235, %v3229
        %v4082 = vpack.c.b16 %v3236, %v3230
        %v4083 = vpack.c.b16 %v3237, %v3231
        %v4084 = vpack.c.b16 %v3238, %v3232
        %v4085 = vpack.c.b16 %v3245, %v3239
        %v4086 = vpack.c.b16 %v3246, %v3240
        %v4087 = vpack.c.b16 %v3247, %v3241
        %v4088 = vpack.c.b16 %v3248, %v3242
        %v4089 = vpack.c.b16 %v3249, %v3243
        %v4090 = vpack.c.b16 %v3250, %v3244
        %v4091 = vpack.c.b16 %v3257, %v3251
        %v4092 = vpack.c.b16 %v3258, %v3252
        %v4093 = vpack.c.b16 %v3259, %v3253
        %v4094 = vpack.c.b16 %v3260, %v3254
        %v4095 = vpack.c.b16 %v3261, %v3255
        %v4096 = vpack.c.b16 %v3262, %v3256
        %v4097 = vpack.c.b16 %v3269, %v3263
        %v4098 = vpack.c.b16 %v3270, %v3264
        %v4099 = vpack.c.b16 %v3271, %v3265
        %v4100 = vpack.c.b16 %v3272, %v3266
        %v4101 = vpack.c.b16 %v3273, %v3267
        %v4102 = vpack.c.b16 %v3274, %v3268
        %v4103 = vpack.c.b16 %v3281, %v3275
        %v4104 = vpack.c.b16 %v3282, %v3276
        %v4105 = vpack.c.b16 %v3283, %v3277
        %v4106 = vpack.c.b16 %v3284, %v3278
        %v4107 = vpack.c.b16 %v3285, %v3279
        %v4108 = vpack.c.b16 %v3286, %v3280
        %v4109 = vpack.c.b16 %v3293, %v3287
        %v4110 = vpack.c.b16 %v3294, %v3288
        %v4111 = vpack.c.b16 %v3295, %v3289
        %v4112 = vpack.c.b16 %v3296, %v3290
        %v4113 = vpack.c.b16 %v3297, %v3291
        %v4114 = vpack.c.b16 %v3298, %v3292
        %v4115 = vpack.c.b16 %v3305, %v3299
        %v4116 = vpack.c.b16 %v3306, %v3300
        %v4117 = vpack.c.b16 %v3307, %v3301
        %v4118 = vpack.c.b16 %v3308, %v3302
        %v4119 = vpack.c.b16 %v3309, %v3303
        %v4120 = vpack.c.b16 %v3310, %v3304
        %v4121 = vpack.c.b16 %v3317, %v3311
        %v4122 = vpack.c.b16 %v3318, %v3312
        %v4123 = vpack.c.b16 %v3319, %v3313
        %v4124 = vpack.c.b16 %v3320, %v3314
        %v4125 = vpack.c.b16 %v3321, %v3315
        %v4126 = vpack.c.b16 %v3322, %v3316
        %v4127 = vpack.c.b16 %v3329, %v3323
        %v4128 = vpack.c.b16 %v3330, %v3324
        %v4129 = vpack.c.b16 %v3331, %v3325
        %v4130 = vpack.c.b16 %v3332, %v3326
        %v4131 = vpack.c.b16 %v3333, %v3327
        %v4132 = vpack.c.b16 %v3334, %v3328
        %v4133 = vpack.c.b16 %v3341, %v3335
        %v4134 = vpack.c.b16 %v3342, %v3336
        %v4135 = vpack.c.b16 %v3343, %v3337
        %v4136 = vpack.c.b16 %v3344, %v3338
        %v4137 = vpack.c.b16 %v3345, %v3339
        %v4138 = vpack.c.b16 %v3346, %v3340
        %v4139 = vpack.c.b16 %v3353, %v3347
        %v4140 = vpack.c.b16 %v3354, %v3348
        %v4141 = vpack.c.b16 %v3355, %v3349
        %v4142 = vpack.c.b16 %v3356, %v3350
        %v4143 = vpack.c.b16 %v3357, %v3351
        %v4144 = vpack.c.b16 %v3358, %v3352
        %v4145 = vpack.c.b16 %v3365, %v3359
        %v4146 = vpack.c.b16 %v3366, %v3360
        %v4147 = vpack.c.b16 %v3367, %v3361
        %v4148 = vpack.c.b16 %v3368, %v3362
        %v4149 = vpack.c.b16 %v3369, %v3363
        %v4150 = vpack.c.b16 %v3370, %v3364
        %v4151 = vpack.c.b16 %v3377, %v3371
        %v4152 = vpack.c.b16 %v3378, %v3372
        %v4153 = vpack.c.b16 %v3379, %v3373
        %v4154 = vpack.c.b16 %v3380, %v3374
        %v4155 = vpack.c.b16 %v3381, %v3375
        %v4156 = vpack.c.b16 %v3382, %v3376
        %v4157 = vpack.c.b16 %v3389, %v3383
        %v4158 = vpack.c.b16 %v3390, %v3384
        %v4159 = vpack.c.b16 %v3391, %v3385
        %v4160 = vpack.c.b16 %v3392, %v3386
        %v4161 = vpack.c.b16 %v3393, %v3387
        %v4162 = vpack.c.b16 %v3394, %v3388
        %v5027 = vunpack.c.l.b16 %v988
        %v5028 = vunpack.c.l.b16 %v989
        %v5029 = vunpack.c.l.b16 %v990
        %v5030 = vunpack.c.l.b16 %v991
        %v5031 = vunpack.c.l.b16 %v992
        %v5032 = vunpack.c.l.b16 %v993
        %v5033 = vunpack.c.l.b16 %v994
        %v5034 = vunpack.c.l.b16 %v995
        %v5035 = vunpack.c.l.b16 %v996
        %v5036 = vunpack.c.l.b16 %v997
        %v5037 = vunpack.c.l.b16 %v998
        %v5038 = vunpack.c.l.b16 %v999
        %v5039 = vunpack.c.l.b16 %v1000
        %v5040 = vunpack.c.l.b16 %v1001
        %v5041 = vunpack.c.l.b16 %v1002
        %v5042 = vunpack.c.l.b16 %v1003
        %v5043 = vunpack.c.l.b16 %v1004
        %v5044 = vunpack.c.l.b16 %v1005
        %v5045 = vunpack.c.l.b16 %v1006
        %v5046 = vunpack.c.l.b16 %v1007
        %v5047 = vunpack.c.l.b16 %v1008
        %v5048 = vunpack.c.l.b16 %v1009
        %v5049 = vunpack.c.l.b16 %v1010
        %v5050 = vunpack.c.l.b16 %v1011
        %v5051 = vunpack.c.l.b16 %v1012
        %v5052 = vunpack.c.l.b16 %v1013
        %v5053 = vunpack.c.l.b16 %v1014
        %v5054 = vunpack.c.l.b16 %v1015
        %v5055 = vunpack.c.l.b16 %v1016
        %v5056 = vunpack.c.l.b16 %v1017
        %v5057 = vunpack.c.l.b16 %v1018
        %v5058 = vunpack.c.l.b16 %v1019
        %v5059 = vunpack.c.l.b16 %v1020
        %v5060 = vunpack.c.l.b16 %v1021
        %v5061 = vunpack.c.l.b16 %v1022
        %v5062 = vunpack.c.l.b16 %v1023
        %v5063 = vunpack.c.l.b16 %v1024
        %v5064 = vunpack.c.l.b16 %v1025
        %v5065 = vunpack.c.l.b16 %v1026
        %v5066 = vunpack.c.l.b16 %v1027
        %v5067 = vunpack.c.l.b16 %v1028
        %v5068 = vunpack.c.l.b16 %v1029
        %v5069 = vunpack.c.l.b16 %v1030
        %v5070 = vunpack.c.l.b16 %v1031
        %v5071 = vunpack.c.l.b16 %v1032
        %v5072 = vunpack.c.l.b16 %v1033
        %v5073 = vunpack.c.l.b16 %v1034
        %v5074 = vunpack.c.l.b16 %v1035
        %v5075 = vunpack.c.l.b16 %v1036
        %v5076 = vunpack.c.l.b16 %v1037
        %v5077 = vunpack.c.l.b16 %v1038
        %v5078 = vunpack.c.l.b16 %v1039
        %v5079 = vunpack.c.l.b16 %v1040
        %v5080 = vunpack.c.l.b16 %v1041
        %v5081 = vunpack.c.l.b16 %v1042
        %v5082 = vunpack.c.l.b16 %v1043
        %v5083 = vunpack.c.l.b16 %v1044
        %v5084 = vunpack.c.l.b16 %v1045
        %v5085 = vunpack.c.l.b16 %v1046
        %v5086 = vunpack.c.l.b16 %v1047
        %v5087 = vunpack.c.l.b16 %v1048
        %v5088 = vunpack.c.l.b16 %v1049
        %v5089 = vunpack.c.l.b16 %v1050
        %v5090 = vunpack.c.l.b16 %v1051
        %v5091 = vunpack.c.l.b16 %v1052
        %v5092 = vunpack.c.l.b16 %v1053
        %v5093 = vunpack.c.l.b16 %v1054
        %v5094 = vunpack.c.l.b16 %v1055
        %v5095 = vunpack.c.l.b16 %v1056
        %v5096 = vunpack.c.l.b16 %v1057
        %v5097 = vunpack.c.l.b16 %v1058
        %v5098 = vunpack.c.l.b16 %v1059
        %v5099 = vunpack.c.l.b16 %v1060
        %v5100 = vunpack.c.l.b16 %v1061
        %v5101 = vunpack.c.l.b16 %v1062
        %v5102 = vunpack.c.l.b16 %v1063
        %v5103 = vunpack.c.l.b16 %v1064
        %v5104 = vunpack.c.l.b16 %v1065
        %v5105 = vunpack.c.l.b16 %v1066
        %v5106 = vunpack.c.l.b16 %v1067
        %v5107 = vunpack.c.l.b16 %v1068
        %v5108 = vunpack.c.l.b16 %v1069
        %v5109 = vunpack.c.l.b16 %v1070
        %v5110 = vunpack.c.l.b16 %v1071
        %v5111 = vunpack.c.l.b16 %v1072
        %v5112 = vunpack.c.l.b16 %v1073
        %v5113 = vunpack.c.l.b16 %v1074
        %v5114 = vunpack.c.l.b16 %v1075
        %v5115 = vunpack.c.l.b16 %v1076
        %v5116 = vunpack.c.l.b16 %v1077
        %v5117 = vunpack.c.l.b16 %v1078
        %v5118 = vunpack.c.l.b16 %v1079
        %v5119 = vunpack.c.l.b16 %v1080
        %v5120 = vunpack.c.l.b16 %v1081
        %v5121 = vunpack.c.l.b16 %v1082
        %v5122 = vunpack.c.l.b16 %v1083
        %v5123 = vpack.c.b16 %v5028, %v5027
        %v5124 = vpack.c.b16 %v5030, %v5029
        %v5125 = vpack.c.b16 %v5032, %v5031
        %v5126 = vpack.c.b16 %v5034, %v5033
        %v5127 = vpack.c.b16 %v5036, %v5035
        %v5128 = vpack.c.b16 %v5038, %v5037
        %v5129 = vpack.c.b16 %v5040, %v5039
        %v5130 = vpack.c.b16 %v5042, %v5041
        %v5131 = vpack.c.b16 %v5044, %v5043
        %v5132 = vpack.c.b16 %v5046, %v5045
        %v5133 = vpack.c.b16 %v5048, %v5047
        %v5134 = vpack.c.b16 %v5050, %v5049
        %v5135 = vpack.c.b16 %v5052, %v5051
        %v5136 = vpack.c.b16 %v5054, %v5053
        %v5137 = vpack.c.b16 %v5056, %v5055
        %v5138 = vpack.c.b16 %v5058, %v5057
        %v5139 = vpack.c.b16 %v5060, %v5059
        %v5140 = vpack.c.b16 %v5062, %v5061
        %v5141 = vpack.c.b16 %v5064, %v5063
        %v5142 = vpack.c.b16 %v5066, %v5065
        %v5143 = vpack.c.b16 %v5068, %v5067
        %v5144 = vpack.c.b16 %v5070, %v5069
        %v5145 = vpack.c.b16 %v5072, %v5071
        %v5146 = vpack.c.b16 %v5074, %v5073
        %v5147 = vpack.c.b16 %v5076, %v5075
        %v5148 = vpack.c.b16 %v5078, %v5077
        %v5149 = vpack.c.b16 %v5080, %v5079
        %v5150 = vpack.c.b16 %v5082, %v5081
        %v5151 = vpack.c.b16 %v5084, %v5083
        %v5152 = vpack.c.b16 %v5086, %v5085
        %v5153 = vpack.c.b16 %v5088, %v5087
        %v5154 = vpack.c.b16 %v5090, %v5089
        %v5155 = vpack.c.b16 %v5092, %v5091
        %v5156 = vpack.c.b16 %v5094, %v5093
        %v5157 = vpack.c.b16 %v5096, %v5095
        %v5158 = vpack.c.b16 %v5098, %v5097
        %v5159 = vpack.c.b16 %v5100, %v5099
        %v5160 = vpack.c.b16 %v5102, %v5101
        %v5161 = vpack.c.b16 %v5104, %v5103
        %v5162 = vpack.c.b16 %v5106, %v5105
        %v5163 = vpack.c.b16 %v5108, %v5107
        %v5164 = vpack.c.b16 %v5110, %v5109
        %v5165 = vpack.c.b16 %v5112, %v5111
        %v5166 = vpack.c.b16 %v5114, %v5113
        %v5167 = vpack.c.b16 %v5116, %v5115
        %v5168 = vpack.c.b16 %v5118, %v5117
        %v5169 = vpack.c.b16 %v5120, %v5119
        %v5170 = vpack.c.b16 %v5122, %v5121
        %5219 = vmatprep.subr.bf16.mxu0 0
        %5220 = vmatpush1.bf16.msra.mxu0 %v5123
        %5221 = vmatprep.subr.bf16.mxu0 0
        %5222 = vmatpush1.bf16.msra.mxu0 %v5124
        %5223 = vmatprep.subr.bf16.mxu0 0
        %5224 = vmatpush1.bf16.msra.mxu0 %v5125
        %5225 = vmatprep.subr.bf16.mxu0 0
        %5226 = vmatpush1.bf16.msra.mxu0 %v5126
        %5227 = vmatprep.subr.bf16.mxu0 0
        %5228 = vmatpush1.bf16.msra.mxu0 %v5127
        %5229 = vmatprep.subr.bf16.mxu0 0
        %5230 = vmatpush1.bf16.msra.mxu0 %v5128
        %5231 = vmatprep.subr.bf16.mxu0 0
        %5232 = vmatpush1.bf16.msra.mxu0 %v5129
        %5233 = vmatprep.subr.bf16.mxu0 0
        %5234 = vmatpush1.bf16.msra.mxu0 %v5130
        %5235 = vmatprep.subr.bf16.mxu0 0
        %5236 = vmatpush1.bf16.msra.mxu0 %v5131
        %5237 = vmatprep.subr.bf16.mxu0 0
        %5238 = vmatpush1.bf16.msra.mxu0 %v5132
        %5239 = vmatprep.subr.bf16.mxu0 0
        %5240 = vmatpush1.bf16.msra.mxu0 %v5133
        %5241 = vmatprep.subr.bf16.mxu0 0
        %5242 = vmatpush1.bf16.msra.mxu0 %v5134
        %5243 = vmatprep.subr.bf16.mxu0 0
        %5244 = vmatpush1.bf16.msra.mxu0 %v5135
        %5245 = vmatprep.subr.bf16.mxu0 0
        %5246 = vmatpush1.bf16.msra.mxu0 %v5136
        %5247 = vmatprep.subr.bf16.mxu0 0
        %5248 = vmatpush1.bf16.msra.mxu0 %v5137
        %5249 = vmatprep.subr.bf16.mxu0 0
        %5250 = vmatpush1.bf16.msra.mxu0 %v5138
        %5251 = vmatprep.mubr.bf16.mxu0 %v3396
        %5252 = vmatmul.mubr.bf16.gmra.mrb[0].mxu0 %v3395
        %v5253 = vpop.f32.mrb[0].mxu0
        %v5254 = vadd.f32 %v1089, %v5253
        %v5255 = vpop.f32.mrb[0].mxu0
        %v5256 = vpop.f32.mrb[0].mxu0
        %v5257 = vadd.f32 %v1089, %v5256
        %v5258 = vpop.f32.mrb[0].mxu0
        %5259 = vmatprep.mubr.bf16.mxu0 %v3402
        %5260 = vmatmul.mubr.bf16.gmra.mrb[0].mxu0 %v3401
        %v5261 = vpop.f32.mrb[0].mxu0
        %v5262 = vadd.f32 %v1089, %v5261
        %v5263 = vpop.f32.mrb[0].mxu0
        %v5264 = vpop.f32.mrb[0].mxu0
        %v5265 = vadd.f32 %v1089, %v5264
        %v5266 = vpop.f32.mrb[0].mxu0
        %5267 = vmatprep.mubr.bf16.mxu0 %v3408
        %5268 = vmatmul.mubr.bf16.gmra.mrb[0].mxu0 %v3407
        %v5269 = vpop.f32.mrb[0].mxu0
        %v5270 = vadd.f32 %v1089, %v5269
        %v5271 = vpop.f32.mrb[0].mxu0
        %v5272 = vpop.f32.mrb[0].mxu0
        %v5273 = vadd.f32 %v1089, %v5272
        %v5274 = vpop.f32.mrb[0].mxu0
        %5275 = vmatprep.mubr.bf16.mxu0 %v3414
        %5276 = vmatmul.mubr.bf16.gmra.mrb[0].mxu0 %v3413
        %v5277 = vpop.f32.mrb[0].mxu0
        %v5278 = vadd.f32 %v1089, %v5277
        %v5279 = vpop.f32.mrb[0].mxu0
        %v5280 = vpop.f32.mrb[0].mxu0
        %v5281 = vadd.f32 %v1089, %v5280
        %v5282 = vpop.f32.mrb[0].mxu0
        %5283 = vmatprep.mubr.bf16.mxu0 %v3420
        %5284 = vmatmul.mubr.bf16.gmra.mrb[0].mxu0 %v3419
        %v5285 = vpop.f32.mrb[0].mxu0
        %v5286 = vadd.f32 %v1089, %v5285
        %v5287 = vpop.f32.mrb[0].mxu0
        %v5288 = vpop.f32.mrb[0].mxu0
        %v5289 = vadd.f32 %v1089, %v5288
        %v5290 = vpop.f32.mrb[0].mxu0
        %5291 = vmatprep.mubr.bf16.mxu0 %v3426
        %5292 = vmatmul.mubr.bf16.gmra.mrb[0].mxu0 %v3425
        %v5293 = vpop.f32.mrb[0].mxu0
        %v5294 = vadd.f32 %v1089, %v5293
        %v5295 = vpop.f32.mrb[0].mxu0
        %v5296 = vpop.f32.mrb[0].mxu0
        %v5297 = vadd.f32 %v1089, %v5296
        %v5298 = vpop.f32.mrb[0].mxu0
        %5299 = vmatprep.mubr.bf16.mxu0 %v3432
        %5300 = vmatmul.mubr.bf16.gmra.mrb[0].mxu0 %v3431
        %v5301 = vpop.f32.mrb[0].mxu0
        %v5302 = vadd.f32 %v1089, %v5301
        %v5303 = vpop.f32.mrb[0].mxu0
        %v5304 = vpop.f32.mrb[0].mxu0
        %v5305 = vadd.f32 %v1089, %v5304
        %v5306 = vpop.f32.mrb[0].mxu0
        %5307 = vmatprep.mubr.bf16.mxu0 %v3438
        %5308 = vmatmul.mubr.bf16.gmra.mrb[0].mxu0 %v3437
        %v5309 = vpop.f32.mrb[0].mxu0
        %v5310 = vadd.f32 %v1089, %v5309
        %v5311 = vpop.f32.mrb[0].mxu0
        %v5312 = vpop.f32.mrb[0].mxu0
        %v5313 = vadd.f32 %v1089, %v5312
        %v5314 = vpop.f32.mrb[0].mxu0
        %5315 = vmatprep.mubr.bf16.mxu0 %v3444
        %5316 = vmatmul.mubr.bf16.gmra.mrb[0].mxu0 %v3443
        %v5317 = vpop.f32.mrb[0].mxu0
        %v5318 = vadd.f32 %v1089, %v5317
        %v5319 = vpop.f32.mrb[0].mxu0
        %v5320 = vpop.f32.mrb[0].mxu0
        %v5321 = vadd.f32 %v1089, %v5320
        %v5322 = vpop.f32.mrb[0].mxu0
        %5323 = vmatprep.mubr.bf16.mxu0 %v3450
        %5324 = vmatmul.mubr.bf16.gmra.mrb[0].mxu0 %v3449
        %v5325 = vpop.f32.mrb[0].mxu0
        %v5326 = vadd.f32 %v1089, %v5325
        %v5327 = vpop.f32.mrb[0].mxu0
        %v5328 = vpop.f32.mrb[0].mxu0
        %v5329 = vadd.f32 %v1089, %v5328
        %v5330 = vpop.f32.mrb[0].mxu0
        %5331 = vmatprep.mubr.bf16.mxu0 %v3456
        %5332 = vmatmul.mubr.bf16.gmra.mrb[0].mxu0 %v3455
        %v5333 = vpop.f32.mrb[0].mxu0
        %v5334 = vadd.f32 %v1089, %v5333
        %v5335 = vpop.f32.mrb[0].mxu0
        %v5336 = vpop.f32.mrb[0].mxu0
        %v5337 = vadd.f32 %v1089, %v5336
        %v5338 = vpop.f32.mrb[0].mxu0
        %5339 = vmatprep.mubr.bf16.mxu0 %v3462
        %5340 = vmatmul.mubr.bf16.gmra.mrb[0].mxu0 %v3461
        %v5341 = vpop.f32.mrb[0].mxu0
        %v5342 = vadd.f32 %v1089, %v5341
        %v5343 = vpop.f32.mrb[0].mxu0
        %v5344 = vpop.f32.mrb[0].mxu0
        %v5345 = vadd.f32 %v1089, %v5344
        %v5346 = vpop.f32.mrb[0].mxu0
        %5347 = vmatprep.mubr.bf16.mxu0 %v3468
        %5348 = vmatmul.mubr.bf16.gmra.mrb[0].mxu0 %v3467
        %v5349 = vpop.f32.mrb[0].mxu0
        %v5350 = vadd.f32 %v1089, %v5349
        %v5351 = vpop.f32.mrb[0].mxu0
        %v5352 = vpop.f32.mrb[0].mxu0
        %v5353 = vadd.f32 %v1089, %v5352
        %v5354 = vpop.f32.mrb[0].mxu0
        %5355 = vmatprep.mubr.bf16.mxu0 %v3474
        %5356 = vmatmul.mubr.bf16.gmra.mrb[0].mxu0 %v3473
        %v5357 = vpop.f32.mrb[0].mxu0
        %v5358 = vadd.f32 %v1089, %v5357
        %v5359 = vpop.f32.mrb[0].mxu0
        %v5360 = vpop.f32.mrb[0].mxu0
        %v5361 = vadd.f32 %v1089, %v5360
        %v5362 = vpop.f32.mrb[0].mxu0
        %5363 = vmatprep.mubr.bf16.mxu0 %v3480
        %5364 = vmatmul.mubr.bf16.gmra.mrb[0].mxu0 %v3479
        %v5365 = vpop.f32.mrb[0].mxu0
        %v5366 = vadd.f32 %v1089, %v5365
        %v5367 = vpop.f32.mrb[0].mxu0
        %v5368 = vpop.f32.mrb[0].mxu0
        %v5369 = vadd.f32 %v1089, %v5368
        %v5370 = vpop.f32.mrb[0].mxu0
        %5371 = vmatprep.mubr.bf16.mxu0 %v3486
        %5372 = vmatmul.mubr.bf16.gmra.mrb[0].mxu0 %v3485
        %v5373 = vpop.f32.mrb[0].mxu0
        %v5374 = vadd.f32 %v1089, %v5373
        %v5375 = vpop.f32.mrb[0].mxu0
        %v5376 = vpop.f32.mrb[0].mxu0
        %v5377 = vadd.f32 %v1089, %v5376
        %v5378 = vpop.f32.mrb[0].mxu0
        %5379 = vmatprep.mubr.bf16.mxu0 %v3492
        %5380 = vmatmul.mubr.bf16.gmra.mrb[0].mxu0 %v3491
        %v5381 = vpop.f32.mrb[0].mxu0
        %v5382 = vadd.f32 %v1089, %v5381
        %v5383 = vpop.f32.mrb[0].mxu0
        %v5384 = vpop.f32.mrb[0].mxu0
        %v5385 = vadd.f32 %v1089, %v5384
        %v5386 = vpop.f32.mrb[0].mxu0
        %5387 = vmatprep.mubr.bf16.mxu0 %v3498
        %5388 = vmatmul.mubr.bf16.gmra.mrb[0].mxu0 %v3497
        %v5389 = vpop.f32.mrb[0].mxu0
        %v5390 = vadd.f32 %v1089, %v5389
        %v5391 = vpop.f32.mrb[0].mxu0
        %v5392 = vpop.f32.mrb[0].mxu0
        %v5393 = vadd.f32 %v1089, %v5392
        %v5394 = vpop.f32.mrb[0].mxu0
        %5395 = vmatprep.mubr.bf16.mxu0 %v3504
        %5396 = vmatmul.mubr.bf16.gmra.mrb[0].mxu0 %v3503
        %v5397 = vpop.f32.mrb[0].mxu0
        %v5398 = vadd.f32 %v1089, %v5397
        %v5399 = vpop.f32.mrb[0].mxu0
        %v5400 = vpop.f32.mrb[0].mxu0
        %v5401 = vadd.f32 %v1089, %v5400
        %v5402 = vpop.f32.mrb[0].mxu0
        %5403 = vmatprep.mubr.bf16.mxu0 %v3510
        %5404 = vmatmul.mubr.bf16.gmra.mrb[0].mxu0 %v3509
        %v5405 = vpop.f32.mrb[0].mxu0
        %v5406 = vadd.f32 %v1089, %v5405
        %v5407 = vpop.f32.mrb[0].mxu0
        %v5408 = vpop.f32.mrb[0].mxu0
        %v5409 = vadd.f32 %v1089, %v5408
        %v5410 = vpop.f32.mrb[0].mxu0
        %5411 = vmatprep.mubr.bf16.mxu0 %v3516
        %5412 = vmatmul.mubr.bf16.gmra.mrb[0].mxu0 %v3515
        %v5413 = vpop.f32.mrb[0].mxu0
        %v5414 = vadd.f32 %v1089, %v5413
        %v5415 = vpop.f32.mrb[0].mxu0
        %v5416 = vpop.f32.mrb[0].mxu0
        %v5417 = vadd.f32 %v1089, %v5416
        %v5418 = vpop.f32.mrb[0].mxu0
        %5419 = vmatprep.mubr.bf16.mxu0 %v3522
        %5420 = vmatmul.mubr.bf16.gmra.mrb[0].mxu0 %v3521
        %v5421 = vpop.f32.mrb[0].mxu0
        %v5422 = vadd.f32 %v1089, %v5421
        %v5423 = vpop.f32.mrb[0].mxu0
        %v5424 = vpop.f32.mrb[0].mxu0
        %v5425 = vadd.f32 %v1089, %v5424
        %v5426 = vpop.f32.mrb[0].mxu0
        %5427 = vmatprep.mubr.bf16.mxu0 %v3528
        %5428 = vmatmul.mubr.bf16.gmra.mrb[0].mxu0 %v3527
        %v5429 = vpop.f32.mrb[0].mxu0
        %v5430 = vadd.f32 %v1089, %v5429
        %v5431 = vpop.f32.mrb[0].mxu0
        %v5432 = vpop.f32.mrb[0].mxu0
        %v5433 = vadd.f32 %v1089, %v5432
        %v5434 = vpop.f32.mrb[0].mxu0
        %5435 = vmatprep.mubr.bf16.mxu0 %v3534
        %5436 = vmatmul.mubr.bf16.gmra.mrb[0].mxu0 %v3533
        %v5437 = vpop.f32.mrb[0].mxu0
        %v5438 = vadd.f32 %v1089, %v5437
        %v5439 = vpop.f32.mrb[0].mxu0
        %v5440 = vpop.f32.mrb[0].mxu0
        %v5441 = vadd.f32 %v1089, %v5440
        %v5442 = vpop.f32.mrb[0].mxu0
        %5443 = vmatprep.mubr.bf16.mxu0 %v3540
        %5444 = vmatmul.mubr.bf16.gmra.mrb[0].mxu0 %v3539
        %v5445 = vpop.f32.mrb[0].mxu0
        %v5446 = vadd.f32 %v1089, %v5445
        %v5447 = vpop.f32.mrb[0].mxu0
        %v5448 = vpop.f32.mrb[0].mxu0
        %v5449 = vadd.f32 %v1089, %v5448
        %v5450 = vpop.f32.mrb[0].mxu0
        %5451 = vmatprep.mubr.bf16.mxu0 %v3546
        %5452 = vmatmul.mubr.bf16.gmra.mrb[0].mxu0 %v3545
        %v5453 = vpop.f32.mrb[0].mxu0
        %v5454 = vadd.f32 %v1089, %v5453
        %v5455 = vpop.f32.mrb[0].mxu0
        %v5456 = vpop.f32.mrb[0].mxu0
        %v5457 = vadd.f32 %v1089, %v5456
        %v5458 = vpop.f32.mrb[0].mxu0
        %5459 = vmatprep.mubr.bf16.mxu0 %v3552
        %5460 = vmatmul.mubr.bf16.gmra.mrb[0].mxu0 %v3551
        %v5461 = vpop.f32.mrb[0].mxu0
        %v5462 = vadd.f32 %v1089, %v5461
        %v5463 = vpop.f32.mrb[0].mxu0
        %v5464 = vpop.f32.mrb[0].mxu0
        %v5465 = vadd.f32 %v1089, %v5464
        %v5466 = vpop.f32.mrb[0].mxu0
        %5467 = vmatprep.mubr.bf16.mxu0 %v3558
        %5468 = vmatmul.mubr.bf16.gmra.mrb[0].mxu0 %v3557
        %v5469 = vpop.f32.mrb[0].mxu0
        %v5470 = vadd.f32 %v1089, %v5469
        %v5471 = vpop.f32.mrb[0].mxu0
        %v5472 = vpop.f32.mrb[0].mxu0
        %v5473 = vadd.f32 %v1089, %v5472
        %v5474 = vpop.f32.mrb[0].mxu0
        %5475 = vmatprep.mubr.bf16.mxu0 %v3564
        %5476 = vmatmul.mubr.bf16.gmra.mrb[0].mxu0 %v3563
        %v5477 = vpop.f32.mrb[0].mxu0
        %v5478 = vadd.f32 %v1089, %v5477
        %v5479 = vpop.f32.mrb[0].mxu0
        %v5480 = vpop.f32.mrb[0].mxu0
        %v5481 = vadd.f32 %v1089, %v5480
        %v5482 = vpop.f32.mrb[0].mxu0
        %5483 = vmatprep.mubr.bf16.mxu0 %v3570
        %5484 = vmatmul.mubr.bf16.gmra.mrb[0].mxu0 %v3569
        %v5485 = vpop.f32.mrb[0].mxu0
        %v5486 = vadd.f32 %v1089, %v5485
        %v5487 = vpop.f32.mrb[0].mxu0
        %v5488 = vpop.f32.mrb[0].mxu0
        %v5489 = vadd.f32 %v1089, %v5488
        %v5490 = vpop.f32.mrb[0].mxu0
        %5491 = vmatprep.mubr.bf16.mxu0 %v3576
        %5492 = vmatmul.mubr.bf16.gmra.mrb[0].mxu0 %v3575
        %v5493 = vpop.f32.mrb[0].mxu0
        %v5494 = vadd.f32 %v1089, %v5493
        %v5495 = vpop.f32.mrb[0].mxu0
        %v5496 = vpop.f32.mrb[0].mxu0
        %v5497 = vadd.f32 %v1089, %v5496
        %v5498 = vpop.f32.mrb[0].mxu0
        %5499 = vmatprep.mubr.bf16.mxu0 %v3582
        %5500 = vmatmul.mubr.bf16.gmra.mrb[0].mxu0 %v3581
        %v5501 = vpop.f32.mrb[0].mxu0
        %v5502 = vadd.f32 %v1089, %v5501
        %v5503 = vpop.f32.mrb[0].mxu0
        %v5504 = vpop.f32.mrb[0].mxu0
        %v5505 = vadd.f32 %v1089, %v5504
        %v5506 = vpop.f32.mrb[0].mxu0
        %5507 = vmatprep.mubr.bf16.mxu0 %v3588
        %5508 = vmatmul.mubr.bf16.gmra.mrb[0].mxu0 %v3587
        %v5509 = vpop.f32.mrb[0].mxu0
        %v5510 = vadd.f32 %v1089, %v5509
        %v5511 = vpop.f32.mrb[0].mxu0
        %v5512 = vpop.f32.mrb[0].mxu0
        %v5513 = vadd.f32 %v1089, %v5512
        %v5514 = vpop.f32.mrb[0].mxu0
        %5515 = vmatprep.mubr.bf16.mxu0 %v3594
        %5516 = vmatmul.mubr.bf16.gmra.mrb[0].mxu0 %v3593
        %v5517 = vpop.f32.mrb[0].mxu0
        %v5518 = vadd.f32 %v1089, %v5517
        %v5519 = vpop.f32.mrb[0].mxu0
        %v5520 = vpop.f32.mrb[0].mxu0
        %v5521 = vadd.f32 %v1089, %v5520
        %v5522 = vpop.f32.mrb[0].mxu0
        %5523 = vmatprep.mubr.bf16.mxu0 %v3600
        %5524 = vmatmul.mubr.bf16.gmra.mrb[0].mxu0 %v3599
        %v5525 = vpop.f32.mrb[0].mxu0
        %v5526 = vadd.f32 %v1089, %v5525
        %v5527 = vpop.f32.mrb[0].mxu0
        %v5528 = vpop.f32.mrb[0].mxu0
        %v5529 = vadd.f32 %v1089, %v5528
        %v5530 = vpop.f32.mrb[0].mxu0
        %5531 = vmatprep.mubr.bf16.mxu0 %v3606
        %5532 = vmatmul.mubr.bf16.gmra.mrb[0].mxu0 %v3605
        %v5533 = vpop.f32.mrb[0].mxu0
        %v5534 = vadd.f32 %v1089, %v5533
        %v5535 = vpop.f32.mrb[0].mxu0
        %v5536 = vpop.f32.mrb[0].mxu0
        %v5537 = vadd.f32 %v1089, %v5536
        %v5538 = vpop.f32.mrb[0].mxu0
        %5539 = vmatprep.mubr.bf16.mxu0 %v3612
        %5540 = vmatmul.mubr.bf16.gmra.mrb[0].mxu0 %v3611
        %v5541 = vpop.f32.mrb[0].mxu0
        %v5542 = vadd.f32 %v1089, %v5541
        %v5543 = vpop.f32.mrb[0].mxu0
        %v5544 = vpop.f32.mrb[0].mxu0
        %v5545 = vadd.f32 %v1089, %v5544
        %v5546 = vpop.f32.mrb[0].mxu0
        %5547 = vmatprep.mubr.bf16.mxu0 %v3618
        %5548 = vmatmul.mubr.bf16.gmra.mrb[0].mxu0 %v3617
        %v5549 = vpop.f32.mrb[0].mxu0
        %v5550 = vadd.f32 %v1089, %v5549
        %v5551 = vpop.f32.mrb[0].mxu0
        %v5552 = vpop.f32.mrb[0].mxu0
        %v5553 = vadd.f32 %v1089, %v5552
        %v5554 = vpop.f32.mrb[0].mxu0
        %5555 = vmatprep.mubr.bf16.mxu0 %v3624
        %5556 = vmatmul.mubr.bf16.gmra.mrb[0].mxu0 %v3623
        %v5557 = vpop.f32.mrb[0].mxu0
        %v5558 = vadd.f32 %v1089, %v5557
        %v5559 = vpop.f32.mrb[0].mxu0
        %v5560 = vpop.f32.mrb[0].mxu0
        %v5561 = vadd.f32 %v1089, %v5560
        %v5562 = vpop.f32.mrb[0].mxu0
        %5563 = vmatprep.mubr.bf16.mxu0 %v3630
        %5564 = vmatmul.mubr.bf16.gmra.mrb[0].mxu0 %v3629
        %v5565 = vpop.f32.mrb[0].mxu0
        %v5566 = vadd.f32 %v1089, %v5565
        %v5567 = vpop.f32.mrb[0].mxu0
        %v5568 = vpop.f32.mrb[0].mxu0
        %v5569 = vadd.f32 %v1089, %v5568
        %v5570 = vpop.f32.mrb[0].mxu0
        %5571 = vmatprep.mubr.bf16.mxu0 %v3636
        %5572 = vmatmul.mubr.bf16.gmra.mrb[0].mxu0 %v3635
        %v5573 = vpop.f32.mrb[0].mxu0
        %v5574 = vadd.f32 %v1089, %v5573
        %v5575 = vpop.f32.mrb[0].mxu0
        %v5576 = vpop.f32.mrb[0].mxu0
        %v5577 = vadd.f32 %v1089, %v5576
        %v5578 = vpop.f32.mrb[0].mxu0
        %5579 = vmatprep.mubr.bf16.mxu0 %v3642
        %5580 = vmatmul.mubr.bf16.gmra.mrb[0].mxu0 %v3641
        %v5581 = vpop.f32.mrb[0].mxu0
        %v5582 = vadd.f32 %v1089, %v5581
        %v5583 = vpop.f32.mrb[0].mxu0
        %v5584 = vpop.f32.mrb[0].mxu0
        %v5585 = vadd.f32 %v1089, %v5584
        %v5586 = vpop.f32.mrb[0].mxu0
        %5587 = vmatprep.mubr.bf16.mxu0 %v3648
        %5588 = vmatmul.mubr.bf16.gmra.mrb[0].mxu0 %v3647
        %v5589 = vpop.f32.mrb[0].mxu0
        %v5590 = vadd.f32 %v1089, %v5589
        %v5591 = vpop.f32.mrb[0].mxu0
        %v5592 = vpop.f32.mrb[0].mxu0
        %v5593 = vadd.f32 %v1089, %v5592
        %v5594 = vpop.f32.mrb[0].mxu0
        %5595 = vmatprep.mubr.bf16.mxu0 %v3654
        %5596 = vmatmul.mubr.bf16.gmra.mrb[0].mxu0 %v3653
        %v5597 = vpop.f32.mrb[0].mxu0
        %v5598 = vadd.f32 %v1089, %v5597
        %v5599 = vpop.f32.mrb[0].mxu0
        %v5600 = vpop.f32.mrb[0].mxu0
        %v5601 = vadd.f32 %v1089, %v5600
        %v5602 = vpop.f32.mrb[0].mxu0
        %5603 = vmatprep.mubr.bf16.mxu0 %v3660
        %5604 = vmatmul.mubr.bf16.gmra.mrb[0].mxu0 %v3659
        %v5605 = vpop.f32.mrb[0].mxu0
        %v5606 = vadd.f32 %v1089, %v5605
        %v5607 = vpop.f32.mrb[0].mxu0
        %v5608 = vpop.f32.mrb[0].mxu0
        %v5609 = vadd.f32 %v1089, %v5608
        %v5610 = vpop.f32.mrb[0].mxu0
        %5611 = vmatprep.mubr.bf16.mxu0 %v3666
        %5612 = vmatmul.mubr.bf16.gmra.mrb[0].mxu0 %v3665
        %v5613 = vpop.f32.mrb[0].mxu0
        %v5614 = vadd.f32 %v1089, %v5613
        %v5615 = vpop.f32.mrb[0].mxu0
        %v5616 = vpop.f32.mrb[0].mxu0
        %v5617 = vadd.f32 %v1089, %v5616
        %v5618 = vpop.f32.mrb[0].mxu0
        %5619 = vmatprep.mubr.bf16.mxu0 %v3672
        %5620 = vmatmul.mubr.bf16.gmra.mrb[0].mxu0 %v3671
        %v5621 = vpop.f32.mrb[0].mxu0
        %v5622 = vadd.f32 %v1089, %v5621
        %v5623 = vpop.f32.mrb[0].mxu0
        %v5624 = vpop.f32.mrb[0].mxu0
        %v5625 = vadd.f32 %v1089, %v5624
        %v5626 = vpop.f32.mrb[0].mxu0
        %5627 = vmatprep.mubr.bf16.mxu0 %v3678
        %5628 = vmatmul.mubr.bf16.gmra.mrb[0].mxu0 %v3677
        %v5629 = vpop.f32.mrb[0].mxu0
        %v5630 = vadd.f32 %v1089, %v5629
        %v5631 = vpop.f32.mrb[0].mxu0
        %v5632 = vpop.f32.mrb[0].mxu0
        %v5633 = vadd.f32 %v1089, %v5632
        %v5634 = vpop.f32.mrb[0].mxu0
        %5635 = vmatprep.mubr.bf16.mxu0 %v3684
        %5636 = vmatmul.mubr.bf16.gmra.mrb[0].mxu0 %v3683
        %v5637 = vpop.f32.mrb[0].mxu0
        %v5638 = vadd.f32 %v1089, %v5637
        %v5639 = vpop.f32.mrb[0].mxu0
        %v5640 = vpop.f32.mrb[0].mxu0
        %v5641 = vadd.f32 %v1089, %v5640
        %v5642 = vpop.f32.mrb[0].mxu0
        %5643 = vmatprep.mubr.bf16.mxu0 %v3690
        %5644 = vmatmul.mubr.bf16.gmra.mrb[0].mxu0 %v3689
        %v5645 = vpop.f32.mrb[0].mxu0
        %v5646 = vadd.f32 %v1089, %v5645
        %v5647 = vpop.f32.mrb[0].mxu0
        %v5648 = vpop.f32.mrb[0].mxu0
        %v5649 = vadd.f32 %v1089, %v5648
        %v5650 = vpop.f32.mrb[0].mxu0
        %5651 = vmatprep.mubr.bf16.mxu0 %v3696
        %5652 = vmatmul.mubr.bf16.gmra.mrb[0].mxu0 %v3695
        %v5653 = vpop.f32.mrb[0].mxu0
        %v5654 = vadd.f32 %v1089, %v5653
        %v5655 = vpop.f32.mrb[0].mxu0
        %v5656 = vpop.f32.mrb[0].mxu0
        %v5657 = vadd.f32 %v1089, %v5656
        %v5658 = vpop.f32.mrb[0].mxu0
        %5659 = vmatprep.mubr.bf16.mxu0 %v3702
        %5660 = vmatmul.mubr.bf16.gmra.mrb[0].mxu0 %v3701
        %v5661 = vpop.f32.mrb[0].mxu0
        %v5662 = vadd.f32 %v1089, %v5661
        %v5663 = vpop.f32.mrb[0].mxu0
        %v5664 = vpop.f32.mrb[0].mxu0
        %v5665 = vadd.f32 %v1089, %v5664
        %v5666 = vpop.f32.mrb[0].mxu0
        %5667 = vmatprep.mubr.bf16.mxu0 %v3708
        %5668 = vmatmul.mubr.bf16.gmra.mrb[0].mxu0 %v3707
        %v5669 = vpop.f32.mrb[0].mxu0
        %v5670 = vadd.f32 %v1089, %v5669
        %v5671 = vpop.f32.mrb[0].mxu0
        %v5672 = vpop.f32.mrb[0].mxu0
        %v5673 = vadd.f32 %v1089, %v5672
        %v5674 = vpop.f32.mrb[0].mxu0
        %5675 = vmatprep.mubr.bf16.mxu0 %v3714
        %5676 = vmatmul.mubr.bf16.gmra.mrb[0].mxu0 %v3713
        %v5677 = vpop.f32.mrb[0].mxu0
        %v5678 = vadd.f32 %v1089, %v5677
        %v5679 = vpop.f32.mrb[0].mxu0
        %v5680 = vpop.f32.mrb[0].mxu0
        %v5681 = vadd.f32 %v1089, %v5680
        %v5682 = vpop.f32.mrb[0].mxu0
        %5683 = vmatprep.mubr.bf16.mxu0 %v3720
        %5684 = vmatmul.mubr.bf16.gmra.mrb[0].mxu0 %v3719
        %v5685 = vpop.f32.mrb[0].mxu0
        %v5686 = vadd.f32 %v1089, %v5685
        %v5687 = vpop.f32.mrb[0].mxu0
        %v5688 = vpop.f32.mrb[0].mxu0
        %v5689 = vadd.f32 %v1089, %v5688
        %v5690 = vpop.f32.mrb[0].mxu0
        %5691 = vmatprep.mubr.bf16.mxu0 %v3726
        %5692 = vmatmul.mubr.bf16.gmra.mrb[0].mxu0 %v3725
        %v5693 = vpop.f32.mrb[0].mxu0
        %v5694 = vadd.f32 %v1089, %v5693
        %v5695 = vpop.f32.mrb[0].mxu0
        %v5696 = vpop.f32.mrb[0].mxu0
        %v5697 = vadd.f32 %v1089, %v5696
        %v5698 = vpop.f32.mrb[0].mxu0
        %5699 = vmatprep.mubr.bf16.mxu0 %v3732
        %5700 = vmatmul.mubr.bf16.gmra.mrb[0].mxu0 %v3731
        %v5701 = vpop.f32.mrb[0].mxu0
        %v5702 = vadd.f32 %v1089, %v5701
        %v5703 = vpop.f32.mrb[0].mxu0
        %v5704 = vpop.f32.mrb[0].mxu0
        %v5705 = vadd.f32 %v1089, %v5704
        %v5706 = vpop.f32.mrb[0].mxu0
        %5707 = vmatprep.mubr.bf16.mxu0 %v3738
        %5708 = vmatmul.mubr.bf16.gmra.mrb[0].mxu0 %v3737
        %v5709 = vpop.f32.mrb[0].mxu0
        %v5710 = vadd.f32 %v1089, %v5709
        %v5711 = vpop.f32.mrb[0].mxu0
        %v5712 = vpop.f32.mrb[0].mxu0
        %v5713 = vadd.f32 %v1089, %v5712
        %v5714 = vpop.f32.mrb[0].mxu0
        %5715 = vmatprep.mubr.bf16.mxu0 %v3744
        %5716 = vmatmul.mubr.bf16.gmra.mrb[0].mxu0 %v3743
        %v5717 = vpop.f32.mrb[0].mxu0
        %v5718 = vadd.f32 %v1089, %v5717
        %v5719 = vpop.f32.mrb[0].mxu0
        %v5720 = vpop.f32.mrb[0].mxu0
        %v5721 = vadd.f32 %v1089, %v5720
        %v5722 = vpop.f32.mrb[0].mxu0
        %5723 = vmatprep.mubr.bf16.mxu0 %v3750
        %5724 = vmatmul.mubr.bf16.gmra.mrb[0].mxu0 %v3749
        %v5725 = vpop.f32.mrb[0].mxu0
        %v5726 = vadd.f32 %v1089, %v5725
        %v5727 = vpop.f32.mrb[0].mxu0
        %v5728 = vpop.f32.mrb[0].mxu0
        %v5729 = vadd.f32 %v1089, %v5728
        %v5730 = vpop.f32.mrb[0].mxu0
        %5731 = vmatprep.mubr.bf16.mxu0 %v3756
        %5732 = vmatmul.mubr.bf16.gmra.mrb[0].mxu0 %v3755
        %v5733 = vpop.f32.mrb[0].mxu0
        %v5734 = vadd.f32 %v1089, %v5733
        %v5735 = vpop.f32.mrb[0].mxu0
        %v5736 = vpop.f32.mrb[0].mxu0
        %v5737 = vadd.f32 %v1089, %v5736
        %v5738 = vpop.f32.mrb[0].mxu0
        %5739 = vmatprep.mubr.bf16.mxu0 %v3762
        %5740 = vmatmul.mubr.bf16.gmra.mrb[0].mxu0 %v3761
        %v5741 = vpop.f32.mrb[0].mxu0
        %v5742 = vadd.f32 %v1089, %v5741
        %v5743 = vpop.f32.mrb[0].mxu0
        %v5744 = vpop.f32.mrb[0].mxu0
        %v5745 = vadd.f32 %v1089, %v5744
        %v5746 = vpop.f32.mrb[0].mxu0
        %5747 = vmatprep.mubr.bf16.mxu0 %v3768
        %5748 = vmatmul.mubr.bf16.gmra.mrb[0].mxu0 %v3767
        %v5749 = vpop.f32.mrb[0].mxu0
        %v5750 = vadd.f32 %v1089, %v5749
        %v5751 = vpop.f32.mrb[0].mxu0
        %v5752 = vpop.f32.mrb[0].mxu0
        %v5753 = vadd.f32 %v1089, %v5752
        %v5754 = vpop.f32.mrb[0].mxu0
        %5755 = vmatprep.mubr.bf16.mxu0 %v3774
        %5756 = vmatmul.mubr.bf16.gmra.mrb[0].mxu0 %v3773
        %v5757 = vpop.f32.mrb[0].mxu0
        %v5758 = vadd.f32 %v1089, %v5757
        %v5759 = vpop.f32.mrb[0].mxu0
        %v5760 = vpop.f32.mrb[0].mxu0
        %v5761 = vadd.f32 %v1089, %v5760
        %v5762 = vpop.f32.mrb[0].mxu0
        %5763 = vmatprep.mubr.bf16.mxu0 %v3780
        %5764 = vmatmul.mubr.bf16.gmra.mrb[0].mxu0 %v3779
        %v5765 = vpop.f32.mrb[0].mxu0
        %v5766 = vadd.f32 %v1089, %v5765
        %v5767 = vpop.f32.mrb[0].mxu0
        %v5768 = vpop.f32.mrb[0].mxu0
        %v5769 = vadd.f32 %v1089, %v5768
        %v5770 = vpop.f32.mrb[0].mxu0
        %5771 = vmatprep.mubr.bf16.mxu0 %v3786
        %5772 = vmatmul.mubr.bf16.gmra.mrb[0].mxu0 %v3785
        %v5773 = vpop.f32.mrb[0].mxu0
        %v5774 = vadd.f32 %v1089, %v5773
        %v5775 = vpop.f32.mrb[0].mxu0
        %v5776 = vpop.f32.mrb[0].mxu0
        %v5777 = vadd.f32 %v1089, %v5776
        %v5778 = vpop.f32.mrb[0].mxu0
        %5779 = vmatprep.mubr.bf16.mxu0 %v3792
        %5780 = vmatmul.mubr.bf16.gmra.mrb[0].mxu0 %v3791
        %v5781 = vpop.f32.mrb[0].mxu0
        %v5782 = vadd.f32 %v1089, %v5781
        %v5783 = vpop.f32.mrb[0].mxu0
        %v5784 = vpop.f32.mrb[0].mxu0
        %v5785 = vadd.f32 %v1089, %v5784
        %v5786 = vpop.f32.mrb[0].mxu0
        %5787 = vmatprep.mubr.bf16.mxu0 %v3798
        %5788 = vmatmul.mubr.bf16.gmra.mrb[0].mxu0 %v3797
        %v5789 = vpop.f32.mrb[0].mxu0
        %v5790 = vadd.f32 %v1089, %v5789
        %v5791 = vpop.f32.mrb[0].mxu0
        %v5792 = vpop.f32.mrb[0].mxu0
        %v5793 = vadd.f32 %v1089, %v5792
        %v5794 = vpop.f32.mrb[0].mxu0
        %5795 = vmatprep.mubr.bf16.mxu0 %v3804
        %5796 = vmatmul.mubr.bf16.gmra.mrb[0].mxu0 %v3803
        %v5797 = vpop.f32.mrb[0].mxu0
        %v5798 = vadd.f32 %v1089, %v5797
        %v5799 = vpop.f32.mrb[0].mxu0
        %v5800 = vpop.f32.mrb[0].mxu0
        %v5801 = vadd.f32 %v1089, %v5800
        %v5802 = vpop.f32.mrb[0].mxu0
        %5803 = vmatprep.mubr.bf16.mxu0 %v3810
        %5804 = vmatmul.mubr.bf16.gmra.mrb[0].mxu0 %v3809
        %v5805 = vpop.f32.mrb[0].mxu0
        %v5806 = vadd.f32 %v1089, %v5805
        %v5807 = vpop.f32.mrb[0].mxu0
        %v5808 = vpop.f32.mrb[0].mxu0
        %v5809 = vadd.f32 %v1089, %v5808
        %v5810 = vpop.f32.mrb[0].mxu0
        %5811 = vmatprep.mubr.bf16.mxu0 %v3816
        %5812 = vmatmul.mubr.bf16.gmra.mrb[0].mxu0 %v3815
        %v5813 = vpop.f32.mrb[0].mxu0
        %v5814 = vadd.f32 %v1089, %v5813
        %v5815 = vpop.f32.mrb[0].mxu0
        %v5816 = vpop.f32.mrb[0].mxu0
        %v5817 = vadd.f32 %v1089, %v5816
        %v5818 = vpop.f32.mrb[0].mxu0
        %5819 = vmatprep.mubr.bf16.mxu0 %v3822
        %5820 = vmatmul.mubr.bf16.gmra.mrb[0].mxu0 %v3821
        %v5821 = vpop.f32.mrb[0].mxu0
        %v5822 = vadd.f32 %v1089, %v5821
        %v5823 = vpop.f32.mrb[0].mxu0
        %v5824 = vpop.f32.mrb[0].mxu0
        %v5825 = vadd.f32 %v1089, %v5824
        %v5826 = vpop.f32.mrb[0].mxu0
        %5827 = vmatprep.mubr.bf16.mxu0 %v3828
        %5828 = vmatmul.mubr.bf16.gmra.mrb[0].mxu0 %v3827
        %v5829 = vpop.f32.mrb[0].mxu0
        %v5830 = vadd.f32 %v1089, %v5829
        %v5831 = vpop.f32.mrb[0].mxu0
        %v5832 = vpop.f32.mrb[0].mxu0
        %v5833 = vadd.f32 %v1089, %v5832
        %v5834 = vpop.f32.mrb[0].mxu0
        %5835 = vmatprep.mubr.bf16.mxu0 %v3834
        %5836 = vmatmul.mubr.bf16.gmra.mrb[0].mxu0 %v3833
        %v5837 = vpop.f32.mrb[0].mxu0
        %v5838 = vadd.f32 %v1089, %v5837
        %v5839 = vpop.f32.mrb[0].mxu0
        %v5840 = vpop.f32.mrb[0].mxu0
        %v5841 = vadd.f32 %v1089, %v5840
        %v5842 = vpop.f32.mrb[0].mxu0
        %5843 = vmatprep.mubr.bf16.mxu0 %v3840
        %5844 = vmatmul.mubr.bf16.gmra.mrb[0].mxu0 %v3839
        %v5845 = vpop.f32.mrb[0].mxu0
        %v5846 = vadd.f32 %v1089, %v5845
        %v5847 = vpop.f32.mrb[0].mxu0
        %v5848 = vpop.f32.mrb[0].mxu0
        %v5849 = vadd.f32 %v1089, %v5848
        %v5850 = vpop.f32.mrb[0].mxu0
        %5851 = vmatprep.mubr.bf16.mxu0 %v3846
        %5852 = vmatmul.mubr.bf16.gmra.mrb[0].mxu0 %v3845
        %v5853 = vpop.f32.mrb[0].mxu0
        %v5854 = vadd.f32 %v1089, %v5853
        %v5855 = vpop.f32.mrb[0].mxu0
        %v5856 = vpop.f32.mrb[0].mxu0
        %v5857 = vadd.f32 %v1089, %v5856
        %v5858 = vpop.f32.mrb[0].mxu0
        %5859 = vmatprep.mubr.bf16.mxu0 %v3852
        %5860 = vmatmul.mubr.bf16.gmra.mrb[0].mxu0 %v3851
        %v5861 = vpop.f32.mrb[0].mxu0
        %v5862 = vadd.f32 %v1089, %v5861
        %v5863 = vpop.f32.mrb[0].mxu0
        %v5864 = vpop.f32.mrb[0].mxu0
        %v5865 = vadd.f32 %v1089, %v5864
        %v5866 = vpop.f32.mrb[0].mxu0
        %5867 = vmatprep.mubr.bf16.mxu0 %v3858
        %5868 = vmatmul.mubr.bf16.gmra.mrb[0].mxu0 %v3857
        %v5869 = vpop.f32.mrb[0].mxu0
        %v5870 = vadd.f32 %v1089, %v5869
        %v5871 = vpop.f32.mrb[0].mxu0
        %v5872 = vpop.f32.mrb[0].mxu0
        %v5873 = vadd.f32 %v1089, %v5872
        %v5874 = vpop.f32.mrb[0].mxu0
        %5875 = vmatprep.mubr.bf16.mxu0 %v3864
        %5876 = vmatmul.mubr.bf16.gmra.mrb[0].mxu0 %v3863
        %v5877 = vpop.f32.mrb[0].mxu0
        %v5878 = vadd.f32 %v1089, %v5877
        %v5879 = vpop.f32.mrb[0].mxu0
        %v5880 = vpop.f32.mrb[0].mxu0
        %v5881 = vadd.f32 %v1089, %v5880
        %v5882 = vpop.f32.mrb[0].mxu0
        %5883 = vmatprep.mubr.bf16.mxu0 %v3870
        %5884 = vmatmul.mubr.bf16.gmra.mrb[0].mxu0 %v3869
        %v5885 = vpop.f32.mrb[0].mxu0
        %v5886 = vadd.f32 %v1089, %v5885
        %v5887 = vpop.f32.mrb[0].mxu0
        %v5888 = vpop.f32.mrb[0].mxu0
        %v5889 = vadd.f32 %v1089, %v5888
        %v5890 = vpop.f32.mrb[0].mxu0
        %5891 = vmatprep.mubr.bf16.mxu0 %v3876
        %5892 = vmatmul.mubr.bf16.gmra.mrb[0].mxu0 %v3875
        %v5893 = vpop.f32.mrb[0].mxu0
        %v5894 = vadd.f32 %v1089, %v5893
        %v5895 = vpop.f32.mrb[0].mxu0
        %v5896 = vpop.f32.mrb[0].mxu0
        %v5897 = vadd.f32 %v1089, %v5896
        %v5898 = vpop.f32.mrb[0].mxu0
        %5899 = vmatprep.mubr.bf16.mxu0 %v3882
        %5900 = vmatmul.mubr.bf16.gmra.mrb[0].mxu0 %v3881
        %v5901 = vpop.f32.mrb[0].mxu0
        %v5902 = vadd.f32 %v1089, %v5901
        %v5903 = vpop.f32.mrb[0].mxu0
        %v5904 = vpop.f32.mrb[0].mxu0
        %v5905 = vadd.f32 %v1089, %v5904
        %v5906 = vpop.f32.mrb[0].mxu0
        %5907 = vmatprep.mubr.bf16.mxu0 %v3888
        %5908 = vmatmul.mubr.bf16.gmra.mrb[0].mxu0 %v3887
        %v5909 = vpop.f32.mrb[0].mxu0
        %v5910 = vadd.f32 %v1089, %v5909
        %v5911 = vpop.f32.mrb[0].mxu0
        %v5912 = vpop.f32.mrb[0].mxu0
        %v5913 = vadd.f32 %v1089, %v5912
        %v5914 = vpop.f32.mrb[0].mxu0
        %5915 = vmatprep.mubr.bf16.mxu0 %v3894
        %5916 = vmatmul.mubr.bf16.gmra.mrb[0].mxu0 %v3893
        %v5917 = vpop.f32.mrb[0].mxu0
        %v5918 = vadd.f32 %v1089, %v5917
        %v5919 = vpop.f32.mrb[0].mxu0
        %v5920 = vpop.f32.mrb[0].mxu0
        %v5921 = vadd.f32 %v1089, %v5920
        %v5922 = vpop.f32.mrb[0].mxu0
        %5923 = vmatprep.mubr.bf16.mxu0 %v3900
        %5924 = vmatmul.mubr.bf16.gmra.mrb[0].mxu0 %v3899
        %v5925 = vpop.f32.mrb[0].mxu0
        %v5926 = vadd.f32 %v1089, %v5925
        %v5927 = vpop.f32.mrb[0].mxu0
        %v5928 = vpop.f32.mrb[0].mxu0
        %v5929 = vadd.f32 %v1089, %v5928
        %v5930 = vpop.f32.mrb[0].mxu0
        %5931 = vmatprep.mubr.bf16.mxu0 %v3906
        %5932 = vmatmul.mubr.bf16.gmra.mrb[0].mxu0 %v3905
        %v5933 = vpop.f32.mrb[0].mxu0
        %v5934 = vadd.f32 %v1089, %v5933
        %v5935 = vpop.f32.mrb[0].mxu0
        %v5936 = vpop.f32.mrb[0].mxu0
        %v5937 = vadd.f32 %v1089, %v5936
        %v5938 = vpop.f32.mrb[0].mxu0
        %5939 = vmatprep.mubr.bf16.mxu0 %v3912
        %5940 = vmatmul.mubr.bf16.gmra.mrb[0].mxu0 %v3911
        %v5941 = vpop.f32.mrb[0].mxu0
        %v5942 = vadd.f32 %v1089, %v5941
        %v5943 = vpop.f32.mrb[0].mxu0
        %v5944 = vpop.f32.mrb[0].mxu0
        %v5945 = vadd.f32 %v1089, %v5944
        %v5946 = vpop.f32.mrb[0].mxu0
        %5947 = vmatprep.mubr.bf16.mxu0 %v3918
        %5948 = vmatmul.mubr.bf16.gmra.mrb[0].mxu0 %v3917
        %v5949 = vpop.f32.mrb[0].mxu0
        %v5950 = vadd.f32 %v1089, %v5949
        %v5951 = vpop.f32.mrb[0].mxu0
        %v5952 = vpop.f32.mrb[0].mxu0
        %v5953 = vadd.f32 %v1089, %v5952
        %v5954 = vpop.f32.mrb[0].mxu0
        %5955 = vmatprep.mubr.bf16.mxu0 %v3924
        %5956 = vmatmul.mubr.bf16.gmra.mrb[0].mxu0 %v3923
        %v5957 = vpop.f32.mrb[0].mxu0
        %v5958 = vadd.f32 %v1089, %v5957
        %v5959 = vpop.f32.mrb[0].mxu0
        %v5960 = vpop.f32.mrb[0].mxu0
        %v5961 = vadd.f32 %v1089, %v5960
        %v5962 = vpop.f32.mrb[0].mxu0
        %5963 = vmatprep.mubr.bf16.mxu0 %v3930
        %5964 = vmatmul.mubr.bf16.gmra.mrb[0].mxu0 %v3929
        %v5965 = vpop.f32.mrb[0].mxu0
        %v5966 = vadd.f32 %v1089, %v5965
        %v5967 = vpop.f32.mrb[0].mxu0
        %v5968 = vpop.f32.mrb[0].mxu0
        %v5969 = vadd.f32 %v1089, %v5968
        %v5970 = vpop.f32.mrb[0].mxu0
        %5971 = vmatprep.mubr.bf16.mxu0 %v3936
        %5972 = vmatmul.mubr.bf16.gmra.mrb[0].mxu0 %v3935
        %v5973 = vpop.f32.mrb[0].mxu0
        %v5974 = vadd.f32 %v1089, %v5973
        %v5975 = vpop.f32.mrb[0].mxu0
        %v5976 = vpop.f32.mrb[0].mxu0
        %v5977 = vadd.f32 %v1089, %v5976
        %v5978 = vpop.f32.mrb[0].mxu0
        %5979 = vmatprep.mubr.bf16.mxu0 %v3942
        %5980 = vmatmul.mubr.bf16.gmra.mrb[0].mxu0 %v3941
        %v5981 = vpop.f32.mrb[0].mxu0
        %v5982 = vadd.f32 %v1089, %v5981
        %v5983 = vpop.f32.mrb[0].mxu0
        %v5984 = vpop.f32.mrb[0].mxu0
        %v5985 = vadd.f32 %v1089, %v5984
        %v5986 = vpop.f32.mrb[0].mxu0
        %5987 = vmatprep.mubr.bf16.mxu0 %v3948
        %5988 = vmatmul.mubr.bf16.gmra.mrb[0].mxu0 %v3947
        %v5989 = vpop.f32.mrb[0].mxu0
        %v5990 = vadd.f32 %v1089, %v5989
        %v5991 = vpop.f32.mrb[0].mxu0
        %v5992 = vpop.f32.mrb[0].mxu0
        %v5993 = vadd.f32 %v1089, %v5992
        %v5994 = vpop.f32.mrb[0].mxu0
        %5995 = vmatprep.mubr.bf16.mxu0 %v3954
        %5996 = vmatmul.mubr.bf16.gmra.mrb[0].mxu0 %v3953
        %v5997 = vpop.f32.mrb[0].mxu0
        %v5998 = vadd.f32 %v1089, %v5997
        %v5999 = vpop.f32.mrb[0].mxu0
        %v6000 = vpop.f32.mrb[0].mxu0
        %v6001 = vadd.f32 %v1089, %v6000
        %v6002 = vpop.f32.mrb[0].mxu0
        %6003 = vmatprep.mubr.bf16.mxu0 %v3960
        %6004 = vmatmul.mubr.bf16.gmra.mrb[0].mxu0 %v3959
        %v6005 = vpop.f32.mrb[0].mxu0
        %v6006 = vadd.f32 %v1089, %v6005
        %v6007 = vpop.f32.mrb[0].mxu0
        %v6008 = vpop.f32.mrb[0].mxu0
        %v6009 = vadd.f32 %v1089, %v6008
        %v6010 = vpop.f32.mrb[0].mxu0
        %6011 = vmatprep.mubr.bf16.mxu0 %v3966
        %6012 = vmatmul.mubr.bf16.gmra.mrb[0].mxu0 %v3965
        %v6013 = vpop.f32.mrb[0].mxu0
        %v6014 = vadd.f32 %v1089, %v6013
        %v6015 = vpop.f32.mrb[0].mxu0
        %v6016 = vpop.f32.mrb[0].mxu0
        %v6017 = vadd.f32 %v1089, %v6016
        %v6018 = vpop.f32.mrb[0].mxu0
        %6019 = vmatprep.mubr.bf16.mxu0 %v3972
        %6020 = vmatmul.mubr.bf16.gmra.mrb[0].mxu0 %v3971
        %v6021 = vpop.f32.mrb[0].mxu0
        %v6022 = vadd.f32 %v1089, %v6021
        %v6023 = vpop.f32.mrb[0].mxu0
        %v6024 = vpop.f32.mrb[0].mxu0
        %v6025 = vadd.f32 %v1089, %v6024
        %v6026 = vpop.f32.mrb[0].mxu0
        %6027 = vmatprep.mubr.bf16.mxu0 %v3978
        %6028 = vmatmul.mubr.bf16.gmra.mrb[0].mxu0 %v3977
        %v6029 = vpop.f32.mrb[0].mxu0
        %v6030 = vadd.f32 %v1089, %v6029
        %v6031 = vpop.f32.mrb[0].mxu0
        %v6032 = vpop.f32.mrb[0].mxu0
        %v6033 = vadd.f32 %v1089, %v6032
        %v6034 = vpop.f32.mrb[0].mxu0
        %6035 = vmatprep.mubr.bf16.mxu0 %v3984
        %6036 = vmatmul.mubr.bf16.gmra.mrb[0].mxu0 %v3983
        %v6037 = vpop.f32.mrb[0].mxu0
        %v6038 = vadd.f32 %v1089, %v6037
        %v6039 = vpop.f32.mrb[0].mxu0
        %v6040 = vpop.f32.mrb[0].mxu0
        %v6041 = vadd.f32 %v1089, %v6040
        %v6042 = vpop.f32.mrb[0].mxu0
        %6043 = vmatprep.mubr.bf16.mxu0 %v3990
        %6044 = vmatmul.mubr.bf16.gmra.mrb[0].mxu0 %v3989
        %v6045 = vpop.f32.mrb[0].mxu0
        %v6046 = vadd.f32 %v1089, %v6045
        %v6047 = vpop.f32.mrb[0].mxu0
        %v6048 = vpop.f32.mrb[0].mxu0
        %v6049 = vadd.f32 %v1089, %v6048
        %v6050 = vpop.f32.mrb[0].mxu0
        %6051 = vmatprep.mubr.bf16.mxu0 %v3996
        %6052 = vmatmul.mubr.bf16.gmra.mrb[0].mxu0 %v3995
        %v6053 = vpop.f32.mrb[0].mxu0
        %v6054 = vadd.f32 %v1089, %v6053
        %v6055 = vpop.f32.mrb[0].mxu0
        %v6056 = vpop.f32.mrb[0].mxu0
        %v6057 = vadd.f32 %v1089, %v6056
        %v6058 = vpop.f32.mrb[0].mxu0
        %6059 = vmatprep.mubr.bf16.mxu0 %v4002
        %6060 = vmatmul.mubr.bf16.gmra.mrb[0].mxu0 %v4001
        %v6061 = vpop.f32.mrb[0].mxu0
        %v6062 = vadd.f32 %v1089, %v6061
        %v6063 = vpop.f32.mrb[0].mxu0
        %v6064 = vpop.f32.mrb[0].mxu0
        %v6065 = vadd.f32 %v1089, %v6064
        %v6066 = vpop.f32.mrb[0].mxu0
        %6067 = vmatprep.mubr.bf16.mxu0 %v4008
        %6068 = vmatmul.mubr.bf16.gmra.mrb[0].mxu0 %v4007
        %v6069 = vpop.f32.mrb[0].mxu0
        %v6070 = vadd.f32 %v1089, %v6069
        %v6071 = vpop.f32.mrb[0].mxu0
        %v6072 = vpop.f32.mrb[0].mxu0
        %v6073 = vadd.f32 %v1089, %v6072
        %v6074 = vpop.f32.mrb[0].mxu0
        %6075 = vmatprep.mubr.bf16.mxu0 %v4014
        %6076 = vmatmul.mubr.bf16.gmra.mrb[0].mxu0 %v4013
        %v6077 = vpop.f32.mrb[0].mxu0
        %v6078 = vadd.f32 %v1089, %v6077
        %v6079 = vpop.f32.mrb[0].mxu0
        %v6080 = vpop.f32.mrb[0].mxu0
        %v6081 = vadd.f32 %v1089, %v6080
        %v6082 = vpop.f32.mrb[0].mxu0
        %6083 = vmatprep.mubr.bf16.mxu0 %v4020
        %6084 = vmatmul.mubr.bf16.gmra.mrb[0].mxu0 %v4019
        %v6085 = vpop.f32.mrb[0].mxu0
        %v6086 = vadd.f32 %v1089, %v6085
        %v6087 = vpop.f32.mrb[0].mxu0
        %v6088 = vpop.f32.mrb[0].mxu0
        %v6089 = vadd.f32 %v1089, %v6088
        %v6090 = vpop.f32.mrb[0].mxu0
        %6091 = vmatprep.mubr.bf16.mxu0 %v4026
        %6092 = vmatmul.mubr.bf16.gmra.mrb[0].mxu0 %v4025
        %v6093 = vpop.f32.mrb[0].mxu0
        %v6094 = vadd.f32 %v1089, %v6093
        %v6095 = vpop.f32.mrb[0].mxu0
        %v6096 = vpop.f32.mrb[0].mxu0
        %v6097 = vadd.f32 %v1089, %v6096
        %v6098 = vpop.f32.mrb[0].mxu0
        %6099 = vmatprep.mubr.bf16.mxu0 %v4032
        %6100 = vmatmul.mubr.bf16.gmra.mrb[0].mxu0 %v4031
        %v6101 = vpop.f32.mrb[0].mxu0
        %v6102 = vadd.f32 %v1089, %v6101
        %v6103 = vpop.f32.mrb[0].mxu0
        %v6104 = vpop.f32.mrb[0].mxu0
        %v6105 = vadd.f32 %v1089, %v6104
        %v6106 = vpop.f32.mrb[0].mxu0
        %6107 = vmatprep.mubr.bf16.mxu0 %v4038
        %6108 = vmatmul.mubr.bf16.gmra.mrb[0].mxu0 %v4037
        %v6109 = vpop.f32.mrb[0].mxu0
        %v6110 = vadd.f32 %v1089, %v6109
        %v6111 = vpop.f32.mrb[0].mxu0
        %v6112 = vpop.f32.mrb[0].mxu0
        %v6113 = vadd.f32 %v1089, %v6112
        %v6114 = vpop.f32.mrb[0].mxu0
        %6115 = vmatprep.mubr.bf16.mxu0 %v4044
        %6116 = vmatmul.mubr.bf16.gmra.mrb[0].mxu0 %v4043
        %v6117 = vpop.f32.mrb[0].mxu0
        %v6118 = vadd.f32 %v1089, %v6117
        %v6119 = vpop.f32.mrb[0].mxu0
        %v6120 = vpop.f32.mrb[0].mxu0
        %v6121 = vadd.f32 %v1089, %v6120
        %v6122 = vpop.f32.mrb[0].mxu0
        %6123 = vmatprep.mubr.bf16.mxu0 %v4050
        %6124 = vmatmul.mubr.bf16.gmra.mrb[0].mxu0 %v4049
        %v6125 = vpop.f32.mrb[0].mxu0
        %v6126 = vadd.f32 %v1089, %v6125
        %v6127 = vpop.f32.mrb[0].mxu0
        %v6128 = vpop.f32.mrb[0].mxu0
        %v6129 = vadd.f32 %v1089, %v6128
        %v6130 = vpop.f32.mrb[0].mxu0
        %6131 = vmatprep.mubr.bf16.mxu0 %v4056
        %6132 = vmatmul.mubr.bf16.gmra.mrb[0].mxu0 %v4055
        %v6133 = vpop.f32.mrb[0].mxu0
        %v6134 = vadd.f32 %v1089, %v6133
        %v6135 = vpop.f32.mrb[0].mxu0
        %v6136 = vpop.f32.mrb[0].mxu0
        %v6137 = vadd.f32 %v1089, %v6136
        %v6138 = vpop.f32.mrb[0].mxu0
        %6139 = vmatprep.mubr.bf16.mxu0 %v4062
        %6140 = vmatmul.mubr.bf16.gmra.mrb[0].mxu0 %v4061
        %v6141 = vpop.f32.mrb[0].mxu0
        %v6142 = vadd.f32 %v1089, %v6141
        %v6143 = vpop.f32.mrb[0].mxu0
        %v6144 = vpop.f32.mrb[0].mxu0
        %v6145 = vadd.f32 %v1089, %v6144
        %v6146 = vpop.f32.mrb[0].mxu0
        %6147 = vmatprep.mubr.bf16.mxu0 %v4068
        %6148 = vmatmul.mubr.bf16.gmra.mrb[0].mxu0 %v4067
        %v6149 = vpop.f32.mrb[0].mxu0
        %v6150 = vadd.f32 %v1089, %v6149
        %v6151 = vpop.f32.mrb[0].mxu0
        %v6152 = vpop.f32.mrb[0].mxu0
        %v6153 = vadd.f32 %v1089, %v6152
        %v6154 = vpop.f32.mrb[0].mxu0
        %6155 = vmatprep.mubr.bf16.mxu0 %v4074
        %6156 = vmatmul.mubr.bf16.gmra.mrb[0].mxu0 %v4073
        %v6157 = vpop.f32.mrb[0].mxu0
        %v6158 = vadd.f32 %v1089, %v6157
        %v6159 = vpop.f32.mrb[0].mxu0
        %v6160 = vpop.f32.mrb[0].mxu0
        %v6161 = vadd.f32 %v1089, %v6160
        %v6162 = vpop.f32.mrb[0].mxu0
        %6163 = vmatprep.mubr.bf16.mxu0 %v4080
        %6164 = vmatmul.mubr.bf16.gmra.mrb[0].mxu0 %v4079
        %v6165 = vpop.f32.mrb[0].mxu0
        %v6166 = vadd.f32 %v1089, %v6165
        %v6167 = vpop.f32.mrb[0].mxu0
        %v6168 = vpop.f32.mrb[0].mxu0
        %v6169 = vadd.f32 %v1089, %v6168
        %v6170 = vpop.f32.mrb[0].mxu0
        %6171 = vmatprep.mubr.bf16.mxu0 %v4086
        %6172 = vmatmul.mubr.bf16.gmra.mrb[0].mxu0 %v4085
        %v6173 = vpop.f32.mrb[0].mxu0
        %v6174 = vadd.f32 %v1089, %v6173
        %v6175 = vpop.f32.mrb[0].mxu0
        %v6176 = vpop.f32.mrb[0].mxu0
        %v6177 = vadd.f32 %v1089, %v6176
        %v6178 = vpop.f32.mrb[0].mxu0
        %6179 = vmatprep.mubr.bf16.mxu0 %v4092
        %6180 = vmatmul.mubr.bf16.gmra.mrb[0].mxu0 %v4091
        %v6181 = vpop.f32.mrb[0].mxu0
        %v6182 = vadd.f32 %v1089, %v6181
        %v6183 = vpop.f32.mrb[0].mxu0
        %v6184 = vpop.f32.mrb[0].mxu0
        %v6185 = vadd.f32 %v1089, %v6184
        %v6186 = vpop.f32.mrb[0].mxu0
        %6187 = vmatprep.mubr.bf16.mxu0 %v4098
        %6188 = vmatmul.mubr.bf16.gmra.mrb[0].mxu0 %v4097
        %v6189 = vpop.f32.mrb[0].mxu0
        %v6190 = vadd.f32 %v1089, %v6189
        %v6191 = vpop.f32.mrb[0].mxu0
        %v6192 = vpop.f32.mrb[0].mxu0
        %v6193 = vadd.f32 %v1089, %v6192
        %v6194 = vpop.f32.mrb[0].mxu0
        %6195 = vmatprep.mubr.bf16.mxu0 %v4104
        %6196 = vmatmul.mubr.bf16.gmra.mrb[0].mxu0 %v4103
        %v6197 = vpop.f32.mrb[0].mxu0
        %v6198 = vadd.f32 %v1089, %v6197
        %v6199 = vpop.f32.mrb[0].mxu0
        %v6200 = vpop.f32.mrb[0].mxu0
        %v6201 = vadd.f32 %v1089, %v6200
        %v6202 = vpop.f32.mrb[0].mxu0
        %6203 = vmatprep.mubr.bf16.mxu0 %v4110
        %6204 = vmatmul.mubr.bf16.gmra.mrb[0].mxu0 %v4109
        %v6205 = vpop.f32.mrb[0].mxu0
        %v6206 = vadd.f32 %v1089, %v6205
        %v6207 = vpop.f32.mrb[0].mxu0
        %v6208 = vpop.f32.mrb[0].mxu0
        %v6209 = vadd.f32 %v1089, %v6208
        %v6210 = vpop.f32.mrb[0].mxu0
        %6211 = vmatprep.mubr.bf16.mxu0 %v4116
        %6212 = vmatmul.mubr.bf16.gmra.mrb[0].mxu0 %v4115
        %v6213 = vpop.f32.mrb[0].mxu0
        %v6214 = vadd.f32 %v1089, %v6213
        %v6215 = vpop.f32.mrb[0].mxu0
        %v6216 = vpop.f32.mrb[0].mxu0
        %v6217 = vadd.f32 %v1089, %v6216
        %v6218 = vpop.f32.mrb[0].mxu0
        %6219 = vmatprep.mubr.bf16.mxu0 %v4122
        %6220 = vmatmul.mubr.bf16.gmra.mrb[0].mxu0 %v4121
        %v6221 = vpop.f32.mrb[0].mxu0
        %v6222 = vadd.f32 %v1089, %v6221
        %v6223 = vpop.f32.mrb[0].mxu0
        %v6224 = vpop.f32.mrb[0].mxu0
        %v6225 = vadd.f32 %v1089, %v6224
        %v6226 = vpop.f32.mrb[0].mxu0
        %6227 = vmatprep.mubr.bf16.mxu0 %v4128
        %6228 = vmatmul.mubr.bf16.gmra.mrb[0].mxu0 %v4127
        %v6229 = vpop.f32.mrb[0].mxu0
        %v6230 = vadd.f32 %v1089, %v6229
        %v6231 = vpop.f32.mrb[0].mxu0
        %v6232 = vpop.f32.mrb[0].mxu0
        %v6233 = vadd.f32 %v1089, %v6232
        %v6234 = vpop.f32.mrb[0].mxu0
        %6235 = vmatprep.mubr.bf16.mxu0 %v4134
        %6236 = vmatmul.mubr.bf16.gmra.mrb[0].mxu0 %v4133
        %v6237 = vpop.f32.mrb[0].mxu0
        %v6238 = vadd.f32 %v1089, %v6237
        %v6239 = vpop.f32.mrb[0].mxu0
        %v6240 = vpop.f32.mrb[0].mxu0
        %v6241 = vadd.f32 %v1089, %v6240
        %v6242 = vpop.f32.mrb[0].mxu0
        %6243 = vmatprep.mubr.bf16.mxu0 %v4140
        %6244 = vmatmul.mubr.bf16.gmra.mrb[0].mxu0 %v4139
        %v6245 = vpop.f32.mrb[0].mxu0
        %v6246 = vadd.f32 %v1089, %v6245
        %v6247 = vpop.f32.mrb[0].mxu0
        %v6248 = vpop.f32.mrb[0].mxu0
        %v6249 = vadd.f32 %v1089, %v6248
        %v6250 = vpop.f32.mrb[0].mxu0
        %6251 = vmatprep.mubr.bf16.mxu0 %v4146
        %6252 = vmatmul.mubr.bf16.gmra.mrb[0].mxu0 %v4145
        %v6253 = vpop.f32.mrb[0].mxu0
        %v6254 = vadd.f32 %v1089, %v6253
        %v6255 = vpop.f32.mrb[0].mxu0
        %v6256 = vpop.f32.mrb[0].mxu0
        %v6257 = vadd.f32 %v1089, %v6256
        %v6258 = vpop.f32.mrb[0].mxu0
        %6259 = vmatprep.mubr.bf16.mxu0 %v4152
        %6260 = vmatmul.mubr.bf16.gmra.mrb[0].mxu0 %v4151
        %v6261 = vpop.f32.mrb[0].mxu0
        %v6262 = vadd.f32 %v1089, %v6261
        %v6263 = vpop.f32.mrb[0].mxu0
        %v6264 = vpop.f32.mrb[0].mxu0
        %v6265 = vadd.f32 %v1089, %v6264
        %v6266 = vpop.f32.mrb[0].mxu0
        %6267 = vmatprep.mubr.bf16.mxu0 %v4158
        %6268 = vmatmul.mubr.bf16.gmra.mrb[0].mxu0 %v4157
        %v6269 = vpop.f32.mrb[0].mxu0
        %v6270 = vadd.f32 %v1089, %v6269
        %v6271 = vpop.f32.mrb[0].mxu0
        %v6272 = vpop.f32.mrb[0].mxu0
        %v6273 = vadd.f32 %v1089, %v6272
        %v6274 = vpop.f32.mrb[0].mxu0
        %6275 = vdwg.mxu0
        %6276 = vmatprep.subr.bf16.mxu0 0
        %6277 = vmatpush1.bf16.msra.mxu0 %v5139
        %6278 = vmatprep.subr.bf16.mxu0 0
        %6279 = vmatpush1.bf16.msra.mxu0 %v5140
        %6280 = vmatprep.subr.bf16.mxu0 0
        %6281 = vmatpush1.bf16.msra.mxu0 %v5141
        %6282 = vmatprep.subr.bf16.mxu0 0
        %6283 = vmatpush1.bf16.msra.mxu0 %v5142
        %6284 = vmatprep.subr.bf16.mxu0 0
        %6285 = vmatpush1.bf16.msra.mxu0 %v5143
        %6286 = vmatprep.subr.bf16.mxu0 0
        %6287 = vmatpush1.bf16.msra.mxu0 %v5144
        %6288 = vmatprep.subr.bf16.mxu0 0
        %6289 = vmatpush1.bf16.msra.mxu0 %v5145
        %6290 = vmatprep.subr.bf16.mxu0 0
        %6291 = vmatpush1.bf16.msra.mxu0 %v5146
        %6292 = vmatprep.subr.bf16.mxu0 0
        %6293 = vmatpush1.bf16.msra.mxu0 %v5147
        %6294 = vmatprep.subr.bf16.mxu0 0
        %6295 = vmatpush1.bf16.msra.mxu0 %v5148
        %6296 = vmatprep.subr.bf16.mxu0 0
        %6297 = vmatpush1.bf16.msra.mxu0 %v5149
        %6298 = vmatprep.subr.bf16.mxu0 0
        %6299 = vmatpush1.bf16.msra.mxu0 %v5150
        %6300 = vmatprep.subr.bf16.mxu0 0
        %6301 = vmatpush1.bf16.msra.mxu0 %v5151
        %6302 = vmatprep.subr.bf16.mxu0 0
        %6303 = vmatpush1.bf16.msra.mxu0 %v5152
        %6304 = vmatprep.subr.bf16.mxu0 0
        %6305 = vmatpush1.bf16.msra.mxu0 %v5153
        %6306 = vmatprep.subr.bf16.mxu0 0
        %6307 = vmatpush1.bf16.msra.mxu0 %v5154
        %6308 = vmatprep.mubr.bf16.mxu0 %v3398
        %6309 = vmatmul.mubr.bf16.gmra.mrb[0].mxu0 %v3397
        %v6310 = vpop.f32.mrb[0].mxu0
        %v6311 = vadd.f32 %v5254, %v6310
        %v6312 = vpop.f32.mrb[0].mxu0
        %v6313 = vpop.f32.mrb[0].mxu0
        %v6314 = vadd.f32 %v5257, %v6313
        %v6315 = vpop.f32.mrb[0].mxu0
        %6316 = vmatprep.mubr.bf16.mxu0 %v3404
        %6317 = vmatmul.mubr.bf16.gmra.mrb[0].mxu0 %v3403
        %v6318 = vpop.f32.mrb[0].mxu0
        %v6319 = vadd.f32 %v5262, %v6318
        %v6320 = vpop.f32.mrb[0].mxu0
        %v6321 = vpop.f32.mrb[0].mxu0
        %v6322 = vadd.f32 %v5265, %v6321
        %v6323 = vpop.f32.mrb[0].mxu0
        %6324 = vmatprep.mubr.bf16.mxu0 %v3410
        %6325 = vmatmul.mubr.bf16.gmra.mrb[0].mxu0 %v3409
        %v6326 = vpop.f32.mrb[0].mxu0
        %v6327 = vadd.f32 %v5270, %v6326
        %v6328 = vpop.f32.mrb[0].mxu0
        %v6329 = vpop.f32.mrb[0].mxu0
        %v6330 = vadd.f32 %v5273, %v6329
        %v6331 = vpop.f32.mrb[0].mxu0
        %6332 = vmatprep.mubr.bf16.mxu0 %v3416
        %6333 = vmatmul.mubr.bf16.gmra.mrb[0].mxu0 %v3415
        %v6334 = vpop.f32.mrb[0].mxu0
        %v6335 = vadd.f32 %v5278, %v6334
        %v6336 = vpop.f32.mrb[0].mxu0
        %v6337 = vpop.f32.mrb[0].mxu0
        %v6338 = vadd.f32 %v5281, %v6337
        %v6339 = vpop.f32.mrb[0].mxu0
        %6340 = vmatprep.mubr.bf16.mxu0 %v3422
        %6341 = vmatmul.mubr.bf16.gmra.mrb[0].mxu0 %v3421
        %v6342 = vpop.f32.mrb[0].mxu0
        %v6343 = vadd.f32 %v5286, %v6342
        %v6344 = vpop.f32.mrb[0].mxu0
        %v6345 = vpop.f32.mrb[0].mxu0
        %v6346 = vadd.f32 %v5289, %v6345
        %v6347 = vpop.f32.mrb[0].mxu0
        %6348 = vmatprep.mubr.bf16.mxu0 %v3428
        %6349 = vmatmul.mubr.bf16.gmra.mrb[0].mxu0 %v3427
        %v6350 = vpop.f32.mrb[0].mxu0
        %v6351 = vadd.f32 %v5294, %v6350
        %v6352 = vpop.f32.mrb[0].mxu0
        %v6353 = vpop.f32.mrb[0].mxu0
        %v6354 = vadd.f32 %v5297, %v6353
        %v6355 = vpop.f32.mrb[0].mxu0
        %6356 = vmatprep.mubr.bf16.mxu0 %v3434
        %6357 = vmatmul.mubr.bf16.gmra.mrb[0].mxu0 %v3433
        %v6358 = vpop.f32.mrb[0].mxu0
        %v6359 = vadd.f32 %v5302, %v6358
        %v6360 = vpop.f32.mrb[0].mxu0
        %v6361 = vpop.f32.mrb[0].mxu0
        %v6362 = vadd.f32 %v5305, %v6361
        %v6363 = vpop.f32.mrb[0].mxu0
        %6364 = vmatprep.mubr.bf16.mxu0 %v3440
        %6365 = vmatmul.mubr.bf16.gmra.mrb[0].mxu0 %v3439
        %v6366 = vpop.f32.mrb[0].mxu0
        %v6367 = vadd.f32 %v5310, %v6366
        %v6368 = vpop.f32.mrb[0].mxu0
        %v6369 = vpop.f32.mrb[0].mxu0
        %v6370 = vadd.f32 %v5313, %v6369
        %v6371 = vpop.f32.mrb[0].mxu0
        %6372 = vmatprep.mubr.bf16.mxu0 %v3446
        %6373 = vmatmul.mubr.bf16.gmra.mrb[0].mxu0 %v3445
        %v6374 = vpop.f32.mrb[0].mxu0
        %v6375 = vadd.f32 %v5318, %v6374
        %v6376 = vpop.f32.mrb[0].mxu0
        %v6377 = vpop.f32.mrb[0].mxu0
        %v6378 = vadd.f32 %v5321, %v6377
        %v6379 = vpop.f32.mrb[0].mxu0
        %6380 = vmatprep.mubr.bf16.mxu0 %v3452
        %6381 = vmatmul.mubr.bf16.gmra.mrb[0].mxu0 %v3451
        %v6382 = vpop.f32.mrb[0].mxu0
        %v6383 = vadd.f32 %v5326, %v6382
        %v6384 = vpop.f32.mrb[0].mxu0
        %v6385 = vpop.f32.mrb[0].mxu0
        %v6386 = vadd.f32 %v5329, %v6385
        %v6387 = vpop.f32.mrb[0].mxu0
        %6388 = vmatprep.mubr.bf16.mxu0 %v3458
        %6389 = vmatmul.mubr.bf16.gmra.mrb[0].mxu0 %v3457
        %v6390 = vpop.f32.mrb[0].mxu0
        %v6391 = vadd.f32 %v5334, %v6390
        %v6392 = vpop.f32.mrb[0].mxu0
        %v6393 = vpop.f32.mrb[0].mxu0
        %v6394 = vadd.f32 %v5337, %v6393
        %v6395 = vpop.f32.mrb[0].mxu0
        %6396 = vmatprep.mubr.bf16.mxu0 %v3464
        %6397 = vmatmul.mubr.bf16.gmra.mrb[0].mxu0 %v3463
        %v6398 = vpop.f32.mrb[0].mxu0
        %v6399 = vadd.f32 %v5342, %v6398
        %v6400 = vpop.f32.mrb[0].mxu0
        %v6401 = vpop.f32.mrb[0].mxu0
        %v6402 = vadd.f32 %v5345, %v6401
        %v6403 = vpop.f32.mrb[0].mxu0
        %6404 = vmatprep.mubr.bf16.mxu0 %v3470
        %6405 = vmatmul.mubr.bf16.gmra.mrb[0].mxu0 %v3469
        %v6406 = vpop.f32.mrb[0].mxu0
        %v6407 = vadd.f32 %v5350, %v6406
        %v6408 = vpop.f32.mrb[0].mxu0
        %v6409 = vpop.f32.mrb[0].mxu0
        %v6410 = vadd.f32 %v5353, %v6409
        %v6411 = vpop.f32.mrb[0].mxu0
        %6412 = vmatprep.mubr.bf16.mxu0 %v3476
        %6413 = vmatmul.mubr.bf16.gmra.mrb[0].mxu0 %v3475
        %v6414 = vpop.f32.mrb[0].mxu0
        %v6415 = vadd.f32 %v5358, %v6414
        %v6416 = vpop.f32.mrb[0].mxu0
        %v6417 = vpop.f32.mrb[0].mxu0
        %v6418 = vadd.f32 %v5361, %v6417
        %v6419 = vpop.f32.mrb[0].mxu0
        %6420 = vmatprep.mubr.bf16.mxu0 %v3482
        %6421 = vmatmul.mubr.bf16.gmra.mrb[0].mxu0 %v3481
        %v6422 = vpop.f32.mrb[0].mxu0
        %v6423 = vadd.f32 %v5366, %v6422
        %v6424 = vpop.f32.mrb[0].mxu0
        %v6425 = vpop.f32.mrb[0].mxu0
        %v6426 = vadd.f32 %v5369, %v6425
        %v6427 = vpop.f32.mrb[0].mxu0
        %6428 = vmatprep.mubr.bf16.mxu0 %v3488
        %6429 = vmatmul.mubr.bf16.gmra.mrb[0].mxu0 %v3487
        %v6430 = vpop.f32.mrb[0].mxu0
        %v6431 = vadd.f32 %v5374, %v6430
        %v6432 = vpop.f32.mrb[0].mxu0
        %v6433 = vpop.f32.mrb[0].mxu0
        %v6434 = vadd.f32 %v5377, %v6433
        %v6435 = vpop.f32.mrb[0].mxu0
        %6436 = vmatprep.mubr.bf16.mxu0 %v3494
        %6437 = vmatmul.mubr.bf16.gmra.mrb[0].mxu0 %v3493
        %v6438 = vpop.f32.mrb[0].mxu0
        %v6439 = vadd.f32 %v5382, %v6438
        %v6440 = vpop.f32.mrb[0].mxu0
        %v6441 = vpop.f32.mrb[0].mxu0
        %v6442 = vadd.f32 %v5385, %v6441
        %v6443 = vpop.f32.mrb[0].mxu0
        %6444 = vmatprep.mubr.bf16.mxu0 %v3500
        %6445 = vmatmul.mubr.bf16.gmra.mrb[0].mxu0 %v3499
        %v6446 = vpop.f32.mrb[0].mxu0
        %v6447 = vadd.f32 %v5390, %v6446
        %v6448 = vpop.f32.mrb[0].mxu0
        %v6449 = vpop.f32.mrb[0].mxu0
        %v6450 = vadd.f32 %v5393, %v6449
        %v6451 = vpop.f32.mrb[0].mxu0
        %6452 = vmatprep.mubr.bf16.mxu0 %v3506
        %6453 = vmatmul.mubr.bf16.gmra.mrb[0].mxu0 %v3505
        %v6454 = vpop.f32.mrb[0].mxu0
        %v6455 = vadd.f32 %v5398, %v6454
        %v6456 = vpop.f32.mrb[0].mxu0
        %v6457 = vpop.f32.mrb[0].mxu0
        %v6458 = vadd.f32 %v5401, %v6457
        %v6459 = vpop.f32.mrb[0].mxu0
        %6460 = vmatprep.mubr.bf16.mxu0 %v3512
        %6461 = vmatmul.mubr.bf16.gmra.mrb[0].mxu0 %v3511
        %v6462 = vpop.f32.mrb[0].mxu0
        %v6463 = vadd.f32 %v5406, %v6462
        %v6464 = vpop.f32.mrb[0].mxu0
        %v6465 = vpop.f32.mrb[0].mxu0
        %v6466 = vadd.f32 %v5409, %v6465
        %v6467 = vpop.f32.mrb[0].mxu0
        %6468 = vmatprep.mubr.bf16.mxu0 %v3518
        %6469 = vmatmul.mubr.bf16.gmra.mrb[0].mxu0 %v3517
        %v6470 = vpop.f32.mrb[0].mxu0
        %v6471 = vadd.f32 %v5414, %v6470
        %v6472 = vpop.f32.mrb[0].mxu0
        %v6473 = vpop.f32.mrb[0].mxu0
        %v6474 = vadd.f32 %v5417, %v6473
        %v6475 = vpop.f32.mrb[0].mxu0
        %6476 = vmatprep.mubr.bf16.mxu0 %v3524
        %6477 = vmatmul.mubr.bf16.gmra.mrb[0].mxu0 %v3523
        %v6478 = vpop.f32.mrb[0].mxu0
        %v6479 = vadd.f32 %v5422, %v6478
        %v6480 = vpop.f32.mrb[0].mxu0
        %v6481 = vpop.f32.mrb[0].mxu0
        %v6482 = vadd.f32 %v5425, %v6481
        %v6483 = vpop.f32.mrb[0].mxu0
        %6484 = vmatprep.mubr.bf16.mxu0 %v3530
        %6485 = vmatmul.mubr.bf16.gmra.mrb[0].mxu0 %v3529
        %v6486 = vpop.f32.mrb[0].mxu0
        %v6487 = vadd.f32 %v5430, %v6486
        %v6488 = vpop.f32.mrb[0].mxu0
        %v6489 = vpop.f32.mrb[0].mxu0
        %v6490 = vadd.f32 %v5433, %v6489
        %v6491 = vpop.f32.mrb[0].mxu0
        %6492 = vmatprep.mubr.bf16.mxu0 %v3536
        %6493 = vmatmul.mubr.bf16.gmra.mrb[0].mxu0 %v3535
        %v6494 = vpop.f32.mrb[0].mxu0
        %v6495 = vadd.f32 %v5438, %v6494
        %v6496 = vpop.f32.mrb[0].mxu0
        %v6497 = vpop.f32.mrb[0].mxu0
        %v6498 = vadd.f32 %v5441, %v6497
        %v6499 = vpop.f32.mrb[0].mxu0
        %6500 = vmatprep.mubr.bf16.mxu0 %v3542
        %6501 = vmatmul.mubr.bf16.gmra.mrb[0].mxu0 %v3541
        %v6502 = vpop.f32.mrb[0].mxu0
        %v6503 = vadd.f32 %v5446, %v6502
        %v6504 = vpop.f32.mrb[0].mxu0
        %v6505 = vpop.f32.mrb[0].mxu0
        %v6506 = vadd.f32 %v5449, %v6505
        %v6507 = vpop.f32.mrb[0].mxu0
        %6508 = vmatprep.mubr.bf16.mxu0 %v3548
        %6509 = vmatmul.mubr.bf16.gmra.mrb[0].mxu0 %v3547
        %v6510 = vpop.f32.mrb[0].mxu0
        %v6511 = vadd.f32 %v5454, %v6510
        %v6512 = vpop.f32.mrb[0].mxu0
        %v6513 = vpop.f32.mrb[0].mxu0
        %v6514 = vadd.f32 %v5457, %v6513
        %v6515 = vpop.f32.mrb[0].mxu0
        %6516 = vmatprep.mubr.bf16.mxu0 %v3554
        %6517 = vmatmul.mubr.bf16.gmra.mrb[0].mxu0 %v3553
        %v6518 = vpop.f32.mrb[0].mxu0
        %v6519 = vadd.f32 %v5462, %v6518
        %v6520 = vpop.f32.mrb[0].mxu0
        %v6521 = vpop.f32.mrb[0].mxu0
        %v6522 = vadd.f32 %v5465, %v6521
        %v6523 = vpop.f32.mrb[0].mxu0
        %6524 = vmatprep.mubr.bf16.mxu0 %v3560
        %6525 = vmatmul.mubr.bf16.gmra.mrb[0].mxu0 %v3559
        %v6526 = vpop.f32.mrb[0].mxu0
        %v6527 = vadd.f32 %v5470, %v6526
        %v6528 = vpop.f32.mrb[0].mxu0
        %v6529 = vpop.f32.mrb[0].mxu0
        %v6530 = vadd.f32 %v5473, %v6529
        %v6531 = vpop.f32.mrb[0].mxu0
        %6532 = vmatprep.mubr.bf16.mxu0 %v3566
        %6533 = vmatmul.mubr.bf16.gmra.mrb[0].mxu0 %v3565
        %v6534 = vpop.f32.mrb[0].mxu0
        %v6535 = vadd.f32 %v5478, %v6534
        %v6536 = vpop.f32.mrb[0].mxu0
        %v6537 = vpop.f32.mrb[0].mxu0
        %v6538 = vadd.f32 %v5481, %v6537
        %v6539 = vpop.f32.mrb[0].mxu0
        %6540 = vmatprep.mubr.bf16.mxu0 %v3572
        %6541 = vmatmul.mubr.bf16.gmra.mrb[0].mxu0 %v3571
        %v6542 = vpop.f32.mrb[0].mxu0
        %v6543 = vadd.f32 %v5486, %v6542
        %v6544 = vpop.f32.mrb[0].mxu0
        %v6545 = vpop.f32.mrb[0].mxu0
        %v6546 = vadd.f32 %v5489, %v6545
        %v6547 = vpop.f32.mrb[0].mxu0
        %6548 = vmatprep.mubr.bf16.mxu0 %v3578
        %6549 = vmatmul.mubr.bf16.gmra.mrb[0].mxu0 %v3577
        %v6550 = vpop.f32.mrb[0].mxu0
        %v6551 = vadd.f32 %v5494, %v6550
        %v6552 = vpop.f32.mrb[0].mxu0
        %v6553 = vpop.f32.mrb[0].mxu0
        %v6554 = vadd.f32 %v5497, %v6553
        %v6555 = vpop.f32.mrb[0].mxu0
        %6556 = vmatprep.mubr.bf16.mxu0 %v3584
        %6557 = vmatmul.mubr.bf16.gmra.mrb[0].mxu0 %v3583
        %v6558 = vpop.f32.mrb[0].mxu0
        %v6559 = vadd.f32 %v5502, %v6558
        %v6560 = vpop.f32.mrb[0].mxu0
        %v6561 = vpop.f32.mrb[0].mxu0
        %v6562 = vadd.f32 %v5505, %v6561
        %v6563 = vpop.f32.mrb[0].mxu0
        %6564 = vmatprep.mubr.bf16.mxu0 %v3590
        %6565 = vmatmul.mubr.bf16.gmra.mrb[0].mxu0 %v3589
        %v6566 = vpop.f32.mrb[0].mxu0
        %v6567 = vadd.f32 %v5510, %v6566
        %v6568 = vpop.f32.mrb[0].mxu0
        %v6569 = vpop.f32.mrb[0].mxu0
        %v6570 = vadd.f32 %v5513, %v6569
        %v6571 = vpop.f32.mrb[0].mxu0
        %6572 = vmatprep.mubr.bf16.mxu0 %v3596
        %6573 = vmatmul.mubr.bf16.gmra.mrb[0].mxu0 %v3595
        %v6574 = vpop.f32.mrb[0].mxu0
        %v6575 = vadd.f32 %v5518, %v6574
        %v6576 = vpop.f32.mrb[0].mxu0
        %v6577 = vpop.f32.mrb[0].mxu0
        %v6578 = vadd.f32 %v5521, %v6577
        %v6579 = vpop.f32.mrb[0].mxu0
        %6580 = vmatprep.mubr.bf16.mxu0 %v3602
        %6581 = vmatmul.mubr.bf16.gmra.mrb[0].mxu0 %v3601
        %v6582 = vpop.f32.mrb[0].mxu0
        %v6583 = vadd.f32 %v5526, %v6582
        %v6584 = vpop.f32.mrb[0].mxu0
        %v6585 = vpop.f32.mrb[0].mxu0
        %v6586 = vadd.f32 %v5529, %v6585
        %v6587 = vpop.f32.mrb[0].mxu0
        %6588 = vmatprep.mubr.bf16.mxu0 %v3608
        %6589 = vmatmul.mubr.bf16.gmra.mrb[0].mxu0 %v3607
        %v6590 = vpop.f32.mrb[0].mxu0
        %v6591 = vadd.f32 %v5534, %v6590
        %v6592 = vpop.f32.mrb[0].mxu0
        %v6593 = vpop.f32.mrb[0].mxu0
        %v6594 = vadd.f32 %v5537, %v6593
        %v6595 = vpop.f32.mrb[0].mxu0
        %6596 = vmatprep.mubr.bf16.mxu0 %v3614
        %6597 = vmatmul.mubr.bf16.gmra.mrb[0].mxu0 %v3613
        %v6598 = vpop.f32.mrb[0].mxu0
        %v6599 = vadd.f32 %v5542, %v6598
        %v6600 = vpop.f32.mrb[0].mxu0
        %v6601 = vpop.f32.mrb[0].mxu0
        %v6602 = vadd.f32 %v5545, %v6601
        %v6603 = vpop.f32.mrb[0].mxu0
        %6604 = vmatprep.mubr.bf16.mxu0 %v3620
        %6605 = vmatmul.mubr.bf16.gmra.mrb[0].mxu0 %v3619
        %v6606 = vpop.f32.mrb[0].mxu0
        %v6607 = vadd.f32 %v5550, %v6606
        %v6608 = vpop.f32.mrb[0].mxu0
        %v6609 = vpop.f32.mrb[0].mxu0
        %v6610 = vadd.f32 %v5553, %v6609
        %v6611 = vpop.f32.mrb[0].mxu0
        %6612 = vmatprep.mubr.bf16.mxu0 %v3626
        %6613 = vmatmul.mubr.bf16.gmra.mrb[0].mxu0 %v3625
        %v6614 = vpop.f32.mrb[0].mxu0
        %v6615 = vadd.f32 %v5558, %v6614
        %v6616 = vpop.f32.mrb[0].mxu0
        %v6617 = vpop.f32.mrb[0].mxu0
        %v6618 = vadd.f32 %v5561, %v6617
        %v6619 = vpop.f32.mrb[0].mxu0
        %6620 = vmatprep.mubr.bf16.mxu0 %v3632
        %6621 = vmatmul.mubr.bf16.gmra.mrb[0].mxu0 %v3631
        %v6622 = vpop.f32.mrb[0].mxu0
        %v6623 = vadd.f32 %v5566, %v6622
        %v6624 = vpop.f32.mrb[0].mxu0
        %v6625 = vpop.f32.mrb[0].mxu0
        %v6626 = vadd.f32 %v5569, %v6625
        %v6627 = vpop.f32.mrb[0].mxu0
        %6628 = vmatprep.mubr.bf16.mxu0 %v3638
        %6629 = vmatmul.mubr.bf16.gmra.mrb[0].mxu0 %v3637
        %v6630 = vpop.f32.mrb[0].mxu0
        %v6631 = vadd.f32 %v5574, %v6630
        %v6632 = vpop.f32.mrb[0].mxu0
        %v6633 = vpop.f32.mrb[0].mxu0
        %v6634 = vadd.f32 %v5577, %v6633
        %v6635 = vpop.f32.mrb[0].mxu0
        %6636 = vmatprep.mubr.bf16.mxu0 %v3644
        %6637 = vmatmul.mubr.bf16.gmra.mrb[0].mxu0 %v3643
        %v6638 = vpop.f32.mrb[0].mxu0
        %v6639 = vadd.f32 %v5582, %v6638
        %v6640 = vpop.f32.mrb[0].mxu0
        %v6641 = vpop.f32.mrb[0].mxu0
        %v6642 = vadd.f32 %v5585, %v6641
        %v6643 = vpop.f32.mrb[0].mxu0
        %6644 = vmatprep.mubr.bf16.mxu0 %v3650
        %6645 = vmatmul.mubr.bf16.gmra.mrb[0].mxu0 %v3649
        %v6646 = vpop.f32.mrb[0].mxu0
        %v6647 = vadd.f32 %v5590, %v6646
        %v6648 = vpop.f32.mrb[0].mxu0
        %v6649 = vpop.f32.mrb[0].mxu0
        %v6650 = vadd.f32 %v5593, %v6649
        %v6651 = vpop.f32.mrb[0].mxu0
        %6652 = vmatprep.mubr.bf16.mxu0 %v3656
        %6653 = vmatmul.mubr.bf16.gmra.mrb[0].mxu0 %v3655
        %v6654 = vpop.f32.mrb[0].mxu0
        %v6655 = vadd.f32 %v5598, %v6654
        %v6656 = vpop.f32.mrb[0].mxu0
        %v6657 = vpop.f32.mrb[0].mxu0
        %v6658 = vadd.f32 %v5601, %v6657
        %v6659 = vpop.f32.mrb[0].mxu0
        %6660 = vmatprep.mubr.bf16.mxu0 %v3662
        %6661 = vmatmul.mubr.bf16.gmra.mrb[0].mxu0 %v3661
        %v6662 = vpop.f32.mrb[0].mxu0
        %v6663 = vadd.f32 %v5606, %v6662
        %v6664 = vpop.f32.mrb[0].mxu0
        %v6665 = vpop.f32.mrb[0].mxu0
        %v6666 = vadd.f32 %v5609, %v6665
        %v6667 = vpop.f32.mrb[0].mxu0
        %6668 = vmatprep.mubr.bf16.mxu0 %v3668
        %6669 = vmatmul.mubr.bf16.gmra.mrb[0].mxu0 %v3667
        %v6670 = vpop.f32.mrb[0].mxu0
        %v6671 = vadd.f32 %v5614, %v6670
        %v6672 = vpop.f32.mrb[0].mxu0
        %v6673 = vpop.f32.mrb[0].mxu0
        %v6674 = vadd.f32 %v5617, %v6673
        %v6675 = vpop.f32.mrb[0].mxu0
        %6676 = vmatprep.mubr.bf16.mxu0 %v3674
        %6677 = vmatmul.mubr.bf16.gmra.mrb[0].mxu0 %v3673
        %v6678 = vpop.f32.mrb[0].mxu0
        %v6679 = vadd.f32 %v5622, %v6678
        %v6680 = vpop.f32.mrb[0].mxu0
        %v6681 = vpop.f32.mrb[0].mxu0
        %v6682 = vadd.f32 %v5625, %v6681
        %v6683 = vpop.f32.mrb[0].mxu0
        %6684 = vmatprep.mubr.bf16.mxu0 %v3680
        %6685 = vmatmul.mubr.bf16.gmra.mrb[0].mxu0 %v3679
        %v6686 = vpop.f32.mrb[0].mxu0
        %v6687 = vadd.f32 %v5630, %v6686
        %v6688 = vpop.f32.mrb[0].mxu0
        %v6689 = vpop.f32.mrb[0].mxu0
        %v6690 = vadd.f32 %v5633, %v6689
        %v6691 = vpop.f32.mrb[0].mxu0
        %6692 = vmatprep.mubr.bf16.mxu0 %v3686
        %6693 = vmatmul.mubr.bf16.gmra.mrb[0].mxu0 %v3685
        %v6694 = vpop.f32.mrb[0].mxu0
        %v6695 = vadd.f32 %v5638, %v6694
        %v6696 = vpop.f32.mrb[0].mxu0
        %v6697 = vpop.f32.mrb[0].mxu0
        %v6698 = vadd.f32 %v5641, %v6697
        %v6699 = vpop.f32.mrb[0].mxu0
        %6700 = vmatprep.mubr.bf16.mxu0 %v3692
        %6701 = vmatmul.mubr.bf16.gmra.mrb[0].mxu0 %v3691
        %v6702 = vpop.f32.mrb[0].mxu0
        %v6703 = vadd.f32 %v5646, %v6702
        %v6704 = vpop.f32.mrb[0].mxu0
        %v6705 = vpop.f32.mrb[0].mxu0
        %v6706 = vadd.f32 %v5649, %v6705
        %v6707 = vpop.f32.mrb[0].mxu0
        %6708 = vmatprep.mubr.bf16.mxu0 %v3698
        %6709 = vmatmul.mubr.bf16.gmra.mrb[0].mxu0 %v3697
        %v6710 = vpop.f32.mrb[0].mxu0
        %v6711 = vadd.f32 %v5654, %v6710
        %v6712 = vpop.f32.mrb[0].mxu0
        %v6713 = vpop.f32.mrb[0].mxu0
        %v6714 = vadd.f32 %v5657, %v6713
        %v6715 = vpop.f32.mrb[0].mxu0
        %6716 = vmatprep.mubr.bf16.mxu0 %v3704
        %6717 = vmatmul.mubr.bf16.gmra.mrb[0].mxu0 %v3703
        %v6718 = vpop.f32.mrb[0].mxu0
        %v6719 = vadd.f32 %v5662, %v6718
        %v6720 = vpop.f32.mrb[0].mxu0
        %v6721 = vpop.f32.mrb[0].mxu0
        %v6722 = vadd.f32 %v5665, %v6721
        %v6723 = vpop.f32.mrb[0].mxu0
        %6724 = vmatprep.mubr.bf16.mxu0 %v3710
        %6725 = vmatmul.mubr.bf16.gmra.mrb[0].mxu0 %v3709
        %v6726 = vpop.f32.mrb[0].mxu0
        %v6727 = vadd.f32 %v5670, %v6726
        %v6728 = vpop.f32.mrb[0].mxu0
        %v6729 = vpop.f32.mrb[0].mxu0
        %v6730 = vadd.f32 %v5673, %v6729
        %v6731 = vpop.f32.mrb[0].mxu0
        %6732 = vmatprep.mubr.bf16.mxu0 %v3716
        %6733 = vmatmul.mubr.bf16.gmra.mrb[0].mxu0 %v3715
        %v6734 = vpop.f32.mrb[0].mxu0
        %v6735 = vadd.f32 %v5678, %v6734
        %v6736 = vpop.f32.mrb[0].mxu0
        %v6737 = vpop.f32.mrb[0].mxu0
        %v6738 = vadd.f32 %v5681, %v6737
        %v6739 = vpop.f32.mrb[0].mxu0
        %6740 = vmatprep.mubr.bf16.mxu0 %v3722
        %6741 = vmatmul.mubr.bf16.gmra.mrb[0].mxu0 %v3721
        %v6742 = vpop.f32.mrb[0].mxu0
        %v6743 = vadd.f32 %v5686, %v6742
        %v6744 = vpop.f32.mrb[0].mxu0
        %v6745 = vpop.f32.mrb[0].mxu0
        %v6746 = vadd.f32 %v5689, %v6745
        %v6747 = vpop.f32.mrb[0].mxu0
        %6748 = vmatprep.mubr.bf16.mxu0 %v3728
        %6749 = vmatmul.mubr.bf16.gmra.mrb[0].mxu0 %v3727
        %v6750 = vpop.f32.mrb[0].mxu0
        %v6751 = vadd.f32 %v5694, %v6750
        %v6752 = vpop.f32.mrb[0].mxu0
        %v6753 = vpop.f32.mrb[0].mxu0
        %v6754 = vadd.f32 %v5697, %v6753
        %v6755 = vpop.f32.mrb[0].mxu0
        %6756 = vmatprep.mubr.bf16.mxu0 %v3734
        %6757 = vmatmul.mubr.bf16.gmra.mrb[0].mxu0 %v3733
        %v6758 = vpop.f32.mrb[0].mxu0
        %v6759 = vadd.f32 %v5702, %v6758
        %v6760 = vpop.f32.mrb[0].mxu0
        %v6761 = vpop.f32.mrb[0].mxu0
        %v6762 = vadd.f32 %v5705, %v6761
        %v6763 = vpop.f32.mrb[0].mxu0
        %6764 = vmatprep.mubr.bf16.mxu0 %v3740
        %6765 = vmatmul.mubr.bf16.gmra.mrb[0].mxu0 %v3739
        %v6766 = vpop.f32.mrb[0].mxu0
        %v6767 = vadd.f32 %v5710, %v6766
        %v6768 = vpop.f32.mrb[0].mxu0
        %v6769 = vpop.f32.mrb[0].mxu0
        %v6770 = vadd.f32 %v5713, %v6769
        %v6771 = vpop.f32.mrb[0].mxu0
        %6772 = vmatprep.mubr.bf16.mxu0 %v3746
        %6773 = vmatmul.mubr.bf16.gmra.mrb[0].mxu0 %v3745
        %v6774 = vpop.f32.mrb[0].mxu0
        %v6775 = vadd.f32 %v5718, %v6774
        %v6776 = vpop.f32.mrb[0].mxu0
        %v6777 = vpop.f32.mrb[0].mxu0
        %v6778 = vadd.f32 %v5721, %v6777
        %v6779 = vpop.f32.mrb[0].mxu0
        %6780 = vmatprep.mubr.bf16.mxu0 %v3752
        %6781 = vmatmul.mubr.bf16.gmra.mrb[0].mxu0 %v3751
        %v6782 = vpop.f32.mrb[0].mxu0
        %v6783 = vadd.f32 %v5726, %v6782
        %v6784 = vpop.f32.mrb[0].mxu0
        %v6785 = vpop.f32.mrb[0].mxu0
        %v6786 = vadd.f32 %v5729, %v6785
        %v6787 = vpop.f32.mrb[0].mxu0
        %6788 = vmatprep.mubr.bf16.mxu0 %v3758
        %6789 = vmatmul.mubr.bf16.gmra.mrb[0].mxu0 %v3757
        %v6790 = vpop.f32.mrb[0].mxu0
        %v6791 = vadd.f32 %v5734, %v6790
        %v6792 = vpop.f32.mrb[0].mxu0
        %v6793 = vpop.f32.mrb[0].mxu0
        %v6794 = vadd.f32 %v5737, %v6793
        %v6795 = vpop.f32.mrb[0].mxu0
        %6796 = vmatprep.mubr.bf16.mxu0 %v3764
        %6797 = vmatmul.mubr.bf16.gmra.mrb[0].mxu0 %v3763
        %v6798 = vpop.f32.mrb[0].mxu0
        %v6799 = vadd.f32 %v5742, %v6798
        %v6800 = vpop.f32.mrb[0].mxu0
        %v6801 = vpop.f32.mrb[0].mxu0
        %v6802 = vadd.f32 %v5745, %v6801
        %v6803 = vpop.f32.mrb[0].mxu0
        %6804 = vmatprep.mubr.bf16.mxu0 %v3770
        %6805 = vmatmul.mubr.bf16.gmra.mrb[0].mxu0 %v3769
        %v6806 = vpop.f32.mrb[0].mxu0
        %v6807 = vadd.f32 %v5750, %v6806
        %v6808 = vpop.f32.mrb[0].mxu0
        %v6809 = vpop.f32.mrb[0].mxu0
        %v6810 = vadd.f32 %v5753, %v6809
        %v6811 = vpop.f32.mrb[0].mxu0
        %6812 = vmatprep.mubr.bf16.mxu0 %v3776
        %6813 = vmatmul.mubr.bf16.gmra.mrb[0].mxu0 %v3775
        %v6814 = vpop.f32.mrb[0].mxu0
        %v6815 = vadd.f32 %v5758, %v6814
        %v6816 = vpop.f32.mrb[0].mxu0
        %v6817 = vpop.f32.mrb[0].mxu0
        %v6818 = vadd.f32 %v5761, %v6817
        %v6819 = vpop.f32.mrb[0].mxu0
        %6820 = vmatprep.mubr.bf16.mxu0 %v3782
        %6821 = vmatmul.mubr.bf16.gmra.mrb[0].mxu0 %v3781
        %v6822 = vpop.f32.mrb[0].mxu0
        %v6823 = vadd.f32 %v5766, %v6822
        %v6824 = vpop.f32.mrb[0].mxu0
        %v6825 = vpop.f32.mrb[0].mxu0
        %v6826 = vadd.f32 %v5769, %v6825
        %v6827 = vpop.f32.mrb[0].mxu0
        %6828 = vmatprep.mubr.bf16.mxu0 %v3788
        %6829 = vmatmul.mubr.bf16.gmra.mrb[0].mxu0 %v3787
        %v6830 = vpop.f32.mrb[0].mxu0
        %v6831 = vadd.f32 %v5774, %v6830
        %v6832 = vpop.f32.mrb[0].mxu0
        %v6833 = vpop.f32.mrb[0].mxu0
        %v6834 = vadd.f32 %v5777, %v6833
        %v6835 = vpop.f32.mrb[0].mxu0
        %6836 = vmatprep.mubr.bf16.mxu0 %v3794
        %6837 = vmatmul.mubr.bf16.gmra.mrb[0].mxu0 %v3793
        %v6838 = vpop.f32.mrb[0].mxu0
        %v6839 = vadd.f32 %v5782, %v6838
        %v6840 = vpop.f32.mrb[0].mxu0
        %v6841 = vpop.f32.mrb[0].mxu0
        %v6842 = vadd.f32 %v5785, %v6841
        %v6843 = vpop.f32.mrb[0].mxu0
        %6844 = vmatprep.mubr.bf16.mxu0 %v3800
        %6845 = vmatmul.mubr.bf16.gmra.mrb[0].mxu0 %v3799
        %v6846 = vpop.f32.mrb[0].mxu0
        %v6847 = vadd.f32 %v5790, %v6846
        %v6848 = vpop.f32.mrb[0].mxu0
        %v6849 = vpop.f32.mrb[0].mxu0
        %v6850 = vadd.f32 %v5793, %v6849
        %v6851 = vpop.f32.mrb[0].mxu0
        %6852 = vmatprep.mubr.bf16.mxu0 %v3806
        %6853 = vmatmul.mubr.bf16.gmra.mrb[0].mxu0 %v3805
        %v6854 = vpop.f32.mrb[0].mxu0
        %v6855 = vadd.f32 %v5798, %v6854
        %v6856 = vpop.f32.mrb[0].mxu0
        %v6857 = vpop.f32.mrb[0].mxu0
        %v6858 = vadd.f32 %v5801, %v6857
        %v6859 = vpop.f32.mrb[0].mxu0
        %6860 = vmatprep.mubr.bf16.mxu0 %v3812
        %6861 = vmatmul.mubr.bf16.gmra.mrb[0].mxu0 %v3811
        %v6862 = vpop.f32.mrb[0].mxu0
        %v6863 = vadd.f32 %v5806, %v6862
        %v6864 = vpop.f32.mrb[0].mxu0
        %v6865 = vpop.f32.mrb[0].mxu0
        %v6866 = vadd.f32 %v5809, %v6865
        %v6867 = vpop.f32.mrb[0].mxu0
        %6868 = vmatprep.mubr.bf16.mxu0 %v3818
        %6869 = vmatmul.mubr.bf16.gmra.mrb[0].mxu0 %v3817
        %v6870 = vpop.f32.mrb[0].mxu0
        %v6871 = vadd.f32 %v5814, %v6870
        %v6872 = vpop.f32.mrb[0].mxu0
        %v6873 = vpop.f32.mrb[0].mxu0
        %v6874 = vadd.f32 %v5817, %v6873
        %v6875 = vpop.f32.mrb[0].mxu0
        %6876 = vmatprep.mubr.bf16.mxu0 %v3824
        %6877 = vmatmul.mubr.bf16.gmra.mrb[0].mxu0 %v3823
        %v6878 = vpop.f32.mrb[0].mxu0
        %v6879 = vadd.f32 %v5822, %v6878
        %v6880 = vpop.f32.mrb[0].mxu0
        %v6881 = vpop.f32.mrb[0].mxu0
        %v6882 = vadd.f32 %v5825, %v6881
        %v6883 = vpop.f32.mrb[0].mxu0
        %6884 = vmatprep.mubr.bf16.mxu0 %v3830
        %6885 = vmatmul.mubr.bf16.gmra.mrb[0].mxu0 %v3829
        %v6886 = vpop.f32.mrb[0].mxu0
        %v6887 = vadd.f32 %v5830, %v6886
        %v6888 = vpop.f32.mrb[0].mxu0
        %v6889 = vpop.f32.mrb[0].mxu0
        %v6890 = vadd.f32 %v5833, %v6889
        %v6891 = vpop.f32.mrb[0].mxu0
        %6892 = vmatprep.mubr.bf16.mxu0 %v3836
        %6893 = vmatmul.mubr.bf16.gmra.mrb[0].mxu0 %v3835
        %v6894 = vpop.f32.mrb[0].mxu0
        %v6895 = vadd.f32 %v5838, %v6894
        %v6896 = vpop.f32.mrb[0].mxu0
        %v6897 = vpop.f32.mrb[0].mxu0
        %v6898 = vadd.f32 %v5841, %v6897
        %v6899 = vpop.f32.mrb[0].mxu0
        %6900 = vmatprep.mubr.bf16.mxu0 %v3842
        %6901 = vmatmul.mubr.bf16.gmra.mrb[0].mxu0 %v3841
        %v6902 = vpop.f32.mrb[0].mxu0
        %v6903 = vadd.f32 %v5846, %v6902
        %v6904 = vpop.f32.mrb[0].mxu0
        %v6905 = vpop.f32.mrb[0].mxu0
        %v6906 = vadd.f32 %v5849, %v6905
        %v6907 = vpop.f32.mrb[0].mxu0
        %6908 = vmatprep.mubr.bf16.mxu0 %v3848
        %6909 = vmatmul.mubr.bf16.gmra.mrb[0].mxu0 %v3847
        %v6910 = vpop.f32.mrb[0].mxu0
        %v6911 = vadd.f32 %v5854, %v6910
        %v6912 = vpop.f32.mrb[0].mxu0
        %v6913 = vpop.f32.mrb[0].mxu0
        %v6914 = vadd.f32 %v5857, %v6913
        %v6915 = vpop.f32.mrb[0].mxu0
        %6916 = vmatprep.mubr.bf16.mxu0 %v3854
        %6917 = vmatmul.mubr.bf16.gmra.mrb[0].mxu0 %v3853
        %v6918 = vpop.f32.mrb[0].mxu0
        %v6919 = vadd.f32 %v5862, %v6918
        %v6920 = vpop.f32.mrb[0].mxu0
        %v6921 = vpop.f32.mrb[0].mxu0
        %v6922 = vadd.f32 %v5865, %v6921
        %v6923 = vpop.f32.mrb[0].mxu0
        %6924 = vmatprep.mubr.bf16.mxu0 %v3860
        %6925 = vmatmul.mubr.bf16.gmra.mrb[0].mxu0 %v3859
        %v6926 = vpop.f32.mrb[0].mxu0
        %v6927 = vadd.f32 %v5870, %v6926
        %v6928 = vpop.f32.mrb[0].mxu0
        %v6929 = vpop.f32.mrb[0].mxu0
        %v6930 = vadd.f32 %v5873, %v6929
        %v6931 = vpop.f32.mrb[0].mxu0
        %6932 = vmatprep.mubr.bf16.mxu0 %v3866
        %6933 = vmatmul.mubr.bf16.gmra.mrb[0].mxu0 %v3865
        %v6934 = vpop.f32.mrb[0].mxu0
        %v6935 = vadd.f32 %v5878, %v6934
        %v6936 = vpop.f32.mrb[0].mxu0
        %v6937 = vpop.f32.mrb[0].mxu0
        %v6938 = vadd.f32 %v5881, %v6937
        %v6939 = vpop.f32.mrb[0].mxu0
        %6940 = vmatprep.mubr.bf16.mxu0 %v3872
        %6941 = vmatmul.mubr.bf16.gmra.mrb[0].mxu0 %v3871
        %v6942 = vpop.f32.mrb[0].mxu0
        %v6943 = vadd.f32 %v5886, %v6942
        %v6944 = vpop.f32.mrb[0].mxu0
        %v6945 = vpop.f32.mrb[0].mxu0
        %v6946 = vadd.f32 %v5889, %v6945
        %v6947 = vpop.f32.mrb[0].mxu0
        %6948 = vmatprep.mubr.bf16.mxu0 %v3878
        %6949 = vmatmul.mubr.bf16.gmra.mrb[0].mxu0 %v3877
        %v6950 = vpop.f32.mrb[0].mxu0
        %v6951 = vadd.f32 %v5894, %v6950
        %v6952 = vpop.f32.mrb[0].mxu0
        %v6953 = vpop.f32.mrb[0].mxu0
        %v6954 = vadd.f32 %v5897, %v6953
        %v6955 = vpop.f32.mrb[0].mxu0
        %6956 = vmatprep.mubr.bf16.mxu0 %v3884
        %6957 = vmatmul.mubr.bf16.gmra.mrb[0].mxu0 %v3883
        %v6958 = vpop.f32.mrb[0].mxu0
        %v6959 = vadd.f32 %v5902, %v6958
        %v6960 = vpop.f32.mrb[0].mxu0
        %v6961 = vpop.f32.mrb[0].mxu0
        %v6962 = vadd.f32 %v5905, %v6961
        %v6963 = vpop.f32.mrb[0].mxu0
        %6964 = vmatprep.mubr.bf16.mxu0 %v3890
        %6965 = vmatmul.mubr.bf16.gmra.mrb[0].mxu0 %v3889
        %v6966 = vpop.f32.mrb[0].mxu0
        %v6967 = vadd.f32 %v5910, %v6966
        %v6968 = vpop.f32.mrb[0].mxu0
        %v6969 = vpop.f32.mrb[0].mxu0
        %v6970 = vadd.f32 %v5913, %v6969
        %v6971 = vpop.f32.mrb[0].mxu0
        %6972 = vmatprep.mubr.bf16.mxu0 %v3896
        %6973 = vmatmul.mubr.bf16.gmra.mrb[0].mxu0 %v3895
        %v6974 = vpop.f32.mrb[0].mxu0
        %v6975 = vadd.f32 %v5918, %v6974
        %v6976 = vpop.f32.mrb[0].mxu0
        %v6977 = vpop.f32.mrb[0].mxu0
        %v6978 = vadd.f32 %v5921, %v6977
        %v6979 = vpop.f32.mrb[0].mxu0
        %6980 = vmatprep.mubr.bf16.mxu0 %v3902
        %6981 = vmatmul.mubr.bf16.gmra.mrb[0].mxu0 %v3901
        %v6982 = vpop.f32.mrb[0].mxu0
        %v6983 = vadd.f32 %v5926, %v6982
        %v6984 = vpop.f32.mrb[0].mxu0
        %v6985 = vpop.f32.mrb[0].mxu0
        %v6986 = vadd.f32 %v5929, %v6985
        %v6987 = vpop.f32.mrb[0].mxu0
        %6988 = vmatprep.mubr.bf16.mxu0 %v3908
        %6989 = vmatmul.mubr.bf16.gmra.mrb[0].mxu0 %v3907
        %v6990 = vpop.f32.mrb[0].mxu0
        %v6991 = vadd.f32 %v5934, %v6990
        %v6992 = vpop.f32.mrb[0].mxu0
        %v6993 = vpop.f32.mrb[0].mxu0
        %v6994 = vadd.f32 %v5937, %v6993
        %v6995 = vpop.f32.mrb[0].mxu0
        %6996 = vmatprep.mubr.bf16.mxu0 %v3914
        %6997 = vmatmul.mubr.bf16.gmra.mrb[0].mxu0 %v3913
        %v6998 = vpop.f32.mrb[0].mxu0
        %v6999 = vadd.f32 %v5942, %v6998
        %v7000 = vpop.f32.mrb[0].mxu0
        %v7001 = vpop.f32.mrb[0].mxu0
        %v7002 = vadd.f32 %v5945, %v7001
        %v7003 = vpop.f32.mrb[0].mxu0
        %7004 = vmatprep.mubr.bf16.mxu0 %v3920
        %7005 = vmatmul.mubr.bf16.gmra.mrb[0].mxu0 %v3919
        %v7006 = vpop.f32.mrb[0].mxu0
        %v7007 = vadd.f32 %v5950, %v7006
        %v7008 = vpop.f32.mrb[0].mxu0
        %v7009 = vpop.f32.mrb[0].mxu0
        %v7010 = vadd.f32 %v5953, %v7009
        %v7011 = vpop.f32.mrb[0].mxu0
        %7012 = vmatprep.mubr.bf16.mxu0 %v3926
        %7013 = vmatmul.mubr.bf16.gmra.mrb[0].mxu0 %v3925
        %v7014 = vpop.f32.mrb[0].mxu0
        %v7015 = vadd.f32 %v5958, %v7014
        %v7016 = vpop.f32.mrb[0].mxu0
        %v7017 = vpop.f32.mrb[0].mxu0
        %v7018 = vadd.f32 %v5961, %v7017
        %v7019 = vpop.f32.mrb[0].mxu0
        %7020 = vmatprep.mubr.bf16.mxu0 %v3932
        %7021 = vmatmul.mubr.bf16.gmra.mrb[0].mxu0 %v3931
        %v7022 = vpop.f32.mrb[0].mxu0
        %v7023 = vadd.f32 %v5966, %v7022
        %v7024 = vpop.f32.mrb[0].mxu0
        %v7025 = vpop.f32.mrb[0].mxu0
        %v7026 = vadd.f32 %v5969, %v7025
        %v7027 = vpop.f32.mrb[0].mxu0
        %7028 = vmatprep.mubr.bf16.mxu0 %v3938
        %7029 = vmatmul.mubr.bf16.gmra.mrb[0].mxu0 %v3937
        %v7030 = vpop.f32.mrb[0].mxu0
        %v7031 = vadd.f32 %v5974, %v7030
        %v7032 = vpop.f32.mrb[0].mxu0
        %v7033 = vpop.f32.mrb[0].mxu0
        %v7034 = vadd.f32 %v5977, %v7033
        %v7035 = vpop.f32.mrb[0].mxu0
        %7036 = vmatprep.mubr.bf16.mxu0 %v3944
        %7037 = vmatmul.mubr.bf16.gmra.mrb[0].mxu0 %v3943
        %v7038 = vpop.f32.mrb[0].mxu0
        %v7039 = vadd.f32 %v5982, %v7038
        %v7040 = vpop.f32.mrb[0].mxu0
        %v7041 = vpop.f32.mrb[0].mxu0
        %v7042 = vadd.f32 %v5985, %v7041
        %v7043 = vpop.f32.mrb[0].mxu0
        %7044 = vmatprep.mubr.bf16.mxu0 %v3950
        %7045 = vmatmul.mubr.bf16.gmra.mrb[0].mxu0 %v3949
        %v7046 = vpop.f32.mrb[0].mxu0
        %v7047 = vadd.f32 %v5990, %v7046
        %v7048 = vpop.f32.mrb[0].mxu0
        %v7049 = vpop.f32.mrb[0].mxu0
        %v7050 = vadd.f32 %v5993, %v7049
        %v7051 = vpop.f32.mrb[0].mxu0
        %7052 = vmatprep.mubr.bf16.mxu0 %v3956
        %7053 = vmatmul.mubr.bf16.gmra.mrb[0].mxu0 %v3955
        %v7054 = vpop.f32.mrb[0].mxu0
        %v7055 = vadd.f32 %v5998, %v7054
        %v7056 = vpop.f32.mrb[0].mxu0
        %v7057 = vpop.f32.mrb[0].mxu0
        %v7058 = vadd.f32 %v6001, %v7057
        %v7059 = vpop.f32.mrb[0].mxu0
        %7060 = vmatprep.mubr.bf16.mxu0 %v3962
        %7061 = vmatmul.mubr.bf16.gmra.mrb[0].mxu0 %v3961
        %v7062 = vpop.f32.mrb[0].mxu0
        %v7063 = vadd.f32 %v6006, %v7062
        %v7064 = vpop.f32.mrb[0].mxu0
        %v7065 = vpop.f32.mrb[0].mxu0
        %v7066 = vadd.f32 %v6009, %v7065
        %v7067 = vpop.f32.mrb[0].mxu0
        %7068 = vmatprep.mubr.bf16.mxu0 %v3968
        %7069 = vmatmul.mubr.bf16.gmra.mrb[0].mxu0 %v3967
        %v7070 = vpop.f32.mrb[0].mxu0
        %v7071 = vadd.f32 %v6014, %v7070
        %v7072 = vpop.f32.mrb[0].mxu0
        %v7073 = vpop.f32.mrb[0].mxu0
        %v7074 = vadd.f32 %v6017, %v7073
        %v7075 = vpop.f32.mrb[0].mxu0
        %7076 = vmatprep.mubr.bf16.mxu0 %v3974
        %7077 = vmatmul.mubr.bf16.gmra.mrb[0].mxu0 %v3973
        %v7078 = vpop.f32.mrb[0].mxu0
        %v7079 = vadd.f32 %v6022, %v7078
        %v7080 = vpop.f32.mrb[0].mxu0
        %v7081 = vpop.f32.mrb[0].mxu0
        %v7082 = vadd.f32 %v6025, %v7081
        %v7083 = vpop.f32.mrb[0].mxu0
        %7084 = vmatprep.mubr.bf16.mxu0 %v3980
        %7085 = vmatmul.mubr.bf16.gmra.mrb[0].mxu0 %v3979
        %v7086 = vpop.f32.mrb[0].mxu0
        %v7087 = vadd.f32 %v6030, %v7086
        %v7088 = vpop.f32.mrb[0].mxu0
        %v7089 = vpop.f32.mrb[0].mxu0
        %v7090 = vadd.f32 %v6033, %v7089
        %v7091 = vpop.f32.mrb[0].mxu0
        %7092 = vmatprep.mubr.bf16.mxu0 %v3986
        %7093 = vmatmul.mubr.bf16.gmra.mrb[0].mxu0 %v3985
        %v7094 = vpop.f32.mrb[0].mxu0
        %v7095 = vadd.f32 %v6038, %v7094
        %v7096 = vpop.f32.mrb[0].mxu0
        %v7097 = vpop.f32.mrb[0].mxu0
        %v7098 = vadd.f32 %v6041, %v7097
        %v7099 = vpop.f32.mrb[0].mxu0
        %7100 = vmatprep.mubr.bf16.mxu0 %v3992
        %7101 = vmatmul.mubr.bf16.gmra.mrb[0].mxu0 %v3991
        %v7102 = vpop.f32.mrb[0].mxu0
        %v7103 = vadd.f32 %v6046, %v7102
        %v7104 = vpop.f32.mrb[0].mxu0
        %v7105 = vpop.f32.mrb[0].mxu0
        %v7106 = vadd.f32 %v6049, %v7105
        %v7107 = vpop.f32.mrb[0].mxu0
        %7108 = vmatprep.mubr.bf16.mxu0 %v3998
        %7109 = vmatmul.mubr.bf16.gmra.mrb[0].mxu0 %v3997
        %v7110 = vpop.f32.mrb[0].mxu0
        %v7111 = vadd.f32 %v6054, %v7110
        %v7112 = vpop.f32.mrb[0].mxu0
        %v7113 = vpop.f32.mrb[0].mxu0
        %v7114 = vadd.f32 %v6057, %v7113
        %v7115 = vpop.f32.mrb[0].mxu0
        %7116 = vmatprep.mubr.bf16.mxu0 %v4004
        %7117 = vmatmul.mubr.bf16.gmra.mrb[0].mxu0 %v4003
        %v7118 = vpop.f32.mrb[0].mxu0
        %v7119 = vadd.f32 %v6062, %v7118
        %v7120 = vpop.f32.mrb[0].mxu0
        %v7121 = vpop.f32.mrb[0].mxu0
        %v7122 = vadd.f32 %v6065, %v7121
        %v7123 = vpop.f32.mrb[0].mxu0
        %7124 = vmatprep.mubr.bf16.mxu0 %v4010
        %7125 = vmatmul.mubr.bf16.gmra.mrb[0].mxu0 %v4009
        %v7126 = vpop.f32.mrb[0].mxu0
        %v7127 = vadd.f32 %v6070, %v7126
        %v7128 = vpop.f32.mrb[0].mxu0
        %v7129 = vpop.f32.mrb[0].mxu0
        %v7130 = vadd.f32 %v6073, %v7129
        %v7131 = vpop.f32.mrb[0].mxu0
        %7132 = vmatprep.mubr.bf16.mxu0 %v4016
        %7133 = vmatmul.mubr.bf16.gmra.mrb[0].mxu0 %v4015
        %v7134 = vpop.f32.mrb[0].mxu0
        %v7135 = vadd.f32 %v6078, %v7134
        %v7136 = vpop.f32.mrb[0].mxu0
        %v7137 = vpop.f32.mrb[0].mxu0
        %v7138 = vadd.f32 %v6081, %v7137
        %v7139 = vpop.f32.mrb[0].mxu0
        %7140 = vmatprep.mubr.bf16.mxu0 %v4022
        %7141 = vmatmul.mubr.bf16.gmra.mrb[0].mxu0 %v4021
        %v7142 = vpop.f32.mrb[0].mxu0
        %v7143 = vadd.f32 %v6086, %v7142
        %v7144 = vpop.f32.mrb[0].mxu0
        %v7145 = vpop.f32.mrb[0].mxu0
        %v7146 = vadd.f32 %v6089, %v7145
        %v7147 = vpop.f32.mrb[0].mxu0
        %7148 = vmatprep.mubr.bf16.mxu0 %v4028
        %7149 = vmatmul.mubr.bf16.gmra.mrb[0].mxu0 %v4027
        %v7150 = vpop.f32.mrb[0].mxu0
        %v7151 = vadd.f32 %v6094, %v7150
        %v7152 = vpop.f32.mrb[0].mxu0
        %v7153 = vpop.f32.mrb[0].mxu0
        %v7154 = vadd.f32 %v6097, %v7153
        %v7155 = vpop.f32.mrb[0].mxu0
        %7156 = vmatprep.mubr.bf16.mxu0 %v4034
        %7157 = vmatmul.mubr.bf16.gmra.mrb[0].mxu0 %v4033
        %v7158 = vpop.f32.mrb[0].mxu0
        %v7159 = vadd.f32 %v6102, %v7158
        %v7160 = vpop.f32.mrb[0].mxu0
        %v7161 = vpop.f32.mrb[0].mxu0
        %v7162 = vadd.f32 %v6105, %v7161
        %v7163 = vpop.f32.mrb[0].mxu0
        %7164 = vmatprep.mubr.bf16.mxu0 %v4040
        %7165 = vmatmul.mubr.bf16.gmra.mrb[0].mxu0 %v4039
        %v7166 = vpop.f32.mrb[0].mxu0
        %v7167 = vadd.f32 %v6110, %v7166
        %v7168 = vpop.f32.mrb[0].mxu0
        %v7169 = vpop.f32.mrb[0].mxu0
        %v7170 = vadd.f32 %v6113, %v7169
        %v7171 = vpop.f32.mrb[0].mxu0
        %7172 = vmatprep.mubr.bf16.mxu0 %v4046
        %7173 = vmatmul.mubr.bf16.gmra.mrb[0].mxu0 %v4045
        %v7174 = vpop.f32.mrb[0].mxu0
        %v7175 = vadd.f32 %v6118, %v7174
        %v7176 = vpop.f32.mrb[0].mxu0
        %v7177 = vpop.f32.mrb[0].mxu0
        %v7178 = vadd.f32 %v6121, %v7177
        %v7179 = vpop.f32.mrb[0].mxu0
        %7180 = vmatprep.mubr.bf16.mxu0 %v4052
        %7181 = vmatmul.mubr.bf16.gmra.mrb[0].mxu0 %v4051
        %v7182 = vpop.f32.mrb[0].mxu0
        %v7183 = vadd.f32 %v6126, %v7182
        %v7184 = vpop.f32.mrb[0].mxu0
        %v7185 = vpop.f32.mrb[0].mxu0
        %v7186 = vadd.f32 %v6129, %v7185
        %v7187 = vpop.f32.mrb[0].mxu0
        %7188 = vmatprep.mubr.bf16.mxu0 %v4058
        %7189 = vmatmul.mubr.bf16.gmra.mrb[0].mxu0 %v4057
        %v7190 = vpop.f32.mrb[0].mxu0
        %v7191 = vadd.f32 %v6134, %v7190
        %v7192 = vpop.f32.mrb[0].mxu0
        %v7193 = vpop.f32.mrb[0].mxu0
        %v7194 = vadd.f32 %v6137, %v7193
        %v7195 = vpop.f32.mrb[0].mxu0
        %7196 = vmatprep.mubr.bf16.mxu0 %v4064
        %7197 = vmatmul.mubr.bf16.gmra.mrb[0].mxu0 %v4063
        %v7198 = vpop.f32.mrb[0].mxu0
        %v7199 = vadd.f32 %v6142, %v7198
        %v7200 = vpop.f32.mrb[0].mxu0
        %v7201 = vpop.f32.mrb[0].mxu0
        %v7202 = vadd.f32 %v6145, %v7201
        %v7203 = vpop.f32.mrb[0].mxu0
        %7204 = vmatprep.mubr.bf16.mxu0 %v4070
        %7205 = vmatmul.mubr.bf16.gmra.mrb[0].mxu0 %v4069
        %v7206 = vpop.f32.mrb[0].mxu0
        %v7207 = vadd.f32 %v6150, %v7206
        %v7208 = vpop.f32.mrb[0].mxu0
        %v7209 = vpop.f32.mrb[0].mxu0
        %v7210 = vadd.f32 %v6153, %v7209
        %v7211 = vpop.f32.mrb[0].mxu0
        %7212 = vmatprep.mubr.bf16.mxu0 %v4076
        %7213 = vmatmul.mubr.bf16.gmra.mrb[0].mxu0 %v4075
        %v7214 = vpop.f32.mrb[0].mxu0
        %v7215 = vadd.f32 %v6158, %v7214
        %v7216 = vpop.f32.mrb[0].mxu0
        %v7217 = vpop.f32.mrb[0].mxu0
        %v7218 = vadd.f32 %v6161, %v7217
        %v7219 = vpop.f32.mrb[0].mxu0
        %7220 = vmatprep.mubr.bf16.mxu0 %v4082
        %7221 = vmatmul.mubr.bf16.gmra.mrb[0].mxu0 %v4081
        %v7222 = vpop.f32.mrb[0].mxu0
        %v7223 = vadd.f32 %v6166, %v7222
        %v7224 = vpop.f32.mrb[0].mxu0
        %v7225 = vpop.f32.mrb[0].mxu0
        %v7226 = vadd.f32 %v6169, %v7225
        %v7227 = vpop.f32.mrb[0].mxu0
        %7228 = vmatprep.mubr.bf16.mxu0 %v4088
        %7229 = vmatmul.mubr.bf16.gmra.mrb[0].mxu0 %v4087
        %v7230 = vpop.f32.mrb[0].mxu0
        %v7231 = vadd.f32 %v6174, %v7230
        %v7232 = vpop.f32.mrb[0].mxu0
        %v7233 = vpop.f32.mrb[0].mxu0
        %v7234 = vadd.f32 %v6177, %v7233
        %v7235 = vpop.f32.mrb[0].mxu0
        %7236 = vmatprep.mubr.bf16.mxu0 %v4094
        %7237 = vmatmul.mubr.bf16.gmra.mrb[0].mxu0 %v4093
        %v7238 = vpop.f32.mrb[0].mxu0
        %v7239 = vadd.f32 %v6182, %v7238
        %v7240 = vpop.f32.mrb[0].mxu0
        %v7241 = vpop.f32.mrb[0].mxu0
        %v7242 = vadd.f32 %v6185, %v7241
        %v7243 = vpop.f32.mrb[0].mxu0
        %7244 = vmatprep.mubr.bf16.mxu0 %v4100
        %7245 = vmatmul.mubr.bf16.gmra.mrb[0].mxu0 %v4099
        %v7246 = vpop.f32.mrb[0].mxu0
        %v7247 = vadd.f32 %v6190, %v7246
        %v7248 = vpop.f32.mrb[0].mxu0
        %v7249 = vpop.f32.mrb[0].mxu0
        %v7250 = vadd.f32 %v6193, %v7249
        %v7251 = vpop.f32.mrb[0].mxu0
        %7252 = vmatprep.mubr.bf16.mxu0 %v4106
        %7253 = vmatmul.mubr.bf16.gmra.mrb[0].mxu0 %v4105
        %v7254 = vpop.f32.mrb[0].mxu0
        %v7255 = vadd.f32 %v6198, %v7254
        %v7256 = vpop.f32.mrb[0].mxu0
        %v7257 = vpop.f32.mrb[0].mxu0
        %v7258 = vadd.f32 %v6201, %v7257
        %v7259 = vpop.f32.mrb[0].mxu0
        %7260 = vmatprep.mubr.bf16.mxu0 %v4112
        %7261 = vmatmul.mubr.bf16.gmra.mrb[0].mxu0 %v4111
        %v7262 = vpop.f32.mrb[0].mxu0
        %v7263 = vadd.f32 %v6206, %v7262
        %v7264 = vpop.f32.mrb[0].mxu0
        %v7265 = vpop.f32.mrb[0].mxu0
        %v7266 = vadd.f32 %v6209, %v7265
        %v7267 = vpop.f32.mrb[0].mxu0
        %7268 = vmatprep.mubr.bf16.mxu0 %v4118
        %7269 = vmatmul.mubr.bf16.gmra.mrb[0].mxu0 %v4117
        %v7270 = vpop.f32.mrb[0].mxu0
        %v7271 = vadd.f32 %v6214, %v7270
        %v7272 = vpop.f32.mrb[0].mxu0
        %v7273 = vpop.f32.mrb[0].mxu0
        %v7274 = vadd.f32 %v6217, %v7273
        %v7275 = vpop.f32.mrb[0].mxu0
        %7276 = vmatprep.mubr.bf16.mxu0 %v4124
        %7277 = vmatmul.mubr.bf16.gmra.mrb[0].mxu0 %v4123
        %v7278 = vpop.f32.mrb[0].mxu0
        %v7279 = vadd.f32 %v6222, %v7278
        %v7280 = vpop.f32.mrb[0].mxu0
        %v7281 = vpop.f32.mrb[0].mxu0
        %v7282 = vadd.f32 %v6225, %v7281
        %v7283 = vpop.f32.mrb[0].mxu0
        %7284 = vmatprep.mubr.bf16.mxu0 %v4130
        %7285 = vmatmul.mubr.bf16.gmra.mrb[0].mxu0 %v4129
        %v7286 = vpop.f32.mrb[0].mxu0
        %v7287 = vadd.f32 %v6230, %v7286
        %v7288 = vpop.f32.mrb[0].mxu0
        %v7289 = vpop.f32.mrb[0].mxu0
        %v7290 = vadd.f32 %v6233, %v7289
        %v7291 = vpop.f32.mrb[0].mxu0
        %7292 = vmatprep.mubr.bf16.mxu0 %v4136
        %7293 = vmatmul.mubr.bf16.gmra.mrb[0].mxu0 %v4135
        %v7294 = vpop.f32.mrb[0].mxu0
        %v7295 = vadd.f32 %v6238, %v7294
        %v7296 = vpop.f32.mrb[0].mxu0
        %v7297 = vpop.f32.mrb[0].mxu0
        %v7298 = vadd.f32 %v6241, %v7297
        %v7299 = vpop.f32.mrb[0].mxu0
        %7300 = vmatprep.mubr.bf16.mxu0 %v4142
        %7301 = vmatmul.mubr.bf16.gmra.mrb[0].mxu0 %v4141
        %v7302 = vpop.f32.mrb[0].mxu0
        %v7303 = vadd.f32 %v6246, %v7302
        %v7304 = vpop.f32.mrb[0].mxu0
        %v7305 = vpop.f32.mrb[0].mxu0
        %v7306 = vadd.f32 %v6249, %v7305
        %v7307 = vpop.f32.mrb[0].mxu0
        %7308 = vmatprep.mubr.bf16.mxu0 %v4148
        %7309 = vmatmul.mubr.bf16.gmra.mrb[0].mxu0 %v4147
        %v7310 = vpop.f32.mrb[0].mxu0
        %v7311 = vadd.f32 %v6254, %v7310
        %v7312 = vpop.f32.mrb[0].mxu0
        %v7313 = vpop.f32.mrb[0].mxu0
        %v7314 = vadd.f32 %v6257, %v7313
        %v7315 = vpop.f32.mrb[0].mxu0
        %7316 = vmatprep.mubr.bf16.mxu0 %v4154
        %7317 = vmatmul.mubr.bf16.gmra.mrb[0].mxu0 %v4153
        %v7318 = vpop.f32.mrb[0].mxu0
        %v7319 = vadd.f32 %v6262, %v7318
        %v7320 = vpop.f32.mrb[0].mxu0
        %v7321 = vpop.f32.mrb[0].mxu0
        %v7322 = vadd.f32 %v6265, %v7321
        %v7323 = vpop.f32.mrb[0].mxu0
        %7324 = vmatprep.mubr.bf16.mxu0 %v4160
        %7325 = vmatmul.mubr.bf16.gmra.mrb[0].mxu0 %v4159
        %v7326 = vpop.f32.mrb[0].mxu0
        %v7327 = vadd.f32 %v6270, %v7326
        %v7328 = vpop.f32.mrb[0].mxu0
        %v7329 = vpop.f32.mrb[0].mxu0
        %v7330 = vadd.f32 %v6273, %v7329
        %v7331 = vpop.f32.mrb[0].mxu0
        %7332 = vdwg.mxu0
        %7333 = vmatprep.subr.bf16.mxu0 0
        %7334 = vmatpush1.bf16.msra.mxu0 %v5155
        %7335 = vmatprep.subr.bf16.mxu0 0
        %7336 = vmatpush1.bf16.msra.mxu0 %v5156
        %7337 = vmatprep.subr.bf16.mxu0 0
        %7338 = vmatpush1.bf16.msra.mxu0 %v5157
        %7339 = vmatprep.subr.bf16.mxu0 0
        %7340 = vmatpush1.bf16.msra.mxu0 %v5158
        %7341 = vmatprep.subr.bf16.mxu0 0
        %7342 = vmatpush1.bf16.msra.mxu0 %v5159
        %7343 = vmatprep.subr.bf16.mxu0 0
        %7344 = vmatpush1.bf16.msra.mxu0 %v5160
        %7345 = vmatprep.subr.bf16.mxu0 0
        %7346 = vmatpush1.bf16.msra.mxu0 %v5161
        %7347 = vmatprep.subr.bf16.mxu0 0
        %7348 = vmatpush1.bf16.msra.mxu0 %v5162
        %7349 = vmatprep.subr.bf16.mxu0 0
        %7350 = vmatpush1.bf16.msra.mxu0 %v5163
        %7351 = vmatprep.subr.bf16.mxu0 0
        %7352 = vmatpush1.bf16.msra.mxu0 %v5164
        %7353 = vmatprep.subr.bf16.mxu0 0
        %7354 = vmatpush1.bf16.msra.mxu0 %v5165
        %7355 = vmatprep.subr.bf16.mxu0 0
        %7356 = vmatpush1.bf16.msra.mxu0 %v5166
        %7357 = vmatprep.subr.bf16.mxu0 0
        %7358 = vmatpush1.bf16.msra.mxu0 %v5167
        %7359 = vmatprep.subr.bf16.mxu0 0
        %7360 = vmatpush1.bf16.msra.mxu0 %v5168
        %7361 = vmatprep.subr.bf16.mxu0 0
        %7362 = vmatpush1.bf16.msra.mxu0 %v5169
        %7363 = vmatprep.subr.bf16.mxu0 0
        %7364 = vmatpush1.bf16.msra.mxu0 %v5170
        %7365 = vmatprep.mubr.bf16.mxu0 %v3400
        %7366 = vmatmul.mubr.bf16.gmra.mrb[0].mxu0 %v3399
        %v7367 = vpop.f32.mrb[0].mxu0
        %v7368 = vadd.f32 %v6311, %v7367
        %v7369 = vpop.f32.mrb[0].mxu0
        %v7370 = vpop.f32.mrb[0].mxu0
        %v7371 = vadd.f32 %v6314, %v7370
        %v7372 = vpop.f32.mrb[0].mxu0
        %7373 = vmatprep.mubr.bf16.mxu0 %v3406
        %7374 = vmatmul.mubr.bf16.gmra.mrb[0].mxu0 %v3405
        %v7375 = vpop.f32.mrb[0].mxu0
        %v7376 = vadd.f32 %v6319, %v7375
        %v7377 = vpop.f32.mrb[0].mxu0
        %v7378 = vpop.f32.mrb[0].mxu0
        %v7379 = vadd.f32 %v6322, %v7378
        %v7380 = vpop.f32.mrb[0].mxu0
        %7381 = vmatprep.mubr.bf16.mxu0 %v3412
        %7382 = vmatmul.mubr.bf16.gmra.mrb[0].mxu0 %v3411
        %v7383 = vpop.f32.mrb[0].mxu0
        %v7384 = vadd.f32 %v6327, %v7383
        %v7385 = vpop.f32.mrb[0].mxu0
        %v7386 = vpop.f32.mrb[0].mxu0
        %v7387 = vadd.f32 %v6330, %v7386
        %v7388 = vpop.f32.mrb[0].mxu0
        %7389 = vmatprep.mubr.bf16.mxu0 %v3418
        %7390 = vmatmul.mubr.bf16.gmra.mrb[0].mxu0 %v3417
        %v7391 = vpop.f32.mrb[0].mxu0
        %v7392 = vadd.f32 %v6335, %v7391
        %v7393 = vpop.f32.mrb[0].mxu0
        %v7394 = vpop.f32.mrb[0].mxu0
        %v7395 = vadd.f32 %v6338, %v7394
        %v7396 = vpop.f32.mrb[0].mxu0
        %7397 = vmatprep.mubr.bf16.mxu0 %v3424
        %7398 = vmatmul.mubr.bf16.gmra.mrb[0].mxu0 %v3423
        %v7399 = vpop.f32.mrb[0].mxu0
        %v7400 = vadd.f32 %v6343, %v7399
        %v7401 = vpop.f32.mrb[0].mxu0
        %v7402 = vpop.f32.mrb[0].mxu0
        %v7403 = vadd.f32 %v6346, %v7402
        %v7404 = vpop.f32.mrb[0].mxu0
        %7405 = vmatprep.mubr.bf16.mxu0 %v3430
        %7406 = vmatmul.mubr.bf16.gmra.mrb[0].mxu0 %v3429
        %v7407 = vpop.f32.mrb[0].mxu0
        %v7408 = vadd.f32 %v6351, %v7407
        %v7409 = vpop.f32.mrb[0].mxu0
        %v7410 = vpop.f32.mrb[0].mxu0
        %v7411 = vadd.f32 %v6354, %v7410
        %v7412 = vpop.f32.mrb[0].mxu0
        %7413 = vmatprep.mubr.bf16.mxu0 %v3436
        %7414 = vmatmul.mubr.bf16.gmra.mrb[0].mxu0 %v3435
        %v7415 = vpop.f32.mrb[0].mxu0
        %v7416 = vadd.f32 %v6359, %v7415
        %v7417 = vpop.f32.mrb[0].mxu0
        %v7418 = vpop.f32.mrb[0].mxu0
        %v7419 = vadd.f32 %v6362, %v7418
        %v7420 = vpop.f32.mrb[0].mxu0
        %7421 = vmatprep.mubr.bf16.mxu0 %v3442
        %7422 = vmatmul.mubr.bf16.gmra.mrb[0].mxu0 %v3441
        %v7423 = vpop.f32.mrb[0].mxu0
        %v7424 = vadd.f32 %v6367, %v7423
        %v7425 = vpop.f32.mrb[0].mxu0
        %v7426 = vpop.f32.mrb[0].mxu0
        %v7427 = vadd.f32 %v6370, %v7426
        %v7428 = vpop.f32.mrb[0].mxu0
        %7429 = vmatprep.mubr.bf16.mxu0 %v3448
        %7430 = vmatmul.mubr.bf16.gmra.mrb[0].mxu0 %v3447
        %v7431 = vpop.f32.mrb[0].mxu0
        %v7432 = vadd.f32 %v6375, %v7431
        %v7433 = vpop.f32.mrb[0].mxu0
        %v7434 = vpop.f32.mrb[0].mxu0
        %v7435 = vadd.f32 %v6378, %v7434
        %v7436 = vpop.f32.mrb[0].mxu0
        %7437 = vmatprep.mubr.bf16.mxu0 %v3454
        %7438 = vmatmul.mubr.bf16.gmra.mrb[0].mxu0 %v3453
        %v7439 = vpop.f32.mrb[0].mxu0
        %v7440 = vadd.f32 %v6383, %v7439
        %v7441 = vpop.f32.mrb[0].mxu0
        %v7442 = vpop.f32.mrb[0].mxu0
        %v7443 = vadd.f32 %v6386, %v7442
        %v7444 = vpop.f32.mrb[0].mxu0
        %7445 = vmatprep.mubr.bf16.mxu0 %v3460
        %7446 = vmatmul.mubr.bf16.gmra.mrb[0].mxu0 %v3459
        %v7447 = vpop.f32.mrb[0].mxu0
        %v7448 = vadd.f32 %v6391, %v7447
        %v7449 = vpop.f32.mrb[0].mxu0
        %v7450 = vpop.f32.mrb[0].mxu0
        %v7451 = vadd.f32 %v6394, %v7450
        %v7452 = vpop.f32.mrb[0].mxu0
        %7453 = vmatprep.mubr.bf16.mxu0 %v3466
        %7454 = vmatmul.mubr.bf16.gmra.mrb[0].mxu0 %v3465
        %v7455 = vpop.f32.mrb[0].mxu0
        %v7456 = vadd.f32 %v6399, %v7455
        %v7457 = vpop.f32.mrb[0].mxu0
        %v7458 = vpop.f32.mrb[0].mxu0
        %v7459 = vadd.f32 %v6402, %v7458
        %v7460 = vpop.f32.mrb[0].mxu0
        %7461 = vmatprep.mubr.bf16.mxu0 %v3472
        %7462 = vmatmul.mubr.bf16.gmra.mrb[0].mxu0 %v3471
        %v7463 = vpop.f32.mrb[0].mxu0
        %v7464 = vadd.f32 %v6407, %v7463
        %v7465 = vpop.f32.mrb[0].mxu0
        %v7466 = vpop.f32.mrb[0].mxu0
        %v7467 = vadd.f32 %v6410, %v7466
        %v7468 = vpop.f32.mrb[0].mxu0
        %7469 = vmatprep.mubr.bf16.mxu0 %v3478
        %7470 = vmatmul.mubr.bf16.gmra.mrb[0].mxu0 %v3477
        %v7471 = vpop.f32.mrb[0].mxu0
        %v7472 = vadd.f32 %v6415, %v7471
        %v7473 = vpop.f32.mrb[0].mxu0
        %v7474 = vpop.f32.mrb[0].mxu0
        %v7475 = vadd.f32 %v6418, %v7474
        %v7476 = vpop.f32.mrb[0].mxu0
        %7477 = vmatprep.mubr.bf16.mxu0 %v3484
        %7478 = vmatmul.mubr.bf16.gmra.mrb[0].mxu0 %v3483
        %v7479 = vpop.f32.mrb[0].mxu0
        %v7480 = vadd.f32 %v6423, %v7479
        %v7481 = vpop.f32.mrb[0].mxu0
        %v7482 = vpop.f32.mrb[0].mxu0
        %v7483 = vadd.f32 %v6426, %v7482
        %v7484 = vpop.f32.mrb[0].mxu0
        %7485 = vmatprep.mubr.bf16.mxu0 %v3490
        %7486 = vmatmul.mubr.bf16.gmra.mrb[0].mxu0 %v3489
        %v7487 = vpop.f32.mrb[0].mxu0
        %v7488 = vadd.f32 %v6431, %v7487
        %v7489 = vpop.f32.mrb[0].mxu0
        %v7490 = vpop.f32.mrb[0].mxu0
        %v7491 = vadd.f32 %v6434, %v7490
        %v7492 = vpop.f32.mrb[0].mxu0
        %7493 = vmatprep.mubr.bf16.mxu0 %v3496
        %7494 = vmatmul.mubr.bf16.gmra.mrb[0].mxu0 %v3495
        %v7495 = vpop.f32.mrb[0].mxu0
        %v7496 = vadd.f32 %v6439, %v7495
        %v7497 = vpop.f32.mrb[0].mxu0
        %v7498 = vpop.f32.mrb[0].mxu0
        %v7499 = vadd.f32 %v6442, %v7498
        %v7500 = vpop.f32.mrb[0].mxu0
        %7501 = vmatprep.mubr.bf16.mxu0 %v3502
        %7502 = vmatmul.mubr.bf16.gmra.mrb[0].mxu0 %v3501
        %v7503 = vpop.f32.mrb[0].mxu0
        %v7504 = vadd.f32 %v6447, %v7503
        %v7505 = vpop.f32.mrb[0].mxu0
        %v7506 = vpop.f32.mrb[0].mxu0
        %v7507 = vadd.f32 %v6450, %v7506
        %v7508 = vpop.f32.mrb[0].mxu0
        %7509 = vmatprep.mubr.bf16.mxu0 %v3508
        %7510 = vmatmul.mubr.bf16.gmra.mrb[0].mxu0 %v3507
        %v7511 = vpop.f32.mrb[0].mxu0
        %v7512 = vadd.f32 %v6455, %v7511
        %v7513 = vpop.f32.mrb[0].mxu0
        %v7514 = vpop.f32.mrb[0].mxu0
        %v7515 = vadd.f32 %v6458, %v7514
        %v7516 = vpop.f32.mrb[0].mxu0
        %7517 = vmatprep.mubr.bf16.mxu0 %v3514
        %7518 = vmatmul.mubr.bf16.gmra.mrb[0].mxu0 %v3513
        %v7519 = vpop.f32.mrb[0].mxu0
        %v7520 = vadd.f32 %v6463, %v7519
        %v7521 = vpop.f32.mrb[0].mxu0
        %v7522 = vpop.f32.mrb[0].mxu0
        %v7523 = vadd.f32 %v6466, %v7522
        %v7524 = vpop.f32.mrb[0].mxu0
        %7525 = vmatprep.mubr.bf16.mxu0 %v3520
        %7526 = vmatmul.mubr.bf16.gmra.mrb[0].mxu0 %v3519
        %v7527 = vpop.f32.mrb[0].mxu0
        %v7528 = vadd.f32 %v6471, %v7527
        %v7529 = vpop.f32.mrb[0].mxu0
        %v7530 = vpop.f32.mrb[0].mxu0
        %v7531 = vadd.f32 %v6474, %v7530
        %v7532 = vpop.f32.mrb[0].mxu0
        %7533 = vmatprep.mubr.bf16.mxu0 %v3526
        %7534 = vmatmul.mubr.bf16.gmra.mrb[0].mxu0 %v3525
        %v7535 = vpop.f32.mrb[0].mxu0
        %v7536 = vadd.f32 %v6479, %v7535
        %v7537 = vpop.f32.mrb[0].mxu0
        %v7538 = vpop.f32.mrb[0].mxu0
        %v7539 = vadd.f32 %v6482, %v7538
        %v7540 = vpop.f32.mrb[0].mxu0
        %7541 = vmatprep.mubr.bf16.mxu0 %v3532
        %7542 = vmatmul.mubr.bf16.gmra.mrb[0].mxu0 %v3531
        %v7543 = vpop.f32.mrb[0].mxu0
        %v7544 = vadd.f32 %v6487, %v7543
        %v7545 = vpop.f32.mrb[0].mxu0
        %v7546 = vpop.f32.mrb[0].mxu0
        %v7547 = vadd.f32 %v6490, %v7546
        %v7548 = vpop.f32.mrb[0].mxu0
        %7549 = vmatprep.mubr.bf16.mxu0 %v3538
        %7550 = vmatmul.mubr.bf16.gmra.mrb[0].mxu0 %v3537
        %v7551 = vpop.f32.mrb[0].mxu0
        %v7552 = vadd.f32 %v6495, %v7551
        %v7553 = vpop.f32.mrb[0].mxu0
        %v7554 = vpop.f32.mrb[0].mxu0
        %v7555 = vadd.f32 %v6498, %v7554
        %v7556 = vpop.f32.mrb[0].mxu0
        %7557 = vmatprep.mubr.bf16.mxu0 %v3544
        %7558 = vmatmul.mubr.bf16.gmra.mrb[0].mxu0 %v3543
        %v7559 = vpop.f32.mrb[0].mxu0
        %v7560 = vadd.f32 %v6503, %v7559
        %v7561 = vpop.f32.mrb[0].mxu0
        %v7562 = vpop.f32.mrb[0].mxu0
        %v7563 = vadd.f32 %v6506, %v7562
        %v7564 = vpop.f32.mrb[0].mxu0
        %7565 = vmatprep.mubr.bf16.mxu0 %v3550
        %7566 = vmatmul.mubr.bf16.gmra.mrb[0].mxu0 %v3549
        %v7567 = vpop.f32.mrb[0].mxu0
        %v7568 = vadd.f32 %v6511, %v7567
        %v7569 = vpop.f32.mrb[0].mxu0
        %v7570 = vpop.f32.mrb[0].mxu0
        %v7571 = vadd.f32 %v6514, %v7570
        %v7572 = vpop.f32.mrb[0].mxu0
        %7573 = vmatprep.mubr.bf16.mxu0 %v3556
        %7574 = vmatmul.mubr.bf16.gmra.mrb[0].mxu0 %v3555
        %v7575 = vpop.f32.mrb[0].mxu0
        %v7576 = vadd.f32 %v6519, %v7575
        %v7577 = vpop.f32.mrb[0].mxu0
        %v7578 = vpop.f32.mrb[0].mxu0
        %v7579 = vadd.f32 %v6522, %v7578
        %v7580 = vpop.f32.mrb[0].mxu0
        %7581 = vmatprep.mubr.bf16.mxu0 %v3562
        %7582 = vmatmul.mubr.bf16.gmra.mrb[0].mxu0 %v3561
        %v7583 = vpop.f32.mrb[0].mxu0
        %v7584 = vadd.f32 %v6527, %v7583
        %v7585 = vpop.f32.mrb[0].mxu0
        %v7586 = vpop.f32.mrb[0].mxu0
        %v7587 = vadd.f32 %v6530, %v7586
        %v7588 = vpop.f32.mrb[0].mxu0
        %7589 = vmatprep.mubr.bf16.mxu0 %v3568
        %7590 = vmatmul.mubr.bf16.gmra.mrb[0].mxu0 %v3567
        %v7591 = vpop.f32.mrb[0].mxu0
        %v7592 = vadd.f32 %v6535, %v7591
        %v7593 = vpop.f32.mrb[0].mxu0
        %v7594 = vpop.f32.mrb[0].mxu0
        %v7595 = vadd.f32 %v6538, %v7594
        %v7596 = vpop.f32.mrb[0].mxu0
        %7597 = vmatprep.mubr.bf16.mxu0 %v3574
        %7598 = vmatmul.mubr.bf16.gmra.mrb[0].mxu0 %v3573
        %v7599 = vpop.f32.mrb[0].mxu0
        %v7600 = vadd.f32 %v6543, %v7599
        %v7601 = vpop.f32.mrb[0].mxu0
        %v7602 = vpop.f32.mrb[0].mxu0
        %v7603 = vadd.f32 %v6546, %v7602
        %v7604 = vpop.f32.mrb[0].mxu0
        %7605 = vmatprep.mubr.bf16.mxu0 %v3580
        %7606 = vmatmul.mubr.bf16.gmra.mrb[0].mxu0 %v3579
        %v7607 = vpop.f32.mrb[0].mxu0
        %v7608 = vadd.f32 %v6551, %v7607
        %v7609 = vpop.f32.mrb[0].mxu0
        %v7610 = vpop.f32.mrb[0].mxu0
        %v7611 = vadd.f32 %v6554, %v7610
        %v7612 = vpop.f32.mrb[0].mxu0
        %7613 = vmatprep.mubr.bf16.mxu0 %v3586
        %7614 = vmatmul.mubr.bf16.gmra.mrb[0].mxu0 %v3585
        %v7615 = vpop.f32.mrb[0].mxu0
        %v7616 = vadd.f32 %v6559, %v7615
        %v7617 = vpop.f32.mrb[0].mxu0
        %v7618 = vpop.f32.mrb[0].mxu0
        %v7619 = vadd.f32 %v6562, %v7618
        %v7620 = vpop.f32.mrb[0].mxu0
        %7621 = vmatprep.mubr.bf16.mxu0 %v3592
        %7622 = vmatmul.mubr.bf16.gmra.mrb[0].mxu0 %v3591
        %v7623 = vpop.f32.mrb[0].mxu0
        %v7624 = vadd.f32 %v6567, %v7623
        %v7625 = vpop.f32.mrb[0].mxu0
        %v7626 = vpop.f32.mrb[0].mxu0
        %v7627 = vadd.f32 %v6570, %v7626
        %v7628 = vpop.f32.mrb[0].mxu0
        %7629 = vmatprep.mubr.bf16.mxu0 %v3598
        %7630 = vmatmul.mubr.bf16.gmra.mrb[0].mxu0 %v3597
        %v7631 = vpop.f32.mrb[0].mxu0
        %v7632 = vadd.f32 %v6575, %v7631
        %v7633 = vpop.f32.mrb[0].mxu0
        %v7634 = vpop.f32.mrb[0].mxu0
        %v7635 = vadd.f32 %v6578, %v7634
        %v7636 = vpop.f32.mrb[0].mxu0
        %7637 = vmatprep.mubr.bf16.mxu0 %v3604
        %7638 = vmatmul.mubr.bf16.gmra.mrb[0].mxu0 %v3603
        %v7639 = vpop.f32.mrb[0].mxu0
        %v7640 = vadd.f32 %v6583, %v7639
        %v7641 = vpop.f32.mrb[0].mxu0
        %v7642 = vpop.f32.mrb[0].mxu0
        %v7643 = vadd.f32 %v6586, %v7642
        %v7644 = vpop.f32.mrb[0].mxu0
        %7645 = vmatprep.mubr.bf16.mxu0 %v3610
        %7646 = vmatmul.mubr.bf16.gmra.mrb[0].mxu0 %v3609
        %v7647 = vpop.f32.mrb[0].mxu0
        %v7648 = vadd.f32 %v6591, %v7647
        %v7649 = vpop.f32.mrb[0].mxu0
        %v7650 = vpop.f32.mrb[0].mxu0
        %v7651 = vadd.f32 %v6594, %v7650
        %v7652 = vpop.f32.mrb[0].mxu0
        %7653 = vmatprep.mubr.bf16.mxu0 %v3616
        %7654 = vmatmul.mubr.bf16.gmra.mrb[0].mxu0 %v3615
        %v7655 = vpop.f32.mrb[0].mxu0
        %v7656 = vadd.f32 %v6599, %v7655
        %v7657 = vpop.f32.mrb[0].mxu0
        %v7658 = vpop.f32.mrb[0].mxu0
        %v7659 = vadd.f32 %v6602, %v7658
        %v7660 = vpop.f32.mrb[0].mxu0
        %7661 = vmatprep.mubr.bf16.mxu0 %v3622
        %7662 = vmatmul.mubr.bf16.gmra.mrb[0].mxu0 %v3621
        %v7663 = vpop.f32.mrb[0].mxu0
        %v7664 = vadd.f32 %v6607, %v7663
        %v7665 = vpop.f32.mrb[0].mxu0
        %v7666 = vpop.f32.mrb[0].mxu0
        %v7667 = vadd.f32 %v6610, %v7666
        %v7668 = vpop.f32.mrb[0].mxu0
        %7669 = vmatprep.mubr.bf16.mxu0 %v3628
        %7670 = vmatmul.mubr.bf16.gmra.mrb[0].mxu0 %v3627
        %v7671 = vpop.f32.mrb[0].mxu0
        %v7672 = vadd.f32 %v6615, %v7671
        %v7673 = vpop.f32.mrb[0].mxu0
        %v7674 = vpop.f32.mrb[0].mxu0
        %v7675 = vadd.f32 %v6618, %v7674
        %v7676 = vpop.f32.mrb[0].mxu0
        %7677 = vmatprep.mubr.bf16.mxu0 %v3634
        %7678 = vmatmul.mubr.bf16.gmra.mrb[0].mxu0 %v3633
        %v7679 = vpop.f32.mrb[0].mxu0
        %v7680 = vadd.f32 %v6623, %v7679
        %v7681 = vpop.f32.mrb[0].mxu0
        %v7682 = vpop.f32.mrb[0].mxu0
        %v7683 = vadd.f32 %v6626, %v7682
        %v7684 = vpop.f32.mrb[0].mxu0
        %7685 = vmatprep.mubr.bf16.mxu0 %v3640
        %7686 = vmatmul.mubr.bf16.gmra.mrb[0].mxu0 %v3639
        %v7687 = vpop.f32.mrb[0].mxu0
        %v7688 = vadd.f32 %v6631, %v7687
        %v7689 = vpop.f32.mrb[0].mxu0
        %v7690 = vpop.f32.mrb[0].mxu0
        %v7691 = vadd.f32 %v6634, %v7690
        %v7692 = vpop.f32.mrb[0].mxu0
        %7693 = vmatprep.mubr.bf16.mxu0 %v3646
        %7694 = vmatmul.mubr.bf16.gmra.mrb[0].mxu0 %v3645
        %v7695 = vpop.f32.mrb[0].mxu0
        %v7696 = vadd.f32 %v6639, %v7695
        %v7697 = vpop.f32.mrb[0].mxu0
        %v7698 = vpop.f32.mrb[0].mxu0
        %v7699 = vadd.f32 %v6642, %v7698
        %v7700 = vpop.f32.mrb[0].mxu0
        %7701 = vmatprep.mubr.bf16.mxu0 %v3652
        %7702 = vmatmul.mubr.bf16.gmra.mrb[0].mxu0 %v3651
        %v7703 = vpop.f32.mrb[0].mxu0
        %v7704 = vadd.f32 %v6647, %v7703
        %v7705 = vpop.f32.mrb[0].mxu0
        %v7706 = vpop.f32.mrb[0].mxu0
        %v7707 = vadd.f32 %v6650, %v7706
        %v7708 = vpop.f32.mrb[0].mxu0
        %7709 = vmatprep.mubr.bf16.mxu0 %v3658
        %7710 = vmatmul.mubr.bf16.gmra.mrb[0].mxu0 %v3657
        %v7711 = vpop.f32.mrb[0].mxu0
        %v7712 = vadd.f32 %v6655, %v7711
        %v7713 = vpop.f32.mrb[0].mxu0
        %v7714 = vpop.f32.mrb[0].mxu0
        %v7715 = vadd.f32 %v6658, %v7714
        %v7716 = vpop.f32.mrb[0].mxu0
        %7717 = vmatprep.mubr.bf16.mxu0 %v3664
        %7718 = vmatmul.mubr.bf16.gmra.mrb[0].mxu0 %v3663
        %v7719 = vpop.f32.mrb[0].mxu0
        %v7720 = vadd.f32 %v6663, %v7719
        %v7721 = vpop.f32.mrb[0].mxu0
        %v7722 = vpop.f32.mrb[0].mxu0
        %v7723 = vadd.f32 %v6666, %v7722
        %v7724 = vpop.f32.mrb[0].mxu0
        %7725 = vmatprep.mubr.bf16.mxu0 %v3670
        %7726 = vmatmul.mubr.bf16.gmra.mrb[0].mxu0 %v3669
        %v7727 = vpop.f32.mrb[0].mxu0
        %v7728 = vadd.f32 %v6671, %v7727
        %v7729 = vpop.f32.mrb[0].mxu0
        %v7730 = vpop.f32.mrb[0].mxu0
        %v7731 = vadd.f32 %v6674, %v7730
        %v7732 = vpop.f32.mrb[0].mxu0
        %7733 = vmatprep.mubr.bf16.mxu0 %v3676
        %7734 = vmatmul.mubr.bf16.gmra.mrb[0].mxu0 %v3675
        %v7735 = vpop.f32.mrb[0].mxu0
        %v7736 = vadd.f32 %v6679, %v7735
        %v7737 = vpop.f32.mrb[0].mxu0
        %v7738 = vpop.f32.mrb[0].mxu0
        %v7739 = vadd.f32 %v6682, %v7738
        %v7740 = vpop.f32.mrb[0].mxu0
        %7741 = vmatprep.mubr.bf16.mxu0 %v3682
        %7742 = vmatmul.mubr.bf16.gmra.mrb[0].mxu0 %v3681
        %v7743 = vpop.f32.mrb[0].mxu0
        %v7744 = vadd.f32 %v6687, %v7743
        %v7745 = vpop.f32.mrb[0].mxu0
        %v7746 = vpop.f32.mrb[0].mxu0
        %v7747 = vadd.f32 %v6690, %v7746
        %v7748 = vpop.f32.mrb[0].mxu0
        %7749 = vmatprep.mubr.bf16.mxu0 %v3688
        %7750 = vmatmul.mubr.bf16.gmra.mrb[0].mxu0 %v3687
        %v7751 = vpop.f32.mrb[0].mxu0
        %v7752 = vadd.f32 %v6695, %v7751
        %v7753 = vpop.f32.mrb[0].mxu0
        %v7754 = vpop.f32.mrb[0].mxu0
        %v7755 = vadd.f32 %v6698, %v7754
        %v7756 = vpop.f32.mrb[0].mxu0
        %7757 = vmatprep.mubr.bf16.mxu0 %v3694
        %7758 = vmatmul.mubr.bf16.gmra.mrb[0].mxu0 %v3693
        %v7759 = vpop.f32.mrb[0].mxu0
        %v7760 = vadd.f32 %v6703, %v7759
        %v7761 = vpop.f32.mrb[0].mxu0
        %v7762 = vpop.f32.mrb[0].mxu0
        %v7763 = vadd.f32 %v6706, %v7762
        %v7764 = vpop.f32.mrb[0].mxu0
        %7765 = vmatprep.mubr.bf16.mxu0 %v3700
        %7766 = vmatmul.mubr.bf16.gmra.mrb[0].mxu0 %v3699
        %v7767 = vpop.f32.mrb[0].mxu0
        %v7768 = vadd.f32 %v6711, %v7767
        %v7769 = vpop.f32.mrb[0].mxu0
        %v7770 = vpop.f32.mrb[0].mxu0
        %v7771 = vadd.f32 %v6714, %v7770
        %v7772 = vpop.f32.mrb[0].mxu0
        %7773 = vmatprep.mubr.bf16.mxu0 %v3706
        %7774 = vmatmul.mubr.bf16.gmra.mrb[0].mxu0 %v3705
        %v7775 = vpop.f32.mrb[0].mxu0
        %v7776 = vadd.f32 %v6719, %v7775
        %v7777 = vpop.f32.mrb[0].mxu0
        %v7778 = vpop.f32.mrb[0].mxu0
        %v7779 = vadd.f32 %v6722, %v7778
        %v7780 = vpop.f32.mrb[0].mxu0
        %7781 = vmatprep.mubr.bf16.mxu0 %v3712
        %7782 = vmatmul.mubr.bf16.gmra.mrb[0].mxu0 %v3711
        %v7783 = vpop.f32.mrb[0].mxu0
        %v7784 = vadd.f32 %v6727, %v7783
        %v7785 = vpop.f32.mrb[0].mxu0
        %v7786 = vpop.f32.mrb[0].mxu0
        %v7787 = vadd.f32 %v6730, %v7786
        %v7788 = vpop.f32.mrb[0].mxu0
        %7789 = vmatprep.mubr.bf16.mxu0 %v3718
        %7790 = vmatmul.mubr.bf16.gmra.mrb[0].mxu0 %v3717
        %v7791 = vpop.f32.mrb[0].mxu0
        %v7792 = vadd.f32 %v6735, %v7791
        %v7793 = vpop.f32.mrb[0].mxu0
        %v7794 = vpop.f32.mrb[0].mxu0
        %v7795 = vadd.f32 %v6738, %v7794
        %v7796 = vpop.f32.mrb[0].mxu0
        %7797 = vmatprep.mubr.bf16.mxu0 %v3724
        %7798 = vmatmul.mubr.bf16.gmra.mrb[0].mxu0 %v3723
        %v7799 = vpop.f32.mrb[0].mxu0
        %v7800 = vadd.f32 %v6743, %v7799
        %v7801 = vpop.f32.mrb[0].mxu0
        %v7802 = vpop.f32.mrb[0].mxu0
        %v7803 = vadd.f32 %v6746, %v7802
        %v7804 = vpop.f32.mrb[0].mxu0
        %7805 = vmatprep.mubr.bf16.mxu0 %v3730
        %7806 = vmatmul.mubr.bf16.gmra.mrb[0].mxu0 %v3729
        %v7807 = vpop.f32.mrb[0].mxu0
        %v7808 = vadd.f32 %v6751, %v7807
        %v7809 = vpop.f32.mrb[0].mxu0
        %v7810 = vpop.f32.mrb[0].mxu0
        %v7811 = vadd.f32 %v6754, %v7810
        %v7812 = vpop.f32.mrb[0].mxu0
        %7813 = vmatprep.mubr.bf16.mxu0 %v3736
        %7814 = vmatmul.mubr.bf16.gmra.mrb[0].mxu0 %v3735
        %v7815 = vpop.f32.mrb[0].mxu0
        %v7816 = vadd.f32 %v6759, %v7815
        %v7817 = vpop.f32.mrb[0].mxu0
        %v7818 = vpop.f32.mrb[0].mxu0
        %v7819 = vadd.f32 %v6762, %v7818
        %v7820 = vpop.f32.mrb[0].mxu0
        %7821 = vmatprep.mubr.bf16.mxu0 %v3742
        %7822 = vmatmul.mubr.bf16.gmra.mrb[0].mxu0 %v3741
        %v7823 = vpop.f32.mrb[0].mxu0
        %v7824 = vadd.f32 %v6767, %v7823
        %v7825 = vpop.f32.mrb[0].mxu0
        %v7826 = vpop.f32.mrb[0].mxu0
        %v7827 = vadd.f32 %v6770, %v7826
        %v7828 = vpop.f32.mrb[0].mxu0
        %7829 = vmatprep.mubr.bf16.mxu0 %v3748
        %7830 = vmatmul.mubr.bf16.gmra.mrb[0].mxu0 %v3747
        %v7831 = vpop.f32.mrb[0].mxu0
        %v7832 = vadd.f32 %v6775, %v7831
        %v7833 = vpop.f32.mrb[0].mxu0
        %v7834 = vpop.f32.mrb[0].mxu0
        %v7835 = vadd.f32 %v6778, %v7834
        %v7836 = vpop.f32.mrb[0].mxu0
        %7837 = vmatprep.mubr.bf16.mxu0 %v3754
        %7838 = vmatmul.mubr.bf16.gmra.mrb[0].mxu0 %v3753
        %v7839 = vpop.f32.mrb[0].mxu0
        %v7840 = vadd.f32 %v6783, %v7839
        %v7841 = vpop.f32.mrb[0].mxu0
        %v7842 = vpop.f32.mrb[0].mxu0
        %v7843 = vadd.f32 %v6786, %v7842
        %v7844 = vpop.f32.mrb[0].mxu0
        %7845 = vmatprep.mubr.bf16.mxu0 %v3760
        %7846 = vmatmul.mubr.bf16.gmra.mrb[0].mxu0 %v3759
        %v7847 = vpop.f32.mrb[0].mxu0
        %v7848 = vadd.f32 %v6791, %v7847
        %v7849 = vpop.f32.mrb[0].mxu0
        %v7850 = vpop.f32.mrb[0].mxu0
        %v7851 = vadd.f32 %v6794, %v7850
        %v7852 = vpop.f32.mrb[0].mxu0
        %7853 = vmatprep.mubr.bf16.mxu0 %v3766
        %7854 = vmatmul.mubr.bf16.gmra.mrb[0].mxu0 %v3765
        %v7855 = vpop.f32.mrb[0].mxu0
        %v7856 = vadd.f32 %v6799, %v7855
        %v7857 = vpop.f32.mrb[0].mxu0
        %v7858 = vpop.f32.mrb[0].mxu0
        %v7859 = vadd.f32 %v6802, %v7858
        %v7860 = vpop.f32.mrb[0].mxu0
        %7861 = vmatprep.mubr.bf16.mxu0 %v3772
        %7862 = vmatmul.mubr.bf16.gmra.mrb[0].mxu0 %v3771
        %v7863 = vpop.f32.mrb[0].mxu0
        %v7864 = vadd.f32 %v6807, %v7863
        %v7865 = vpop.f32.mrb[0].mxu0
        %v7866 = vpop.f32.mrb[0].mxu0
        %v7867 = vadd.f32 %v6810, %v7866
        %v7868 = vpop.f32.mrb[0].mxu0
        %7869 = vmatprep.mubr.bf16.mxu0 %v3778
        %7870 = vmatmul.mubr.bf16.gmra.mrb[0].mxu0 %v3777
        %v7871 = vpop.f32.mrb[0].mxu0
        %v7872 = vadd.f32 %v6815, %v7871
        %v7873 = vpop.f32.mrb[0].mxu0
        %v7874 = vpop.f32.mrb[0].mxu0
        %v7875 = vadd.f32 %v6818, %v7874
        %v7876 = vpop.f32.mrb[0].mxu0
        %7877 = vmatprep.mubr.bf16.mxu0 %v3784
        %7878 = vmatmul.mubr.bf16.gmra.mrb[0].mxu0 %v3783
        %v7879 = vpop.f32.mrb[0].mxu0
        %v7880 = vadd.f32 %v6823, %v7879
        %v7881 = vpop.f32.mrb[0].mxu0
        %v7882 = vpop.f32.mrb[0].mxu0
        %v7883 = vadd.f32 %v6826, %v7882
        %v7884 = vpop.f32.mrb[0].mxu0
        %7885 = vmatprep.mubr.bf16.mxu0 %v3790
        %7886 = vmatmul.mubr.bf16.gmra.mrb[0].mxu0 %v3789
        %v7887 = vpop.f32.mrb[0].mxu0
        %v7888 = vadd.f32 %v6831, %v7887
        %v7889 = vpop.f32.mrb[0].mxu0
        %v7890 = vpop.f32.mrb[0].mxu0
        %v7891 = vadd.f32 %v6834, %v7890
        %v7892 = vpop.f32.mrb[0].mxu0
        %7893 = vmatprep.mubr.bf16.mxu0 %v3796
        %7894 = vmatmul.mubr.bf16.gmra.mrb[0].mxu0 %v3795
        %v7895 = vpop.f32.mrb[0].mxu0
        %v7896 = vadd.f32 %v6839, %v7895
        %v7897 = vpop.f32.mrb[0].mxu0
        %v7898 = vpop.f32.mrb[0].mxu0
        %v7899 = vadd.f32 %v6842, %v7898
        %v7900 = vpop.f32.mrb[0].mxu0
        %7901 = vmatprep.mubr.bf16.mxu0 %v3802
        %7902 = vmatmul.mubr.bf16.gmra.mrb[0].mxu0 %v3801
        %v7903 = vpop.f32.mrb[0].mxu0
        %v7904 = vadd.f32 %v6847, %v7903
        %v7905 = vpop.f32.mrb[0].mxu0
        %v7906 = vpop.f32.mrb[0].mxu0
        %v7907 = vadd.f32 %v6850, %v7906
        %v7908 = vpop.f32.mrb[0].mxu0
        %7909 = vmatprep.mubr.bf16.mxu0 %v3808
        %7910 = vmatmul.mubr.bf16.gmra.mrb[0].mxu0 %v3807
        %v7911 = vpop.f32.mrb[0].mxu0
        %v7912 = vadd.f32 %v6855, %v7911
        %v7913 = vpop.f32.mrb[0].mxu0
        %v7914 = vpop.f32.mrb[0].mxu0
        %v7915 = vadd.f32 %v6858, %v7914
        %v7916 = vpop.f32.mrb[0].mxu0
        %7917 = vmatprep.mubr.bf16.mxu0 %v3814
        %7918 = vmatmul.mubr.bf16.gmra.mrb[0].mxu0 %v3813
        %v7919 = vpop.f32.mrb[0].mxu0
        %v7920 = vadd.f32 %v6863, %v7919
        %v7921 = vpop.f32.mrb[0].mxu0
        %v7922 = vpop.f32.mrb[0].mxu0
        %v7923 = vadd.f32 %v6866, %v7922
        %v7924 = vpop.f32.mrb[0].mxu0
        %7925 = vmatprep.mubr.bf16.mxu0 %v3820
        %7926 = vmatmul.mubr.bf16.gmra.mrb[0].mxu0 %v3819
        %v7927 = vpop.f32.mrb[0].mxu0
        %v7928 = vadd.f32 %v6871, %v7927
        %v7929 = vpop.f32.mrb[0].mxu0
        %v7930 = vpop.f32.mrb[0].mxu0
        %v7931 = vadd.f32 %v6874, %v7930
        %v7932 = vpop.f32.mrb[0].mxu0
        %7933 = vmatprep.mubr.bf16.mxu0 %v3826
        %7934 = vmatmul.mubr.bf16.gmra.mrb[0].mxu0 %v3825
        %v7935 = vpop.f32.mrb[0].mxu0
        %v7936 = vadd.f32 %v6879, %v7935
        %v7937 = vpop.f32.mrb[0].mxu0
        %v7938 = vpop.f32.mrb[0].mxu0
        %v7939 = vadd.f32 %v6882, %v7938
        %v7940 = vpop.f32.mrb[0].mxu0
        %7941 = vmatprep.mubr.bf16.mxu0 %v3832
        %7942 = vmatmul.mubr.bf16.gmra.mrb[0].mxu0 %v3831
        %v7943 = vpop.f32.mrb[0].mxu0
        %v7944 = vadd.f32 %v6887, %v7943
        %v7945 = vpop.f32.mrb[0].mxu0
        %v7946 = vpop.f32.mrb[0].mxu0
        %v7947 = vadd.f32 %v6890, %v7946
        %v7948 = vpop.f32.mrb[0].mxu0
        %7949 = vmatprep.mubr.bf16.mxu0 %v3838
        %7950 = vmatmul.mubr.bf16.gmra.mrb[0].mxu0 %v3837
        %v7951 = vpop.f32.mrb[0].mxu0
        %v7952 = vadd.f32 %v6895, %v7951
        %v7953 = vpop.f32.mrb[0].mxu0
        %v7954 = vpop.f32.mrb[0].mxu0
        %v7955 = vadd.f32 %v6898, %v7954
        %v7956 = vpop.f32.mrb[0].mxu0
        %7957 = vmatprep.mubr.bf16.mxu0 %v3844
        %7958 = vmatmul.mubr.bf16.gmra.mrb[0].mxu0 %v3843
        %v7959 = vpop.f32.mrb[0].mxu0
        %v7960 = vadd.f32 %v6903, %v7959
        %v7961 = vpop.f32.mrb[0].mxu0
        %v7962 = vpop.f32.mrb[0].mxu0
        %v7963 = vadd.f32 %v6906, %v7962
        %v7964 = vpop.f32.mrb[0].mxu0
        %7965 = vmatprep.mubr.bf16.mxu0 %v3850
        %7966 = vmatmul.mubr.bf16.gmra.mrb[0].mxu0 %v3849
        %v7967 = vpop.f32.mrb[0].mxu0
        %v7968 = vadd.f32 %v6911, %v7967
        %v7969 = vpop.f32.mrb[0].mxu0
        %v7970 = vpop.f32.mrb[0].mxu0
        %v7971 = vadd.f32 %v6914, %v7970
        %v7972 = vpop.f32.mrb[0].mxu0
        %7973 = vmatprep.mubr.bf16.mxu0 %v3856
        %7974 = vmatmul.mubr.bf16.gmra.mrb[0].mxu0 %v3855
        %v7975 = vpop.f32.mrb[0].mxu0
        %v7976 = vadd.f32 %v6919, %v7975
        %v7977 = vpop.f32.mrb[0].mxu0
        %v7978 = vpop.f32.mrb[0].mxu0
        %v7979 = vadd.f32 %v6922, %v7978
        %v7980 = vpop.f32.mrb[0].mxu0
        %7981 = vmatprep.mubr.bf16.mxu0 %v3862
        %7982 = vmatmul.mubr.bf16.gmra.mrb[0].mxu0 %v3861
        %v7983 = vpop.f32.mrb[0].mxu0
        %v7984 = vadd.f32 %v6927, %v7983
        %v7985 = vpop.f32.mrb[0].mxu0
        %v7986 = vpop.f32.mrb[0].mxu0
        %v7987 = vadd.f32 %v6930, %v7986
        %v7988 = vpop.f32.mrb[0].mxu0
        %7989 = vmatprep.mubr.bf16.mxu0 %v3868
        %7990 = vmatmul.mubr.bf16.gmra.mrb[0].mxu0 %v3867
        %v7991 = vpop.f32.mrb[0].mxu0
        %v7992 = vadd.f32 %v6935, %v7991
        %v7993 = vpop.f32.mrb[0].mxu0
        %v7994 = vpop.f32.mrb[0].mxu0
        %v7995 = vadd.f32 %v6938, %v7994
        %v7996 = vpop.f32.mrb[0].mxu0
        %7997 = vmatprep.mubr.bf16.mxu0 %v3874
        %7998 = vmatmul.mubr.bf16.gmra.mrb[0].mxu0 %v3873
        %v7999 = vpop.f32.mrb[0].mxu0
        %v8000 = vadd.f32 %v6943, %v7999
        %v8001 = vpop.f32.mrb[0].mxu0
        %v8002 = vpop.f32.mrb[0].mxu0
        %v8003 = vadd.f32 %v6946, %v8002
        %v8004 = vpop.f32.mrb[0].mxu0
        %8005 = vmatprep.mubr.bf16.mxu0 %v3880
        %8006 = vmatmul.mubr.bf16.gmra.mrb[0].mxu0 %v3879
        %v8007 = vpop.f32.mrb[0].mxu0
        %v8008 = vadd.f32 %v6951, %v8007
        %v8009 = vpop.f32.mrb[0].mxu0
        %v8010 = vpop.f32.mrb[0].mxu0
        %v8011 = vadd.f32 %v6954, %v8010
        %v8012 = vpop.f32.mrb[0].mxu0
        %8013 = vmatprep.mubr.bf16.mxu0 %v3886
        %8014 = vmatmul.mubr.bf16.gmra.mrb[0].mxu0 %v3885
        %v8015 = vpop.f32.mrb[0].mxu0
        %v8016 = vadd.f32 %v6959, %v8015
        %v8017 = vpop.f32.mrb[0].mxu0
        %v8018 = vpop.f32.mrb[0].mxu0
        %v8019 = vadd.f32 %v6962, %v8018
        %v8020 = vpop.f32.mrb[0].mxu0
        %8021 = vmatprep.mubr.bf16.mxu0 %v3892
        %8022 = vmatmul.mubr.bf16.gmra.mrb[0].mxu0 %v3891
        %v8023 = vpop.f32.mrb[0].mxu0
        %v8024 = vadd.f32 %v6967, %v8023
        %v8025 = vpop.f32.mrb[0].mxu0
        %v8026 = vpop.f32.mrb[0].mxu0
        %v8027 = vadd.f32 %v6970, %v8026
        %v8028 = vpop.f32.mrb[0].mxu0
        %8029 = vmatprep.mubr.bf16.mxu0 %v3898
        %8030 = vmatmul.mubr.bf16.gmra.mrb[0].mxu0 %v3897
        %v8031 = vpop.f32.mrb[0].mxu0
        %v8032 = vadd.f32 %v6975, %v8031
        %v8033 = vpop.f32.mrb[0].mxu0
        %v8034 = vpop.f32.mrb[0].mxu0
        %v8035 = vadd.f32 %v6978, %v8034
        %v8036 = vpop.f32.mrb[0].mxu0
        %8037 = vmatprep.mubr.bf16.mxu0 %v3904
        %8038 = vmatmul.mubr.bf16.gmra.mrb[0].mxu0 %v3903
        %v8039 = vpop.f32.mrb[0].mxu0
        %v8040 = vadd.f32 %v6983, %v8039
        %v8041 = vpop.f32.mrb[0].mxu0
        %v8042 = vpop.f32.mrb[0].mxu0
        %v8043 = vadd.f32 %v6986, %v8042
        %v8044 = vpop.f32.mrb[0].mxu0
        %8045 = vmatprep.mubr.bf16.mxu0 %v3910
        %8046 = vmatmul.mubr.bf16.gmra.mrb[0].mxu0 %v3909
        %v8047 = vpop.f32.mrb[0].mxu0
        %v8048 = vadd.f32 %v6991, %v8047
        %v8049 = vpop.f32.mrb[0].mxu0
        %v8050 = vpop.f32.mrb[0].mxu0
        %v8051 = vadd.f32 %v6994, %v8050
        %v8052 = vpop.f32.mrb[0].mxu0
        %8053 = vmatprep.mubr.bf16.mxu0 %v3916
        %8054 = vmatmul.mubr.bf16.gmra.mrb[0].mxu0 %v3915
        %v8055 = vpop.f32.mrb[0].mxu0
        %v8056 = vadd.f32 %v6999, %v8055
        %v8057 = vpop.f32.mrb[0].mxu0
        %v8058 = vpop.f32.mrb[0].mxu0
        %v8059 = vadd.f32 %v7002, %v8058
        %v8060 = vpop.f32.mrb[0].mxu0
        %8061 = vmatprep.mubr.bf16.mxu0 %v3922
        %8062 = vmatmul.mubr.bf16.gmra.mrb[0].mxu0 %v3921
        %v8063 = vpop.f32.mrb[0].mxu0
        %v8064 = vadd.f32 %v7007, %v8063
        %v8065 = vpop.f32.mrb[0].mxu0
        %v8066 = vpop.f32.mrb[0].mxu0
        %v8067 = vadd.f32 %v7010, %v8066
        %v8068 = vpop.f32.mrb[0].mxu0
        %8069 = vmatprep.mubr.bf16.mxu0 %v3928
        %8070 = vmatmul.mubr.bf16.gmra.mrb[0].mxu0 %v3927
        %v8071 = vpop.f32.mrb[0].mxu0
        %v8072 = vadd.f32 %v7015, %v8071
        %v8073 = vpop.f32.mrb[0].mxu0
        %v8074 = vpop.f32.mrb[0].mxu0
        %v8075 = vadd.f32 %v7018, %v8074
        %v8076 = vpop.f32.mrb[0].mxu0
        %8077 = vmatprep.mubr.bf16.mxu0 %v3934
        %8078 = vmatmul.mubr.bf16.gmra.mrb[0].mxu0 %v3933
        %v8079 = vpop.f32.mrb[0].mxu0
        %v8080 = vadd.f32 %v7023, %v8079
        %v8081 = vpop.f32.mrb[0].mxu0
        %v8082 = vpop.f32.mrb[0].mxu0
        %v8083 = vadd.f32 %v7026, %v8082
        %v8084 = vpop.f32.mrb[0].mxu0
        %8085 = vmatprep.mubr.bf16.mxu0 %v3940
        %8086 = vmatmul.mubr.bf16.gmra.mrb[0].mxu0 %v3939
        %v8087 = vpop.f32.mrb[0].mxu0
        %v8088 = vadd.f32 %v7031, %v8087
        %v8089 = vpop.f32.mrb[0].mxu0
        %v8090 = vpop.f32.mrb[0].mxu0
        %v8091 = vadd.f32 %v7034, %v8090
        %v8092 = vpop.f32.mrb[0].mxu0
        %8093 = vmatprep.mubr.bf16.mxu0 %v3946
        %8094 = vmatmul.mubr.bf16.gmra.mrb[0].mxu0 %v3945
        %v8095 = vpop.f32.mrb[0].mxu0
        %v8096 = vadd.f32 %v7039, %v8095
        %v8097 = vpop.f32.mrb[0].mxu0
        %v8098 = vpop.f32.mrb[0].mxu0
        %v8099 = vadd.f32 %v7042, %v8098
        %v8100 = vpop.f32.mrb[0].mxu0
        %8101 = vmatprep.mubr.bf16.mxu0 %v3952
        %8102 = vmatmul.mubr.bf16.gmra.mrb[0].mxu0 %v3951
        %v8103 = vpop.f32.mrb[0].mxu0
        %v8104 = vadd.f32 %v7047, %v8103
        %v8105 = vpop.f32.mrb[0].mxu0
        %v8106 = vpop.f32.mrb[0].mxu0
        %v8107 = vadd.f32 %v7050, %v8106
        %v8108 = vpop.f32.mrb[0].mxu0
        %8109 = vmatprep.mubr.bf16.mxu0 %v3958
        %8110 = vmatmul.mubr.bf16.gmra.mrb[0].mxu0 %v3957
        %v8111 = vpop.f32.mrb[0].mxu0
        %v8112 = vadd.f32 %v7055, %v8111
        %v8113 = vpop.f32.mrb[0].mxu0
        %v8114 = vpop.f32.mrb[0].mxu0
        %v8115 = vadd.f32 %v7058, %v8114
        %v8116 = vpop.f32.mrb[0].mxu0
        %8117 = vmatprep.mubr.bf16.mxu0 %v3964
        %8118 = vmatmul.mubr.bf16.gmra.mrb[0].mxu0 %v3963
        %v8119 = vpop.f32.mrb[0].mxu0
        %v8120 = vadd.f32 %v7063, %v8119
        %v8121 = vpop.f32.mrb[0].mxu0
        %v8122 = vpop.f32.mrb[0].mxu0
        %v8123 = vadd.f32 %v7066, %v8122
        %v8124 = vpop.f32.mrb[0].mxu0
        %8125 = vmatprep.mubr.bf16.mxu0 %v3970
        %8126 = vmatmul.mubr.bf16.gmra.mrb[0].mxu0 %v3969
        %v8127 = vpop.f32.mrb[0].mxu0
        %v8128 = vadd.f32 %v7071, %v8127
        %v8129 = vpop.f32.mrb[0].mxu0
        %v8130 = vpop.f32.mrb[0].mxu0
        %v8131 = vadd.f32 %v7074, %v8130
        %v8132 = vpop.f32.mrb[0].mxu0
        %8133 = vmatprep.mubr.bf16.mxu0 %v3976
        %8134 = vmatmul.mubr.bf16.gmra.mrb[0].mxu0 %v3975
        %v8135 = vpop.f32.mrb[0].mxu0
        %v8136 = vadd.f32 %v7079, %v8135
        %v8137 = vpop.f32.mrb[0].mxu0
        %v8138 = vpop.f32.mrb[0].mxu0
        %v8139 = vadd.f32 %v7082, %v8138
        %v8140 = vpop.f32.mrb[0].mxu0
        %8141 = vmatprep.mubr.bf16.mxu0 %v3982
        %8142 = vmatmul.mubr.bf16.gmra.mrb[0].mxu0 %v3981
        %v8143 = vpop.f32.mrb[0].mxu0
        %v8144 = vadd.f32 %v7087, %v8143
        %v8145 = vpop.f32.mrb[0].mxu0
        %v8146 = vpop.f32.mrb[0].mxu0
        %v8147 = vadd.f32 %v7090, %v8146
        %v8148 = vpop.f32.mrb[0].mxu0
        %8149 = vmatprep.mubr.bf16.mxu0 %v3988
        %8150 = vmatmul.mubr.bf16.gmra.mrb[0].mxu0 %v3987
        %v8151 = vpop.f32.mrb[0].mxu0
        %v8152 = vadd.f32 %v7095, %v8151
        %v8153 = vpop.f32.mrb[0].mxu0
        %v8154 = vpop.f32.mrb[0].mxu0
        %v8155 = vadd.f32 %v7098, %v8154
        %v8156 = vpop.f32.mrb[0].mxu0
        %8157 = vmatprep.mubr.bf16.mxu0 %v3994
        %8158 = vmatmul.mubr.bf16.gmra.mrb[0].mxu0 %v3993
        %v8159 = vpop.f32.mrb[0].mxu0
        %v8160 = vadd.f32 %v7103, %v8159
        %v8161 = vpop.f32.mrb[0].mxu0
        %v8162 = vpop.f32.mrb[0].mxu0
        %v8163 = vadd.f32 %v7106, %v8162
        %v8164 = vpop.f32.mrb[0].mxu0
        %8165 = vmatprep.mubr.bf16.mxu0 %v4000
        %8166 = vmatmul.mubr.bf16.gmra.mrb[0].mxu0 %v3999
        %v8167 = vpop.f32.mrb[0].mxu0
        %v8168 = vadd.f32 %v7111, %v8167
        %v8169 = vpop.f32.mrb[0].mxu0
        %v8170 = vpop.f32.mrb[0].mxu0
        %v8171 = vadd.f32 %v7114, %v8170
        %v8172 = vpop.f32.mrb[0].mxu0
        %8173 = vmatprep.mubr.bf16.mxu0 %v4006
        %8174 = vmatmul.mubr.bf16.gmra.mrb[0].mxu0 %v4005
        %v8175 = vpop.f32.mrb[0].mxu0
        %v8176 = vadd.f32 %v7119, %v8175
        %v8177 = vpop.f32.mrb[0].mxu0
        %v8178 = vpop.f32.mrb[0].mxu0
        %v8179 = vadd.f32 %v7122, %v8178
        %v8180 = vpop.f32.mrb[0].mxu0
        %8181 = vmatprep.mubr.bf16.mxu0 %v4012
        %8182 = vmatmul.mubr.bf16.gmra.mrb[0].mxu0 %v4011
        %v8183 = vpop.f32.mrb[0].mxu0
        %v8184 = vadd.f32 %v7127, %v8183
        %v8185 = vpop.f32.mrb[0].mxu0
        %v8186 = vpop.f32.mrb[0].mxu0
        %v8187 = vadd.f32 %v7130, %v8186
        %v8188 = vpop.f32.mrb[0].mxu0
        %8189 = vmatprep.mubr.bf16.mxu0 %v4018
        %8190 = vmatmul.mubr.bf16.gmra.mrb[0].mxu0 %v4017
        %v8191 = vpop.f32.mrb[0].mxu0
        %v8192 = vadd.f32 %v7135, %v8191
        %v8193 = vpop.f32.mrb[0].mxu0
        %v8194 = vpop.f32.mrb[0].mxu0
        %v8195 = vadd.f32 %v7138, %v8194
        %v8196 = vpop.f32.mrb[0].mxu0
        %8197 = vmatprep.mubr.bf16.mxu0 %v4024
        %8198 = vmatmul.mubr.bf16.gmra.mrb[0].mxu0 %v4023
        %v8199 = vpop.f32.mrb[0].mxu0
        %v8200 = vadd.f32 %v7143, %v8199
        %v8201 = vpop.f32.mrb[0].mxu0
        %v8202 = vpop.f32.mrb[0].mxu0
        %v8203 = vadd.f32 %v7146, %v8202
        %v8204 = vpop.f32.mrb[0].mxu0
        %8205 = vmatprep.mubr.bf16.mxu0 %v4030
        %8206 = vmatmul.mubr.bf16.gmra.mrb[0].mxu0 %v4029
        %v8207 = vpop.f32.mrb[0].mxu0
        %v8208 = vadd.f32 %v7151, %v8207
        %v8209 = vpop.f32.mrb[0].mxu0
        %v8210 = vpop.f32.mrb[0].mxu0
        %v8211 = vadd.f32 %v7154, %v8210
        %v8212 = vpop.f32.mrb[0].mxu0
        %8213 = vmatprep.mubr.bf16.mxu0 %v4036
        %8214 = vmatmul.mubr.bf16.gmra.mrb[0].mxu0 %v4035
        %v8215 = vpop.f32.mrb[0].mxu0
        %v8216 = vadd.f32 %v7159, %v8215
        %v8217 = vpop.f32.mrb[0].mxu0
        %v8218 = vpop.f32.mrb[0].mxu0
        %v8219 = vadd.f32 %v7162, %v8218
        %v8220 = vpop.f32.mrb[0].mxu0
        %8221 = vmatprep.mubr.bf16.mxu0 %v4042
        %8222 = vmatmul.mubr.bf16.gmra.mrb[0].mxu0 %v4041
        %v8223 = vpop.f32.mrb[0].mxu0
        %v8224 = vadd.f32 %v7167, %v8223
        %v8225 = vpop.f32.mrb[0].mxu0
        %v8226 = vpop.f32.mrb[0].mxu0
        %v8227 = vadd.f32 %v7170, %v8226
        %v8228 = vpop.f32.mrb[0].mxu0
        %8229 = vmatprep.mubr.bf16.mxu0 %v4048
        %8230 = vmatmul.mubr.bf16.gmra.mrb[0].mxu0 %v4047
        %v8231 = vpop.f32.mrb[0].mxu0
        %v8232 = vadd.f32 %v7175, %v8231
        %v8233 = vpop.f32.mrb[0].mxu0
        %v8234 = vpop.f32.mrb[0].mxu0
        %v8235 = vadd.f32 %v7178, %v8234
        %v8236 = vpop.f32.mrb[0].mxu0
        %8237 = vmatprep.mubr.bf16.mxu0 %v4054
        %8238 = vmatmul.mubr.bf16.gmra.mrb[0].mxu0 %v4053
        %v8239 = vpop.f32.mrb[0].mxu0
        %v8240 = vadd.f32 %v7183, %v8239
        %v8241 = vpop.f32.mrb[0].mxu0
        %v8242 = vpop.f32.mrb[0].mxu0
        %v8243 = vadd.f32 %v7186, %v8242
        %v8244 = vpop.f32.mrb[0].mxu0
        %8245 = vmatprep.mubr.bf16.mxu0 %v4060
        %8246 = vmatmul.mubr.bf16.gmra.mrb[0].mxu0 %v4059
        %v8247 = vpop.f32.mrb[0].mxu0
        %v8248 = vadd.f32 %v7191, %v8247
        %v8249 = vpop.f32.mrb[0].mxu0
        %v8250 = vpop.f32.mrb[0].mxu0
        %v8251 = vadd.f32 %v7194, %v8250
        %v8252 = vpop.f32.mrb[0].mxu0
        %8253 = vmatprep.mubr.bf16.mxu0 %v4066
        %8254 = vmatmul.mubr.bf16.gmra.mrb[0].mxu0 %v4065
        %v8255 = vpop.f32.mrb[0].mxu0
        %v8256 = vadd.f32 %v7199, %v8255
        %v8257 = vpop.f32.mrb[0].mxu0
        %v8258 = vpop.f32.mrb[0].mxu0
        %v8259 = vadd.f32 %v7202, %v8258
        %v8260 = vpop.f32.mrb[0].mxu0
        %8261 = vmatprep.mubr.bf16.mxu0 %v4072
        %8262 = vmatmul.mubr.bf16.gmra.mrb[0].mxu0 %v4071
        %v8263 = vpop.f32.mrb[0].mxu0
        %v8264 = vadd.f32 %v7207, %v8263
        %v8265 = vpop.f32.mrb[0].mxu0
        %v8266 = vpop.f32.mrb[0].mxu0
        %v8267 = vadd.f32 %v7210, %v8266
        %v8268 = vpop.f32.mrb[0].mxu0
        %8269 = vmatprep.mubr.bf16.mxu0 %v4078
        %8270 = vmatmul.mubr.bf16.gmra.mrb[0].mxu0 %v4077
        %v8271 = vpop.f32.mrb[0].mxu0
        %v8272 = vadd.f32 %v7215, %v8271
        %v8273 = vpop.f32.mrb[0].mxu0
        %v8274 = vpop.f32.mrb[0].mxu0
        %v8275 = vadd.f32 %v7218, %v8274
        %v8276 = vpop.f32.mrb[0].mxu0
        %8277 = vmatprep.mubr.bf16.mxu0 %v4084
        %8278 = vmatmul.mubr.bf16.gmra.mrb[0].mxu0 %v4083
        %v8279 = vpop.f32.mrb[0].mxu0
        %v8280 = vadd.f32 %v7223, %v8279
        %v8281 = vpop.f32.mrb[0].mxu0
        %v8282 = vpop.f32.mrb[0].mxu0
        %v8283 = vadd.f32 %v7226, %v8282
        %v8284 = vpop.f32.mrb[0].mxu0
        %8285 = vmatprep.mubr.bf16.mxu0 %v4090
        %8286 = vmatmul.mubr.bf16.gmra.mrb[0].mxu0 %v4089
        %v8287 = vpop.f32.mrb[0].mxu0
        %v8288 = vadd.f32 %v7231, %v8287
        %v8289 = vpop.f32.mrb[0].mxu0
        %v8290 = vpop.f32.mrb[0].mxu0
        %v8291 = vadd.f32 %v7234, %v8290
        %v8292 = vpop.f32.mrb[0].mxu0
        %8293 = vmatprep.mubr.bf16.mxu0 %v4096
        %8294 = vmatmul.mubr.bf16.gmra.mrb[0].mxu0 %v4095
        %v8295 = vpop.f32.mrb[0].mxu0
        %v8296 = vadd.f32 %v7239, %v8295
        %v8297 = vpop.f32.mrb[0].mxu0
        %v8298 = vpop.f32.mrb[0].mxu0
        %v8299 = vadd.f32 %v7242, %v8298
        %v8300 = vpop.f32.mrb[0].mxu0
        %8301 = vmatprep.mubr.bf16.mxu0 %v4102
        %8302 = vmatmul.mubr.bf16.gmra.mrb[0].mxu0 %v4101
        %v8303 = vpop.f32.mrb[0].mxu0
        %v8304 = vadd.f32 %v7247, %v8303
        %v8305 = vpop.f32.mrb[0].mxu0
        %v8306 = vpop.f32.mrb[0].mxu0
        %v8307 = vadd.f32 %v7250, %v8306
        %v8308 = vpop.f32.mrb[0].mxu0
        %8309 = vmatprep.mubr.bf16.mxu0 %v4108
        %8310 = vmatmul.mubr.bf16.gmra.mrb[0].mxu0 %v4107
        %v8311 = vpop.f32.mrb[0].mxu0
        %v8312 = vadd.f32 %v7255, %v8311
        %v8313 = vpop.f32.mrb[0].mxu0
        %v8314 = vpop.f32.mrb[0].mxu0
        %v8315 = vadd.f32 %v7258, %v8314
        %v8316 = vpop.f32.mrb[0].mxu0
        %8317 = vmatprep.mubr.bf16.mxu0 %v4114
        %8318 = vmatmul.mubr.bf16.gmra.mrb[0].mxu0 %v4113
        %v8319 = vpop.f32.mrb[0].mxu0
        %v8320 = vadd.f32 %v7263, %v8319
        %v8321 = vpop.f32.mrb[0].mxu0
        %v8322 = vpop.f32.mrb[0].mxu0
        %v8323 = vadd.f32 %v7266, %v8322
        %v8324 = vpop.f32.mrb[0].mxu0
        %8325 = vmatprep.mubr.bf16.mxu0 %v4120
        %8326 = vmatmul.mubr.bf16.gmra.mrb[0].mxu0 %v4119
        %v8327 = vpop.f32.mrb[0].mxu0
        %v8328 = vadd.f32 %v7271, %v8327
        %v8329 = vpop.f32.mrb[0].mxu0
        %v8330 = vpop.f32.mrb[0].mxu0
        %v8331 = vadd.f32 %v7274, %v8330
        %v8332 = vpop.f32.mrb[0].mxu0
        %8333 = vmatprep.mubr.bf16.mxu0 %v4126
        %8334 = vmatmul.mubr.bf16.gmra.mrb[0].mxu0 %v4125
        %v8335 = vpop.f32.mrb[0].mxu0
        %v8336 = vadd.f32 %v7279, %v8335
        %v8337 = vpop.f32.mrb[0].mxu0
        %v8338 = vpop.f32.mrb[0].mxu0
        %v8339 = vadd.f32 %v7282, %v8338
        %v8340 = vpop.f32.mrb[0].mxu0
        %8341 = vmatprep.mubr.bf16.mxu0 %v4132
        %8342 = vmatmul.mubr.bf16.gmra.mrb[0].mxu0 %v4131
        %v8343 = vpop.f32.mrb[0].mxu0
        %v8344 = vadd.f32 %v7287, %v8343
        %v8345 = vpop.f32.mrb[0].mxu0
        %v8346 = vpop.f32.mrb[0].mxu0
        %v8347 = vadd.f32 %v7290, %v8346
        %v8348 = vpop.f32.mrb[0].mxu0
        %8349 = vmatprep.mubr.bf16.mxu0 %v4138
        %8350 = vmatmul.mubr.bf16.gmra.mrb[0].mxu0 %v4137
        %v8351 = vpop.f32.mrb[0].mxu0
        %v8352 = vadd.f32 %v7295, %v8351
        %v8353 = vpop.f32.mrb[0].mxu0
        %v8354 = vpop.f32.mrb[0].mxu0
        %v8355 = vadd.f32 %v7298, %v8354
        %v8356 = vpop.f32.mrb[0].mxu0
        %8357 = vmatprep.mubr.bf16.mxu0 %v4144
        %8358 = vmatmul.mubr.bf16.gmra.mrb[0].mxu0 %v4143
        %v8359 = vpop.f32.mrb[0].mxu0
        %v8360 = vadd.f32 %v7303, %v8359
        %v8361 = vpop.f32.mrb[0].mxu0
        %v8362 = vpop.f32.mrb[0].mxu0
        %v8363 = vadd.f32 %v7306, %v8362
        %v8364 = vpop.f32.mrb[0].mxu0
        %8365 = vmatprep.mubr.bf16.mxu0 %v4150
        %8366 = vmatmul.mubr.bf16.gmra.mrb[0].mxu0 %v4149
        %v8367 = vpop.f32.mrb[0].mxu0
        %v8368 = vadd.f32 %v7311, %v8367
        %v8369 = vpop.f32.mrb[0].mxu0
        %v8370 = vpop.f32.mrb[0].mxu0
        %v8371 = vadd.f32 %v7314, %v8370
        %v8372 = vpop.f32.mrb[0].mxu0
        %8373 = vmatprep.mubr.bf16.mxu0 %v4156
        %8374 = vmatmul.mubr.bf16.gmra.mrb[0].mxu0 %v4155
        %v8375 = vpop.f32.mrb[0].mxu0
        %v8376 = vadd.f32 %v7319, %v8375
        %v8377 = vpop.f32.mrb[0].mxu0
        %v8378 = vpop.f32.mrb[0].mxu0
        %v8379 = vadd.f32 %v7322, %v8378
        %v8380 = vpop.f32.mrb[0].mxu0
        %8381 = vmatprep.mubr.bf16.mxu0 %v4162
        %8382 = vmatmul.mubr.bf16.gmra.mrb[0].mxu0 %v4161
        %v8383 = vpop.f32.mrb[0].mxu0
        %v8384 = vadd.f32 %v7327, %v8383
        %v8385 = vpop.f32.mrb[0].mxu0
        %v8386 = vpop.f32.mrb[0].mxu0
        %v8387 = vadd.f32 %v7330, %v8386
        %v8388 = vpop.f32.mrb[0].mxu0
        %8389 = vdwg.mxu0
        %v8390 = vmax.f32 %v7368, 0.0
        %v8391 = vmax.f32 %v7371, 0.0
        %v8392 = vmax.f32 %v7376, 0.0
        %v8393 = vmax.f32 %v7379, 0.0
        %v8394 = vmax.f32 %v7384, 0.0
        %v8395 = vmax.f32 %v7387, 0.0
        %v8396 = vmax.f32 %v7392, 0.0
        %v8397 = vmax.f32 %v7395, 0.0
        %v8398 = vmax.f32 %v7400, 0.0
        %v8399 = vmax.f32 %v7403, 0.0
        %v8400 = vmax.f32 %v7408, 0.0
        %v8401 = vmax.f32 %v7411, 0.0
        %v8402 = vmax.f32 %v7416, 0.0
        %v8403 = vmax.f32 %v7419, 0.0
        %v8404 = vmax.f32 %v7424, 0.0
        %v8405 = vmax.f32 %v7427, 0.0
        %v8406 = vmax.f32 %v7432, 0.0
        %v8407 = vmax.f32 %v7435, 0.0
        %v8408 = vmax.f32 %v7440, 0.0
        %v8409 = vmax.f32 %v7443, 0.0
        %v8410 = vmax.f32 %v7448, 0.0
        %v8411 = vmax.f32 %v7451, 0.0
        %v8412 = vmax.f32 %v7456, 0.0
        %v8413 = vmax.f32 %v7459, 0.0
        %v8414 = vmax.f32 %v7464, 0.0
        %v8415 = vmax.f32 %v7467, 0.0
        %v8416 = vmax.f32 %v7472, 0.0
        %v8417 = vmax.f32 %v7475, 0.0
        %v8418 = vmax.f32 %v7480, 0.0
        %v8419 = vmax.f32 %v7483, 0.0
        %v8420 = vmax.f32 %v7488, 0.0
        %v8421 = vmax.f32 %v7491, 0.0
        %v8422 = vmax.f32 %v7496, 0.0
        %v8423 = vmax.f32 %v7499, 0.0
        %v8424 = vmax.f32 %v7504, 0.0
        %v8425 = vmax.f32 %v7507, 0.0
        %v8426 = vmax.f32 %v7512, 0.0
        %v8427 = vmax.f32 %v7515, 0.0
        %v8428 = vmax.f32 %v7520, 0.0
        %v8429 = vmax.f32 %v7523, 0.0
        %v8430 = vmax.f32 %v7528, 0.0
        %v8431 = vmax.f32 %v7531, 0.0
        %v8432 = vmax.f32 %v7536, 0.0
        %v8433 = vmax.f32 %v7539, 0.0
        %v8434 = vmax.f32 %v7544, 0.0
        %v8435 = vmax.f32 %v7547, 0.0
        %v8436 = vmax.f32 %v7552, 0.0
        %v8437 = vmax.f32 %v7555, 0.0
        %v8438 = vmax.f32 %v7560, 0.0
        %v8439 = vmax.f32 %v7563, 0.0
        %v8440 = vmax.f32 %v7568, 0.0
        %v8441 = vmax.f32 %v7571, 0.0
        %v8442 = vmax.f32 %v7576, 0.0
        %v8443 = vmax.f32 %v7579, 0.0
        %v8444 = vmax.f32 %v7584, 0.0
        %v8445 = vmax.f32 %v7587, 0.0
        %v8446 = vmax.f32 %v7592, 0.0
        %v8447 = vmax.f32 %v7595, 0.0
        %v8448 = vmax.f32 %v7600, 0.0
        %v8449 = vmax.f32 %v7603, 0.0
        %v8450 = vmax.f32 %v7608, 0.0
        %v8451 = vmax.f32 %v7611, 0.0
        %v8452 = vmax.f32 %v7616, 0.0
        %v8453 = vmax.f32 %v7619, 0.0
        %v8454 = vmax.f32 %v7624, 0.0
        %v8455 = vmax.f32 %v7627, 0.0
        %v8456 = vmax.f32 %v7632, 0.0
        %v8457 = vmax.f32 %v7635, 0.0
        %v8458 = vmax.f32 %v7640, 0.0
        %v8459 = vmax.f32 %v7643, 0.0
        %v8460 = vmax.f32 %v7648, 0.0
        %v8461 = vmax.f32 %v7651, 0.0
        %v8462 = vmax.f32 %v7656, 0.0
        %v8463 = vmax.f32 %v7659, 0.0
        %v8464 = vmax.f32 %v7664, 0.0
        %v8465 = vmax.f32 %v7667, 0.0
        %v8466 = vmax.f32 %v7672, 0.0
        %v8467 = vmax.f32 %v7675, 0.0
        %v8468 = vmax.f32 %v7680, 0.0
        %v8469 = vmax.f32 %v7683, 0.0
        %v8470 = vmax.f32 %v7688, 0.0
        %v8471 = vmax.f32 %v7691, 0.0
        %v8472 = vmax.f32 %v7696, 0.0
        %v8473 = vmax.f32 %v7699, 0.0
        %v8474 = vmax.f32 %v7704, 0.0
        %v8475 = vmax.f32 %v7707, 0.0
        %v8476 = vmax.f32 %v7712, 0.0
        %v8477 = vmax.f32 %v7715, 0.0
        %v8478 = vmax.f32 %v7720, 0.0
        %v8479 = vmax.f32 %v7723, 0.0
        %v8480 = vmax.f32 %v7728, 0.0
        %v8481 = vmax.f32 %v7731, 0.0
        %v8482 = vmax.f32 %v7736, 0.0
        %v8483 = vmax.f32 %v7739, 0.0
        %v8484 = vmax.f32 %v7744, 0.0
        %v8485 = vmax.f32 %v7747, 0.0
        %v8486 = vmax.f32 %v7752, 0.0
        %v8487 = vmax.f32 %v7755, 0.0
        %v8488 = vmax.f32 %v7760, 0.0
        %v8489 = vmax.f32 %v7763, 0.0
        %v8490 = vmax.f32 %v7768, 0.0
        %v8491 = vmax.f32 %v7771, 0.0
        %v8492 = vmax.f32 %v7776, 0.0
        %v8493 = vmax.f32 %v7779, 0.0
        %v8494 = vmax.f32 %v7784, 0.0
        %v8495 = vmax.f32 %v7787, 0.0
        %v8496 = vmax.f32 %v7792, 0.0
        %v8497 = vmax.f32 %v7795, 0.0
        %v8498 = vmax.f32 %v7800, 0.0
        %v8499 = vmax.f32 %v7803, 0.0
        %v8500 = vmax.f32 %v7808, 0.0
        %v8501 = vmax.f32 %v7811, 0.0
        %v8502 = vmax.f32 %v7816, 0.0
        %v8503 = vmax.f32 %v7819, 0.0
        %v8504 = vmax.f32 %v7824, 0.0
        %v8505 = vmax.f32 %v7827, 0.0
        %v8506 = vmax.f32 %v7832, 0.0
        %v8507 = vmax.f32 %v7835, 0.0
        %v8508 = vmax.f32 %v7840, 0.0
        %v8509 = vmax.f32 %v7843, 0.0
        %v8510 = vmax.f32 %v7848, 0.0
        %v8511 = vmax.f32 %v7851, 0.0
        %v8512 = vmax.f32 %v7856, 0.0
        %v8513 = vmax.f32 %v7859, 0.0
        %v8514 = vmax.f32 %v7864, 0.0
        %v8515 = vmax.f32 %v7867, 0.0
        %v8516 = vmax.f32 %v7872, 0.0
        %v8517 = vmax.f32 %v7875, 0.0
        %v8518 = vmax.f32 %v7880, 0.0
        %v8519 = vmax.f32 %v7883, 0.0
        %v8520 = vmax.f32 %v7888, 0.0
        %v8521 = vmax.f32 %v7891, 0.0
        %v8522 = vmax.f32 %v7896, 0.0
        %v8523 = vmax.f32 %v7899, 0.0
        %v8524 = vmax.f32 %v7904, 0.0
        %v8525 = vmax.f32 %v7907, 0.0
        %v8526 = vmax.f32 %v7912, 0.0
        %v8527 = vmax.f32 %v7915, 0.0
        %v8528 = vmax.f32 %v7920, 0.0
        %v8529 = vmax.f32 %v7923, 0.0
        %v8530 = vmax.f32 %v7928, 0.0
        %v8531 = vmax.f32 %v7931, 0.0
        %v8532 = vmax.f32 %v7936, 0.0
        %v8533 = vmax.f32 %v7939, 0.0
        %v8534 = vmax.f32 %v7944, 0.0
        %v8535 = vmax.f32 %v7947, 0.0
        %v8536 = vmax.f32 %v7952, 0.0
        %v8537 = vmax.f32 %v7955, 0.0
        %v8538 = vmax.f32 %v7960, 0.0
        %v8539 = vmax.f32 %v7963, 0.0
        %v8540 = vmax.f32 %v7968, 0.0
        %v8541 = vmax.f32 %v7971, 0.0
        %v8542 = vmax.f32 %v7976, 0.0
        %v8543 = vmax.f32 %v7979, 0.0
        %v8544 = vmax.f32 %v7984, 0.0
        %v8545 = vmax.f32 %v7987, 0.0
        %v8546 = vmax.f32 %v7992, 0.0
        %v8547 = vmax.f32 %v7995, 0.0
        %v8548 = vmax.f32 %v8000, 0.0
        %v8549 = vmax.f32 %v8003, 0.0
        %v8550 = vmax.f32 %v8008, 0.0
        %v8551 = vmax.f32 %v8011, 0.0
        %v8552 = vmax.f32 %v8016, 0.0
        %v8553 = vmax.f32 %v8019, 0.0
        %v8554 = vmax.f32 %v8024, 0.0
        %v8555 = vmax.f32 %v8027, 0.0
        %v8556 = vmax.f32 %v8032, 0.0
        %v8557 = vmax.f32 %v8035, 0.0
        %v8558 = vmax.f32 %v8040, 0.0
        %v8559 = vmax.f32 %v8043, 0.0
        %v8560 = vmax.f32 %v8048, 0.0
        %v8561 = vmax.f32 %v8051, 0.0
        %v8562 = vmax.f32 %v8056, 0.0
        %v8563 = vmax.f32 %v8059, 0.0
        %v8564 = vmax.f32 %v8064, 0.0
        %v8565 = vmax.f32 %v8067, 0.0
        %v8566 = vmax.f32 %v8072, 0.0
        %v8567 = vmax.f32 %v8075, 0.0
        %v8568 = vmax.f32 %v8080, 0.0
        %v8569 = vmax.f32 %v8083, 0.0
        %v8570 = vmax.f32 %v8088, 0.0
        %v8571 = vmax.f32 %v8091, 0.0
        %v8572 = vmax.f32 %v8096, 0.0
        %v8573 = vmax.f32 %v8099, 0.0
        %v8574 = vmax.f32 %v8104, 0.0
        %v8575 = vmax.f32 %v8107, 0.0
        %v8576 = vmax.f32 %v8112, 0.0
        %v8577 = vmax.f32 %v8115, 0.0
        %v8578 = vmax.f32 %v8120, 0.0
        %v8579 = vmax.f32 %v8123, 0.0
        %v8580 = vmax.f32 %v8128, 0.0
        %v8581 = vmax.f32 %v8131, 0.0
        %v8582 = vmax.f32 %v8136, 0.0
        %v8583 = vmax.f32 %v8139, 0.0
        %v8584 = vmax.f32 %v8144, 0.0
        %v8585 = vmax.f32 %v8147, 0.0
        %v8586 = vmax.f32 %v8152, 0.0
        %v8587 = vmax.f32 %v8155, 0.0
        %v8588 = vmax.f32 %v8160, 0.0
        %v8589 = vmax.f32 %v8163, 0.0
        %v8590 = vmax.f32 %v8168, 0.0
        %v8591 = vmax.f32 %v8171, 0.0
        %v8592 = vmax.f32 %v8176, 0.0
        %v8593 = vmax.f32 %v8179, 0.0
        %v8594 = vmax.f32 %v8184, 0.0
        %v8595 = vmax.f32 %v8187, 0.0
        %v8596 = vmax.f32 %v8192, 0.0
        %v8597 = vmax.f32 %v8195, 0.0
        %v8598 = vmax.f32 %v8200, 0.0
        %v8599 = vmax.f32 %v8203, 0.0
        %v8600 = vmax.f32 %v8208, 0.0
        %v8601 = vmax.f32 %v8211, 0.0
        %v8602 = vmax.f32 %v8216, 0.0
        %v8603 = vmax.f32 %v8219, 0.0
        %v8604 = vmax.f32 %v8224, 0.0
        %v8605 = vmax.f32 %v8227, 0.0
        %v8606 = vmax.f32 %v8232, 0.0
        %v8607 = vmax.f32 %v8235, 0.0
        %v8608 = vmax.f32 %v8240, 0.0
        %v8609 = vmax.f32 %v8243, 0.0
        %v8610 = vmax.f32 %v8248, 0.0
        %v8611 = vmax.f32 %v8251, 0.0
        %v8612 = vmax.f32 %v8256, 0.0
        %v8613 = vmax.f32 %v8259, 0.0
        %v8614 = vmax.f32 %v8264, 0.0
        %v8615 = vmax.f32 %v8267, 0.0
        %v8616 = vmax.f32 %v8272, 0.0
        %v8617 = vmax.f32 %v8275, 0.0
        %v8618 = vmax.f32 %v8280, 0.0
        %v8619 = vmax.f32 %v8283, 0.0
        %v8620 = vmax.f32 %v8288, 0.0
        %v8621 = vmax.f32 %v8291, 0.0
        %v8622 = vmax.f32 %v8296, 0.0
        %v8623 = vmax.f32 %v8299, 0.0
        %v8624 = vmax.f32 %v8304, 0.0
        %v8625 = vmax.f32 %v8307, 0.0
        %v8626 = vmax.f32 %v8312, 0.0
        %v8627 = vmax.f32 %v8315, 0.0
        %v8628 = vmax.f32 %v8320, 0.0
        %v8629 = vmax.f32 %v8323, 0.0
        %v8630 = vmax.f32 %v8328, 0.0
        %v8631 = vmax.f32 %v8331, 0.0
        %v8632 = vmax.f32 %v8336, 0.0
        %v8633 = vmax.f32 %v8339, 0.0
        %v8634 = vmax.f32 %v8344, 0.0
        %v8635 = vmax.f32 %v8347, 0.0
        %v8636 = vmax.f32 %v8352, 0.0
        %v8637 = vmax.f32 %v8355, 0.0
        %v8638 = vmax.f32 %v8360, 0.0
        %v8639 = vmax.f32 %v8363, 0.0
        %v8640 = vmax.f32 %v8368, 0.0
        %v8641 = vmax.f32 %v8371, 0.0
        %v8642 = vmax.f32 %v8376, 0.0
        %v8643 = vmax.f32 %v8379, 0.0
        %v8644 = vmax.f32 %v8384, 0.0
        %v8645 = vmax.f32 %v8387, 0.0
        %v8646 = vpack.c.bf16 %v8391, %v8390
        %v8647 = vpack.c.bf16 %v8393, %v8392
        %v8648 = vpack.c.bf16 %v8395, %v8394
        %v8649 = vpack.c.bf16 %v8397, %v8396
        %v8650 = vpack.c.bf16 %v8399, %v8398
        %v8651 = vpack.c.bf16 %v8401, %v8400
        %v8652 = vpack.c.bf16 %v8403, %v8402
        %v8653 = vpack.c.bf16 %v8405, %v8404
        %v8654 = vpack.c.bf16 %v8407, %v8406
        %v8655 = vpack.c.bf16 %v8409, %v8408
        %v8656 = vpack.c.bf16 %v8411, %v8410
        %v8657 = vpack.c.bf16 %v8413, %v8412
        %v8658 = vpack.c.bf16 %v8415, %v8414
        %v8659 = vpack.c.bf16 %v8417, %v8416
        %v8660 = vpack.c.bf16 %v8419, %v8418
        %v8661 = vpack.c.bf16 %v8421, %v8420
        %v8662 = vpack.c.bf16 %v8423, %v8422
        %v8663 = vpack.c.bf16 %v8425, %v8424
        %v8664 = vpack.c.bf16 %v8427, %v8426
        %v8665 = vpack.c.bf16 %v8429, %v8428
        %v8666 = vpack.c.bf16 %v8431, %v8430
        %v8667 = vpack.c.bf16 %v8433, %v8432
        %v8668 = vpack.c.bf16 %v8435, %v8434
        %v8669 = vpack.c.bf16 %v8437, %v8436
        %v8670 = vpack.c.bf16 %v8439, %v8438
        %v8671 = vpack.c.bf16 %v8441, %v8440
        %v8672 = vpack.c.bf16 %v8443, %v8442
        %v8673 = vpack.c.bf16 %v8445, %v8444
        %v8674 = vpack.c.bf16 %v8447, %v8446
        %v8675 = vpack.c.bf16 %v8449, %v8448
        %v8676 = vpack.c.bf16 %v8451, %v8450
        %v8677 = vpack.c.bf16 %v8453, %v8452
        %v8678 = vpack.c.bf16 %v8455, %v8454
        %v8679 = vpack.c.bf16 %v8457, %v8456
        %v8680 = vpack.c.bf16 %v8459, %v8458
        %v8681 = vpack.c.bf16 %v8461, %v8460
        %v8682 = vpack.c.bf16 %v8463, %v8462
        %v8683 = vpack.c.bf16 %v8465, %v8464
        %v8684 = vpack.c.bf16 %v8467, %v8466
        %v8685 = vpack.c.bf16 %v8469, %v8468
        %v8686 = vpack.c.bf16 %v8471, %v8470
        %v8687 = vpack.c.bf16 %v8473, %v8472
        %v8688 = vpack.c.bf16 %v8475, %v8474
        %v8689 = vpack.c.bf16 %v8477, %v8476
        %v8690 = vpack.c.bf16 %v8479, %v8478
        %v8691 = vpack.c.bf16 %v8481, %v8480
        %v8692 = vpack.c.bf16 %v8483, %v8482
        %v8693 = vpack.c.bf16 %v8485, %v8484
        %v8694 = vpack.c.bf16 %v8487, %v8486
        %v8695 = vpack.c.bf16 %v8489, %v8488
        %v8696 = vpack.c.bf16 %v8491, %v8490
        %v8697 = vpack.c.bf16 %v8493, %v8492
        %v8698 = vpack.c.bf16 %v8495, %v8494
        %v8699 = vpack.c.bf16 %v8497, %v8496
        %v8700 = vpack.c.bf16 %v8499, %v8498
        %v8701 = vpack.c.bf16 %v8501, %v8500
        %v8702 = vpack.c.bf16 %v8503, %v8502
        %v8703 = vpack.c.bf16 %v8505, %v8504
        %v8704 = vpack.c.bf16 %v8507, %v8506
        %v8705 = vpack.c.bf16 %v8509, %v8508
        %v8706 = vpack.c.bf16 %v8511, %v8510
        %v8707 = vpack.c.bf16 %v8513, %v8512
        %v8708 = vpack.c.bf16 %v8515, %v8514
        %v8709 = vpack.c.bf16 %v8517, %v8516
        %v8710 = vpack.c.bf16 %v8519, %v8518
        %v8711 = vpack.c.bf16 %v8521, %v8520
        %v8712 = vpack.c.bf16 %v8523, %v8522
        %v8713 = vpack.c.bf16 %v8525, %v8524
        %v8714 = vpack.c.bf16 %v8527, %v8526
        %v8715 = vpack.c.bf16 %v8529, %v8528
        %v8716 = vpack.c.bf16 %v8531, %v8530
        %v8717 = vpack.c.bf16 %v8533, %v8532
        %v8718 = vpack.c.bf16 %v8535, %v8534
        %v8719 = vpack.c.bf16 %v8537, %v8536
        %v8720 = vpack.c.bf16 %v8539, %v8538
        %v8721 = vpack.c.bf16 %v8541, %v8540
        %v8722 = vpack.c.bf16 %v8543, %v8542
        %v8723 = vpack.c.bf16 %v8545, %v8544
        %v8724 = vpack.c.bf16 %v8547, %v8546
        %v8725 = vpack.c.bf16 %v8549, %v8548
        %v8726 = vpack.c.bf16 %v8551, %v8550
        %v8727 = vpack.c.bf16 %v8553, %v8552
        %v8728 = vpack.c.bf16 %v8555, %v8554
        %v8729 = vpack.c.bf16 %v8557, %v8556
        %v8730 = vpack.c.bf16 %v8559, %v8558
        %v8731 = vpack.c.bf16 %v8561, %v8560
        %v8732 = vpack.c.bf16 %v8563, %v8562
        %v8733 = vpack.c.bf16 %v8565, %v8564
        %v8734 = vpack.c.bf16 %v8567, %v8566
        %v8735 = vpack.c.bf16 %v8569, %v8568
        %v8736 = vpack.c.bf16 %v8571, %v8570
        %v8737 = vpack.c.bf16 %v8573, %v8572
        %v8738 = vpack.c.bf16 %v8575, %v8574
        %v8739 = vpack.c.bf16 %v8577, %v8576
        %v8740 = vpack.c.bf16 %v8579, %v8578
        %v8741 = vpack.c.bf16 %v8581, %v8580
        %v8742 = vpack.c.bf16 %v8583, %v8582
        %v8743 = vpack.c.bf16 %v8585, %v8584
        %v8744 = vpack.c.bf16 %v8587, %v8586
        %v8745 = vpack.c.bf16 %v8589, %v8588
        %v8746 = vpack.c.bf16 %v8591, %v8590
        %v8747 = vpack.c.bf16 %v8593, %v8592
        %v8748 = vpack.c.bf16 %v8595, %v8594
        %v8749 = vpack.c.bf16 %v8597, %v8596
        %v8750 = vpack.c.bf16 %v8599, %v8598
        %v8751 = vpack.c.bf16 %v8601, %v8600
        %v8752 = vpack.c.bf16 %v8603, %v8602
        %v8753 = vpack.c.bf16 %v8605, %v8604
        %v8754 = vpack.c.bf16 %v8607, %v8606
        %v8755 = vpack.c.bf16 %v8609, %v8608
        %v8756 = vpack.c.bf16 %v8611, %v8610
        %v8757 = vpack.c.bf16 %v8613, %v8612
        %v8758 = vpack.c.bf16 %v8615, %v8614
        %v8759 = vpack.c.bf16 %v8617, %v8616
        %v8760 = vpack.c.bf16 %v8619, %v8618
        %v8761 = vpack.c.bf16 %v8621, %v8620
        %v8762 = vpack.c.bf16 %v8623, %v8622
        %v8763 = vpack.c.bf16 %v8625, %v8624
        %v8764 = vpack.c.bf16 %v8627, %v8626
        %v8765 = vpack.c.bf16 %v8629, %v8628
        %v8766 = vpack.c.bf16 %v8631, %v8630
        %v8767 = vpack.c.bf16 %v8633, %v8632
        %v8768 = vpack.c.bf16 %v8635, %v8634
        %v8769 = vpack.c.bf16 %v8637, %v8636
        %v8770 = vpack.c.bf16 %v8639, %v8638
        %v8771 = vpack.c.bf16 %v8641, %v8640
        %v8772 = vpack.c.bf16 %v8643, %v8642
        %v8773 = vpack.c.bf16 %v8645, %v8644
        %v8902 = vunpack.c.l.b16 %v8646
        %v8903 = vunpack.c.h.b16 %v8646
        %v8904 = vunpack.c.l.b16 %v8647
        %v8905 = vunpack.c.h.b16 %v8647
        %v8906 = vunpack.c.l.b16 %v8648
        %v8907 = vunpack.c.h.b16 %v8648
        %v8908 = vunpack.c.l.b16 %v8649
        %v8909 = vunpack.c.h.b16 %v8649
        %v8910 = vunpack.c.l.b16 %v8650
        %v8911 = vunpack.c.h.b16 %v8650
        %v8912 = vunpack.c.l.b16 %v8651
        %v8913 = vunpack.c.h.b16 %v8651
        %v8914 = vunpack.c.l.b16 %v8652
        %v8915 = vunpack.c.h.b16 %v8652
        %v8916 = vunpack.c.l.b16 %v8653
        %v8917 = vunpack.c.h.b16 %v8653
        %v8918 = vunpack.c.l.b16 %v8654
        %v8919 = vunpack.c.h.b16 %v8654
        %v8920 = vunpack.c.l.b16 %v8655
        %v8921 = vunpack.c.h.b16 %v8655
        %v8922 = vunpack.c.l.b16 %v8656
        %v8923 = vunpack.c.h.b16 %v8656
        %v8924 = vunpack.c.l.b16 %v8657
        %v8925 = vunpack.c.h.b16 %v8657
        %v8926 = vunpack.c.l.b16 %v8658
        %v8927 = vunpack.c.h.b16 %v8658
        %v8928 = vunpack.c.l.b16 %v8659
        %v8929 = vunpack.c.h.b16 %v8659
        %v8930 = vunpack.c.l.b16 %v8660
        %v8931 = vunpack.c.h.b16 %v8660
        %v8932 = vunpack.c.l.b16 %v8661
        %v8933 = vunpack.c.h.b16 %v8661
        %v8934 = vunpack.c.l.b16 %v8662
        %v8935 = vunpack.c.h.b16 %v8662
        %v8936 = vunpack.c.l.b16 %v8663
        %v8937 = vunpack.c.h.b16 %v8663
        %v8938 = vunpack.c.l.b16 %v8664
        %v8939 = vunpack.c.h.b16 %v8664
        %v8940 = vunpack.c.l.b16 %v8665
        %v8941 = vunpack.c.h.b16 %v8665
        %v8942 = vunpack.c.l.b16 %v8666
        %v8943 = vunpack.c.h.b16 %v8666
        %v8944 = vunpack.c.l.b16 %v8667
        %v8945 = vunpack.c.h.b16 %v8667
        %v8946 = vunpack.c.l.b16 %v8668
        %v8947 = vunpack.c.h.b16 %v8668
        %v8948 = vunpack.c.l.b16 %v8669
        %v8949 = vunpack.c.h.b16 %v8669
        %v8950 = vunpack.c.l.b16 %v8670
        %v8951 = vunpack.c.h.b16 %v8670
        %v8952 = vunpack.c.l.b16 %v8671
        %v8953 = vunpack.c.h.b16 %v8671
        %v8954 = vunpack.c.l.b16 %v8672
        %v8955 = vunpack.c.h.b16 %v8672
        %v8956 = vunpack.c.l.b16 %v8673
        %v8957 = vunpack.c.h.b16 %v8673
        %v8958 = vunpack.c.l.b16 %v8674
        %v8959 = vunpack.c.h.b16 %v8674
        %v8960 = vunpack.c.l.b16 %v8675
        %v8961 = vunpack.c.h.b16 %v8675
        %v8962 = vunpack.c.l.b16 %v8676
        %v8963 = vunpack.c.h.b16 %v8676
        %v8964 = vunpack.c.l.b16 %v8677
        %v8965 = vunpack.c.h.b16 %v8677
        %v8966 = vunpack.c.l.b16 %v8678
        %v8967 = vunpack.c.h.b16 %v8678
        %v8968 = vunpack.c.l.b16 %v8679
        %v8969 = vunpack.c.h.b16 %v8679
        %v8970 = vunpack.c.l.b16 %v8680
        %v8971 = vunpack.c.h.b16 %v8680
        %v8972 = vunpack.c.l.b16 %v8681
        %v8973 = vunpack.c.h.b16 %v8681
        %v8974 = vunpack.c.l.b16 %v8682
        %v8975 = vunpack.c.h.b16 %v8682
        %v8976 = vunpack.c.l.b16 %v8683
        %v8977 = vunpack.c.h.b16 %v8683
        %v8978 = vunpack.c.l.b16 %v8684
        %v8979 = vunpack.c.h.b16 %v8684
        %v8980 = vunpack.c.l.b16 %v8685
        %v8981 = vunpack.c.h.b16 %v8685
        %v8982 = vunpack.c.l.b16 %v8686
        %v8983 = vunpack.c.h.b16 %v8686
        %v8984 = vunpack.c.l.b16 %v8687
        %v8985 = vunpack.c.h.b16 %v8687
        %v8986 = vunpack.c.l.b16 %v8688
        %v8987 = vunpack.c.h.b16 %v8688
        %v8988 = vunpack.c.l.b16 %v8689
        %v8989 = vunpack.c.h.b16 %v8689
        %v8990 = vunpack.c.l.b16 %v8690
        %v8991 = vunpack.c.h.b16 %v8690
        %v8992 = vunpack.c.l.b16 %v8691
        %v8993 = vunpack.c.h.b16 %v8691
        %v8994 = vunpack.c.l.b16 %v8692
        %v8995 = vunpack.c.h.b16 %v8692
        %v8996 = vunpack.c.l.b16 %v8693
        %v8997 = vunpack.c.h.b16 %v8693
        %v8998 = vunpack.c.l.b16 %v8694
        %v8999 = vunpack.c.h.b16 %v8694
        %v9000 = vunpack.c.l.b16 %v8695
        %v9001 = vunpack.c.h.b16 %v8695
        %v9002 = vunpack.c.l.b16 %v8696
        %v9003 = vunpack.c.h.b16 %v8696
        %v9004 = vunpack.c.l.b16 %v8697
        %v9005 = vunpack.c.h.b16 %v8697
        %v9006 = vunpack.c.l.b16 %v8698
        %v9007 = vunpack.c.h.b16 %v8698
        %v9008 = vunpack.c.l.b16 %v8699
        %v9009 = vunpack.c.h.b16 %v8699
        %v9010 = vunpack.c.l.b16 %v8700
        %v9011 = vunpack.c.h.b16 %v8700
        %v9012 = vunpack.c.l.b16 %v8701
        %v9013 = vunpack.c.h.b16 %v8701
        %v9014 = vunpack.c.l.b16 %v8702
        %v9015 = vunpack.c.h.b16 %v8702
        %v9016 = vunpack.c.l.b16 %v8703
        %v9017 = vunpack.c.h.b16 %v8703
        %v9018 = vunpack.c.l.b16 %v8704
        %v9019 = vunpack.c.h.b16 %v8704
        %v9020 = vunpack.c.l.b16 %v8705
        %v9021 = vunpack.c.h.b16 %v8705
        %v9022 = vunpack.c.l.b16 %v8706
        %v9023 = vunpack.c.h.b16 %v8706
        %v9024 = vunpack.c.l.b16 %v8707
        %v9025 = vunpack.c.h.b16 %v8707
        %v9026 = vunpack.c.l.b16 %v8708
        %v9027 = vunpack.c.h.b16 %v8708
        %v9028 = vunpack.c.l.b16 %v8709
        %v9029 = vunpack.c.h.b16 %v8709
        %v9030 = vunpack.c.l.b16 %v8710
        %v9031 = vunpack.c.h.b16 %v8710
        %v9032 = vunpack.c.l.b16 %v8711
        %v9033 = vunpack.c.h.b16 %v8711
        %v9034 = vunpack.c.l.b16 %v8712
        %v9035 = vunpack.c.h.b16 %v8712
        %v9036 = vunpack.c.l.b16 %v8713
        %v9037 = vunpack.c.h.b16 %v8713
        %v9038 = vunpack.c.l.b16 %v8714
        %v9039 = vunpack.c.h.b16 %v8714
        %v9040 = vunpack.c.l.b16 %v8715
        %v9041 = vunpack.c.h.b16 %v8715
        %v9042 = vunpack.c.l.b16 %v8716
        %v9043 = vunpack.c.h.b16 %v8716
        %v9044 = vunpack.c.l.b16 %v8717
        %v9045 = vunpack.c.h.b16 %v8717
        %v9046 = vunpack.c.l.b16 %v8718
        %v9047 = vunpack.c.h.b16 %v8718
        %v9048 = vunpack.c.l.b16 %v8719
        %v9049 = vunpack.c.h.b16 %v8719
        %v9050 = vunpack.c.l.b16 %v8720
        %v9051 = vunpack.c.h.b16 %v8720
        %v9052 = vunpack.c.l.b16 %v8721
        %v9053 = vunpack.c.h.b16 %v8721
        %v9054 = vunpack.c.l.b16 %v8722
        %v9055 = vunpack.c.h.b16 %v8722
        %v9056 = vunpack.c.l.b16 %v8723
        %v9057 = vunpack.c.h.b16 %v8723
        %v9058 = vunpack.c.l.b16 %v8724
        %v9059 = vunpack.c.h.b16 %v8724
        %v9060 = vunpack.c.l.b16 %v8725
        %v9061 = vunpack.c.h.b16 %v8725
        %v9062 = vunpack.c.l.b16 %v8726
        %v9063 = vunpack.c.h.b16 %v8726
        %v9064 = vunpack.c.l.b16 %v8727
        %v9065 = vunpack.c.h.b16 %v8727
        %v9066 = vunpack.c.l.b16 %v8728
        %v9067 = vunpack.c.h.b16 %v8728
        %v9068 = vunpack.c.l.b16 %v8729
        %v9069 = vunpack.c.h.b16 %v8729
        %v9070 = vunpack.c.l.b16 %v8730
        %v9071 = vunpack.c.h.b16 %v8730
        %v9072 = vunpack.c.l.b16 %v8731
        %v9073 = vunpack.c.h.b16 %v8731
        %v9074 = vunpack.c.l.b16 %v8732
        %v9075 = vunpack.c.h.b16 %v8732
        %v9076 = vunpack.c.l.b16 %v8733
        %v9077 = vunpack.c.h.b16 %v8733
        %v9078 = vunpack.c.l.b16 %v8734
        %v9079 = vunpack.c.h.b16 %v8734
        %v9080 = vunpack.c.l.b16 %v8735
        %v9081 = vunpack.c.h.b16 %v8735
        %v9082 = vunpack.c.l.b16 %v8736
        %v9083 = vunpack.c.h.b16 %v8736
        %v9084 = vunpack.c.l.b16 %v8737
        %v9085 = vunpack.c.h.b16 %v8737
        %v9086 = vunpack.c.l.b16 %v8738
        %v9087 = vunpack.c.h.b16 %v8738
        %v9088 = vunpack.c.l.b16 %v8739
        %v9089 = vunpack.c.h.b16 %v8739
        %v9090 = vunpack.c.l.b16 %v8740
        %v9091 = vunpack.c.h.b16 %v8740
        %v9092 = vunpack.c.l.b16 %v8741
        %v9093 = vunpack.c.h.b16 %v8741
        %v9094 = vunpack.c.l.b16 %v8742
        %v9095 = vunpack.c.h.b16 %v8742
        %v9096 = vunpack.c.l.b16 %v8743
        %v9097 = vunpack.c.h.b16 %v8743
        %v9098 = vunpack.c.l.b16 %v8744
        %v9099 = vunpack.c.h.b16 %v8744
        %v9100 = vunpack.c.l.b16 %v8745
        %v9101 = vunpack.c.h.b16 %v8745
        %v9102 = vunpack.c.l.b16 %v8746
        %v9103 = vunpack.c.h.b16 %v8746
        %v9104 = vunpack.c.l.b16 %v8747
        %v9105 = vunpack.c.h.b16 %v8747
        %v9106 = vunpack.c.l.b16 %v8748
        %v9107 = vunpack.c.h.b16 %v8748
        %v9108 = vunpack.c.l.b16 %v8749
        %v9109 = vunpack.c.h.b16 %v8749
        %v9110 = vunpack.c.l.b16 %v8750
        %v9111 = vunpack.c.h.b16 %v8750
        %v9112 = vunpack.c.l.b16 %v8751
        %v9113 = vunpack.c.h.b16 %v8751
        %v9114 = vunpack.c.l.b16 %v8752
        %v9115 = vunpack.c.h.b16 %v8752
        %v9116 = vunpack.c.l.b16 %v8753
        %v9117 = vunpack.c.h.b16 %v8753
        %v9118 = vunpack.c.l.b16 %v8754
        %v9119 = vunpack.c.h.b16 %v8754
        %v9120 = vunpack.c.l.b16 %v8755
        %v9121 = vunpack.c.h.b16 %v8755
        %v9122 = vunpack.c.l.b16 %v8756
        %v9123 = vunpack.c.h.b16 %v8756
        %v9124 = vunpack.c.l.b16 %v8757
        %v9125 = vunpack.c.h.b16 %v8757
        %v9126 = vunpack.c.l.b16 %v8758
        %v9127 = vunpack.c.h.b16 %v8758
        %v9128 = vunpack.c.l.b16 %v8759
        %v9129 = vunpack.c.h.b16 %v8759
        %v9130 = vunpack.c.l.b16 %v8760
        %v9131 = vunpack.c.h.b16 %v8760
        %v9132 = vunpack.c.l.b16 %v8761
        %v9133 = vunpack.c.h.b16 %v8761
        %v9134 = vunpack.c.l.b16 %v8762
        %v9135 = vunpack.c.h.b16 %v8762
        %v9136 = vunpack.c.l.b16 %v8763
        %v9137 = vunpack.c.h.b16 %v8763
        %v9138 = vunpack.c.l.b16 %v8764
        %v9139 = vunpack.c.h.b16 %v8764
        %v9140 = vunpack.c.l.b16 %v8765
        %v9141 = vunpack.c.h.b16 %v8765
        %v9142 = vunpack.c.l.b16 %v8766
        %v9143 = vunpack.c.h.b16 %v8766
        %v9144 = vunpack.c.l.b16 %v8767
        %v9145 = vunpack.c.h.b16 %v8767
        %v9146 = vunpack.c.l.b16 %v8768
        %v9147 = vunpack.c.h.b16 %v8768
        %v9148 = vunpack.c.l.b16 %v8769
        %v9149 = vunpack.c.h.b16 %v8769
        %v9150 = vunpack.c.l.b16 %v8770
        %v9151 = vunpack.c.h.b16 %v8770
        %v9152 = vunpack.c.l.b16 %v8771
        %v9153 = vunpack.c.h.b16 %v8771
        %v9154 = vunpack.c.l.b16 %v8772
        %v9155 = vunpack.c.h.b16 %v8772
        %v9156 = vunpack.c.l.b16 %v8773
        %v9157 = vunpack.c.h.b16 %v8773
        %v9158 = vpack.c.b16 %v8902, %v8902
        %v9159 = vpack.c.b16 %v8903, %v8903
        %v9160 = vpack.c.b16 %v8904, %v8904
        %v9161 = vpack.c.b16 %v8905, %v8905
        %v9162 = vpack.c.b16 %v8906, %v8906
        %v9163 = vpack.c.b16 %v8907, %v8907
        %v9164 = vpack.c.b16 %v8908, %v8908
        %v9165 = vpack.c.b16 %v8909, %v8909
        %v9166 = vpack.c.b16 %v8910, %v8910
        %v9167 = vpack.c.b16 %v8911, %v8911
        %v9168 = vpack.c.b16 %v8912, %v8912
        %v9169 = vpack.c.b16 %v8913, %v8913
        %v9170 = vpack.c.b16 %v8914, %v8914
        %v9171 = vpack.c.b16 %v8915, %v8915
        %v9172 = vpack.c.b16 %v8916, %v8916
        %v9173 = vpack.c.b16 %v8917, %v8917
        %v9174 = vpack.c.b16 %v8918, %v8918
        %v9175 = vpack.c.b16 %v8919, %v8919
        %v9176 = vpack.c.b16 %v8920, %v8920
        %v9177 = vpack.c.b16 %v8921, %v8921
        %v9178 = vpack.c.b16 %v8922, %v8922
        %v9179 = vpack.c.b16 %v8923, %v8923
        %v9180 = vpack.c.b16 %v8924, %v8924
        %v9181 = vpack.c.b16 %v8925, %v8925
        %v9182 = vpack.c.b16 %v8926, %v8926
        %v9183 = vpack.c.b16 %v8927, %v8927
        %v9184 = vpack.c.b16 %v8928, %v8928
        %v9185 = vpack.c.b16 %v8929, %v8929
        %v9186 = vpack.c.b16 %v8930, %v8930
        %v9187 = vpack.c.b16 %v8931, %v8931
        %v9188 = vpack.c.b16 %v8932, %v8932
        %v9189 = vpack.c.b16 %v8933, %v8933
        %v9190 = vpack.c.b16 %v8934, %v8934
        %v9191 = vpack.c.b16 %v8935, %v8935
        %v9192 = vpack.c.b16 %v8936, %v8936
        %v9193 = vpack.c.b16 %v8937, %v8937
        %v9194 = vpack.c.b16 %v8938, %v8938
        %v9195 = vpack.c.b16 %v8939, %v8939
        %v9196 = vpack.c.b16 %v8940, %v8940
        %v9197 = vpack.c.b16 %v8941, %v8941
        %v9198 = vpack.c.b16 %v8942, %v8942
        %v9199 = vpack.c.b16 %v8943, %v8943
        %v9200 = vpack.c.b16 %v8944, %v8944
        %v9201 = vpack.c.b16 %v8945, %v8945
        %v9202 = vpack.c.b16 %v8946, %v8946
        %v9203 = vpack.c.b16 %v8947, %v8947
        %v9204 = vpack.c.b16 %v8948, %v8948
        %v9205 = vpack.c.b16 %v8949, %v8949
        %v9206 = vpack.c.b16 %v8950, %v8950
        %v9207 = vpack.c.b16 %v8951, %v8951
        %v9208 = vpack.c.b16 %v8952, %v8952
        %v9209 = vpack.c.b16 %v8953, %v8953
        %v9210 = vpack.c.b16 %v8954, %v8954
        %v9211 = vpack.c.b16 %v8955, %v8955
        %v9212 = vpack.c.b16 %v8956, %v8956
        %v9213 = vpack.c.b16 %v8957, %v8957
        %v9214 = vpack.c.b16 %v8958, %v8958
        %v9215 = vpack.c.b16 %v8959, %v8959
        %v9216 = vpack.c.b16 %v8960, %v8960
        %v9217 = vpack.c.b16 %v8961, %v8961
        %v9218 = vpack.c.b16 %v8962, %v8962
        %v9219 = vpack.c.b16 %v8963, %v8963
        %v9220 = vpack.c.b16 %v8964, %v8964
        %v9221 = vpack.c.b16 %v8965, %v8965
        %v9222 = vpack.c.b16 %v8966, %v8966
        %v9223 = vpack.c.b16 %v8967, %v8967
        %v9224 = vpack.c.b16 %v8968, %v8968
        %v9225 = vpack.c.b16 %v8969, %v8969
        %v9226 = vpack.c.b16 %v8970, %v8970
        %v9227 = vpack.c.b16 %v8971, %v8971
        %v9228 = vpack.c.b16 %v8972, %v8972
        %v9229 = vpack.c.b16 %v8973, %v8973
        %v9230 = vpack.c.b16 %v8974, %v8974
        %v9231 = vpack.c.b16 %v8975, %v8975
        %v9232 = vpack.c.b16 %v8976, %v8976
        %v9233 = vpack.c.b16 %v8977, %v8977
        %v9234 = vpack.c.b16 %v8978, %v8978
        %v9235 = vpack.c.b16 %v8979, %v8979
        %v9236 = vpack.c.b16 %v8980, %v8980
        %v9237 = vpack.c.b16 %v8981, %v8981
        %v9238 = vpack.c.b16 %v8982, %v8982
        %v9239 = vpack.c.b16 %v8983, %v8983
        %v9240 = vpack.c.b16 %v8984, %v8984
        %v9241 = vpack.c.b16 %v8985, %v8985
        %v9242 = vpack.c.b16 %v8986, %v8986
        %v9243 = vpack.c.b16 %v8987, %v8987
        %v9244 = vpack.c.b16 %v8988, %v8988
        %v9245 = vpack.c.b16 %v8989, %v8989
        %v9246 = vpack.c.b16 %v8990, %v8990
        %v9247 = vpack.c.b16 %v8991, %v8991
        %v9248 = vpack.c.b16 %v8992, %v8992
        %v9249 = vpack.c.b16 %v8993, %v8993
        %v9250 = vpack.c.b16 %v8994, %v8994
        %v9251 = vpack.c.b16 %v8995, %v8995
        %v9252 = vpack.c.b16 %v8996, %v8996
        %v9253 = vpack.c.b16 %v8997, %v8997
        %v9254 = vpack.c.b16 %v8998, %v8998
        %v9255 = vpack.c.b16 %v8999, %v8999
        %v9256 = vpack.c.b16 %v9000, %v9000
        %v9257 = vpack.c.b16 %v9001, %v9001
        %v9258 = vpack.c.b16 %v9002, %v9002
        %v9259 = vpack.c.b16 %v9003, %v9003
        %v9260 = vpack.c.b16 %v9004, %v9004
        %v9261 = vpack.c.b16 %v9005, %v9005
        %v9262 = vpack.c.b16 %v9006, %v9006
        %v9263 = vpack.c.b16 %v9007, %v9007
        %v9264 = vpack.c.b16 %v9008, %v9008
        %v9265 = vpack.c.b16 %v9009, %v9009
        %v9266 = vpack.c.b16 %v9010, %v9010
        %v9267 = vpack.c.b16 %v9011, %v9011
        %v9268 = vpack.c.b16 %v9012, %v9012
        %v9269 = vpack.c.b16 %v9013, %v9013
        %v9270 = vpack.c.b16 %v9014, %v9014
        %v9271 = vpack.c.b16 %v9015, %v9015
        %v9272 = vpack.c.b16 %v9016, %v9016
        %v9273 = vpack.c.b16 %v9017, %v9017
        %v9274 = vpack.c.b16 %v9018, %v9018
        %v9275 = vpack.c.b16 %v9019, %v9019
        %v9276 = vpack.c.b16 %v9020, %v9020
        %v9277 = vpack.c.b16 %v9021, %v9021
        %v9278 = vpack.c.b16 %v9022, %v9022
        %v9279 = vpack.c.b16 %v9023, %v9023
        %v9280 = vpack.c.b16 %v9024, %v9024
        %v9281 = vpack.c.b16 %v9025, %v9025
        %v9282 = vpack.c.b16 %v9026, %v9026
        %v9283 = vpack.c.b16 %v9027, %v9027
        %v9284 = vpack.c.b16 %v9028, %v9028
        %v9285 = vpack.c.b16 %v9029, %v9029
        %v9286 = vpack.c.b16 %v9030, %v9030
        %v9287 = vpack.c.b16 %v9031, %v9031
        %v9288 = vpack.c.b16 %v9032, %v9032
        %v9289 = vpack.c.b16 %v9033, %v9033
        %v9290 = vpack.c.b16 %v9034, %v9034
        %v9291 = vpack.c.b16 %v9035, %v9035
        %v9292 = vpack.c.b16 %v9036, %v9036
        %v9293 = vpack.c.b16 %v9037, %v9037
        %v9294 = vpack.c.b16 %v9038, %v9038
        %v9295 = vpack.c.b16 %v9039, %v9039
        %v9296 = vpack.c.b16 %v9040, %v9040
        %v9297 = vpack.c.b16 %v9041, %v9041
        %v9298 = vpack.c.b16 %v9042, %v9042
        %v9299 = vpack.c.b16 %v9043, %v9043
        %v9300 = vpack.c.b16 %v9044, %v9044
        %v9301 = vpack.c.b16 %v9045, %v9045
        %v9302 = vpack.c.b16 %v9046, %v9046
        %v9303 = vpack.c.b16 %v9047, %v9047
        %v9304 = vpack.c.b16 %v9048, %v9048
        %v9305 = vpack.c.b16 %v9049, %v9049
        %v9306 = vpack.c.b16 %v9050, %v9050
        %v9307 = vpack.c.b16 %v9051, %v9051
        %v9308 = vpack.c.b16 %v9052, %v9052
        %v9309 = vpack.c.b16 %v9053, %v9053
        %v9310 = vpack.c.b16 %v9054, %v9054
        %v9311 = vpack.c.b16 %v9055, %v9055
        %v9312 = vpack.c.b16 %v9056, %v9056
        %v9313 = vpack.c.b16 %v9057, %v9057
        %v9314 = vpack.c.b16 %v9058, %v9058
        %v9315 = vpack.c.b16 %v9059, %v9059
        %v9316 = vpack.c.b16 %v9060, %v9060
        %v9317 = vpack.c.b16 %v9061, %v9061
        %v9318 = vpack.c.b16 %v9062, %v9062
        %v9319 = vpack.c.b16 %v9063, %v9063
        %v9320 = vpack.c.b16 %v9064, %v9064
        %v9321 = vpack.c.b16 %v9065, %v9065
        %v9322 = vpack.c.b16 %v9066, %v9066
        %v9323 = vpack.c.b16 %v9067, %v9067
        %v9324 = vpack.c.b16 %v9068, %v9068
        %v9325 = vpack.c.b16 %v9069, %v9069
        %v9326 = vpack.c.b16 %v9070, %v9070
        %v9327 = vpack.c.b16 %v9071, %v9071
        %v9328 = vpack.c.b16 %v9072, %v9072
        %v9329 = vpack.c.b16 %v9073, %v9073
        %v9330 = vpack.c.b16 %v9074, %v9074
        %v9331 = vpack.c.b16 %v9075, %v9075
        %v9332 = vpack.c.b16 %v9076, %v9076
        %v9333 = vpack.c.b16 %v9077, %v9077
        %v9334 = vpack.c.b16 %v9078, %v9078
        %v9335 = vpack.c.b16 %v9079, %v9079
        %v9336 = vpack.c.b16 %v9080, %v9080
        %v9337 = vpack.c.b16 %v9081, %v9081
        %v9338 = vpack.c.b16 %v9082, %v9082
        %v9339 = vpack.c.b16 %v9083, %v9083
        %v9340 = vpack.c.b16 %v9084, %v9084
        %v9341 = vpack.c.b16 %v9085, %v9085
        %v9342 = vpack.c.b16 %v9086, %v9086
        %v9343 = vpack.c.b16 %v9087, %v9087
        %v9344 = vpack.c.b16 %v9088, %v9088
        %v9345 = vpack.c.b16 %v9089, %v9089
        %v9346 = vpack.c.b16 %v9090, %v9090
        %v9347 = vpack.c.b16 %v9091, %v9091
        %v9348 = vpack.c.b16 %v9092, %v9092
        %v9349 = vpack.c.b16 %v9093, %v9093
        %v9350 = vpack.c.b16 %v9094, %v9094
        %v9351 = vpack.c.b16 %v9095, %v9095
        %v9352 = vpack.c.b16 %v9096, %v9096
        %v9353 = vpack.c.b16 %v9097, %v9097
        %v9354 = vpack.c.b16 %v9098, %v9098
        %v9355 = vpack.c.b16 %v9099, %v9099
        %v9356 = vpack.c.b16 %v9100, %v9100
        %v9357 = vpack.c.b16 %v9101, %v9101
        %v9358 = vpack.c.b16 %v9102, %v9102
        %v9359 = vpack.c.b16 %v9103, %v9103
        %v9360 = vpack.c.b16 %v9104, %v9104
        %v9361 = vpack.c.b16 %v9105, %v9105
        %v9362 = vpack.c.b16 %v9106, %v9106
        %v9363 = vpack.c.b16 %v9107, %v9107
        %v9364 = vpack.c.b16 %v9108, %v9108
        %v9365 = vpack.c.b16 %v9109, %v9109
        %v9366 = vpack.c.b16 %v9110, %v9110
        %v9367 = vpack.c.b16 %v9111, %v9111
        %v9368 = vpack.c.b16 %v9112, %v9112
        %v9369 = vpack.c.b16 %v9113, %v9113
        %v9370 = vpack.c.b16 %v9114, %v9114
        %v9371 = vpack.c.b16 %v9115, %v9115
        %v9372 = vpack.c.b16 %v9116, %v9116
        %v9373 = vpack.c.b16 %v9117, %v9117
        %v9374 = vpack.c.b16 %v9118, %v9118
        %v9375 = vpack.c.b16 %v9119, %v9119
        %v9376 = vpack.c.b16 %v9120, %v9120
        %v9377 = vpack.c.b16 %v9121, %v9121
        %v9378 = vpack.c.b16 %v9122, %v9122
        %v9379 = vpack.c.b16 %v9123, %v9123
        %v9380 = vpack.c.b16 %v9124, %v9124
        %v9381 = vpack.c.b16 %v9125, %v9125
        %v9382 = vpack.c.b16 %v9126, %v9126
        %v9383 = vpack.c.b16 %v9127, %v9127
        %v9384 = vpack.c.b16 %v9128, %v9128
        %v9385 = vpack.c.b16 %v9129, %v9129
        %v9386 = vpack.c.b16 %v9130, %v9130
        %v9387 = vpack.c.b16 %v9131, %v9131
        %v9388 = vpack.c.b16 %v9132, %v9132
        %v9389 = vpack.c.b16 %v9133, %v9133
        %v9390 = vpack.c.b16 %v9134, %v9134
        %v9391 = vpack.c.b16 %v9135, %v9135
        %v9392 = vpack.c.b16 %v9136, %v9136
        %v9393 = vpack.c.b16 %v9137, %v9137
        %v9394 = vpack.c.b16 %v9138, %v9138
        %v9395 = vpack.c.b16 %v9139, %v9139
        %v9396 = vpack.c.b16 %v9140, %v9140
        %v9397 = vpack.c.b16 %v9141, %v9141
        %v9398 = vpack.c.b16 %v9142, %v9142
        %v9399 = vpack.c.b16 %v9143, %v9143
        %v9400 = vpack.c.b16 %v9144, %v9144
        %v9401 = vpack.c.b16 %v9145, %v9145
        %v9402 = vpack.c.b16 %v9146, %v9146
        %v9403 = vpack.c.b16 %v9147, %v9147
        %v9404 = vpack.c.b16 %v9148, %v9148
        %v9405 = vpack.c.b16 %v9149, %v9149
        %v9406 = vpack.c.b16 %v9150, %v9150
        %v9407 = vpack.c.b16 %v9151, %v9151
        %v9408 = vpack.c.b16 %v9152, %v9152
        %v9409 = vpack.c.b16 %v9153, %v9153
        %v9410 = vpack.c.b16 %v9154, %v9154
        %v9411 = vpack.c.b16 %v9155, %v9155
        %v9412 = vpack.c.b16 %v9156, %v9156
        %v9413 = vpack.c.b16 %v9157, %v9157
        %9670 = vst [vmem:[%s216] sm:$0xf] %v9158
        %9671 = vst [vmem:[%s216 + $0x4] sm:$0xf] %v9159
        %9672 = vst [vmem:[%s216 + $0x8] sm:$0xf] %v9160
        %9673 = vst [vmem:[%s216 + $0xc] sm:$0xf] %v9161
        %9674 = vst [vmem:[%s216 + $0x10] sm:$0xf] %v9162
        %9675 = vst [vmem:[%s216 + $0x14] sm:$0xf] %v9163
        %9676 = vst [vmem:[%s216 + $0x18] sm:$0xf] %v9164
        %9677 = vst [vmem:[%s216 + $0x1c] sm:$0xf] %v9165
        %9678 = vst [vmem:[%s216 + $0x20] sm:$0xf] %v9166
        %9679 = vst [vmem:[%s216 + $0x24] sm:$0xf] %v9167
        %9680 = vst [vmem:[%s216 + $0x28] sm:$0xf] %v9168
        %9681 = vst [vmem:[%s216 + $0x2c] sm:$0xf] %v9169
        %9682 = vst [vmem:[%s216 + $0x30] sm:$0xf] %v9170
        %9683 = vst [vmem:[%s216 + $0x34] sm:$0xf] %v9171
        %9684 = vst [vmem:[%s216 + $0x38] sm:$0xf] %v9172
        %9685 = vst [vmem:[%s216 + $0x3c] sm:$0xf] %v9173
        %9686 = vst [vmem:[%s216 + $0x40] sm:$0xf] %v9174
        %9687 = vst [vmem:[%s216 + $0x44] sm:$0xf] %v9175
        %9688 = vst [vmem:[%s216 + $0x48] sm:$0xf] %v9176
        %9689 = vst [vmem:[%s216 + $0x4c] sm:$0xf] %v9177
        %9690 = vst [vmem:[%s216 + $0x50] sm:$0xf] %v9178
        %9691 = vst [vmem:[%s216 + $0x54] sm:$0xf] %v9179
        %9692 = vst [vmem:[%s216 + $0x58] sm:$0xf] %v9180
        %9693 = vst [vmem:[%s216 + $0x5c] sm:$0xf] %v9181
        %9694 = vst [vmem:[%s216 + $0x60] sm:$0xf] %v9182
        %9695 = vst [vmem:[%s216 + $0x64] sm:$0xf] %v9183
        %9696 = vst [vmem:[%s216 + $0x68] sm:$0xf] %v9184
        %9697 = vst [vmem:[%s216 + $0x6c] sm:$0xf] %v9185
        %9698 = vst [vmem:[%s216 + $0x70] sm:$0xf] %v9186
        %9699 = vst [vmem:[%s216 + $0x74] sm:$0xf] %v9187
        %9700 = vst [vmem:[%s216 + $0x78] sm:$0xf] %v9188
        %9701 = vst [vmem:[%s216 + $0x7c] sm:$0xf] %v9189
        %9702 = vst [vmem:[%s216 + $0x80] sm:$0xf] %v9190
        %9703 = vst [vmem:[%s216 + $0x84] sm:$0xf] %v9191
        %9704 = vst [vmem:[%s216 + $0x88] sm:$0xf] %v9192
        %9705 = vst [vmem:[%s216 + $0x8c] sm:$0xf] %v9193
        %9706 = vst [vmem:[%s216 + $0x90] sm:$0xf] %v9194
        %9707 = vst [vmem:[%s216 + $0x94] sm:$0xf] %v9195
        %9708 = vst [vmem:[%s216 + $0x98] sm:$0xf] %v9196
        %9709 = vst [vmem:[%s216 + $0x9c] sm:$0xf] %v9197
        %9710 = vst [vmem:[%s216 + $0xa0] sm:$0xf] %v9198
        %9711 = vst [vmem:[%s216 + $0xa4] sm:$0xf] %v9199
        %9712 = vst [vmem:[%s216 + $0xa8] sm:$0xf] %v9200
        %9713 = vst [vmem:[%s216 + $0xac] sm:$0xf] %v9201
        %9714 = vst [vmem:[%s216 + $0xb0] sm:$0xf] %v9202
        %9715 = vst [vmem:[%s216 + $0xb4] sm:$0xf] %v9203
        %9716 = vst [vmem:[%s216 + $0xb8] sm:$0xf] %v9204
        %9717 = vst [vmem:[%s216 + $0xbc] sm:$0xf] %v9205
        %9718 = vst [vmem:[%s216 + $0xc0] sm:$0xf] %v9206
        %9719 = vst [vmem:[%s216 + $0xc4] sm:$0xf] %v9207
        %9720 = vst [vmem:[%s216 + $0xc8] sm:$0xf] %v9208
        %9721 = vst [vmem:[%s216 + $0xcc] sm:$0xf] %v9209
        %9722 = vst [vmem:[%s216 + $0xd0] sm:$0xf] %v9210
        %9723 = vst [vmem:[%s216 + $0xd4] sm:$0xf] %v9211
        %9724 = vst [vmem:[%s216 + $0xd8] sm:$0xf] %v9212
        %9725 = vst [vmem:[%s216 + $0xdc] sm:$0xf] %v9213
        %9726 = vst [vmem:[%s216 + $0xe0] sm:$0xf] %v9214
        %9727 = vst [vmem:[%s216 + $0xe4] sm:$0xf] %v9215
        %9728 = vst [vmem:[%s216 + $0xe8] sm:$0xf] %v9216
        %9729 = vst [vmem:[%s216 + $0xec] sm:$0xf] %v9217
        %9730 = vst [vmem:[%s216 + $0xf0] sm:$0xf] %v9218
        %9731 = vst [vmem:[%s216 + $0xf4] sm:$0xf] %v9219
        %9732 = vst [vmem:[%s216 + $0xf8] sm:$0xf] %v9220
        %9733 = vst [vmem:[%s216 + $0xfc] sm:$0xf] %v9221
        %9734 = vst [vmem:[%s216 + $0x100] sm:$0xf] %v9222
        %9735 = vst [vmem:[%s216 + $0x104] sm:$0xf] %v9223
        %9736 = vst [vmem:[%s216 + $0x108] sm:$0xf] %v9224
        %9737 = vst [vmem:[%s216 + $0x10c] sm:$0xf] %v9225
        %9738 = vst [vmem:[%s216 + $0x110] sm:$0xf] %v9226
        %9739 = vst [vmem:[%s216 + $0x114] sm:$0xf] %v9227
        %9740 = vst [vmem:[%s216 + $0x118] sm:$0xf] %v9228
        %9741 = vst [vmem:[%s216 + $0x11c] sm:$0xf] %v9229
        %9742 = vst [vmem:[%s216 + $0x120] sm:$0xf] %v9230
        %9743 = vst [vmem:[%s216 + $0x124] sm:$0xf] %v9231
        %9744 = vst [vmem:[%s216 + $0x128] sm:$0xf] %v9232
        %9745 = vst [vmem:[%s216 + $0x12c] sm:$0xf] %v9233
        %9746 = vst [vmem:[%s216 + $0x130] sm:$0xf] %v9234
        %9747 = vst [vmem:[%s216 + $0x134] sm:$0xf] %v9235
        %9748 = vst [vmem:[%s216 + $0x138] sm:$0xf] %v9236
        %9749 = vst [vmem:[%s216 + $0x13c] sm:$0xf] %v9237
        %9750 = vst [vmem:[%s216 + $0x140] sm:$0xf] %v9238
        %9751 = vst [vmem:[%s216 + $0x144] sm:$0xf] %v9239
        %9752 = vst [vmem:[%s216 + $0x148] sm:$0xf] %v9240
        %9753 = vst [vmem:[%s216 + $0x14c] sm:$0xf] %v9241
        %9754 = vst [vmem:[%s216 + $0x150] sm:$0xf] %v9242
        %9755 = vst [vmem:[%s216 + $0x154] sm:$0xf] %v9243
        %9756 = vst [vmem:[%s216 + $0x158] sm:$0xf] %v9244
        %9757 = vst [vmem:[%s216 + $0x15c] sm:$0xf] %v9245
        %9758 = vst [vmem:[%s216 + $0x160] sm:$0xf] %v9246
        %9759 = vst [vmem:[%s216 + $0x164] sm:$0xf] %v9247
        %9760 = vst [vmem:[%s216 + $0x168] sm:$0xf] %v9248
        %9761 = vst [vmem:[%s216 + $0x16c] sm:$0xf] %v9249
        %9762 = vst [vmem:[%s216 + $0x170] sm:$0xf] %v9250
        %9763 = vst [vmem:[%s216 + $0x174] sm:$0xf] %v9251
        %9764 = vst [vmem:[%s216 + $0x178] sm:$0xf] %v9252
        %9765 = vst [vmem:[%s216 + $0x17c] sm:$0xf] %v9253
        %9766 = vst [vmem:[%s216 + $0x180] sm:$0xf] %v9254
        %9767 = vst [vmem:[%s216 + $0x184] sm:$0xf] %v9255
        %9768 = vst [vmem:[%s216 + $0x188] sm:$0xf] %v9256
        %9769 = vst [vmem:[%s216 + $0x18c] sm:$0xf] %v9257
        %9770 = vst [vmem:[%s216 + $0x190] sm:$0xf] %v9258
        %9771 = vst [vmem:[%s216 + $0x194] sm:$0xf] %v9259
        %9772 = vst [vmem:[%s216 + $0x198] sm:$0xf] %v9260
        %9773 = vst [vmem:[%s216 + $0x19c] sm:$0xf] %v9261
        %9774 = vst [vmem:[%s216 + $0x1a0] sm:$0xf] %v9262
        %9775 = vst [vmem:[%s216 + $0x1a4] sm:$0xf] %v9263
        %9776 = vst [vmem:[%s216 + $0x1a8] sm:$0xf] %v9264
        %9777 = vst [vmem:[%s216 + $0x1ac] sm:$0xf] %v9265
        %9778 = vst [vmem:[%s216 + $0x1b0] sm:$0xf] %v9266
        %9779 = vst [vmem:[%s216 + $0x1b4] sm:$0xf] %v9267
        %9780 = vst [vmem:[%s216 + $0x1b8] sm:$0xf] %v9268
        %9781 = vst [vmem:[%s216 + $0x1bc] sm:$0xf] %v9269
        %9782 = vst [vmem:[%s216 + $0x1c0] sm:$0xf] %v9270
        %9783 = vst [vmem:[%s216 + $0x1c4] sm:$0xf] %v9271
        %9784 = vst [vmem:[%s216 + $0x1c8] sm:$0xf] %v9272
        %9785 = vst [vmem:[%s216 + $0x1cc] sm:$0xf] %v9273
        %9786 = vst [vmem:[%s216 + $0x1d0] sm:$0xf] %v9274
        %9787 = vst [vmem:[%s216 + $0x1d4] sm:$0xf] %v9275
        %9788 = vst [vmem:[%s216 + $0x1d8] sm:$0xf] %v9276
        %9789 = vst [vmem:[%s216 + $0x1dc] sm:$0xf] %v9277
        %9790 = vst [vmem:[%s216 + $0x1e0] sm:$0xf] %v9278
        %9791 = vst [vmem:[%s216 + $0x1e4] sm:$0xf] %v9279
        %9792 = vst [vmem:[%s216 + $0x1e8] sm:$0xf] %v9280
        %9793 = vst [vmem:[%s216 + $0x1ec] sm:$0xf] %v9281
        %9794 = vst [vmem:[%s216 + $0x1f0] sm:$0xf] %v9282
        %9795 = vst [vmem:[%s216 + $0x1f4] sm:$0xf] %v9283
        %9796 = vst [vmem:[%s216 + $0x1f8] sm:$0xf] %v9284
        %9797 = vst [vmem:[%s216 + $0x1fc] sm:$0xf] %v9285
        %9798 = vst [vmem:[%s216 + $0x200] sm:$0xf] %v9286
        %9799 = vst [vmem:[%s216 + $0x204] sm:$0xf] %v9287
        %9800 = vst [vmem:[%s216 + $0x208] sm:$0xf] %v9288
        %9801 = vst [vmem:[%s216 + $0x20c] sm:$0xf] %v9289
        %9802 = vst [vmem:[%s216 + $0x210] sm:$0xf] %v9290
        %9803 = vst [vmem:[%s216 + $0x214] sm:$0xf] %v9291
        %9804 = vst [vmem:[%s216 + $0x218] sm:$0xf] %v9292
        %9805 = vst [vmem:[%s216 + $0x21c] sm:$0xf] %v9293
        %9806 = vst [vmem:[%s216 + $0x220] sm:$0xf] %v9294
        %9807 = vst [vmem:[%s216 + $0x224] sm:$0xf] %v9295
        %9808 = vst [vmem:[%s216 + $0x228] sm:$0xf] %v9296
        %9809 = vst [vmem:[%s216 + $0x22c] sm:$0xf] %v9297
        %9810 = vst [vmem:[%s216 + $0x230] sm:$0xf] %v9298
        %9811 = vst [vmem:[%s216 + $0x234] sm:$0xf] %v9299
        %9812 = vst [vmem:[%s216 + $0x238] sm:$0xf] %v9300
        %9813 = vst [vmem:[%s216 + $0x23c] sm:$0xf] %v9301
        %9814 = vst [vmem:[%s216 + $0x240] sm:$0xf] %v9302
        %9815 = vst [vmem:[%s216 + $0x244] sm:$0xf] %v9303
        %9816 = vst [vmem:[%s216 + $0x248] sm:$0xf] %v9304
        %9817 = vst [vmem:[%s216 + $0x24c] sm:$0xf] %v9305
        %9818 = vst [vmem:[%s216 + $0x250] sm:$0xf] %v9306
        %9819 = vst [vmem:[%s216 + $0x254] sm:$0xf] %v9307
        %9820 = vst [vmem:[%s216 + $0x258] sm:$0xf] %v9308
        %9821 = vst [vmem:[%s216 + $0x25c] sm:$0xf] %v9309
        %9822 = vst [vmem:[%s216 + $0x260] sm:$0xf] %v9310
        %9823 = vst [vmem:[%s216 + $0x264] sm:$0xf] %v9311
        %9824 = vst [vmem:[%s216 + $0x268] sm:$0xf] %v9312
        %9825 = vst [vmem:[%s216 + $0x26c] sm:$0xf] %v9313
        %9826 = vst [vmem:[%s216 + $0x270] sm:$0xf] %v9314
        %9827 = vst [vmem:[%s216 + $0x274] sm:$0xf] %v9315
        %9828 = vst [vmem:[%s216 + $0x278] sm:$0xf] %v9316
        %9829 = vst [vmem:[%s216 + $0x27c] sm:$0xf] %v9317
        %9830 = vst [vmem:[%s216 + $0x280] sm:$0xf] %v9318
        %9831 = vst [vmem:[%s216 + $0x284] sm:$0xf] %v9319
        %9832 = vst [vmem:[%s216 + $0x288] sm:$0xf] %v9320
        %9833 = vst [vmem:[%s216 + $0x28c] sm:$0xf] %v9321
        %9834 = vst [vmem:[%s216 + $0x290] sm:$0xf] %v9322
        %9835 = vst [vmem:[%s216 + $0x294] sm:$0xf] %v9323
        %9836 = vst [vmem:[%s216 + $0x298] sm:$0xf] %v9324
        %9837 = vst [vmem:[%s216 + $0x29c] sm:$0xf] %v9325
        %9838 = vst [vmem:[%s216 + $0x2a0] sm:$0xf] %v9326
        %9839 = vst [vmem:[%s216 + $0x2a4] sm:$0xf] %v9327
        %9840 = vst [vmem:[%s216 + $0x2a8] sm:$0xf] %v9328
        %9841 = vst [vmem:[%s216 + $0x2ac] sm:$0xf] %v9329
        %9842 = vst [vmem:[%s216 + $0x2b0] sm:$0xf] %v9330
        %9843 = vst [vmem:[%s216 + $0x2b4] sm:$0xf] %v9331
        %9844 = vst [vmem:[%s216 + $0x2b8] sm:$0xf] %v9332
        %9845 = vst [vmem:[%s216 + $0x2bc] sm:$0xf] %v9333
        %9846 = vst [vmem:[%s216 + $0x2c0] sm:$0xf] %v9334
        %9847 = vst [vmem:[%s216 + $0x2c4] sm:$0xf] %v9335
        %9848 = vst [vmem:[%s216 + $0x2c8] sm:$0xf] %v9336
        %9849 = vst [vmem:[%s216 + $0x2cc] sm:$0xf] %v9337
        %9850 = vst [vmem:[%s216 + $0x2d0] sm:$0xf] %v9338
        %9851 = vst [vmem:[%s216 + $0x2d4] sm:$0xf] %v9339
        %9852 = vst [vmem:[%s216 + $0x2d8] sm:$0xf] %v9340
        %9853 = vst [vmem:[%s216 + $0x2dc] sm:$0xf] %v9341
        %9854 = vst [vmem:[%s216 + $0x2e0] sm:$0xf] %v9342
        %9855 = vst [vmem:[%s216 + $0x2e4] sm:$0xf] %v9343
        %9856 = vst [vmem:[%s216 + $0x2e8] sm:$0xf] %v9344
        %9857 = vst [vmem:[%s216 + $0x2ec] sm:$0xf] %v9345
        %9858 = vst [vmem:[%s216 + $0x2f0] sm:$0xf] %v9346
        %9859 = vst [vmem:[%s216 + $0x2f4] sm:$0xf] %v9347
        %9860 = vst [vmem:[%s216 + $0x2f8] sm:$0xf] %v9348
        %9861 = vst [vmem:[%s216 + $0x2fc] sm:$0xf] %v9349
        %9862 = vst [vmem:[%s216 + $0x300] sm:$0xf] %v9350
        %9863 = vst [vmem:[%s216 + $0x304] sm:$0xf] %v9351
        %9864 = vst [vmem:[%s216 + $0x308] sm:$0xf] %v9352
        %9865 = vst [vmem:[%s216 + $0x30c] sm:$0xf] %v9353
        %9866 = vst [vmem:[%s216 + $0x310] sm:$0xf] %v9354
        %9867 = vst [vmem:[%s216 + $0x314] sm:$0xf] %v9355
        %9868 = vst [vmem:[%s216 + $0x318] sm:$0xf] %v9356
        %9869 = vst [vmem:[%s216 + $0x31c] sm:$0xf] %v9357
        %9870 = vst [vmem:[%s216 + $0x320] sm:$0xf] %v9358
        %9871 = vst [vmem:[%s216 + $0x324] sm:$0xf] %v9359
        %9872 = vst [vmem:[%s216 + $0x328] sm:$0xf] %v9360
        %9873 = vst [vmem:[%s216 + $0x32c] sm:$0xf] %v9361
        %9874 = vst [vmem:[%s216 + $0x330] sm:$0xf] %v9362
        %9875 = vst [vmem:[%s216 + $0x334] sm:$0xf] %v9363
        %9876 = vst [vmem:[%s216 + $0x338] sm:$0xf] %v9364
        %9877 = vst [vmem:[%s216 + $0x33c] sm:$0xf] %v9365
        %9878 = vst [vmem:[%s216 + $0x340] sm:$0xf] %v9366
        %9879 = vst [vmem:[%s216 + $0x344] sm:$0xf] %v9367
        %9880 = vst [vmem:[%s216 + $0x348] sm:$0xf] %v9368
        %9881 = vst [vmem:[%s216 + $0x34c] sm:$0xf] %v9369
        %9882 = vst [vmem:[%s216 + $0x350] sm:$0xf] %v9370
        %9883 = vst [vmem:[%s216 + $0x354] sm:$0xf] %v9371
        %9884 = vst [vmem:[%s216 + $0x358] sm:$0xf] %v9372
        %9885 = vst [vmem:[%s216 + $0x35c] sm:$0xf] %v9373
        %9886 = vst [vmem:[%s216 + $0x360] sm:$0xf] %v9374
        %9887 = vst [vmem:[%s216 + $0x364] sm:$0xf] %v9375
        %9888 = vst [vmem:[%s216 + $0x368] sm:$0xf] %v9376
        %9889 = vst [vmem:[%s216 + $0x36c] sm:$0xf] %v9377
        %9890 = vst [vmem:[%s216 + $0x370] sm:$0xf] %v9378
        %9891 = vst [vmem:[%s216 + $0x374] sm:$0xf] %v9379
        %9892 = vst [vmem:[%s216 + $0x378] sm:$0xf] %v9380
        %9893 = vst [vmem:[%s216 + $0x37c] sm:$0xf] %v9381
        %9894 = vst [vmem:[%s216 + $0x380] sm:$0xf] %v9382
        %9895 = vst [vmem:[%s216 + $0x384] sm:$0xf] %v9383
        %9896 = vst [vmem:[%s216 + $0x388] sm:$0xf] %v9384
        %9897 = vst [vmem:[%s216 + $0x38c] sm:$0xf] %v9385
        %9898 = vst [vmem:[%s216 + $0x390] sm:$0xf] %v9386
        %9899 = vst [vmem:[%s216 + $0x394] sm:$0xf] %v9387
        %9900 = vst [vmem:[%s216 + $0x398] sm:$0xf] %v9388
        %9901 = vst [vmem:[%s216 + $0x39c] sm:$0xf] %v9389
        %9902 = vst [vmem:[%s216 + $0x3a0] sm:$0xf] %v9390
        %9903 = vst [vmem:[%s216 + $0x3a4] sm:$0xf] %v9391
        %9904 = vst [vmem:[%s216 + $0x3a8] sm:$0xf] %v9392
        %9905 = vst [vmem:[%s216 + $0x3ac] sm:$0xf] %v9393
        %9906 = vst [vmem:[%s216 + $0x3b0] sm:$0xf] %v9394
        %9907 = vst [vmem:[%s216 + $0x3b4] sm:$0xf] %v9395
        %9908 = vst [vmem:[%s216 + $0x3b8] sm:$0xf] %v9396
        %9909 = vst [vmem:[%s216 + $0x3bc] sm:$0xf] %v9397
        %9910 = vst [vmem:[%s216 + $0x3c0] sm:$0xf] %v9398
        %9911 = vst [vmem:[%s216 + $0x3c4] sm:$0xf] %v9399
        %9912 = vst [vmem:[%s216 + $0x3c8] sm:$0xf] %v9400
        %9913 = vst [vmem:[%s216 + $0x3cc] sm:$0xf] %v9401
        %9914 = vst [vmem:[%s216 + $0x3d0] sm:$0xf] %v9402
        %9915 = vst [vmem:[%s216 + $0x3d4] sm:$0xf] %v9403
        %9916 = vst [vmem:[%s216 + $0x3d8] sm:$0xf] %v9404
        %9917 = vst [vmem:[%s216 + $0x3dc] sm:$0xf] %v9405
        %9918 = vst [vmem:[%s216 + $0x3e0] sm:$0xf] %v9406
        %9919 = vst [vmem:[%s216 + $0x3e4] sm:$0xf] %v9407
        %9920 = vst [vmem:[%s216 + $0x3e8] sm:$0xf] %v9408
        %9921 = vst [vmem:[%s216 + $0x3ec] sm:$0xf] %v9409
        %9922 = vst [vmem:[%s216 + $0x3f0] sm:$0xf] %v9410
        %9923 = vst [vmem:[%s216 + $0x3f4] sm:$0xf] %v9411
        %9924 = vst [vmem:[%s216 + $0x3f8] sm:$0xf] %v9412
        %9925 = vst [vmem:[%s216 + $0x3fc] sm:$0xf] %v9413
        %s9926 = sand.u32 %s97, 1
        %s9927 = scalar_lea.sflag [#allocation4], %s9926
        %s9928 = sand.u32 %s97, 1
        %s9929 = smul.addr %s9928, 1024
        %s9930 = scalar_lea.vmem [#allocation8], %s9929
        // Predicated region
        $region45: #{tpu_custom_call.1} parent=31 // pred_check
          %p9931 = pneg %p107
        $region46: #{tpu_custom_call.1} parent=31 // pred_check_branch
          %9933 = sbr.rel (%p9931) target = $region48
        $region47: #{tpu_custom_call.1} parent=31 // pred_region
          %s9934 = smul.u32 256, %s21
          %s9936 = ssub.s32 16384, 16384
          %9937 = vsyncadd %s9927, %s9936
          %s9938 = smul.addr %s9934, 64
          %s9939 = scalar_lea.hbm %s3, %s9938
          %s9940 = sshll.u32 %s9930, 4
          %s9941 = int_to_ptr.vmem [resolvable:$true] %s9940
          %9946 = dma.vmem_to_hbm [thread:$0]  %s9941, 16384, %s9939, %s9927, 64, 64, 4
        $region48: #{tpu_custom_call.1} parent=31 // pred_fallthru
          _
      $region32: #{tpu_custom_call.1} parent=5 // pred_fallthru
        _
      %p9947 = scmp.le.s32.totalorder 2, %s16
      // Predicated region
      $region49: #{tpu_custom_call.1} parent=5 // pred_check
        %p9948 = pneg %p9947
      $region50: #{tpu_custom_call.1} parent=5 // pred_check_branch
        %9950 = sbr.rel (%p9948) target = $region52
      $region51: #{tpu_custom_call.1} parent=5 // pred_region
        %s9951 = ssub.s32 %s16, 2
        // Predicated region
        $region53: #{tpu_custom_call.1} parent=51 // pred_check
          %p9952 = pneg %p113
        $region54: #{tpu_custom_call.1} parent=51 // pred_check_branch
          %9954 = sbr.rel (%p9952) target = $region56
        $region55: #{tpu_custom_call.1} parent=51 // pred_region
          %s9955 = sand.u32 %s98, 1
          %s9956 = scalar_lea.sflag [#allocation4], %s9955
          %s9957 = sand.u32 %s98, 1
          %s9958 = smul.addr %s9957, 1024
          %s9959 = scalar_lea.vmem [#allocation8], %s9958
          %9960 = dma.done %s9956, 16384
        $region56: #{tpu_custom_call.1} parent=51 // pred_fallthru
          _
      $region52: #{tpu_custom_call.1} parent=5 // pred_fallthru
        _
    $region6: #{tpu_custom_call.1} parent=1 // loop_footer
      %s20 = sadd.s32 1, %s16
    $region7: #{tpu_custom_call.1} parent=1 // loop_footer_branch
      %15 = sbr.rel target = $region3
    $region8: #{tpu_custom_call.1} parent=1 // loop_exit
      _
    %9961 = vsyncpa [#allocation3], 1
    %s9962 = scalar_lea.sflag [#allocation3], 1
    %9963 = vsyncpa %s9962, 1
    %9964 = vsyncpa [#allocation6], 1
    %9965 = vsyncpa [#allocation4], 1
    %s9966 = scalar_lea.sflag [#allocation4], 1
    %9967 = vsyncpa %s9966, 1

</llo_original>
